<compile_context>
chip_gen: v5e
topology: v5e:2x2
jax: 0.10.0
libtpu: 0.0.40
codegen_flags: <defaults>
</compile_context>

<pallas_src>
import jax
import jax.numpy as jnp
from jax.experimental import pallas as pl
from jax.experimental.pallas import tpu as pltpu


# ----------------------------- helpers -----------------------------

def _round_up(x, m):
    return ((x + m - 1) // m) * m


def _pick_tile(m, target=512):
    """Largest reasonable M tile (multiple of 8); prefer >=2 grid steps so both
    TensorCores get work on megacore parts (v7x)."""
    tm = min(target, _round_up(m, 8))
    if m > 8 and _round_up(m, tm) // tm < 2:
        tm = _round_up((m + 1) // 2, 8)
    return tm


# ----------------------------- Pallas kernels -----------------------------

def _gemm_bias_kernel(a_ref, b_ref, bias_ref, o_ref):
    # bf16 MXU inputs, f32 accumulate.  B (tiny: Cin x 4*Cout) stays resident.
    o_ref[...] = (jnp.dot(a_ref[...].astype(jnp.bfloat16), b_ref[...],
                          preferred_element_type=jnp.float32)
                  + bias_ref[...])


def gemm_bias(a, b_bf16, bias):
    """C[M, N] = A[M, K] @ B[K, N] + bias[1, N]  (A f32, B bf16, C f32)."""
    m, k = a.shape
    _, ncols = b_bf16.shape
    tm = _pick_tile(m)
    mp = _round_up(m, tm)
    if mp != m:
        a = jnp.pad(a, ((0, mp - m), (0, 0)))
    out = pl.pallas_call(
        _gemm_bias_kernel,
        out_shape=jax.ShapeDtypeStruct((mp, ncols), jnp.float32),
        grid_spec=pltpu.PrefetchScalarGridSpec(
            num_scalar_prefetch=0,
            grid=(mp // tm,),
            in_specs=[pl.BlockSpec((tm, k), lambda i: (i, 0)),
                      pl.BlockSpec((k, ncols), lambda i: (0, 0)),
                      pl.BlockSpec((1, ncols), lambda i: (0, 0))],
            out_specs=pl.BlockSpec((tm, ncols), lambda i: (i, 0)),
        ),
        compiler_params=pltpu.CompilerParams(
            dimension_semantics=("parallel",)),
    )(a, b_bf16, bias)
    return out[:m] if mp != m else out


def _make_conv3x3_kernel(n_inputs, apply_bn, h, w):
    """3x3/pad=1 conv over the (implicit) channel-concat of `n_inputs` NHWC
    inputs, one image per grid step, as 9*n_inputs shifted MXU dots.  Also
    emits the per-image per-channel sum and sum-of-squares of the raw output
    (for the following training-mode BatchNorm)."""

    def kernel(*refs):
        pos = 0
        x_refs = refs[pos:pos + n_inputs]; pos += n_inputs
        w_refs = refs[pos:pos + n_inputs]; pos += n_inputs
        if apply_bn:
            scale_ref, shift_ref = refs[pos], refs[pos + 1]
            pos += 2
        y_ref, stats_ref = refs[pos], refs[pos + 1]
        pads = refs[pos + 2:pos + 2 + n_inputs]

        cout = y_ref.shape[-1]

        # Stage each input into a zero-padded (halo=1) f32 VMEM scratch.  The
        # previous layer's BN+ReLU is applied here on the fly (fused), so the
        # previous conv's raw output never needs its own normalize pass.
        for i in range(n_inputs):
            pad = pads[i]
            pad[...] = jnp.zeros(pad.shape, pad.dtype)
            v = x_refs[i][...]
            if apply_bn and i == 0:
                v = jnp.maximum(v * scale_ref[...] + shift_ref[...], 0.0)
            pad[1:h + 1, 1:w + 1, :] = v

        # conv = sum over 9 taps (per input) of [H*W, Ci] x [Ci, Cout] dots,
        # gathered from VMEM; bf16 MXU inputs, f32 accumulator.
        acc = jnp.zeros((h * w, cout), jnp.float32)
        for i in range(n_inputs):
            pad = pads[i]
            ci = pad.shape[-1]
            for t in range(9):
                dh, dw = t // 3, t % 3
                tap = pad[dh:dh + h, dw:dw + w, :].reshape(h * w, ci)
                acc = acc + jnp.dot(tap.astype(jnp.bfloat16), w_refs[i][t],
                                    preferred_element_type=jnp.float32)

        y_ref[...] = acc.reshape(h, w, cout)
        # Per-image BN statistics (reduced over N in the wrapper — tiny).
        stats_ref[0:1, :] = jnp.sum(acc, axis=0, keepdims=True)
        stats_ref[1:2, :] = jnp.sum(acc * acc, axis=0, keepdims=True)

    return kernel


def conv3x3_fused(xs, ws, bn_scale=None, bn_shift=None):
    """3x3 conv, padding=1, over the implicit channel-concat of `xs` (NHWC).

    xs: list of [N, H, W, Ci] f32 inputs;   ws: list of [9, Ci, Cout] bf16.
    If bn_scale/bn_shift are given ([1, C0]), relu(x*scale+shift) is applied to
    xs[0] while staging it into VMEM (fused BN+ReLU of the previous layer).
    Returns (y [N, H, W, Cout] f32, stats [N, 2, Cout] f32: sum / sum-of-sq).
    """
    n_inputs = len(xs)
    apply_bn = bn_scale is not None
    n, h, w, _ = xs[0].shape
    cout = ws[0].shape[-1]

    kernel = _make_conv3x3_kernel(n_inputs, apply_bn, h, w)

    in_specs = []
    operands = []
    for x in xs:
        ci = x.shape[-1]
        in_specs.append(pl.BlockSpec((None, h, w, ci), lambda i: (i, 0, 0, 0)))
        operands.append(x)
    for wt in ws:
        in_specs.append(pl.BlockSpec(wt.shape, lambda i: (0, 0, 0)))
        operands.append(wt)
    if apply_bn:
        c0 = xs[0].shape[-1]
        in_specs += [pl.BlockSpec((1, c0), lambda i: (0, 0)),
                     pl.BlockSpec((1, c0), lambda i: (0, 0))]
        operands += [bn_scale, bn_shift]

    out_shape = (jax.ShapeDtypeStruct((n, h, w, cout), jnp.float32),
                 jax.ShapeDtypeStruct((n, 2, cout), jnp.float32))
    out_specs = [pl.BlockSpec((None, h, w, cout), lambda i: (i, 0, 0, 0)),
                 pl.BlockSpec((None, 2, cout), lambda i: (i, 0, 0))]
    scratch = [pltpu.VMEM((h + 2, w + 2, x.shape[-1]), jnp.float32) for x in xs]

    return pl.pallas_call(
        kernel,
        out_shape=out_shape,
        grid_spec=pltpu.PrefetchScalarGridSpec(
            num_scalar_prefetch=0,
            grid=(n,),
            in_specs=in_specs,
            out_specs=out_specs,
            scratch_shapes=scratch),
        compiler_params=pltpu.CompilerParams(
            dimension_semantics=("parallel",)),
    )(*operands)


def _bn_relu_kernel(x_ref, scale_ref, shift_ref, o_ref):
    o_ref[...] = jnp.maximum(x_ref[...] * scale_ref[...] + shift_ref[...], 0.0)


def bn_relu(x_flat, scale, shift):
    """ReLU(x*scale + shift),  x: [M, C],  scale/shift: [1, C]."""
    m, c = x_flat.shape
    tm = _pick_tile(m, 1024)
    mp = _round_up(m, tm)
    if mp != m:
        x_flat = jnp.pad(x_flat, ((0, mp - m), (0, 0)))
    out = pl.pallas_call(
        _bn_relu_kernel,
        out_shape=jax.ShapeDtypeStruct((mp, c), jnp.float32),
        grid_spec=pltpu.PrefetchScalarGridSpec(
            num_scalar_prefetch=0,
            grid=(mp // tm,),
            in_specs=[pl.BlockSpec((tm, c), lambda i: (i, 0)),
                      pl.BlockSpec((1, c), lambda i: (0, 0)),
                      pl.BlockSpec((1, c), lambda i: (0, 0))],
            out_specs=pl.BlockSpec((tm, c), lambda i: (i, 0)),
        ),
        compiler_params=pltpu.CompilerParams(
            dimension_semantics=("parallel",)),
    )(x_flat, scale, shift)
    return out[:m] if mp != m else out


# ------------------- JAX glue (param prep, BN affine, forward) -------------------

def _bn_affine(stats, gamma, beta, count, eps=1e-5):
    """Training-mode BatchNorm scale/shift from per-image sum / sum-of-squares."""
    s = jnp.sum(stats[:, 0, :], axis=0)
    ss = jnp.sum(stats[:, 1, :], axis=0)
    mean = s / count
    var = jnp.maximum(ss / count - mean * mean, 0.0)      # biased (PyTorch norm)
    scale = gamma / jnp.sqrt(var + eps)
    shift = beta - mean * scale
    c = gamma.shape[0]
    return scale.reshape(1, c), shift.reshape(1, c)


def prepare_params(p):
    """One-time conversion of PyTorch-layout params to kernel-friendly layouts."""
    in_ch, out_ch = p["w_up"].shape[0], p["w_up"].shape[1]
    c = p["conv"]

    def conv_w(wt):  # [Cout, Ci, 3, 3] -> [9, Ci, Cout]  (t = kh*3 + kw), bf16
        return (wt.transpose(2, 3, 1, 0)
                  .reshape(9, wt.shape[1], wt.shape[0])
                  .astype(jnp.bfloat16))

    return {
        # upconv GEMM: columns ordered (co, dh, dw)
        "w_up_mat": p["w_up"].reshape(in_ch, out_ch * 4).astype(jnp.bfloat16),
        "b_up_mat": jnp.repeat(p["b_up"], 4).reshape(1, out_ch * 4),
        # conv1 split into the up- and skip-channel halves (concat never built)
        "w1a": conv_w(c["w1"][:, :out_ch]),
        "w1b": conv_w(c["w1"][:, out_ch:]),
        "w2": conv_w(c["w2"]),
        # NOTE: conv biases b1/b2 are intentionally dropped — they cancel
        # exactly under training-mode BatchNorm (mean subtraction).
        "g1": c["g1"], "be1": c["be1"], "g2": c["g2"], "be2": c["be2"],
    }


def decoder_forward(kp, x_nchw, skip_nchw):
    n, cin, h, w = x_nchw.shape
    co = kp["g1"].shape[0]
    ho, wo = 2 * h, 2 * w

    # NCHW -> NHWC once, at the external boundary.
    x = jnp.transpose(x_nchw, (0, 2, 3, 1))
    skip = jnp.transpose(skip_nchw, (0, 2, 3, 1))

    # ConvTranspose2d(k=2, s=2): one GEMM + pixel shuffle (pure layout).
    y = gemm_bias(x.reshape(n * h * w, cin), kp["w_up_mat"], kp["b_up_mat"])
    up = (y.reshape(n, h, w, co, 2, 2)
            .transpose(0, 1, 4, 2, 5, 3)
            .reshape(n, ho, wo, co))

    # conv1 over the (never materialized) concat(up, skip); emits BN1 stats.
    y1, st1 = conv3x3_fused([up, skip], [kp["w1a"], kp["w1b"]])
    scale1, shift1 = _bn_affine(st1, kp["g1"], kp["be1"], n * ho * wo)

    # conv2 with BN1+ReLU fused into its input staging; emits BN2 stats.
    y2, st2 = conv3x3_fused([y1], [kp["w2"]], bn_scale=scale1, bn_shift=shift1)
    scale2, shift2 = _bn_affine(st2, kp["g2"], kp["be2"], n * ho * wo)

    # final BN2 + ReLU, then back to NCHW at the external boundary.
    out = bn_relu(y2.reshape(n * ho * wo, co), scale2, shift2)
    return jnp.transpose(out.reshape(n, ho, wo, co), (0, 3, 1, 2))


def init_params(key, in_ch, out_ch):
    ks = jax.random.split(key, 10)
    c_cat = out_ch * 2
    return {
        "w_up": 0.1 * jax.random.normal(ks[0], (in_ch, out_ch, 2, 2), jnp.float32),
        "b_up": 0.05 * jax.random.normal(ks[1], (out_ch,), jnp.float32),
        "conv": {
            "w1": 0.1 * jax.random.normal(ks[2], (out_ch, c_cat, 3, 3), jnp.float32),
            "b1": 0.05 * jax.random.normal(ks[3], (out_ch,), jnp.float32),
            "g1": 1.0 + 0.1 * jax.random.normal(ks[4], (out_ch,), jnp.float32),
            "be1": 0.05 * jax.random.normal(ks[5], (out_ch,), jnp.float32),
            "w2": 0.1 * jax.random.normal(ks[6], (out_ch, out_ch, 3, 3), jnp.float32),
            "b2": 0.05 * jax.random.normal(ks[7], (out_ch,), jnp.float32),
            "g2": 1.0 + 0.1 * jax.random.normal(ks[8], (out_ch,), jnp.float32),
            "be2": 0.05 * jax.random.normal(ks[9], (out_ch,), jnp.float32),
        },
    }


# ------------------- pure-JAX reference (PyTorch-faithful, f32) -------------------

def _ref_conv3x3(x, w, b):
    y = jax.lax.conv_general_dilated(
        x, w, (1, 1), ((1, 1), (1, 1)),
        dimension_numbers=("NCHW", "OIHW", "NCHW"),
        precision=jax.lax.Precision.HIGHEST)
    return y + b[None, :, None, None]


def _ref_bn_relu(x, g, be, eps=1e-5):
    mean = x.mean(axis=(0, 2, 3), keepdims=True)
    var = ((x - mean) ** 2).mean(axis=(0, 2, 3), keepdims=True)
    y = (x - mean) / jnp.sqrt(var + eps) * g[None, :, None, None] + be[None, :, None, None]
    return jnp.maximum(y, 0.0)


def decoder_reference(params, x, skip):
    y = jnp.einsum("nchw,cokl->nohkwl", x, params["w_up"],
                   precision=jax.lax.Precision.HIGHEST)   # [N, Co, H, 2, W, 2]
    n, co, h, _, w, _ = y.shape
    up = y.reshape(n, co, 2 * h, 2 * w) + params["b_up"][None, :, None, None]
    cat = jnp.concatenate([up, skip], axis=1)
    p = params["conv"]
    z = _ref_bn_relu(_ref_conv3x3(cat, p["w1"], p["b1"]), p["g1"], p["be1"])
    z = _ref_bn_relu(_ref_conv3x3(z, p["w2"], p["b2"]), p["g2"], p["be2"])
    return z


# ----------------------------- main -----------------------------

if __name__ == "__main__":
    key = jax.random.PRNGKey(0)
    kx, ksk = jax.random.split(key)

    in_ch, out_ch = 8, 4
    n, h, w = 2, 8, 8                                   # upsampled spatial = 16x16
    x = jax.random.normal(kx, (n, in_ch, h, w), jnp.float32)
    skip = jax.random.normal(ksk, (n, out_ch, 2 * h, 2 * w), jnp.float32)

    params = init_params(jax.random.PRNGKey(42), in_ch, out_ch)
    kparams = prepare_params(params)

    out = jax.jit(decoder_forward)(kparams, x, skip)
    out = jax.block_until_ready(out)
    assert out.shape == (n, out_ch, 2 * h, 2 * w), out.shape

    ref = decoder_reference(params, x, skip)
    err = float(jnp.max(jnp.abs(out - ref)))
    # bf16 MXU inputs (f32 accumulate) give ~1e-2..3e-2 max deviation from the
    # f32 HIGHEST-precision reference; a genuine bug would be O(1).
    assert err < 8e-2, f"max abs err too large: {err}"

    print("KERNEL_OK")
</pallas_src>

<mosaic_0001>
module attributes {stable_mosaic.version = 11 : i64} {
  func.func @_gemm_bias_kernel(%arg0: i32, %arg1: memref<64x8xf32, #tpu.memory_space<vmem>>, %arg2: memref<8x16xbf16, #tpu.memory_space<vmem>>, %arg3: memref<1x16xf32, #tpu.memory_space<vmem>>, %arg4: memref<64x16xf32, #tpu.memory_space<vmem>>) attributes {dimension_semantics = [#tpu.dimension_semantics<parallel>], iteration_bounds = array<i64: 2>, scalar_prefetch = 0 : i64, scratch_operands = 0 : i64, tpu.core_type = #tpu.core_type<tc>, window_params = [{transform_indices = @transform_0, window_bounds = array<i64: 64, 8>}, {pipeline_mode = #tpu.pipeline_mode<synchronous>, transform_indices = @transform_1, window_bounds = array<i64: 8, 16>}, {pipeline_mode = #tpu.pipeline_mode<synchronous>, transform_indices = @transform_2, window_bounds = array<i64: 1, 16>}, {transform_indices = @transform_3, window_bounds = array<i64: 64, 16>}]} {
    %c0 = arith.constant 0 : index
    %c0_0 = arith.constant 0 : index
    %0 = vector.load %arg1[%c0, %c0_0] : memref<64x8xf32, #tpu.memory_space<vmem>>, vector<64x8xf32>
    %1 = arith.truncf %0 : vector<64x8xf32> to vector<64x8xbf16>
    %c0_1 = arith.constant 0 : index
    %c0_2 = arith.constant 0 : index
    %2 = vector.load %arg2[%c0_1, %c0_2] : memref<8x16xbf16, #tpu.memory_space<vmem>>, vector<8x16xbf16>
    %cst = arith.constant dense<0.000000e+00> : vector<64x16xf32>
    %3 = tpu.matmul %1, %2, %cst {dimension_numbers = #tpu.dot_dimension_numbers<[1], [0], [0], [1], [0, 0, 1, 1], [], []>} : vector<64x8xbf16>, vector<8x16xbf16>, vector<64x16xf32> -> vector<64x16xf32>
    %c0_3 = arith.constant 0 : index
    %c0_4 = arith.constant 0 : index
    %4 = vector.load %arg3[%c0_3, %c0_4] : memref<1x16xf32, #tpu.memory_space<vmem>>, vector<1x16xf32>
    %5 = vector.broadcast %4 : vector<1x16xf32> to vector<64x16xf32>
    %6 = arith.addf %3, %5 : vector<64x16xf32>
    %c0_5 = arith.constant 0 : index
    %c0_6 = arith.constant 0 : index
    %7 = vector.load %arg4[%c0_5, %c0_6] : memref<64x16xf32, #tpu.memory_space<vmem>>, vector<64x16xf32>
    tpu.vector_store %arg4[%c0_5, %c0_6], %6 {strides = array<i32>} : memref<64x16xf32, #tpu.memory_space<vmem>>, vector<64x16xf32>,
    return
  }
  func.func @transform_0(%arg0: i32) -> (i32, i32) {
    %c0_i32 = arith.constant 0 : i32
    %c0_i32_0 = arith.constant 0 : i32
    return %arg0, %c0_i32 : i32, i32
  }
  func.func @transform_1(%arg0: i32) -> (i32, i32) {
    %c0_i32 = arith.constant 0 : i32
    %c0_i32_0 = arith.constant 0 : i32
    %c0_i32_1 = arith.constant 0 : i32
    return %c0_i32, %c0_i32_0 : i32, i32
  }
  func.func @transform_2(%arg0: i32) -> (i32, i32) {
    %c0_i32 = arith.constant 0 : i32
    %c0_i32_0 = arith.constant 0 : i32
    %c0_i32_1 = arith.constant 0 : i32
    return %c0_i32, %c0_i32_0 : i32, i32
  }
  func.func @transform_3(%arg0: i32) -> (i32, i32) {
    %c0_i32 = arith.constant 0 : i32
    %c0_i32_0 = arith.constant 0 : i32
    return %arg0, %c0_i32 : i32, i32
  }
}

module attributes {stable_mosaic.version = 11 : i64} {
  func.func @kernel(%arg0: i32, %arg1: memref<1x16x16x4xf32, #tpu.memory_space<vmem>>, %arg2: memref<1x16x16x4xf32, #tpu.memory_space<vmem>>, %arg3: memref<9x4x4xbf16, #tpu.memory_space<vmem>>, %arg4: memref<9x4x4xbf16, #tpu.memory_space<vmem>>, %arg5: memref<1x16x16x4xf32, #tpu.memory_space<vmem>>, %arg6: memref<1x2x4xf32, #tpu.memory_space<vmem>>, %arg7: memref<18x18x4xf32, #tpu.memory_space<vmem>>, %arg8: memref<18x18x4xf32, #tpu.memory_space<vmem>>) attributes {dimension_semantics = [#tpu.dimension_semantics<parallel>], iteration_bounds = array<i64: 2>, scalar_prefetch = 0 : i64, scratch_operands = 2 : i64, tpu.core_type = #tpu.core_type<tc>, window_params = [{transform_indices = @transform_0, window_bounds = array<i64: 1, 16, 16, 4>}, {transform_indices = @transform_1, window_bounds = array<i64: 1, 16, 16, 4>}, {pipeline_mode = #tpu.pipeline_mode<synchronous>, transform_indices = @transform_2, window_bounds = array<i64: 9, 4, 4>}, {pipeline_mode = #tpu.pipeline_mode<synchronous>, transform_indices = @transform_3, window_bounds = array<i64: 9, 4, 4>}, {transform_indices = @transform_4, window_bounds = array<i64: 1, 16, 16, 4>}, {transform_indices = @transform_5, window_bounds = array<i64: 1, 2, 4>}]} {
    %cst = arith.constant 0.000000e+00 : f32
    %0 = vector.broadcast %cst : f32 to vector<18x18x4xf32>
    %c0 = arith.constant 0 : index
    %c0_0 = arith.constant 0 : index
    %c0_1 = arith.constant 0 : index
    %1 = vector.load %arg7[%c0, %c0_0, %c0_1] : memref<18x18x4xf32, #tpu.memory_space<vmem>>, vector<18x18x4xf32>
    tpu.vector_store %arg7[%c0, %c0_0, %c0_1], %0 {strides = array<i32>} : memref<18x18x4xf32, #tpu.memory_space<vmem>>, vector<18x18x4xf32>,
    %c0_2 = arith.constant 0 : index
    %c0_3 = arith.constant 0 : index
    %c0_4 = arith.constant 0 : index
    %c0_5 = arith.constant 0 : index
    %2 = vector.load %arg1[%c0_2, %c0_3, %c0_4, %c0_5] : memref<1x16x16x4xf32, #tpu.memory_space<vmem>>, vector<1x16x16x4xf32>
    %3 = vector.shape_cast %2 : vector<1x16x16x4xf32> to vector<16x16x4xf32>
    %c1 = arith.constant 1 : index
    %c1_6 = arith.constant 1 : index
    %c0_7 = arith.constant 0 : index
    %4 = vector.load %arg7[%c1, %c1_6, %c0_7] : memref<18x18x4xf32, #tpu.memory_space<vmem>>, vector<16x16x4xf32>
    tpu.vector_store %arg7[%c1, %c1_6, %c0_7], %3 {strides = array<i32>} : memref<18x18x4xf32, #tpu.memory_space<vmem>>, vector<16x16x4xf32>,
    %cst_8 = arith.constant 0.000000e+00 : f32
    %5 = vector.broadcast %cst_8 : f32 to vector<18x18x4xf32>
    %c0_9 = arith.constant 0 : index
    %c0_10 = arith.constant 0 : index
    %c0_11 = arith.constant 0 : index
    %6 = vector.load %arg8[%c0_9, %c0_10, %c0_11] : memref<18x18x4xf32, #tpu.memory_space<vmem>>, vector<18x18x4xf32>
    tpu.vector_store %arg8[%c0_9, %c0_10, %c0_11], %5 {strides = array<i32>} : memref<18x18x4xf32, #tpu.memory_space<vmem>>, vector<18x18x4xf32>,
    %c0_12 = arith.constant 0 : index
    %c0_13 = arith.constant 0 : index
    %c0_14 = arith.constant 0 : index
    %c0_15 = arith.constant 0 : index
    %7 = vector.load %arg2[%c0_12, %c0_13, %c0_14, %c0_15] : memref<1x16x16x4xf32, #tpu.memory_space<vmem>>, vector<1x16x16x4xf32>
    %8 = vector.shape_cast %7 : vector<1x16x16x4xf32> to vector<16x16x4xf32>
    %c1_16 = arith.constant 1 : index
    %c1_17 = arith.constant 1 : index
    %c0_18 = arith.constant 0 : index
    %9 = vector.load %arg8[%c1_16, %c1_17, %c0_18] : memref<18x18x4xf32, #tpu.memory_space<vmem>>, vector<16x16x4xf32>
    tpu.vector_store %arg8[%c1_16, %c1_17, %c0_18], %8 {strides = array<i32>} : memref<18x18x4xf32, #tpu.memory_space<vmem>>, vector<16x16x4xf32>,
    %cst_19 = arith.constant 0.000000e+00 : f32
    %10 = vector.broadcast %cst_19 : f32 to vector<256x4xf32>
    %c0_20 = arith.constant 0 : index
    %c0_21 = arith.constant 0 : index
    %c0_22 = arith.constant 0 : index
    %11 = vector.load %arg7[%c0_20, %c0_21, %c0_22] : memref<18x18x4xf32, #tpu.memory_space<vmem>>, vector<16x16x4xf32>
    %12 = vector.shape_cast %11 : vector<16x16x4xf32> to vector<256x4xf32>
    %13 = arith.truncf %12 : vector<256x4xf32> to vector<256x4xbf16>
    %c0_23 = arith.constant 0 : index
    %c0_24 = arith.constant 0 : index
    %c0_25 = arith.constant 0 : index
    %14 = vector.load %arg3[%c0_23, %c0_24, %c0_25] : memref<9x4x4xbf16, #tpu.memory_space<vmem>>, vector<1x4x4xbf16>
    %15 = vector.shape_cast %14 : vector<1x4x4xbf16> to vector<4x4xbf16>
    %cst_26 = arith.constant dense<0.000000e+00> : vector<256x4xf32>
    %16 = tpu.matmul %13, %15, %cst_26 {dimension_numbers = #tpu.dot_dimension_numbers<[1], [0], [0], [1], [0, 0, 1, 1], [], []>} : vector<256x4xbf16>, vector<4x4xbf16>, vector<256x4xf32> -> vector<256x4xf32>
    %17 = arith.addf %10, %16 : vector<256x4xf32>
    %c0_27 = arith.constant 0 : index
    %c1_28 = arith.constant 1 : index
    %c0_29 = arith.constant 0 : index
    %18 = vector.load %arg7[%c0_27, %c1_28, %c0_29] : memref<18x18x4xf32, #tpu.memory_space<vmem>>, vector<16x16x4xf32>
    %19 = vector.shape_cast %18 : vector<16x16x4xf32> to vector<256x4xf32>
    %20 = arith.truncf %19 : vector<256x4xf32> to vector<256x4xbf16>
    %c1_30 = arith.constant 1 : index
    %c0_31 = arith.constant 0 : index
    %c0_32 = arith.constant 0 : index
    %21 = vector.load %arg3[%c1_30, %c0_31, %c0_32] : memref<9x4x4xbf16, #tpu.memory_space<vmem>>, vector<1x4x4xbf16>
    %22 = vector.shape_cast %21 : vector<1x4x4xbf16> to vector<4x4xbf16>
    %cst_33 = arith.constant dense<0.000000e+00> : vector<256x4xf32>
    %23 = tpu.matmul %20, %22, %cst_33 {dimension_numbers = #tpu.dot_dimension_numbers<[1], [0], [0], [1], [0, 0, 1, 1], [], []>} : vector<256x4xbf16>, vector<4x4xbf16>, vector<256x4xf32> -> vector<256x4xf32>
    %24 = arith.addf %17, %23 : vector<256x4xf32>
    %c0_34 = arith.constant 0 : index
    %c2 = arith.constant 2 : index
    %c0_35 = arith.constant 0 : index
    %25 = vector.load %arg7[%c0_34, %c2, %c0_35] : memref<18x18x4xf32, #tpu.memory_space<vmem>>, vector<16x16x4xf32>
    %26 = vector.shape_cast %25 : vector<16x16x4xf32> to vector<256x4xf32>
    %27 = arith.truncf %26 : vector<256x4xf32> to vector<256x4xbf16>
    %c2_36 = arith.constant 2 : index
    %c0_37 = arith.constant 0 : index
    %c0_38 = arith.constant 0 : index
    %28 = vector.load %arg3[%c2_36, %c0_37, %c0_38] : memref<9x4x4xbf16, #tpu.memory_space<vmem>>, vector<1x4x4xbf16>
    %29 = vector.shape_cast %28 : vector<1x4x4xbf16> to vector<4x4xbf16>
    %cst_39 = arith.constant dense<0.000000e+00> : vector<256x4xf32>
    %30 = tpu.matmul %27, %29, %cst_39 {dimension_numbers = #tpu.dot_dimension_numbers<[1], [0], [0], [1], [0, 0, 1, 1], [], []>} : vector<256x4xbf16>, vector<4x4xbf16>, vector<256x4xf32> -> vector<256x4xf32>
    %31 = arith.addf %24, %30 : vector<256x4xf32>
    %c1_40 = arith.constant 1 : index
    %c0_41 = arith.constant 0 : index
    %c0_42 = arith.constant 0 : index
    %32 = vector.load %arg7[%c1_40, %c0_41, %c0_42] : memref<18x18x4xf32, #tpu.memory_space<vmem>>, vector<16x16x4xf32>
    %33 = vector.shape_cast %32 : vector<16x16x4xf32> to vector<256x4xf32>
    %34 = arith.truncf %33 : vector<256x4xf32> to vector<256x4xbf16>
    %c3 = arith.constant 3 : index
    %c0_43 = arith.constant 0 : index
    %c0_44 = arith.constant 0 : index
    %35 = vector.load %arg3[%c3, %c0_43, %c0_44] : memref<9x4x4xbf16, #tpu.memory_space<vmem>>, vector<1x4x4xbf16>
    %36 = vector.shape_cast %35 : vector<1x4x4xbf16> to vector<4x4xbf16>
    %cst_45 = arith.constant dense<0.000000e+00> : vector<256x4xf32>
    %37 = tpu.matmul %34, %36, %cst_45 {dimension_numbers = #tpu.dot_dimension_numbers<[1], [0], [0], [1], [0, 0, 1, 1], [], []>} : vector<256x4xbf16>, vector<4x4xbf16>, vector<256x4xf32> -> vector<256x4xf32>
    %38 = arith.addf %31, %37 : vector<256x4xf32>
    %c1_46 = arith.constant 1 : index
    %c1_47 = arith.constant 1 : index
    %c0_48 = arith.constant 0 : index
    %39 = vector.load %arg7[%c1_46, %c1_47, %c0_48] : memref<18x18x4xf32, #tpu.memory_space<vmem>>, vector<16x16x4xf32>
    %40 = vector.shape_cast %39 : vector<16x16x4xf32> to vector<256x4xf32>
    %41 = arith.truncf %40 : vector<256x4xf32> to vector<256x4xbf16>
    %c4 = arith.constant 4 : index
    %c0_49 = arith.constant 0 : index
    %c0_50 = arith.constant 0 : index
    %42 = vector.load %arg3[%c4, %c0_49, %c0_50] : memref<9x4x4xbf16, #tpu.memory_space<vmem>>, vector<1x4x4xbf16>
    %43 = vector.shape_cast %42 : vector<1x4x4xbf16> to vector<4x4xbf16>
    %cst_51 = arith.constant dense<0.000000e+00> : vector<256x4xf32>
    %44 = tpu.matmul %41, %43, %cst_51 {dimension_numbers = #tpu.dot_dimension_numbers<[1], [0], [0], [1], [0, 0, 1, 1], [], []>} : vector<256x4xbf16>, vector<4x4xbf16>, vector<256x4xf32> -> vector<256x4xf32>
    %45 = arith.addf %38, %44 : vector<256x4xf32>
    %c1_52 = arith.constant 1 : index
    %c2_53 = arith.constant 2 : index
    %c0_54 = arith.constant 0 : index
    %46 = vector.load %arg7[%c1_52, %c2_53, %c0_54] : memref<18x18x4xf32, #tpu.memory_space<vmem>>, vector<16x16x4xf32>
    %47 = vector.shape_cast %46 : vector<16x16x4xf32> to vector<256x4xf32>
    %48 = arith.truncf %47 : vector<256x4xf32> to vector<256x4xbf16>
    %c5 = arith.constant 5 : index
    %c0_55 = arith.constant 0 : index
    %c0_56 = arith.constant 0 : index
    %49 = vector.load %arg3[%c5, %c0_55, %c0_56] : memref<9x4x4xbf16, #tpu.memory_space<vmem>>, vector<1x4x4xbf16>
    %50 = vector.shape_cast %49 : vector<1x4x4xbf16> to vector<4x4xbf16>
    %cst_57 = arith.constant dense<0.000000e+00> : vector<256x4xf32>
    %51 = tpu.matmul %48, %50, %cst_57 {dimension_numbers = #tpu.dot_dimension_numbers<[1], [0], [0], [1], [0, 0, 1, 1], [], []>} : vector<256x4xbf16>, vector<4x4xbf16>, vector<256x4xf32> -> vector<256x4xf32>
    %52 = arith.addf %45, %51 : vector<256x4xf32>
    %c2_58 = arith.constant 2 : index
    %c0_59 = arith.constant 0 : index
    %c0_60 = arith.constant 0 : index
    %53 = vector.load %arg7[%c2_58, %c0_59, %c0_60] : memref<18x18x4xf32, #tpu.memory_space<vmem>>, vector<16x16x4xf32>
    %54 = vector.shape_cast %53 : vector<16x16x4xf32> to vector<256x4xf32>
    %55 = arith.truncf %54 : vector<256x4xf32> to vector<256x4xbf16>
    %c6 = arith.constant 6 : index
    %c0_61 = arith.constant 0 : index
    %c0_62 = arith.constant 0 : index
    %56 = vector.load %arg3[%c6, %c0_61, %c0_62] : memref<9x4x4xbf16, #tpu.memory_space<vmem>>, vector<1x4x4xbf16>
    %57 = vector.shape_cast %56 : vector<1x4x4xbf16> to vector<4x4xbf16>
    %cst_63 = arith.constant dense<0.000000e+00> : vector<256x4xf32>
    %58 = tpu.matmul %55, %57, %cst_63 {dimension_numbers = #tpu.dot_dimension_numbers<[1], [0], [0], [1], [0, 0, 1, 1], [], []>} : vector<256x4xbf16>, vector<4x4xbf16>, vector<256x4xf32> -> vector<256x4xf32>
    %59 = arith.addf %52, %58 : vector<256x4xf32>
    %c2_64 = arith.constant 2 : index
    %c1_65 = arith.constant 1 : index
    %c0_66 = arith.constant 0 : index
    %60 = vector.load %arg7[%c2_64, %c1_65, %c0_66] : memref<18x18x4xf32, #tpu.memory_space<vmem>>, vector<16x16x4xf32>
    %61 = vector.shape_cast %60 : vector<16x16x4xf32> to vector<256x4xf32>
    %62 = arith.truncf %61 : vector<256x4xf32> to vector<256x4xbf16>
    %c7 = arith.constant 7 : index
    %c0_67 = arith.constant 0 : index
    %c0_68 = arith.constant 0 : index
    %63 = vector.load %arg3[%c7, %c0_67, %c0_68] : memref<9x4x4xbf16, #tpu.memory_space<vmem>>, vector<1x4x4xbf16>
    %64 = vector.shape_cast %63 : vector<1x4x4xbf16> to vector<4x4xbf16>
    %cst_69 = arith.constant dense<0.000000e+00> : vector<256x4xf32>
    %65 = tpu.matmul %62, %64, %cst_69 {dimension_numbers = #tpu.dot_dimension_numbers<[1], [0], [0], [1], [0, 0, 1, 1], [], []>} : vector<256x4xbf16>, vector<4x4xbf16>, vector<256x4xf32> -> vector<256x4xf32>
    %66 = arith.addf %59, %65 : vector<256x4xf32>
    %c2_70 = arith.constant 2 : index
    %c2_71 = arith.constant 2 : index
    %c0_72 = arith.constant 0 : index
    %67 = vector.load %arg7[%c2_70, %c2_71, %c0_72] : memref<18x18x4xf32, #tpu.memory_space<vmem>>, vector<16x16x4xf32>
    %68 = vector.shape_cast %67 : vector<16x16x4xf32> to vector<256x4xf32>
    %69 = arith.truncf %68 : vector<256x4xf32> to vector<256x4xbf16>
    %c8 = arith.constant 8 : index
    %c0_73 = arith.constant 0 : index
    %c0_74 = arith.constant 0 : index
    %70 = vector.load %arg3[%c8, %c0_73, %c0_74] : memref<9x4x4xbf16, #tpu.memory_space<vmem>>, vector<1x4x4xbf16>
    %71 = vector.shape_cast %70 : vector<1x4x4xbf16> to vector<4x4xbf16>
    %cst_75 = arith.constant dense<0.000000e+00> : vector<256x4xf32>
    %72 = tpu.matmul %69, %71, %cst_75 {dimension_numbers = #tpu.dot_dimension_numbers<[1], [0], [0], [1], [0, 0, 1, 1], [], []>} : vector<256x4xbf16>, vector<4x4xbf16>, vector<256x4xf32> -> vector<256x4xf32>
    %73 = arith.addf %66, %72 : vector<256x4xf32>
    %c0_76 = arith.constant 0 : index
    %c0_77 = arith.constant 0 : index
    %c0_78 = arith.constant 0 : index
    %74 = vector.load %arg8[%c0_76, %c0_77, %c0_78] : memref<18x18x4xf32, #tpu.memory_space<vmem>>, vector<16x16x4xf32>
    %75 = vector.shape_cast %74 : vector<16x16x4xf32> to vector<256x4xf32>
    %76 = arith.truncf %75 : vector<256x4xf32> to vector<256x4xbf16>
    %c0_79 = arith.constant 0 : index
    %c0_80 = arith.constant 0 : index
    %c0_81 = arith.constant 0 : index
    %77 = vector.load %arg4[%c0_79, %c0_80, %c0_81] : memref<9x4x4xbf16, #tpu.memory_space<vmem>>, vector<1x4x4xbf16>
    %78 = vector.shape_cast %77 : vector<1x4x4xbf16> to vector<4x4xbf16>
    %cst_82 = arith.constant dense<0.000000e+00> : vector<256x4xf32>
    %79 = tpu.matmul %76, %78, %cst_82 {dimension_numbers = #tpu.dot_dimension_numbers<[1], [0], [0], [1], [0, 0, 1, 1], [], []>} : vector<256x4xbf16>, vector<4x4xbf16>, vector<256x4xf32> -> vector<256x4xf32>
    %80 = arith.addf %73, %79 : vector<256x4xf32>
    %c0_83 = arith.constant 0 : index
    %c1_84 = arith.constant 1 : index
    %c0_85 = arith.constant 0 : index
    %81 = vector.load %arg8[%c0_83, %c1_84, %c0_85] : memref<18x18x4xf32, #tpu.memory_space<vmem>>, vector<16x16x4xf32>
    %82 = vector.shape_cast %81 : vector<16x16x4xf32> to vector<256x4xf32>
    %83 = arith.truncf %82 : vector<256x4xf32> to vector<256x4xbf16>
    %c1_86 = arith.constant 1 : index
    %c0_87 = arith.constant 0 : index
    %c0_88 = arith.constant 0 : index
    %84 = vector.load %arg4[%c1_86, %c0_87, %c0_88] : memref<9x4x4xbf16, #tpu.memory_space<vmem>>, vector<1x4x4xbf16>
    %85 = vector.shape_cast %84 : vector<1x4x4xbf16> to vector<4x4xbf16>
    %cst_89 = arith.constant dense<0.000000e+00> : vector<256x4xf32>
    %86 = tpu.matmul %83, %85, %cst_89 {dimension_numbers = #tpu.dot_dimension_numbers<[1], [0], [0], [1], [0, 0, 1, 1], [], []>} : vector<256x4xbf16>, vector<4x4xbf16>, vector<256x4xf32> -> vector<256x4xf32>
    %87 = arith.addf %80, %86 : vector<256x4xf32>
    %c0_90 = arith.constant 0 : index
    %c2_91 = arith.constant 2 : index
    %c0_92 = arith.constant 0 : index
    %88 = vector.load %arg8[%c0_90, %c2_91, %c0_92] : memref<18x18x4xf32, #tpu.memory_space<vmem>>, vector<16x16x4xf32>
    %89 = vector.shape_cast %88 : vector<16x16x4xf32> to vector<256x4xf32>
    %90 = arith.truncf %89 : vector<256x4xf32> to vector<256x4xbf16>
    %c2_93 = arith.constant 2 : index
    %c0_94 = arith.constant 0 : index
    %c0_95 = arith.constant 0 : index
    %91 = vector.load %arg4[%c2_93, %c0_94, %c0_95] : memref<9x4x4xbf16, #tpu.memory_space<vmem>>, vector<1x4x4xbf16>
    %92 = vector.shape_cast %91 : vector<1x4x4xbf16> to vector<4x4xbf16>
    %cst_96 = arith.constant dense<0.000000e+00> : vector<256x4xf32>
    %93 = tpu.matmul %90, %92, %cst_96 {dimension_numbers = #tpu.dot_dimension_numbers<[1], [0], [0], [1], [0, 0, 1, 1], [], []>} : vector<256x4xbf16>, vector<4x4xbf16>, vector<256x4xf32> -> vector<256x4xf32>
    %94 = arith.addf %87, %93 : vector<256x4xf32>
    %c1_97 = arith.constant 1 : index
    %c0_98 = arith.constant 0 : index
    %c0_99 = arith.constant 0 : index
    %95 = vector.load %arg8[%c1_97, %c0_98, %c0_99] : memref<18x18x4xf32, #tpu.memory_space<vmem>>, vector<16x16x4xf32>
    %96 = vector.shape_cast %95 : vector<16x16x4xf32> to vector<256x4xf32>
    %97 = arith.truncf %96 : vector<256x4xf32> to vector<256x4xbf16>
    %c3_100 = arith.constant 3 : index
    %c0_101 = arith.constant 0 : index
    %c0_102 = arith.constant 0 : index
    %98 = vector.load %arg4[%c3_100, %c0_101, %c0_102] : memref<9x4x4xbf16, #tpu.memory_space<vmem>>, vector<1x4x4xbf16>
    %99 = vector.shape_cast %98 : vector<1x4x4xbf16> to vector<4x4xbf16>
    %cst_103 = arith.constant dense<0.000000e+00> : vector<256x4xf32>
    %100 = tpu.matmul %97, %99, %cst_103 {dimension_numbers = #tpu.dot_dimension_numbers<[1], [0], [0], [1], [0, 0, 1, 1], [], []>} : vector<256x4xbf16>, vector<4x4xbf16>, vector<256x4xf32> -> vector<256x4xf32>
    %101 = arith.addf %94, %100 : vector<256x4xf32>
    %c1_104 = arith.constant 1 : index
    %c1_105 = arith.constant 1 : index
    %c0_106 = arith.constant 0 : index
    %102 = vector.load %arg8[%c1_104, %c1_105, %c0_106] : memref<18x18x4xf32, #tpu.memory_space<vmem>>, vector<16x16x4xf32>
    %103 = vector.shape_cast %102 : vector<16x16x4xf32> to vector<256x4xf32>
    %104 = arith.truncf %103 : vector<256x4xf32> to vector<256x4xbf16>
    %c4_107 = arith.constant 4 : index
    %c0_108 = arith.constant 0 : index
    %c0_109 = arith.constant 0 : index
    %105 = vector.load %arg4[%c4_107, %c0_108, %c0_109] : memref<9x4x4xbf16, #tpu.memory_space<vmem>>, vector<1x4x4xbf16>
    %106 = vector.shape_cast %105 : vector<1x4x4xbf16> to vector<4x4xbf16>
    %cst_110 = arith.constant dense<0.000000e+00> : vector<256x4xf32>
    %107 = tpu.matmul %104, %106, %cst_110 {dimension_numbers = #tpu.dot_dimension_numbers<[1], [0], [0], [1], [0, 0, 1, 1], [], []>} : vector<256x4xbf16>, vector<4x4xbf16>, vector<256x4xf32> -> vector<256x4xf32>
    %108 = arith.addf %101, %107 : vector<256x4xf32>
    %c1_111 = arith.constant 1 : index
    %c2_112 = arith.constant 2 : index
    %c0_113 = arith.constant 0 : index
    %109 = vector.load %arg8[%c1_111, %c2_112, %c0_113] : memref<18x18x4xf32, #tpu.memory_space<vmem>>, vector<16x16x4xf32>
    %110 = vector.shape_cast %109 : vector<16x16x4xf32> to vector<256x4xf32>
    %111 = arith.truncf %110 : vector<256x4xf32> to vector<256x4xbf16>
    %c5_114 = arith.constant 5 : index
    %c0_115 = arith.constant 0 : index
    %c0_116 = arith.constant 0 : index
    %112 = vector.load %arg4[%c5_114, %c0_115, %c0_116] : memref<9x4x4xbf16, #tpu.memory_space<vmem>>, vector<1x4x4xbf16>
    %113 = vector.shape_cast %112 : vector<1x4x4xbf16> to vector<4x4xbf16>
    %cst_117 = arith.constant dense<0.000000e+00> : vector<256x4xf32>
    %114 = tpu.matmul %111, %113, %cst_117 {dimension_numbers = #tpu.dot_dimension_numbers<[1], [0], [0], [1], [0, 0, 1, 1], [], []>} : vector<256x4xbf16>, vector<4x4xbf16>, vector<256x4xf32> -> vector<256x4xf32>
    %115 = arith.addf %108, %114 : vector<256x4xf32>
    %c2_118 = arith.constant 2 : index
    %c0_119 = arith.constant 0 : index
    %c0_120 = arith.constant 0 : index
    %116 = vector.load %arg8[%c2_118, %c0_119, %c0_120] : memref<18x18x4xf32, #tpu.memory_space<vmem>>, vector<16x16x4xf32>
    %117 = vector.shape_cast %116 : vector<16x16x4xf32> to vector<256x4xf32>
    %118 = arith.truncf %117 : vector<256x4xf32> to vector<256x4xbf16>
    %c6_121 = arith.constant 6 : index
    %c0_122 = arith.constant 0 : index
    %c0_123 = arith.constant 0 : index
    %119 = vector.load %arg4[%c6_121, %c0_122, %c0_123] : memref<9x4x4xbf16, #tpu.memory_space<vmem>>, vector<1x4x4xbf16>
    %120 = vector.shape_cast %119 : vector<1x4x4xbf16> to vector<4x4xbf16>
    %cst_124 = arith.constant dense<0.000000e+00> : vector<256x4xf32>
    %121 = tpu.matmul %118, %120, %cst_124 {dimension_numbers = #tpu.dot_dimension_numbers<[1], [0], [0], [1], [0, 0, 1, 1], [], []>} : vector<256x4xbf16>, vector<4x4xbf16>, vector<256x4xf32> -> vector<256x4xf32>
    %122 = arith.addf %115, %121 : vector<256x4xf32>
    %c2_125 = arith.constant 2 : index
    %c1_126 = arith.constant 1 : index
    %c0_127 = arith.constant 0 : index
    %123 = vector.load %arg8[%c2_125, %c1_126, %c0_127] : memref<18x18x4xf32, #tpu.memory_space<vmem>>, vector<16x16x4xf32>
    %124 = vector.shape_cast %123 : vector<16x16x4xf32> to vector<256x4xf32>
    %125 = arith.truncf %124 : vector<256x4xf32> to vector<256x4xbf16>
    %c7_128 = arith.constant 7 : index
    %c0_129 = arith.constant 0 : index
    %c0_130 = arith.constant 0 : index
    %126 = vector.load %arg4[%c7_128, %c0_129, %c0_130] : memref<9x4x4xbf16, #tpu.memory_space<vmem>>, vector<1x4x4xbf16>
    %127 = vector.shape_cast %126 : vector<1x4x4xbf16> to vector<4x4xbf16>
    %cst_131 = arith.constant dense<0.000000e+00> : vector<256x4xf32>
    %128 = tpu.matmul %125, %127, %cst_131 {dimension_numbers = #tpu.dot_dimension_numbers<[1], [0], [0], [1], [0, 0, 1, 1], [], []>} : vector<256x4xbf16>, vector<4x4xbf16>, vector<256x4xf32> -> vector<256x4xf32>
    %129 = arith.addf %122, %128 : vector<256x4xf32>
    %c2_132 = arith.constant 2 : index
    %c2_133 = arith.constant 2 : index
    %c0_134 = arith.constant 0 : index
    %130 = vector.load %arg8[%c2_132, %c2_133, %c0_134] : memref<18x18x4xf32, #tpu.memory_space<vmem>>, vector<16x16x4xf32>
    %131 = vector.shape_cast %130 : vector<16x16x4xf32> to vector<256x4xf32>
    %132 = arith.truncf %131 : vector<256x4xf32> to vector<256x4xbf16>
    %c8_135 = arith.constant 8 : index
    %c0_136 = arith.constant 0 : index
    %c0_137 = arith.constant 0 : index
    %133 = vector.load %arg4[%c8_135, %c0_136, %c0_137] : memref<9x4x4xbf16, #tpu.memory_space<vmem>>, vector<1x4x4xbf16>
    %134 = vector.shape_cast %133 : vector<1x4x4xbf16> to vector<4x4xbf16>
    %cst_138 = arith.constant dense<0.000000e+00> : vector<256x4xf32>
    %135 = tpu.matmul %132, %134, %cst_138 {dimension_numbers = #tpu.dot_dimension_numbers<[1], [0], [0], [1], [0, 0, 1, 1], [], []>} : vector<256x4xbf16>, vector<4x4xbf16>, vector<256x4xf32> -> vector<256x4xf32>
    %136 = arith.addf %129, %135 : vector<256x4xf32>
    %137 = vector.shape_cast %136 : vector<256x4xf32> to vector<16x16x4xf32>
    %c0_139 = arith.constant 0 : index
    %c0_140 = arith.constant 0 : index
    %c0_141 = arith.constant 0 : index
    %c0_142 = arith.constant 0 : index
    %138 = vector.load %arg5[%c0_139, %c0_140, %c0_141, %c0_142] : memref<1x16x16x4xf32, #tpu.memory_space<vmem>>, vector<1x16x16x4xf32>
    %139 = vector.shape_cast %138 : vector<1x16x16x4xf32> to vector<16x16x4xf32>
    %140 = vector.shape_cast %137 : vector<16x16x4xf32> to vector<1x16x16x4xf32>
    tpu.vector_store %arg5[%c0_139, %c0_140, %c0_141, %c0_142], %140 {strides = array<i32>} : memref<1x16x16x4xf32, #tpu.memory_space<vmem>>, vector<1x16x16x4xf32>,
    %cst_143 = arith.constant dense<0.000000e+00> : vector<4xf32>
    %141 = vector.multi_reduction <add>, %136, %cst_143 [0] : vector<256x4xf32> to vector<4xf32>
    %142 = vector.shape_cast %141 : vector<4xf32> to vector<1x4xf32>
    %c0_144 = arith.constant 0 : index
    %c0_145 = arith.constant 0 : index
    %c0_146 = arith.constant 0 : index
    %143 = vector.load %arg6[%c0_144, %c0_145, %c0_146] : memref<1x2x4xf32, #tpu.memory_space<vmem>>, vector<1x1x4xf32>
    %144 = vector.shape_cast %143 : vector<1x1x4xf32> to vector<1x4xf32>
    %145 = vector.shape_cast %142 : vector<1x4xf32> to vector<1x1x4xf32>
    tpu.vector_store %arg6[%c0_144, %c0_145, %c0_146], %145 {strides = array<i32>} : memref<1x2x4xf32, #tpu.memory_space<vmem>>, vector<1x1x4xf32>,
    %146 = arith.mulf %136, %136 : vector<256x4xf32>
    %cst_147 = arith.constant dense<0.000000e+00> : vector<4xf32>
    %147 = vector.multi_reduction <add>, %146, %cst_147 [0] : vector<256x4xf32> to vector<4xf32>
    %148 = vector.shape_cast %147 : vector<4xf32> to vector<1x4xf32>
    %c0_148 = arith.constant 0 : index
    %c1_149 = arith.constant 1 : index
    %c0_150 = arith.constant 0 : index
    %149 = vector.load %arg6[%c0_148, %c1_149, %c0_150] : memref<1x2x4xf32, #tpu.memory_space<vmem>>, vector<1x1x4xf32>
    %150 = vector.shape_cast %149 : vector<1x1x4xf32> to vector<1x4xf32>
    %151 = vector.shape_cast %148 : vector<1x4xf32> to vector<1x1x4xf32>
    tpu.vector_store %arg6[%c0_148, %c1_149, %c0_150], %151 {strides = array<i32>} : memref<1x2x4xf32, #tpu.memory_space<vmem>>, vector<1x1x4xf32>,
    return
  }
  func.func @transform_0(%arg0: i32) -> (i32, i32, i32, i32) {
    %c0_i32 = arith.constant 0 : i32
    %c0_i32_0 = arith.constant 0 : i32
    %c0_i32_1 = arith.constant 0 : i32
    %c0_i32_2 = arith.constant 0 : i32
    return %arg0, %c0_i32, %c0_i32_0, %c0_i32_1 : i32, i32, i32, i32
  }
  func.func @transform_1(%arg0: i32) -> (i32, i32, i32, i32) {
    %c0_i32 = arith.constant 0 : i32
    %c0_i32_0 = arith.constant 0 : i32
    %c0_i32_1 = arith.constant 0 : i32
    %c0_i32_2 = arith.constant 0 : i32
    return %arg0, %c0_i32, %c0_i32_0, %c0_i32_1 : i32, i32, i32, i32
  }
  func.func @transform_2(%arg0: i32) -> (i32, i32, i32) {
    %c0_i32 = arith.constant 0 : i32
    %c0_i32_0 = arith.constant 0 : i32
    %c0_i32_1 = arith.constant 0 : i32
    %c0_i32_2 = arith.constant 0 : i32
    return %c0_i32, %c0_i32_0, %c0_i32_1 : i32, i32, i32
  }
  func.func @transform_3(%arg0: i32) -> (i32, i32, i32) {
    %c0_i32 = arith.constant 0 : i32
    %c0_i32_0 = arith.constant 0 : i32
    %c0_i32_1 = arith.constant 0 : i32
    %c0_i32_2 = arith.constant 0 : i32
    return %c0_i32, %c0_i32_0, %c0_i32_1 : i32, i32, i32
  }
  func.func @transform_4(%arg0: i32) -> (i32, i32, i32, i32) {
    %c0_i32 = arith.constant 0 : i32
    %c0_i32_0 = arith.constant 0 : i32
    %c0_i32_1 = arith.constant 0 : i32
    %c0_i32_2 = arith.constant 0 : i32
    return %arg0, %c0_i32, %c0_i32_0, %c0_i32_1 : i32, i32, i32, i32
  }
  func.func @transform_5(%arg0: i32) -> (i32, i32, i32) {
    %c0_i32 = arith.constant 0 : i32
    %c0_i32_0 = arith.constant 0 : i32
    %c0_i32_1 = arith.constant 0 : i32
    return %arg0, %c0_i32, %c0_i32_0 : i32, i32, i32
  }
}

module attributes {stable_mosaic.version = 11 : i64} {
  func.func @kernel(%arg0: i32, %arg1: memref<1x16x16x4xf32, #tpu.memory_space<vmem>>, %arg2: memref<9x4x4xbf16, #tpu.memory_space<vmem>>, %arg3: memref<1x4xf32, #tpu.memory_space<vmem>>, %arg4: memref<1x4xf32, #tpu.memory_space<vmem>>, %arg5: memref<1x16x16x4xf32, #tpu.memory_space<vmem>>, %arg6: memref<1x2x4xf32, #tpu.memory_space<vmem>>, %arg7: memref<18x18x4xf32, #tpu.memory_space<vmem>>) attributes {dimension_semantics = [#tpu.dimension_semantics<parallel>], iteration_bounds = array<i64: 2>, scalar_prefetch = 0 : i64, scratch_operands = 1 : i64, tpu.core_type = #tpu.core_type<tc>, window_params = [{transform_indices = @transform_0, window_bounds = array<i64: 1, 16, 16, 4>}, {pipeline_mode = #tpu.pipeline_mode<synchronous>, transform_indices = @transform_1, window_bounds = array<i64: 9, 4, 4>}, {pipeline_mode = #tpu.pipeline_mode<synchronous>, transform_indices = @transform_2, window_bounds = array<i64: 1, 4>}, {pipeline_mode = #tpu.pipeline_mode<synchronous>, transform_indices = @transform_3, window_bounds = array<i64: 1, 4>}, {transform_indices = @transform_4, window_bounds = array<i64: 1, 16, 16, 4>}, {transform_indices = @transform_5, window_bounds = array<i64: 1, 2, 4>}]} {
    %cst = arith.constant 0.000000e+00 : f32
    %0 = vector.broadcast %cst : f32 to vector<18x18x4xf32>
    %c0 = arith.constant 0 : index
    %c0_0 = arith.constant 0 : index
    %c0_1 = arith.constant 0 : index
    %1 = vector.load %arg7[%c0, %c0_0, %c0_1] : memref<18x18x4xf32, #tpu.memory_space<vmem>>, vector<18x18x4xf32>
    tpu.vector_store %arg7[%c0, %c0_0, %c0_1], %0 {strides = array<i32>} : memref<18x18x4xf32, #tpu.memory_space<vmem>>, vector<18x18x4xf32>,
    %c0_2 = arith.constant 0 : index
    %c0_3 = arith.constant 0 : index
    %c0_4 = arith.constant 0 : index
    %c0_5 = arith.constant 0 : index
    %2 = vector.load %arg1[%c0_2, %c0_3, %c0_4, %c0_5] : memref<1x16x16x4xf32, #tpu.memory_space<vmem>>, vector<1x16x16x4xf32>
    %3 = vector.shape_cast %2 : vector<1x16x16x4xf32> to vector<16x16x4xf32>
    %c0_6 = arith.constant 0 : index
    %c0_7 = arith.constant 0 : index
    %4 = vector.load %arg3[%c0_6, %c0_7] : memref<1x4xf32, #tpu.memory_space<vmem>>, vector<1x4xf32>
    %5 = vector.shape_cast %4 : vector<1x4xf32> to vector<1x1x4xf32>
    %6 = vector.broadcast %5 : vector<1x1x4xf32> to vector<16x16x4xf32>
    %7 = arith.mulf %3, %6 : vector<16x16x4xf32>
    %c0_8 = arith.constant 0 : index
    %c0_9 = arith.constant 0 : index
    %8 = vector.load %arg4[%c0_8, %c0_9] : memref<1x4xf32, #tpu.memory_space<vmem>>, vector<1x4xf32>
    %9 = vector.shape_cast %8 : vector<1x4xf32> to vector<1x1x4xf32>
    %10 = vector.broadcast %9 : vector<1x1x4xf32> to vector<16x16x4xf32>
    %11 = arith.addf %7, %10 : vector<16x16x4xf32>
    %cst_10 = arith.constant 0.000000e+00 : f32
    %12 = vector.broadcast %cst_10 : f32 to vector<16x16x4xf32>
    %13 = arith.maximumf %11, %12 : vector<16x16x4xf32>
    %c1 = arith.constant 1 : index
    %c1_11 = arith.constant 1 : index
    %c0_12 = arith.constant 0 : index
    %14 = vector.load %arg7[%c1, %c1_11, %c0_12] : memref<18x18x4xf32, #tpu.memory_space<vmem>>, vector<16x16x4xf32>
    tpu.vector_store %arg7[%c1, %c1_11, %c0_12], %13 {strides = array<i32>} : memref<18x18x4xf32, #tpu.memory_space<vmem>>, vector<16x16x4xf32>,
    %cst_13 = arith.constant 0.000000e+00 : f32
    %15 = vector.broadcast %cst_13 : f32 to vector<256x4xf32>
    %c0_14 = arith.constant 0 : index
    %c0_15 = arith.constant 0 : index
    %c0_16 = arith.constant 0 : index
    %16 = vector.load %arg7[%c0_14, %c0_15, %c0_16] : memref<18x18x4xf32, #tpu.memory_space<vmem>>, vector<16x16x4xf32>
    %17 = vector.shape_cast %16 : vector<16x16x4xf32> to vector<256x4xf32>
    %18 = arith.truncf %17 : vector<256x4xf32> to vector<256x4xbf16>
    %c0_17 = arith.constant 0 : index
    %c0_18 = arith.constant 0 : index
    %c0_19 = arith.constant 0 : index
    %19 = vector.load %arg2[%c0_17, %c0_18, %c0_19] : memref<9x4x4xbf16, #tpu.memory_space<vmem>>, vector<1x4x4xbf16>
    %20 = vector.shape_cast %19 : vector<1x4x4xbf16> to vector<4x4xbf16>
    %cst_20 = arith.constant dense<0.000000e+00> : vector<256x4xf32>
    %21 = tpu.matmul %18, %20, %cst_20 {dimension_numbers = #tpu.dot_dimension_numbers<[1], [0], [0], [1], [0, 0, 1, 1], [], []>} : vector<256x4xbf16>, vector<4x4xbf16>, vector<256x4xf32> -> vector<256x4xf32>
    %22 = arith.addf %15, %21 : vector<256x4xf32>
    %c0_21 = arith.constant 0 : index
    %c1_22 = arith.constant 1 : index
    %c0_23 = arith.constant 0 : index
    %23 = vector.load %arg7[%c0_21, %c1_22, %c0_23] : memref<18x18x4xf32, #tpu.memory_space<vmem>>, vector<16x16x4xf32>
    %24 = vector.shape_cast %23 : vector<16x16x4xf32> to vector<256x4xf32>
    %25 = arith.truncf %24 : vector<256x4xf32> to vector<256x4xbf16>
    %c1_24 = arith.constant 1 : index
    %c0_25 = arith.constant 0 : index
    %c0_26 = arith.constant 0 : index
    %26 = vector.load %arg2[%c1_24, %c0_25, %c0_26] : memref<9x4x4xbf16, #tpu.memory_space<vmem>>, vector<1x4x4xbf16>
    %27 = vector.shape_cast %26 : vector<1x4x4xbf16> to vector<4x4xbf16>
    %cst_27 = arith.constant dense<0.000000e+00> : vector<256x4xf32>
    %28 = tpu.matmul %25, %27, %cst_27 {dimension_numbers = #tpu.dot_dimension_numbers<[1], [0], [0], [1], [0, 0, 1, 1], [], []>} : vector<256x4xbf16>, vector<4x4xbf16>, vector<256x4xf32> -> vector<256x4xf32>
    %29 = arith.addf %22, %28 : vector<256x4xf32>
    %c0_28 = arith.constant 0 : index
    %c2 = arith.constant 2 : index
    %c0_29 = arith.constant 0 : index
    %30 = vector.load %arg7[%c0_28, %c2, %c0_29] : memref<18x18x4xf32, #tpu.memory_space<vmem>>, vector<16x16x4xf32>
    %31 = vector.shape_cast %30 : vector<16x16x4xf32> to vector<256x4xf32>
    %32 = arith.truncf %31 : vector<256x4xf32> to vector<256x4xbf16>
    %c2_30 = arith.constant 2 : index
    %c0_31 = arith.constant 0 : index
    %c0_32 = arith.constant 0 : index
    %33 = vector.load %arg2[%c2_30, %c0_31, %c0_32] : memref<9x4x4xbf16, #tpu.memory_space<vmem>>, vector<1x4x4xbf16>
    %34 = vector.shape_cast %33 : vector<1x4x4xbf16> to vector<4x4xbf16>
    %cst_33 = arith.constant dense<0.000000e+00> : vector<256x4xf32>
    %35 = tpu.matmul %32, %34, %cst_33 {dimension_numbers = #tpu.dot_dimension_numbers<[1], [0], [0], [1], [0, 0, 1, 1], [], []>} : vector<256x4xbf16>, vector<4x4xbf16>, vector<256x4xf32> -> vector<256x4xf32>
    %36 = arith.addf %29, %35 : vector<256x4xf32>
    %c1_34 = arith.constant 1 : index
    %c0_35 = arith.constant 0 : index
    %c0_36 = arith.constant 0 : index
    %37 = vector.load %arg7[%c1_34, %c0_35, %c0_36] : memref<18x18x4xf32, #tpu.memory_space<vmem>>, vector<16x16x4xf32>
    %38 = vector.shape_cast %37 : vector<16x16x4xf32> to vector<256x4xf32>
    %39 = arith.truncf %38 : vector<256x4xf32> to vector<256x4xbf16>
    %c3 = arith.constant 3 : index
    %c0_37 = arith.constant 0 : index
    %c0_38 = arith.constant 0 : index
    %40 = vector.load %arg2[%c3, %c0_37, %c0_38] : memref<9x4x4xbf16, #tpu.memory_space<vmem>>, vector<1x4x4xbf16>
    %41 = vector.shape_cast %40 : vector<1x4x4xbf16> to vector<4x4xbf16>
    %cst_39 = arith.constant dense<0.000000e+00> : vector<256x4xf32>
    %42 = tpu.matmul %39, %41, %cst_39 {dimension_numbers = #tpu.dot_dimension_numbers<[1], [0], [0], [1], [0, 0, 1, 1], [], []>} : vector<256x4xbf16>, vector<4x4xbf16>, vector<256x4xf32> -> vector<256x4xf32>
    %43 = arith.addf %36, %42 : vector<256x4xf32>
    %c1_40 = arith.constant 1 : index
    %c1_41 = arith.constant 1 : index
    %c0_42 = arith.constant 0 : index
    %44 = vector.load %arg7[%c1_40, %c1_41, %c0_42] : memref<18x18x4xf32, #tpu.memory_space<vmem>>, vector<16x16x4xf32>
    %45 = vector.shape_cast %44 : vector<16x16x4xf32> to vector<256x4xf32>
    %46 = arith.truncf %45 : vector<256x4xf32> to vector<256x4xbf16>
    %c4 = arith.constant 4 : index
    %c0_43 = arith.constant 0 : index
    %c0_44 = arith.constant 0 : index
    %47 = vector.load %arg2[%c4, %c0_43, %c0_44] : memref<9x4x4xbf16, #tpu.memory_space<vmem>>, vector<1x4x4xbf16>
    %48 = vector.shape_cast %47 : vector<1x4x4xbf16> to vector<4x4xbf16>
    %cst_45 = arith.constant dense<0.000000e+00> : vector<256x4xf32>
    %49 = tpu.matmul %46, %48, %cst_45 {dimension_numbers = #tpu.dot_dimension_numbers<[1], [0], [0], [1], [0, 0, 1, 1], [], []>} : vector<256x4xbf16>, vector<4x4xbf16>, vector<256x4xf32> -> vector<256x4xf32>
    %50 = arith.addf %43, %49 : vector<256x4xf32>
    %c1_46 = arith.constant 1 : index
    %c2_47 = arith.constant 2 : index
    %c0_48 = arith.constant 0 : index
    %51 = vector.load %arg7[%c1_46, %c2_47, %c0_48] : memref<18x18x4xf32, #tpu.memory_space<vmem>>, vector<16x16x4xf32>
    %52 = vector.shape_cast %51 : vector<16x16x4xf32> to vector<256x4xf32>
    %53 = arith.truncf %52 : vector<256x4xf32> to vector<256x4xbf16>
    %c5 = arith.constant 5 : index
    %c0_49 = arith.constant 0 : index
    %c0_50 = arith.constant 0 : index
    %54 = vector.load %arg2[%c5, %c0_49, %c0_50] : memref<9x4x4xbf16, #tpu.memory_space<vmem>>, vector<1x4x4xbf16>
    %55 = vector.shape_cast %54 : vector<1x4x4xbf16> to vector<4x4xbf16>
    %cst_51 = arith.constant dense<0.000000e+00> : vector<256x4xf32>
    %56 = tpu.matmul %53, %55, %cst_51 {dimension_numbers = #tpu.dot_dimension_numbers<[1], [0], [0], [1], [0, 0, 1, 1], [], []>} : vector<256x4xbf16>, vector<4x4xbf16>, vector<256x4xf32> -> vector<256x4xf32>
    %57 = arith.addf %50, %56 : vector<256x4xf32>
    %c2_52 = arith.constant 2 : index
    %c0_53 = arith.constant 0 : index
    %c0_54 = arith.constant 0 : index
    %58 = vector.load %arg7[%c2_52, %c0_53, %c0_54] : memref<18x18x4xf32, #tpu.memory_space<vmem>>, vector<16x16x4xf32>
    %59 = vector.shape_cast %58 : vector<16x16x4xf32> to vector<256x4xf32>
    %60 = arith.truncf %59 : vector<256x4xf32> to vector<256x4xbf16>
    %c6 = arith.constant 6 : index
    %c0_55 = arith.constant 0 : index
    %c0_56 = arith.constant 0 : index
    %61 = vector.load %arg2[%c6, %c0_55, %c0_56] : memref<9x4x4xbf16, #tpu.memory_space<vmem>>, vector<1x4x4xbf16>
    %62 = vector.shape_cast %61 : vector<1x4x4xbf16> to vector<4x4xbf16>
    %cst_57 = arith.constant dense<0.000000e+00> : vector<256x4xf32>
    %63 = tpu.matmul %60, %62, %cst_57 {dimension_numbers = #tpu.dot_dimension_numbers<[1], [0], [0], [1], [0, 0, 1, 1], [], []>} : vector<256x4xbf16>, vector<4x4xbf16>, vector<256x4xf32> -> vector<256x4xf32>
    %64 = arith.addf %57, %63 : vector<256x4xf32>
    %c2_58 = arith.constant 2 : index
    %c1_59 = arith.constant 1 : index
    %c0_60 = arith.constant 0 : index
    %65 = vector.load %arg7[%c2_58, %c1_59, %c0_60] : memref<18x18x4xf32, #tpu.memory_space<vmem>>, vector<16x16x4xf32>
    %66 = vector.shape_cast %65 : vector<16x16x4xf32> to vector<256x4xf32>
    %67 = arith.truncf %66 : vector<256x4xf32> to vector<256x4xbf16>
    %c7 = arith.constant 7 : index
    %c0_61 = arith.constant 0 : index
    %c0_62 = arith.constant 0 : index
    %68 = vector.load %arg2[%c7, %c0_61, %c0_62] : memref<9x4x4xbf16, #tpu.memory_space<vmem>>, vector<1x4x4xbf16>
    %69 = vector.shape_cast %68 : vector<1x4x4xbf16> to vector<4x4xbf16>
    %cst_63 = arith.constant dense<0.000000e+00> : vector<256x4xf32>
    %70 = tpu.matmul %67, %69, %cst_63 {dimension_numbers = #tpu.dot_dimension_numbers<[1], [0], [0], [1], [0, 0, 1, 1], [], []>} : vector<256x4xbf16>, vector<4x4xbf16>, vector<256x4xf32> -> vector<256x4xf32>
    %71 = arith.addf %64, %70 : vector<256x4xf32>
    %c2_64 = arith.constant 2 : index
    %c2_65 = arith.constant 2 : index
    %c0_66 = arith.constant 0 : index
    %72 = vector.load %arg7[%c2_64, %c2_65, %c0_66] : memref<18x18x4xf32, #tpu.memory_space<vmem>>, vector<16x16x4xf32>
    %73 = vector.shape_cast %72 : vector<16x16x4xf32> to vector<256x4xf32>
    %74 = arith.truncf %73 : vector<256x4xf32> to vector<256x4xbf16>
    %c8 = arith.constant 8 : index
    %c0_67 = arith.constant 0 : index
    %c0_68 = arith.constant 0 : index
    %75 = vector.load %arg2[%c8, %c0_67, %c0_68] : memref<9x4x4xbf16, #tpu.memory_space<vmem>>, vector<1x4x4xbf16>
    %76 = vector.shape_cast %75 : vector<1x4x4xbf16> to vector<4x4xbf16>
    %cst_69 = arith.constant dense<0.000000e+00> : vector<256x4xf32>
    %77 = tpu.matmul %74, %76, %cst_69 {dimension_numbers = #tpu.dot_dimension_numbers<[1], [0], [0], [1], [0, 0, 1, 1], [], []>} : vector<256x4xbf16>, vector<4x4xbf16>, vector<256x4xf32> -> vector<256x4xf32>
    %78 = arith.addf %71, %77 : vector<256x4xf32>
    %79 = vector.shape_cast %78 : vector<256x4xf32> to vector<16x16x4xf32>
    %c0_70 = arith.constant 0 : index
    %c0_71 = arith.constant 0 : index
    %c0_72 = arith.constant 0 : index
    %c0_73 = arith.constant 0 : index
    %80 = vector.load %arg5[%c0_70, %c0_71, %c0_72, %c0_73] : memref<1x16x16x4xf32, #tpu.memory_space<vmem>>, vector<1x16x16x4xf32>
    %81 = vector.shape_cast %80 : vector<1x16x16x4xf32> to vector<16x16x4xf32>
    %82 = vector.shape_cast %79 : vector<16x16x4xf32> to vector<1x16x16x4xf32>
    tpu.vector_store %arg5[%c0_70, %c0_71, %c0_72, %c0_73], %82 {strides = array<i32>} : memref<1x16x16x4xf32, #tpu.memory_space<vmem>>, vector<1x16x16x4xf32>,
    %cst_74 = arith.constant dense<0.000000e+00> : vector<4xf32>
    %83 = vector.multi_reduction <add>, %78, %cst_74 [0] : vector<256x4xf32> to vector<4xf32>
    %84 = vector.shape_cast %83 : vector<4xf32> to vector<1x4xf32>
    %c0_75 = arith.constant 0 : index
    %c0_76 = arith.constant 0 : index
    %c0_77 = arith.constant 0 : index
    %85 = vector.load %arg6[%c0_75, %c0_76, %c0_77] : memref<1x2x4xf32, #tpu.memory_space<vmem>>, vector<1x1x4xf32>
    %86 = vector.shape_cast %85 : vector<1x1x4xf32> to vector<1x4xf32>
    %87 = vector.shape_cast %84 : vector<1x4xf32> to vector<1x1x4xf32>
    tpu.vector_store %arg6[%c0_75, %c0_76, %c0_77], %87 {strides = array<i32>} : memref<1x2x4xf32, #tpu.memory_space<vmem>>, vector<1x1x4xf32>,
    %88 = arith.mulf %78, %78 : vector<256x4xf32>
    %cst_78 = arith.constant dense<0.000000e+00> : vector<4xf32>
    %89 = vector.multi_reduction <add>, %88, %cst_78 [0] : vector<256x4xf32> to vector<4xf32>
    %90 = vector.shape_cast %89 : vector<4xf32> to vector<1x4xf32>
    %c0_79 = arith.constant 0 : index
    %c1_80 = arith.constant 1 : index
    %c0_81 = arith.constant 0 : index
    %91 = vector.load %arg6[%c0_79, %c1_80, %c0_81] : memref<1x2x4xf32, #tpu.memory_space<vmem>>, vector<1x1x4xf32>
    %92 = vector.shape_cast %91 : vector<1x1x4xf32> to vector<1x4xf32>
    %93 = vector.shape_cast %90 : vector<1x4xf32> to vector<1x1x4xf32>
    tpu.vector_store %arg6[%c0_79, %c1_80, %c0_81], %93 {strides = array<i32>} : memref<1x2x4xf32, #tpu.memory_space<vmem>>, vector<1x1x4xf32>,
    return
  }
  func.func @transform_0(%arg0: i32) -> (i32, i32, i32, i32) {
    %c0_i32 = arith.constant 0 : i32
    %c0_i32_0 = arith.constant 0 : i32
    %c0_i32_1 = arith.constant 0 : i32
    %c0_i32_2 = arith.constant 0 : i32
    return %arg0, %c0_i32, %c0_i32_0, %c0_i32_1 : i32, i32, i32, i32
  }
  func.func @transform_1(%arg0: i32) -> (i32, i32, i32) {
    %c0_i32 = arith.constant 0 : i32
    %c0_i32_0 = arith.constant 0 : i32
    %c0_i32_1 = arith.constant 0 : i32
    %c0_i32_2 = arith.constant 0 : i32
    return %c0_i32, %c0_i32_0, %c0_i32_1 : i32, i32, i32
  }
  func.func @transform_2(%arg0: i32) -> (i32, i32) {
    %c0_i32 = arith.constant 0 : i32
    %c0_i32_0 = arith.constant 0 : i32
    %c0_i32_1 = arith.constant 0 : i32
    return %c0_i32, %c0_i32_0 : i32, i32
  }
  func.func @transform_3(%arg0: i32) -> (i32, i32) {
    %c0_i32 = arith.constant 0 : i32
    %c0_i32_0 = arith.constant 0 : i32
    %c0_i32_1 = arith.constant 0 : i32
    return %c0_i32, %c0_i32_0 : i32, i32
  }
  func.func @transform_4(%arg0: i32) -> (i32, i32, i32, i32) {
    %c0_i32 = arith.constant 0 : i32
    %c0_i32_0 = arith.constant 0 : i32
    %c0_i32_1 = arith.constant 0 : i32
    %c0_i32_2 = arith.constant 0 : i32
    return %arg0, %c0_i32, %c0_i32_0, %c0_i32_1 : i32, i32, i32, i32
  }
  func.func @transform_5(%arg0: i32) -> (i32, i32, i32) {
    %c0_i32 = arith.constant 0 : i32
    %c0_i32_0 = arith.constant 0 : i32
    %c0_i32_1 = arith.constant 0 : i32
    return %arg0, %c0_i32, %c0_i32_0 : i32, i32, i32
  }
}

module attributes {stable_mosaic.version = 11 : i64} {
  func.func @_bn_relu_kernel(%arg0: i32, %arg1: memref<256x4xf32, #tpu.memory_space<vmem>>, %arg2: memref<1x4xf32, #tpu.memory_space<vmem>>, %arg3: memref<1x4xf32, #tpu.memory_space<vmem>>, %arg4: memref<256x4xf32, #tpu.memory_space<vmem>>) attributes {dimension_semantics = [#tpu.dimension_semantics<parallel>], iteration_bounds = array<i64: 2>, scalar_prefetch = 0 : i64, scratch_operands = 0 : i64, tpu.core_type = #tpu.core_type<tc>, window_params = [{transform_indices = @transform_0, window_bounds = array<i64: 256, 4>}, {pipeline_mode = #tpu.pipeline_mode<synchronous>, transform_indices = @transform_1, window_bounds = array<i64: 1, 4>}, {pipeline_mode = #tpu.pipeline_mode<synchronous>, transform_indices = @transform_2, window_bounds = array<i64: 1, 4>}, {transform_indices = @transform_3, window_bounds = array<i64: 256, 4>}]} {
    %c0 = arith.constant 0 : index
    %c0_0 = arith.constant 0 : index
    %0 = vector.load %arg1[%c0, %c0_0] : memref<256x4xf32, #tpu.memory_space<vmem>>, vector<256x4xf32>
    %c0_1 = arith.constant 0 : index
    %c0_2 = arith.constant 0 : index
    %1 = vector.load %arg2[%c0_1, %c0_2] : memref<1x4xf32, #tpu.memory_space<vmem>>, vector<1x4xf32>
    %2 = vector.broadcast %1 : vector<1x4xf32> to vector<256x4xf32>
    %3 = arith.mulf %0, %2 : vector<256x4xf32>
    %c0_3 = arith.constant 0 : index
    %c0_4 = arith.constant 0 : index
    %4 = vector.load %arg3[%c0_3, %c0_4] : memref<1x4xf32, #tpu.memory_space<vmem>>, vector<1x4xf32>
    %5 = vector.broadcast %4 : vector<1x4xf32> to vector<256x4xf32>
    %6 = arith.addf %3, %5 : vector<256x4xf32>
    %cst = arith.constant 0.000000e+00 : f32
    %7 = vector.broadcast %cst : f32 to vector<256x4xf32>
    %8 = arith.maximumf %6, %7 : vector<256x4xf32>
    %c0_5 = arith.constant 0 : index
    %c0_6 = arith.constant 0 : index
    %9 = vector.load %arg4[%c0_5, %c0_6] : memref<256x4xf32, #tpu.memory_space<vmem>>, vector<256x4xf32>
    tpu.vector_store %arg4[%c0_5, %c0_6], %8 {strides = array<i32>} : memref<256x4xf32, #tpu.memory_space<vmem>>, vector<256x4xf32>,
    return
  }
  func.func @transform_0(%arg0: i32) -> (i32, i32) {
    %c0_i32 = arith.constant 0 : i32
    %c0_i32_0 = arith.constant 0 : i32
    return %arg0, %c0_i32 : i32, i32
  }
  func.func @transform_1(%arg0: i32) -> (i32, i32) {
    %c0_i32 = arith.constant 0 : i32
    %c0_i32_0 = arith.constant 0 : i32
    %c0_i32_1 = arith.constant 0 : i32
    return %c0_i32, %c0_i32_0 : i32, i32
  }
  func.func @transform_2(%arg0: i32) -> (i32, i32) {
    %c0_i32 = arith.constant 0 : i32
    %c0_i32_0 = arith.constant 0 : i32
    %c0_i32_1 = arith.constant 0 : i32
    return %c0_i32, %c0_i32_0 : i32, i32
  }
  func.func @transform_3(%arg0: i32) -> (i32, i32) {
    %c0_i32 = arith.constant 0 : i32
    %c0_i32_0 = arith.constant 0 : i32
    return %arg0, %c0_i32 : i32, i32
  }
}

</mosaic_0001>

<llo_original>
// kernel: decoder_forward.4
$region0: #{decoder_forward.4}
  #allocation0 [shape = 'u32[]', space=smem, size = 0x4, offset = 0x4, fixed_abs, tag = 'smem constant byte address 0x4 - core index']
  #allocation1 [shape = 'u32[72,128]{1,0:T(1,128)}', space=vmem, size = 0x9000, scoped, tag = 'internal scratch']
  %s0 = inlined_call_operand.vmem [shape: f32[128,8], index: 0, kind: input, shape index: {}]
  %s1 = inlined_call_operand.vmem [shape: bf16[8,16], index: 1, kind: input, shape index: {}]
  %s2 = inlined_call_operand.vmem [shape: f32[1,16], index: 2, kind: input, shape index: {}]
  %s3 = inlined_call_operand.vmem [shape: f32[128,16], index: 3, kind: output, shape index: {}]
  %s4 = sld [smem:[#allocation0]]
  $region45: #{decoder_forward.4} parent=0
    _
  %s6 = ssub.s32 1, %s4
  %s7 = scalar_select 0, %s6, %s4
  loop: start=0, step=1, limit=4
  $region2: #{decoder_forward.4} parent=0 // loop_pre_header
    _
  $region3: #{decoder_forward.4} parent=0 // loop_header
    %s9 = sphi 0, %s13
    %p10 = scmp.ge.s32.totalorder %s9, 4
    %s19 = sphi 0, %s21
    %s22 = sphi 0, %s19
    %s23 = sphi 0, %s22
    %s39 = sphi 0, %s23
    %s43 = sphi 0, %s43
    %s45 = sphi 0, %s43
    %s46 = sphi 0, %s45
    %s60 = sphi 0, %s46
    %s64 = sphi 0, %s64
    %s66 = sphi 0, %s64
    %s67 = sphi 0, %s66
    %s81 = sphi 0, %s67
    %s87 = sphi 0, %s89
    %s90 = sphi 0, %s87
    %s91 = sphi 0, %s90
    %s107 = sphi 0, %s91
  $region4: #{decoder_forward.4} parent=0 // loop_header_branch
    %12 = sbr.rel (%p10) target = $region8
  $region5: #{decoder_forward.4} parent=0 // loop_body
    %s14 = ssub.s32 %s9, 1
    %s15 = ssub.s32 %s9, 2
    %s16 = sadd.s32 %s9, 1
    %s17 = ssub.s32 %s9, %s16
    %p18 = scmp.eq.s32.totalorder %s17, 0
    %s20 = sadd.s32 %s19, 1
    %s21 = scalar_select %p18, %s19, %s20
    %p24 = pneg %p18
    %p25 = scmp.eq.s32.totalorder %s9, 1
    %p26 = por %p24, %p25
    %p27 = scmp.ne.s32.totalorder %s19, %s22
    %p28 = scmp.eq.s32.totalorder %s9, 0
    %p29 = por %p27, %p28
    %p30 = scmp.ne.s32.totalorder %s19, %s22
    %p31 = scmp.eq.s32.totalorder %s14, 1
    %p32 = por %p30, %p31
    %p33 = scmp.ne.s32.totalorder %s22, %s23
    %p34 = scmp.eq.s32.totalorder %s14, 0
    %p35 = por %p33, %p34
    %p36 = scmp.ne.s32.totalorder %s22, %s23
    %p37 = scmp.eq.s32.totalorder %s15, 1
    %p38 = por %p36, %p37
    %p40 = scmp.ne.s32.totalorder %s23, %s39
    %p41 = scmp.eq.s32.totalorder %s15, 0
    %p42 = por %p40, %p41
    %s44 = sadd.s32 %s43, 1
    %p47 = scmp.eq.s32.totalorder %s9, 1
    %p48 = scmp.ne.s32.totalorder %s43, %s45
    %p49 = scmp.eq.s32.totalorder %s9, 0
    %p50 = por %p48, %p49
    %p51 = scmp.ne.s32.totalorder %s43, %s45
    %p52 = scmp.eq.s32.totalorder %s14, 1
    %p53 = por %p51, %p52
    %p54 = scmp.ne.s32.totalorder %s45, %s46
    %p55 = scmp.eq.s32.totalorder %s14, 0
    %p56 = por %p54, %p55
    %p57 = scmp.ne.s32.totalorder %s45, %s46
    %p58 = scmp.eq.s32.totalorder %s15, 1
    %p59 = por %p57, %p58
    %p61 = scmp.ne.s32.totalorder %s46, %s60
    %p62 = scmp.eq.s32.totalorder %s15, 0
    %p63 = por %p61, %p62
    %s65 = sadd.s32 %s64, 1
    %p68 = scmp.eq.s32.totalorder %s9, 1
    %p69 = scmp.ne.s32.totalorder %s64, %s66
    %p70 = scmp.eq.s32.totalorder %s9, 0
    %p71 = por %p69, %p70
    %p72 = scmp.ne.s32.totalorder %s64, %s66
    %p73 = scmp.eq.s32.totalorder %s14, 1
    %p74 = por %p72, %p73
    %p75 = scmp.ne.s32.totalorder %s66, %s67
    %p76 = scmp.eq.s32.totalorder %s14, 0
    %p77 = por %p75, %p76
    %p78 = scmp.ne.s32.totalorder %s66, %s67
    %p79 = scmp.eq.s32.totalorder %s15, 1
    %p80 = por %p78, %p79
    %p82 = scmp.ne.s32.totalorder %s67, %s81
    %p83 = scmp.eq.s32.totalorder %s15, 0
    %p84 = por %p82, %p83
    %s85 = ssub.s32 %s9, %s16
    %p86 = scmp.eq.s32.totalorder %s85, 0
    %s88 = sadd.s32 %s87, 1
    %s89 = scalar_select %p86, %s87, %s88
    %p92 = pneg %p86
    %p93 = scmp.eq.s32.totalorder %s9, 1
    %p94 = por %p92, %p93
    %p95 = scmp.ne.s32.totalorder %s87, %s90
    %p96 = scmp.eq.s32.totalorder %s9, 0
    %p97 = por %p95, %p96
    %p98 = scmp.ne.s32.totalorder %s87, %s90
    %p99 = scmp.eq.s32.totalorder %s14, 1
    %p100 = por %p98, %p99
    %p101 = scmp.ne.s32.totalorder %s90, %s91
    %p102 = scmp.eq.s32.totalorder %s14, 0
    %p103 = por %p101, %p102
    %p104 = scmp.ne.s32.totalorder %s90, %s91
    %p105 = scmp.eq.s32.totalorder %s15, 1
    %p106 = por %p104, %p105
    %p108 = scmp.ne.s32.totalorder %s91, %s107
    %p109 = scmp.eq.s32.totalorder %s15, 0
    %p110 = por %p108, %p109
    %p111 = scmp.le.s32.totalorder 1, %s9
    %p112 = scmp.lt.s32.totalorder %s9, 3
    %p113 = pnand %p111, %p112
    %p114 = pneg %p113
    // Predicated region
    $region9: #{decoder_forward.4} parent=5 // pred_check
      _
    $region10: #{decoder_forward.4} parent=5 // pred_check_branch
      %116 = sbr.rel (%p113) target = $region12
    $region11: #{decoder_forward.4} parent=5 // pred_region
      %s117 = ssub.s32 %s9, 1
      // Predicated region
      $region13: #{decoder_forward.4} parent=11 // pred_check
        %p118 = pneg %p56
      $region14: #{decoder_forward.4} parent=11 // pred_check_branch
        %120 = sbr.rel (%p118) target = $region16
      $region15: #{decoder_forward.4} parent=11 // pred_region
        _
      $region16: #{decoder_forward.4} parent=11 // pred_fallthru
        _
      // Predicated region
      $region17: #{decoder_forward.4} parent=11 // pred_check
        %p121 = pneg %p77
      $region18: #{decoder_forward.4} parent=11 // pred_check_branch
        %123 = sbr.rel (%p121) target = $region20
      $region19: #{decoder_forward.4} parent=11 // pred_region
        _
      $region20: #{decoder_forward.4} parent=11 // pred_fallthru
        _
    $region12: #{decoder_forward.4} parent=5 // pred_fallthru
      _
    %p124 = scmp.lt.s32.totalorder %s9, 2
    // Predicated region
    $region21: #{decoder_forward.4} parent=5 // pred_check
      %p125 = pneg %p124
    $region22: #{decoder_forward.4} parent=5 // pred_check_branch
      %127 = sbr.rel (%p125) target = $region24
    $region23: #{decoder_forward.4} parent=5 // pred_region
      // Predicated region
      $region25: #{decoder_forward.4} parent=23 // pred_check
        %p128 = pneg %p29
      $region26: #{decoder_forward.4} parent=23 // pred_check_branch
        %130 = sbr.rel (%p128) target = $region28
      $region27: #{decoder_forward.4} parent=23 // pred_region
        %s131 = smul.u32 8, %s9
        %p132 = scmp.lt.s32.totalorder %s131, 15
        %s133 = scalar_select %p132, %s131, 15
        %s134 = smul.addr %s133, 8
        %s135 = scalar_lea.vmem %s0, %s134
        %s136 = smul.u32 8, %s9
      $region28: #{decoder_forward.4} parent=23 // pred_fallthru
        _
    $region24: #{decoder_forward.4} parent=5 // pred_fallthru
      _
    %p137 = scmp.le.s32.totalorder 1, %s9
    %p138 = scmp.lt.s32.totalorder %s9, 3
    %p139 = pnand %p137, %p138
    %p140 = pneg %p139
    // Predicated region
    $region29: #{decoder_forward.4} parent=5 // pred_check
      _
    $region30: #{decoder_forward.4} parent=5 // pred_check_branch
      %142 = sbr.rel (%p139) target = $region32
    $region31: #{decoder_forward.4} parent=5 // pred_region
      %s143 = ssub.s32 %s9, 1
      %s144 = smul.u32 8, %s14
      %p145 = scmp.lt.s32.totalorder %s144, 15
      %s146 = scalar_select %p145, %s144, 15
      %s147 = smul.addr %s146, 8
      %s148 = scalar_lea.vmem %s0, %s147
      %p149 = pneg %p35
      %p150 = pneg %p32
      %p151 = pneg %p56
      %p152 = pneg %p53
      %p153 = pneg %p77
      %p154 = pneg %p74
      %p155 = pneg %p103
      %p156 = pneg %p100
      %s157 = smul.u32 8, %s14
      %p158 = scmp.lt.s32.totalorder %s157, 15
      %s159 = scalar_select %p158, %s157, 15
      %s160 = smul.addr %s159, 8
      %s161 = scalar_lea.vmem %s3, %s160
      %s162 = smul.u32 8, %s14
      %p163 = scmp.lt.s32.totalorder %s162, 15
      %s164 = scalar_select %p163, %s162, 15
      %s165 = smul.addr %s164, 8
      %s166 = scalar_lea.vmem %s0, %s165
      %s167 = smul.u32 8, %s14
      %s168 = smul.u32 8, %s14
      %p169 = scmp.lt.s32.totalorder %s168, 15
      %s170 = scalar_select %p169, %s168, 15
      %s171 = smul.addr %s170, 8
      %s172 = scalar_lea.vmem %s3, %s171
      %s173 = smul.u32 8, %s14
      %v175 = vld [vmem:[%s166] sm:$0xff]
      %v176 = vld [vmem:[%s166 + $0x8] sm:$0xff]
      %v177 = vld [vmem:[%s166 + $0x10] sm:$0xff]
      %v178 = vld [vmem:[%s166 + $0x18] sm:$0xff]
      %v179 = vld [vmem:[%s166 + $0x20] sm:$0xff]
      %v180 = vld [vmem:[%s166 + $0x28] sm:$0xff]
      %v181 = vld [vmem:[%s166 + $0x30] sm:$0xff]
      %v182 = vld [vmem:[%s166 + $0x38] sm:$0xff]
      %v183 = vpack.c.bf16 %v176, %v175
      %v184 = vpack.c.bf16 %v178, %v177
      %v185 = vpack.c.bf16 %v180, %v179
      %v186 = vpack.c.bf16 %v182, %v181
      %v187 = vld [vmem:[%s1] sm:$0xf]
      %v188 = vld [vmem:[%s2] sm:$0x1]
      %v190 = vperm.slane %v188, 0
      %vm192 = vcmask 64512
      %v194 = vsel %vm192, %v183, 0
      %v197 = vsel %vm192, %v184, 0
      %v200 = vsel %vm192, %v185, 0
      %v203 = vsel %vm192, %v186, 0
      %vm205 = vcmask 1043456
      %v207 = vsel %vm205, %v187, 0
      %209 = vmatpush.bf16.msra.mxu0 0
      %210 = vmatpush.bf16.msra.mxu0 0
      %211 = vmatpush.bf16.msra.mxu0 0
      %212 = vmatpush.bf16.msra.mxu0 0
      %213 = vmatpush.bf16.msra.mxu0 0
      %214 = vmatpush.bf16.msra.mxu0 0
      %215 = vmatpush.bf16.msra.mxu0 0
      %216 = vmatpush.bf16.msra.mxu0 %v207
      %217 = vmatmul.bf16.gmra.mxu0 %v194
      %v218 = vpop.f32.mrf.mxu0
      %v219 = vadd.f32 %v190, %v218
      %v220 = vpop.f32.mrf.mxu0
      %v221 = vadd.f32 %v190, %v220
      %222 = vmatmul.bf16.gmra.mxu0 %v197
      %v223 = vpop.f32.mrf.mxu0
      %v224 = vadd.f32 %v190, %v223
      %v225 = vpop.f32.mrf.mxu0
      %v226 = vadd.f32 %v190, %v225
      %227 = vmatmul.bf16.gmra.mxu0 %v200
      %v228 = vpop.f32.mrf.mxu0
      %v229 = vadd.f32 %v190, %v228
      %v230 = vpop.f32.mrf.mxu0
      %v231 = vadd.f32 %v190, %v230
      %232 = vmatmul.bf16.gmra.mxu0 %v203
      %v233 = vpop.f32.mrf.mxu0
      %v234 = vadd.f32 %v190, %v233
      %v235 = vpop.f32.mrf.mxu0
      %v236 = vadd.f32 %v190, %v235
      %237 = vdwg.mxu0
      %vm238 = vcmask 130048
      %239 = vst.msk [vmem:[%s172] sm:$0xff] %vm238, %v219
      %240 = vst.msk [vmem:[%s172 + $0x8] sm:$0xff] %vm238, %v221
      %241 = vst.msk [vmem:[%s172 + $0x10] sm:$0xff] %vm238, %v224
      %242 = vst.msk [vmem:[%s172 + $0x18] sm:$0xff] %vm238, %v226
      %243 = vst.msk [vmem:[%s172 + $0x20] sm:$0xff] %vm238, %v229
      %244 = vst.msk [vmem:[%s172 + $0x28] sm:$0xff] %vm238, %v231
      %245 = vst.msk [vmem:[%s172 + $0x30] sm:$0xff] %vm238, %v234
      %246 = vst.msk [vmem:[%s172 + $0x38] sm:$0xff] %vm238, %v236
      %s247 = smul.u32 8, %s14
      %p248 = scmp.lt.s32.totalorder %s247, 15
      %s249 = scalar_select %p248, %s247, 15
      %s250 = smul.addr %s249, 8
      %s251 = scalar_lea.vmem %s3, %s250
      // Predicated region
      $region33: #{decoder_forward.4} parent=31 // pred_check
        %p252 = pneg %p100
      $region34: #{decoder_forward.4} parent=31 // pred_check_branch
        %254 = sbr.rel (%p252) target = $region36
      $region35: #{decoder_forward.4} parent=31 // pred_region
        %s255 = smul.u32 8, %s14
      $region36: #{decoder_forward.4} parent=31 // pred_fallthru
        _
    $region32: #{decoder_forward.4} parent=5 // pred_fallthru
      _
    %p256 = scmp.le.s32.totalorder 2, %s9
    // Predicated region
    $region37: #{decoder_forward.4} parent=5 // pred_check
      %p257 = pneg %p256
    $region38: #{decoder_forward.4} parent=5 // pred_check_branch
      %259 = sbr.rel (%p257) target = $region40
    $region39: #{decoder_forward.4} parent=5 // pred_region
      %s260 = ssub.s32 %s9, 2
      // Predicated region
      $region41: #{decoder_forward.4} parent=39 // pred_check
        %p261 = pneg %p106
      $region42: #{decoder_forward.4} parent=39 // pred_check_branch
        %263 = sbr.rel (%p261) target = $region44
      $region43: #{decoder_forward.4} parent=39 // pred_region
        %s264 = smul.u32 8, %s15
        %p265 = scmp.lt.s32.totalorder %s264, 15
        %s266 = scalar_select %p265, %s264, 15
        %s267 = smul.addr %s266, 8
        %s268 = scalar_lea.vmem %s3, %s267
      $region44: #{decoder_forward.4} parent=39 // pred_fallthru
        _
    $region40: #{decoder_forward.4} parent=5 // pred_fallthru
      _
  $region6: #{decoder_forward.4} parent=0 // loop_footer
    %s13 = sadd.s32 1, %s9
  $region7: #{decoder_forward.4} parent=0 // loop_footer_branch
    %8 = sbr.rel target = $region3
  $region8: #{decoder_forward.4} parent=0 // loop_exit
    _

// kernel: decoder_forward.7
$region0: #{decoder_forward.7}
  #allocation0 [shape = 'u32[]', space=smem, size = 0x4, offset = 0x4, fixed_abs, tag = 'smem constant byte address 0x4 - core index']
  #allocation1 [shape = 'u32[72,128]{1,0:T(1,128)}', space=vmem, size = 0x9000, scoped, tag = 'internal scratch']
  %s0 = inlined_call_operand.vmem [shape: f32[512,4], index: 0, kind: input, shape index: {}]
  %s1 = inlined_call_operand.vmem [shape: f32[1,4], index: 1, kind: input, shape index: {}]
  %s2 = inlined_call_operand.vmem [shape: f32[1,4], index: 2, kind: input, shape index: {}]
  %s3 = inlined_call_operand.vmem [shape: f32[512,4], index: 3, kind: output, shape index: {}]
  %s4 = sld [smem:[#allocation0]]
  $region45: #{decoder_forward.7} parent=0
    _
  %s6 = ssub.s32 1, %s4
  %s7 = scalar_select 0, %s6, %s4
  loop: start=0, step=1, limit=4
  $region2: #{decoder_forward.7} parent=0 // loop_pre_header
    _
  $region3: #{decoder_forward.7} parent=0 // loop_header
    %s9 = sphi 0, %s13
    %p10 = scmp.ge.s32.totalorder %s9, 4
    %s19 = sphi 0, %s21
    %s22 = sphi 0, %s19
    %s23 = sphi 0, %s22
    %s39 = sphi 0, %s23
    %s43 = sphi 0, %s43
    %s45 = sphi 0, %s43
    %s46 = sphi 0, %s45
    %s60 = sphi 0, %s46
    %s64 = sphi 0, %s64
    %s66 = sphi 0, %s64
    %s67 = sphi 0, %s66
    %s81 = sphi 0, %s67
    %s87 = sphi 0, %s89
    %s90 = sphi 0, %s87
    %s91 = sphi 0, %s90
    %s107 = sphi 0, %s91
  $region4: #{decoder_forward.7} parent=0 // loop_header_branch
    %12 = sbr.rel (%p10) target = $region8
  $region5: #{decoder_forward.7} parent=0 // loop_body
    %s14 = ssub.s32 %s9, 1
    %s15 = ssub.s32 %s9, 2
    %s16 = sadd.s32 %s9, 1
    %s17 = ssub.s32 %s9, %s16
    %p18 = scmp.eq.s32.totalorder %s17, 0
    %s20 = sadd.s32 %s19, 1
    %s21 = scalar_select %p18, %s19, %s20
    %p24 = pneg %p18
    %p25 = scmp.eq.s32.totalorder %s9, 1
    %p26 = por %p24, %p25
    %p27 = scmp.ne.s32.totalorder %s19, %s22
    %p28 = scmp.eq.s32.totalorder %s9, 0
    %p29 = por %p27, %p28
    %p30 = scmp.ne.s32.totalorder %s19, %s22
    %p31 = scmp.eq.s32.totalorder %s14, 1
    %p32 = por %p30, %p31
    %p33 = scmp.ne.s32.totalorder %s22, %s23
    %p34 = scmp.eq.s32.totalorder %s14, 0
    %p35 = por %p33, %p34
    %p36 = scmp.ne.s32.totalorder %s22, %s23
    %p37 = scmp.eq.s32.totalorder %s15, 1
    %p38 = por %p36, %p37
    %p40 = scmp.ne.s32.totalorder %s23, %s39
    %p41 = scmp.eq.s32.totalorder %s15, 0
    %p42 = por %p40, %p41
    %s44 = sadd.s32 %s43, 1
    %p47 = scmp.eq.s32.totalorder %s9, 1
    %p48 = scmp.ne.s32.totalorder %s43, %s45
    %p49 = scmp.eq.s32.totalorder %s9, 0
    %p50 = por %p48, %p49
    %p51 = scmp.ne.s32.totalorder %s43, %s45
    %p52 = scmp.eq.s32.totalorder %s14, 1
    %p53 = por %p51, %p52
    %p54 = scmp.ne.s32.totalorder %s45, %s46
    %p55 = scmp.eq.s32.totalorder %s14, 0
    %p56 = por %p54, %p55
    %p57 = scmp.ne.s32.totalorder %s45, %s46
    %p58 = scmp.eq.s32.totalorder %s15, 1
    %p59 = por %p57, %p58
    %p61 = scmp.ne.s32.totalorder %s46, %s60
    %p62 = scmp.eq.s32.totalorder %s15, 0
    %p63 = por %p61, %p62
    %s65 = sadd.s32 %s64, 1
    %p68 = scmp.eq.s32.totalorder %s9, 1
    %p69 = scmp.ne.s32.totalorder %s64, %s66
    %p70 = scmp.eq.s32.totalorder %s9, 0
    %p71 = por %p69, %p70
    %p72 = scmp.ne.s32.totalorder %s64, %s66
    %p73 = scmp.eq.s32.totalorder %s14, 1
    %p74 = por %p72, %p73
    %p75 = scmp.ne.s32.totalorder %s66, %s67
    %p76 = scmp.eq.s32.totalorder %s14, 0
    %p77 = por %p75, %p76
    %p78 = scmp.ne.s32.totalorder %s66, %s67
    %p79 = scmp.eq.s32.totalorder %s15, 1
    %p80 = por %p78, %p79
    %p82 = scmp.ne.s32.totalorder %s67, %s81
    %p83 = scmp.eq.s32.totalorder %s15, 0
    %p84 = por %p82, %p83
    %s85 = ssub.s32 %s9, %s16
    %p86 = scmp.eq.s32.totalorder %s85, 0
    %s88 = sadd.s32 %s87, 1
    %s89 = scalar_select %p86, %s87, %s88
    %p92 = pneg %p86
    %p93 = scmp.eq.s32.totalorder %s9, 1
    %p94 = por %p92, %p93
    %p95 = scmp.ne.s32.totalorder %s87, %s90
    %p96 = scmp.eq.s32.totalorder %s9, 0
    %p97 = por %p95, %p96
    %p98 = scmp.ne.s32.totalorder %s87, %s90
    %p99 = scmp.eq.s32.totalorder %s14, 1
    %p100 = por %p98, %p99
    %p101 = scmp.ne.s32.totalorder %s90, %s91
    %p102 = scmp.eq.s32.totalorder %s14, 0
    %p103 = por %p101, %p102
    %p104 = scmp.ne.s32.totalorder %s90, %s91
    %p105 = scmp.eq.s32.totalorder %s15, 1
    %p106 = por %p104, %p105
    %p108 = scmp.ne.s32.totalorder %s91, %s107
    %p109 = scmp.eq.s32.totalorder %s15, 0
    %p110 = por %p108, %p109
    %p111 = scmp.le.s32.totalorder 1, %s9
    %p112 = scmp.lt.s32.totalorder %s9, 3
    %p113 = pnand %p111, %p112
    %p114 = pneg %p113
    // Predicated region
    $region9: #{decoder_forward.7} parent=5 // pred_check
      _
    $region10: #{decoder_forward.7} parent=5 // pred_check_branch
      %116 = sbr.rel (%p113) target = $region12
    $region11: #{decoder_forward.7} parent=5 // pred_region
      %s117 = ssub.s32 %s9, 1
      // Predicated region
      $region13: #{decoder_forward.7} parent=11 // pred_check
        %p118 = pneg %p56
      $region14: #{decoder_forward.7} parent=11 // pred_check_branch
        %120 = sbr.rel (%p118) target = $region16
      $region15: #{decoder_forward.7} parent=11 // pred_region
        _
      $region16: #{decoder_forward.7} parent=11 // pred_fallthru
        _
      // Predicated region
      $region17: #{decoder_forward.7} parent=11 // pred_check
        %p121 = pneg %p77
      $region18: #{decoder_forward.7} parent=11 // pred_check_branch
        %123 = sbr.rel (%p121) target = $region20
      $region19: #{decoder_forward.7} parent=11 // pred_region
        _
      $region20: #{decoder_forward.7} parent=11 // pred_fallthru
        _
    $region12: #{decoder_forward.7} parent=5 // pred_fallthru
      _
    %p124 = scmp.lt.s32.totalorder %s9, 2
    // Predicated region
    $region21: #{decoder_forward.7} parent=5 // pred_check
      %p125 = pneg %p124
    $region22: #{decoder_forward.7} parent=5 // pred_check_branch
      %127 = sbr.rel (%p125) target = $region24
    $region23: #{decoder_forward.7} parent=5 // pred_region
      // Predicated region
      $region25: #{decoder_forward.7} parent=23 // pred_check
        %p128 = pneg %p29
      $region26: #{decoder_forward.7} parent=23 // pred_check_branch
        %130 = sbr.rel (%p128) target = $region28
      $region27: #{decoder_forward.7} parent=23 // pred_region
        %s131 = smul.u32 32, %s9
        %p132 = scmp.lt.s32.totalorder %s131, 63
        %s133 = scalar_select %p132, %s131, 63
        %s134 = smul.addr %s133, 8
        %s135 = scalar_lea.vmem %s0, %s134
        %s136 = smul.u32 32, %s9
      $region28: #{decoder_forward.7} parent=23 // pred_fallthru
        _
    $region24: #{decoder_forward.7} parent=5 // pred_fallthru
      _
    %p137 = scmp.le.s32.totalorder 1, %s9
    %p138 = scmp.lt.s32.totalorder %s9, 3
    %p139 = pnand %p137, %p138
    %p140 = pneg %p139
    // Predicated region
    $region29: #{decoder_forward.7} parent=5 // pred_check
      _
    $region30: #{decoder_forward.7} parent=5 // pred_check_branch
      %142 = sbr.rel (%p139) target = $region32
    $region31: #{decoder_forward.7} parent=5 // pred_region
      %s143 = ssub.s32 %s9, 1
      %s144 = smul.u32 32, %s14
      %p145 = scmp.lt.s32.totalorder %s144, 63
      %s146 = scalar_select %p145, %s144, 63
      %s147 = smul.addr %s146, 8
      %s148 = scalar_lea.vmem %s0, %s147
      %p149 = pneg %p35
      %p150 = pneg %p32
      %p151 = pneg %p56
      %p152 = pneg %p53
      %p153 = pneg %p77
      %p154 = pneg %p74
      %p155 = pneg %p103
      %p156 = pneg %p100
      %s157 = smul.u32 32, %s14
      %p158 = scmp.lt.s32.totalorder %s157, 63
      %s159 = scalar_select %p158, %s157, 63
      %s160 = smul.addr %s159, 8
      %s161 = scalar_lea.vmem %s3, %s160
      %s162 = smul.u32 32, %s14
      %p163 = scmp.lt.s32.totalorder %s162, 63
      %s164 = scalar_select %p163, %s162, 63
      %s165 = smul.addr %s164, 8
      %s166 = scalar_lea.vmem %s0, %s165
      %s167 = smul.u32 32, %s14
      %s168 = smul.u32 32, %s14
      %p169 = scmp.lt.s32.totalorder %s168, 63
      %s170 = scalar_select %p169, %s168, 63
      %s171 = smul.addr %s170, 8
      %s172 = scalar_lea.vmem %s3, %s171
      %s173 = smul.u32 32, %s14
      %v174 = vld [vmem:[%s166] sm:$0xff]
      %v175 = vld [vmem:[%s166 + $0x8] sm:$0xff]
      %v176 = vld [vmem:[%s166 + $0x10] sm:$0xff]
      %v177 = vld [vmem:[%s166 + $0x18] sm:$0xff]
      %v178 = vld [vmem:[%s166 + $0x20] sm:$0xff]
      %v179 = vld [vmem:[%s166 + $0x28] sm:$0xff]
      %v180 = vld [vmem:[%s166 + $0x30] sm:$0xff]
      %v181 = vld [vmem:[%s166 + $0x38] sm:$0xff]
      %v182 = vld [vmem:[%s166 + $0x40] sm:$0xff]
      %v183 = vld [vmem:[%s166 + $0x48] sm:$0xff]
      %v184 = vld [vmem:[%s166 + $0x50] sm:$0xff]
      %v185 = vld [vmem:[%s166 + $0x58] sm:$0xff]
      %v186 = vld [vmem:[%s166 + $0x60] sm:$0xff]
      %v187 = vld [vmem:[%s166 + $0x68] sm:$0xff]
      %v188 = vld [vmem:[%s166 + $0x70] sm:$0xff]
      %v189 = vld [vmem:[%s166 + $0x78] sm:$0xff]
      %v190 = vld [vmem:[%s166 + $0x80] sm:$0xff]
      %v191 = vld [vmem:[%s166 + $0x88] sm:$0xff]
      %v192 = vld [vmem:[%s166 + $0x90] sm:$0xff]
      %v193 = vld [vmem:[%s166 + $0x98] sm:$0xff]
      %v194 = vld [vmem:[%s166 + $0xa0] sm:$0xff]
      %v195 = vld [vmem:[%s166 + $0xa8] sm:$0xff]
      %v196 = vld [vmem:[%s166 + $0xb0] sm:$0xff]
      %v197 = vld [vmem:[%s166 + $0xb8] sm:$0xff]
      %v198 = vld [vmem:[%s166 + $0xc0] sm:$0xff]
      %v199 = vld [vmem:[%s166 + $0xc8] sm:$0xff]
      %v200 = vld [vmem:[%s166 + $0xd0] sm:$0xff]
      %v201 = vld [vmem:[%s166 + $0xd8] sm:$0xff]
      %v202 = vld [vmem:[%s166 + $0xe0] sm:$0xff]
      %v203 = vld [vmem:[%s166 + $0xe8] sm:$0xff]
      %v204 = vld [vmem:[%s166 + $0xf0] sm:$0xff]
      %v205 = vld [vmem:[%s166 + $0xf8] sm:$0xff]
      %v206 = vld [vmem:[%s1] sm:$0x1]
      %v208 = vperm.slane %v206, 0
      %v210 = vmul.f32 %v174, %v208
      %v211 = vmul.f32 %v175, %v208
      %v212 = vmul.f32 %v176, %v208
      %v213 = vmul.f32 %v177, %v208
      %v214 = vmul.f32 %v178, %v208
      %v215 = vmul.f32 %v179, %v208
      %v216 = vmul.f32 %v180, %v208
      %v217 = vmul.f32 %v181, %v208
      %v218 = vmul.f32 %v182, %v208
      %v219 = vmul.f32 %v183, %v208
      %v220 = vmul.f32 %v184, %v208
      %v221 = vmul.f32 %v185, %v208
      %v222 = vmul.f32 %v186, %v208
      %v223 = vmul.f32 %v187, %v208
      %v224 = vmul.f32 %v188, %v208
      %v225 = vmul.f32 %v189, %v208
      %v226 = vmul.f32 %v190, %v208
      %v227 = vmul.f32 %v191, %v208
      %v228 = vmul.f32 %v192, %v208
      %v229 = vmul.f32 %v193, %v208
      %v230 = vmul.f32 %v194, %v208
      %v231 = vmul.f32 %v195, %v208
      %v232 = vmul.f32 %v196, %v208
      %v233 = vmul.f32 %v197, %v208
      %v234 = vmul.f32 %v198, %v208
      %v235 = vmul.f32 %v199, %v208
      %v236 = vmul.f32 %v200, %v208
      %v237 = vmul.f32 %v201, %v208
      %v238 = vmul.f32 %v202, %v208
      %v239 = vmul.f32 %v203, %v208
      %v240 = vmul.f32 %v204, %v208
      %v241 = vmul.f32 %v205, %v208
      %v242 = vld [vmem:[%s2] sm:$0x1]
      %v244 = vperm.slane %v242, 0
      %v246 = vadd.f32 %v210, %v244
      %v247 = vadd.f32 %v211, %v244
      %v248 = vadd.f32 %v212, %v244
      %v249 = vadd.f32 %v213, %v244
      %v250 = vadd.f32 %v214, %v244
      %v251 = vadd.f32 %v215, %v244
      %v252 = vadd.f32 %v216, %v244
      %v253 = vadd.f32 %v217, %v244
      %v254 = vadd.f32 %v218, %v244
      %v255 = vadd.f32 %v219, %v244
      %v256 = vadd.f32 %v220, %v244
      %v257 = vadd.f32 %v221, %v244
      %v258 = vadd.f32 %v222, %v244
      %v259 = vadd.f32 %v223, %v244
      %v260 = vadd.f32 %v224, %v244
      %v261 = vadd.f32 %v225, %v244
      %v262 = vadd.f32 %v226, %v244
      %v263 = vadd.f32 %v227, %v244
      %v264 = vadd.f32 %v228, %v244
      %v265 = vadd.f32 %v229, %v244
      %v266 = vadd.f32 %v230, %v244
      %v267 = vadd.f32 %v231, %v244
      %v268 = vadd.f32 %v232, %v244
      %v269 = vadd.f32 %v233, %v244
      %v270 = vadd.f32 %v234, %v244
      %v271 = vadd.f32 %v235, %v244
      %v272 = vadd.f32 %v236, %v244
      %v273 = vadd.f32 %v237, %v244
      %v274 = vadd.f32 %v238, %v244
      %v275 = vadd.f32 %v239, %v244
      %v276 = vadd.f32 %v240, %v244
      %v277 = vadd.f32 %v241, %v244
      %v278 = vmax.f32 %v246, 0.0
      %v279 = vmax.f32 %v247, 0.0
      %v280 = vmax.f32 %v248, 0.0
      %v281 = vmax.f32 %v249, 0.0
      %v282 = vmax.f32 %v250, 0.0
      %v283 = vmax.f32 %v251, 0.0
      %v284 = vmax.f32 %v252, 0.0
      %v285 = vmax.f32 %v253, 0.0
      %v286 = vmax.f32 %v254, 0.0
      %v287 = vmax.f32 %v255, 0.0
      %v288 = vmax.f32 %v256, 0.0
      %v289 = vmax.f32 %v257, 0.0
      %v290 = vmax.f32 %v258, 0.0
      %v291 = vmax.f32 %v259, 0.0
      %v292 = vmax.f32 %v260, 0.0
      %v293 = vmax.f32 %v261, 0.0
      %v294 = vmax.f32 %v262, 0.0
      %v295 = vmax.f32 %v263, 0.0
      %v296 = vmax.f32 %v264, 0.0
      %v297 = vmax.f32 %v265, 0.0
      %v298 = vmax.f32 %v266, 0.0
      %v299 = vmax.f32 %v267, 0.0
      %v300 = vmax.f32 %v268, 0.0
      %v301 = vmax.f32 %v269, 0.0
      %v302 = vmax.f32 %v270, 0.0
      %v303 = vmax.f32 %v271, 0.0
      %v304 = vmax.f32 %v272, 0.0
      %v305 = vmax.f32 %v273, 0.0
      %v306 = vmax.f32 %v274, 0.0
      %v307 = vmax.f32 %v275, 0.0
      %v308 = vmax.f32 %v276, 0.0
      %v309 = vmax.f32 %v277, 0.0
      %vm310 = vcmask 31744
      %311 = vst.msk [vmem:[%s172] sm:$0xff] %vm310, %v278
      %312 = vst.msk [vmem:[%s172 + $0x8] sm:$0xff] %vm310, %v279
      %313 = vst.msk [vmem:[%s172 + $0x10] sm:$0xff] %vm310, %v280
      %314 = vst.msk [vmem:[%s172 + $0x18] sm:$0xff] %vm310, %v281
      %315 = vst.msk [vmem:[%s172 + $0x20] sm:$0xff] %vm310, %v282
      %316 = vst.msk [vmem:[%s172 + $0x28] sm:$0xff] %vm310, %v283
      %317 = vst.msk [vmem:[%s172 + $0x30] sm:$0xff] %vm310, %v284
      %318 = vst.msk [vmem:[%s172 + $0x38] sm:$0xff] %vm310, %v285
      %319 = vst.msk [vmem:[%s172 + $0x40] sm:$0xff] %vm310, %v286
      %320 = vst.msk [vmem:[%s172 + $0x48] sm:$0xff] %vm310, %v287
      %321 = vst.msk [vmem:[%s172 + $0x50] sm:$0xff] %vm310, %v288
      %322 = vst.msk [vmem:[%s172 + $0x58] sm:$0xff] %vm310, %v289
      %323 = vst.msk [vmem:[%s172 + $0x60] sm:$0xff] %vm310, %v290
      %324 = vst.msk [vmem:[%s172 + $0x68] sm:$0xff] %vm310, %v291
      %325 = vst.msk [vmem:[%s172 + $0x70] sm:$0xff] %vm310, %v292
      %326 = vst.msk [vmem:[%s172 + $0x78] sm:$0xff] %vm310, %v293
      %327 = vst.msk [vmem:[%s172 + $0x80] sm:$0xff] %vm310, %v294
      %328 = vst.msk [vmem:[%s172 + $0x88] sm:$0xff] %vm310, %v295
      %329 = vst.msk [vmem:[%s172 + $0x90] sm:$0xff] %vm310, %v296
      %330 = vst.msk [vmem:[%s172 + $0x98] sm:$0xff] %vm310, %v297
      %331 = vst.msk [vmem:[%s172 + $0xa0] sm:$0xff] %vm310, %v298
      %332 = vst.msk [vmem:[%s172 + $0xa8] sm:$0xff] %vm310, %v299
      %333 = vst.msk [vmem:[%s172 + $0xb0] sm:$0xff] %vm310, %v300
      %334 = vst.msk [vmem:[%s172 + $0xb8] sm:$0xff] %vm310, %v301
      %335 = vst.msk [vmem:[%s172 + $0xc0] sm:$0xff] %vm310, %v302
      %336 = vst.msk [vmem:[%s172 + $0xc8] sm:$0xff] %vm310, %v303
      %337 = vst.msk [vmem:[%s172 + $0xd0] sm:$0xff] %vm310, %v304
      %338 = vst.msk [vmem:[%s172 + $0xd8] sm:$0xff] %vm310, %v305
      %339 = vst.msk [vmem:[%s172 + $0xe0] sm:$0xff] %vm310, %v306
      %340 = vst.msk [vmem:[%s172 + $0xe8] sm:$0xff] %vm310, %v307
      %341 = vst.msk [vmem:[%s172 + $0xf0] sm:$0xff] %vm310, %v308
      %342 = vst.msk [vmem:[%s172 + $0xf8] sm:$0xff] %vm310, %v309
      %s343 = smul.u32 32, %s14
      %p344 = scmp.lt.s32.totalorder %s343, 63
      %s345 = scalar_select %p344, %s343, 63
      %s346 = smul.addr %s345, 8
      %s347 = scalar_lea.vmem %s3, %s346
      // Predicated region
      $region33: #{decoder_forward.7} parent=31 // pred_check
        %p348 = pneg %p100
      $region34: #{decoder_forward.7} parent=31 // pred_check_branch
        %350 = sbr.rel (%p348) target = $region36
      $region35: #{decoder_forward.7} parent=31 // pred_region
        %s351 = smul.u32 32, %s14
      $region36: #{decoder_forward.7} parent=31 // pred_fallthru
        _
    $region32: #{decoder_forward.7} parent=5 // pred_fallthru
      _
    %p352 = scmp.le.s32.totalorder 2, %s9
    // Predicated region
    $region37: #{decoder_forward.7} parent=5 // pred_check
      %p353 = pneg %p352
    $region38: #{decoder_forward.7} parent=5 // pred_check_branch
      %355 = sbr.rel (%p353) target = $region40
    $region39: #{decoder_forward.7} parent=5 // pred_region
      %s356 = ssub.s32 %s9, 2
      // Predicated region
      $region41: #{decoder_forward.7} parent=39 // pred_check
        %p357 = pneg %p106
      $region42: #{decoder_forward.7} parent=39 // pred_check_branch
        %359 = sbr.rel (%p357) target = $region44
      $region43: #{decoder_forward.7} parent=39 // pred_region
        %s360 = smul.u32 32, %s15
        %p361 = scmp.lt.s32.totalorder %s360, 63
        %s362 = scalar_select %p361, %s360, 63
        %s363 = smul.addr %s362, 8
        %s364 = scalar_lea.vmem %s3, %s363
      $region44: #{decoder_forward.7} parent=39 // pred_fallthru
        _
    $region40: #{decoder_forward.7} parent=5 // pred_fallthru
      _
  $region6: #{decoder_forward.7} parent=0 // loop_footer
    %s13 = sadd.s32 1, %s9
  $region7: #{decoder_forward.7} parent=0 // loop_footer_branch
    %8 = sbr.rel target = $region3
  $region8: #{decoder_forward.7} parent=0 // loop_exit
    _

// kernel: decoder_forward.6
$region0: #{decoder_forward.6}
  #allocation0 [shape = 'u32[]', space=smem, size = 0x4, offset = 0x4, fixed_abs, tag = 'smem constant byte address 0x4 - core index']
  #allocation1 [shape = 'u32[72,128]{1,0:T(1,128)}', space=vmem, size = 0x9000, scoped, tag = 'internal scratch']
  #allocation2 [shape = 'f32[18,18,4]{2,1,0:T(8,128)}', space=vmem, size = 0x36000, scoped, tag = 'scratch operand']
  %s0 = inlined_call_operand.vmem [shape: f32[2,16,16,4], index: 0, kind: input, shape index: {}]
  %s1 = inlined_call_operand.vmem [shape: bf16[9,4,4], index: 1, kind: input, shape index: {}]
  %s2 = inlined_call_operand.vmem [shape: f32[1,4], index: 2, kind: input, shape index: {}]
  %s3 = inlined_call_operand.vmem [shape: f32[1,4], index: 3, kind: input, shape index: {}]
  %s4 = inlined_call_operand.vmem [shape: f32[2,16,16,4], index: 4, kind: output, shape index: {0}]
  %s5 = inlined_call_operand.vmem [shape: f32[2,2,4], index: 5, kind: output, shape index: {1}]
  %6 = xla_tuple %s4, %s5
  %s7 = sld [smem:[#allocation0]]
  $region57: #{decoder_forward.6} parent=0
    _
  %s9 = ssub.s32 1, %s7
  %s10 = scalar_select 0, %s9, %s7
  loop: start=0, step=1, limit=4
  $region2: #{decoder_forward.6} parent=0 // loop_pre_header
    _
  $region3: #{decoder_forward.6} parent=0 // loop_header
    %s12 = sphi 0, %s16
    %p13 = scmp.ge.s32.totalorder %s12, 4
    %s22 = sphi 0, %s24
    %s25 = sphi 0, %s22
    %s26 = sphi 0, %s25
    %s42 = sphi 0, %s26
    %s46 = sphi 0, %s46
    %s48 = sphi 0, %s46
    %s49 = sphi 0, %s48
    %s63 = sphi 0, %s49
    %s67 = sphi 0, %s67
    %s69 = sphi 0, %s67
    %s70 = sphi 0, %s69
    %s84 = sphi 0, %s70
    %s88 = sphi 0, %s88
    %s90 = sphi 0, %s88
    %s91 = sphi 0, %s90
    %s105 = sphi 0, %s91
    %s111 = sphi 0, %s113
    %s114 = sphi 0, %s111
    %s115 = sphi 0, %s114
    %s131 = sphi 0, %s115
    %s137 = sphi 0, %s139
    %s140 = sphi 0, %s137
    %s141 = sphi 0, %s140
    %s157 = sphi 0, %s141
  $region4: #{decoder_forward.6} parent=0 // loop_header_branch
    %15 = sbr.rel (%p13) target = $region8
  $region5: #{decoder_forward.6} parent=0 // loop_body
    %s17 = ssub.s32 %s12, 1
    %s18 = ssub.s32 %s12, 2
    %s19 = sadd.s32 %s12, 1
    %s20 = ssub.s32 %s12, %s19
    %p21 = scmp.eq.s32.totalorder %s20, 0
    %s23 = sadd.s32 %s22, 1
    %s24 = scalar_select %p21, %s22, %s23
    %p27 = pneg %p21
    %p28 = scmp.eq.s32.totalorder %s12, 1
    %p29 = por %p27, %p28
    %p30 = scmp.ne.s32.totalorder %s22, %s25
    %p31 = scmp.eq.s32.totalorder %s12, 0
    %p32 = por %p30, %p31
    %p33 = scmp.ne.s32.totalorder %s22, %s25
    %p34 = scmp.eq.s32.totalorder %s17, 1
    %p35 = por %p33, %p34
    %p36 = scmp.ne.s32.totalorder %s25, %s26
    %p37 = scmp.eq.s32.totalorder %s17, 0
    %p38 = por %p36, %p37
    %p39 = scmp.ne.s32.totalorder %s25, %s26
    %p40 = scmp.eq.s32.totalorder %s18, 1
    %p41 = por %p39, %p40
    %p43 = scmp.ne.s32.totalorder %s26, %s42
    %p44 = scmp.eq.s32.totalorder %s18, 0
    %p45 = por %p43, %p44
    %s47 = sadd.s32 %s46, 1
    %p50 = scmp.eq.s32.totalorder %s12, 1
    %p51 = scmp.ne.s32.totalorder %s46, %s48
    %p52 = scmp.eq.s32.totalorder %s12, 0
    %p53 = por %p51, %p52
    %p54 = scmp.ne.s32.totalorder %s46, %s48
    %p55 = scmp.eq.s32.totalorder %s17, 1
    %p56 = por %p54, %p55
    %p57 = scmp.ne.s32.totalorder %s48, %s49
    %p58 = scmp.eq.s32.totalorder %s17, 0
    %p59 = por %p57, %p58
    %p60 = scmp.ne.s32.totalorder %s48, %s49
    %p61 = scmp.eq.s32.totalorder %s18, 1
    %p62 = por %p60, %p61
    %p64 = scmp.ne.s32.totalorder %s49, %s63
    %p65 = scmp.eq.s32.totalorder %s18, 0
    %p66 = por %p64, %p65
    %s68 = sadd.s32 %s67, 1
    %p71 = scmp.eq.s32.totalorder %s12, 1
    %p72 = scmp.ne.s32.totalorder %s67, %s69
    %p73 = scmp.eq.s32.totalorder %s12, 0
    %p74 = por %p72, %p73
    %p75 = scmp.ne.s32.totalorder %s67, %s69
    %p76 = scmp.eq.s32.totalorder %s17, 1
    %p77 = por %p75, %p76
    %p78 = scmp.ne.s32.totalorder %s69, %s70
    %p79 = scmp.eq.s32.totalorder %s17, 0
    %p80 = por %p78, %p79
    %p81 = scmp.ne.s32.totalorder %s69, %s70
    %p82 = scmp.eq.s32.totalorder %s18, 1
    %p83 = por %p81, %p82
    %p85 = scmp.ne.s32.totalorder %s70, %s84
    %p86 = scmp.eq.s32.totalorder %s18, 0
    %p87 = por %p85, %p86
    %s89 = sadd.s32 %s88, 1
    %p92 = scmp.eq.s32.totalorder %s12, 1
    %p93 = scmp.ne.s32.totalorder %s88, %s90
    %p94 = scmp.eq.s32.totalorder %s12, 0
    %p95 = por %p93, %p94
    %p96 = scmp.ne.s32.totalorder %s88, %s90
    %p97 = scmp.eq.s32.totalorder %s17, 1
    %p98 = por %p96, %p97
    %p99 = scmp.ne.s32.totalorder %s90, %s91
    %p100 = scmp.eq.s32.totalorder %s17, 0
    %p101 = por %p99, %p100
    %p102 = scmp.ne.s32.totalorder %s90, %s91
    %p103 = scmp.eq.s32.totalorder %s18, 1
    %p104 = por %p102, %p103
    %p106 = scmp.ne.s32.totalorder %s91, %s105
    %p107 = scmp.eq.s32.totalorder %s18, 0
    %p108 = por %p106, %p107
    %s109 = ssub.s32 %s12, %s19
    %p110 = scmp.eq.s32.totalorder %s109, 0
    %s112 = sadd.s32 %s111, 1
    %s113 = scalar_select %p110, %s111, %s112
    %p116 = pneg %p110
    %p117 = scmp.eq.s32.totalorder %s12, 1
    %p118 = por %p116, %p117
    %p119 = scmp.ne.s32.totalorder %s111, %s114
    %p120 = scmp.eq.s32.totalorder %s12, 0
    %p121 = por %p119, %p120
    %p122 = scmp.ne.s32.totalorder %s111, %s114
    %p123 = scmp.eq.s32.totalorder %s17, 1
    %p124 = por %p122, %p123
    %p125 = scmp.ne.s32.totalorder %s114, %s115
    %p126 = scmp.eq.s32.totalorder %s17, 0
    %p127 = por %p125, %p126
    %p128 = scmp.ne.s32.totalorder %s114, %s115
    %p129 = scmp.eq.s32.totalorder %s18, 1
    %p130 = por %p128, %p129
    %p132 = scmp.ne.s32.totalorder %s115, %s131
    %p133 = scmp.eq.s32.totalorder %s18, 0
    %p134 = por %p132, %p133
    %s135 = ssub.s32 %s12, %s19
    %p136 = scmp.eq.s32.totalorder %s135, 0
    %s138 = sadd.s32 %s137, 1
    %s139 = scalar_select %p136, %s137, %s138
    %p142 = pneg %p136
    %p143 = scmp.eq.s32.totalorder %s12, 1
    %p144 = por %p142, %p143
    %p145 = scmp.ne.s32.totalorder %s137, %s140
    %p146 = scmp.eq.s32.totalorder %s12, 0
    %p147 = por %p145, %p146
    %p148 = scmp.ne.s32.totalorder %s137, %s140
    %p149 = scmp.eq.s32.totalorder %s17, 1
    %p150 = por %p148, %p149
    %p151 = scmp.ne.s32.totalorder %s140, %s141
    %p152 = scmp.eq.s32.totalorder %s17, 0
    %p153 = por %p151, %p152
    %p154 = scmp.ne.s32.totalorder %s140, %s141
    %p155 = scmp.eq.s32.totalorder %s18, 1
    %p156 = por %p154, %p155
    %p158 = scmp.ne.s32.totalorder %s141, %s157
    %p159 = scmp.eq.s32.totalorder %s18, 0
    %p160 = por %p158, %p159
    %p161 = scmp.le.s32.totalorder 1, %s12
    %p162 = scmp.lt.s32.totalorder %s12, 3
    %p163 = pnand %p161, %p162
    %p164 = pneg %p163
    // Predicated region
    $region9: #{decoder_forward.6} parent=5 // pred_check
      _
    $region10: #{decoder_forward.6} parent=5 // pred_check_branch
      %166 = sbr.rel (%p163) target = $region12
    $region11: #{decoder_forward.6} parent=5 // pred_region
      %s167 = ssub.s32 %s12, 1
      // Predicated region
      $region13: #{decoder_forward.6} parent=11 // pred_check
        %p168 = pneg %p59
      $region14: #{decoder_forward.6} parent=11 // pred_check_branch
        %170 = sbr.rel (%p168) target = $region16
      $region15: #{decoder_forward.6} parent=11 // pred_region
        _
      $region16: #{decoder_forward.6} parent=11 // pred_fallthru
        _
      // Predicated region
      $region17: #{decoder_forward.6} parent=11 // pred_check
        %p171 = pneg %p80
      $region18: #{decoder_forward.6} parent=11 // pred_check_branch
        %173 = sbr.rel (%p171) target = $region20
      $region19: #{decoder_forward.6} parent=11 // pred_region
        _
      $region20: #{decoder_forward.6} parent=11 // pred_fallthru
        _
      // Predicated region
      $region21: #{decoder_forward.6} parent=11 // pred_check
        %p174 = pneg %p101
      $region22: #{decoder_forward.6} parent=11 // pred_check_branch
        %176 = sbr.rel (%p174) target = $region24
      $region23: #{decoder_forward.6} parent=11 // pred_region
        _
      $region24: #{decoder_forward.6} parent=11 // pred_fallthru
        _
    $region12: #{decoder_forward.6} parent=5 // pred_fallthru
      _
    %p177 = scmp.lt.s32.totalorder %s12, 2
    // Predicated region
    $region25: #{decoder_forward.6} parent=5 // pred_check
      %p178 = pneg %p177
    $region26: #{decoder_forward.6} parent=5 // pred_check_branch
      %180 = sbr.rel (%p178) target = $region28
    $region27: #{decoder_forward.6} parent=5 // pred_region
      // Predicated region
      $region29: #{decoder_forward.6} parent=27 // pred_check
        %p181 = pneg %p32
      $region30: #{decoder_forward.6} parent=27 // pred_check_branch
        %183 = sbr.rel (%p181) target = $region32
      $region31: #{decoder_forward.6} parent=27 // pred_region
        %p184 = scmp.lt.s32.totalorder %s12, 1
        %s185 = scalar_select %p184, %s12, 1
        %s186 = smul.addr %s185, 32
        %s187 = smul.addr %s186, 8
        %s188 = scalar_lea.vmem %s0, %s187
      $region32: #{decoder_forward.6} parent=27 // pred_fallthru
        _
    $region28: #{decoder_forward.6} parent=5 // pred_fallthru
      _
    %p189 = scmp.le.s32.totalorder 1, %s12
    %p190 = scmp.lt.s32.totalorder %s12, 3
    %p191 = pnand %p189, %p190
    %p192 = pneg %p191
    // Predicated region
    $region33: #{decoder_forward.6} parent=5 // pred_check
      _
    $region34: #{decoder_forward.6} parent=5 // pred_check_branch
      %194 = sbr.rel (%p191) target = $region36
    $region35: #{decoder_forward.6} parent=5 // pred_region
      %s195 = ssub.s32 %s12, 1
      %p196 = scmp.lt.s32.totalorder %s17, 1
      %s197 = scalar_select %p196, %s17, 1
      %s198 = smul.addr %s197, 32
      %s199 = smul.addr %s198, 8
      %s200 = scalar_lea.vmem %s0, %s199
      %p201 = pneg %p38
      %p202 = pneg %p35
      %p203 = pneg %p59
      %p204 = pneg %p56
      %p205 = pneg %p80
      %p206 = pneg %p77
      %p207 = pneg %p101
      %p208 = pneg %p98
      %p209 = pneg %p127
      %p210 = pneg %p124
      %p211 = scmp.lt.s32.totalorder %s17, 1
      %s212 = scalar_select %p211, %s17, 1
      %s213 = smul.addr %s212, 32
      %s214 = smul.addr %s213, 8
      %s215 = scalar_lea.vmem %s4, %s214
      %p216 = pneg %p153
      %p217 = pneg %p150
      %p218 = scmp.lt.s32.totalorder %s17, 1
      %s219 = scalar_select %p218, %s17, 1
      %s220 = smul.addr %s219, 2
      %s221 = scalar_lea.vmem %s5, %s220
      %p222 = scmp.lt.s32.totalorder %s17, 1
      %s223 = scalar_select %p222, %s17, 1
      %s224 = smul.addr %s223, 32
      %s225 = smul.addr %s224, 8
      %s226 = scalar_lea.vmem %s0, %s225
      %p227 = scmp.lt.s32.totalorder %s17, 1
      %s228 = scalar_select %p227, %s17, 1
      %s229 = smul.addr %s228, 32
      %s230 = smul.addr %s229, 8
      %s231 = scalar_lea.vmem %s4, %s230
      %p232 = scmp.lt.s32.totalorder %s17, 1
      %s233 = scalar_select %p232, %s17, 1
      %s234 = smul.addr %s233, 2
      %s235 = scalar_lea.vmem %s5, %s234
      %vm237 = vcmask 31744
      %238 = vst.msk [vmem:[#allocation2] sm:$0xff] %vm237, 0.0
      %239 = vst.msk [vmem:[#allocation2 + $0x8] sm:$0xff] %vm237, 0.0
      %vm240 = vcmask 25600
      %241 = vst.msk [vmem:[#allocation2 + $0x10] sm:$0x3] %vm240, 0.0
      %242 = vst.msk [vmem:[#allocation2 + $0x18] sm:$0xff] %vm237, 0.0
      %243 = vst.msk [vmem:[#allocation2 + $0x20] sm:$0xff] %vm237, 0.0
      %244 = vst.msk [vmem:[#allocation2 + $0x28] sm:$0x3] %vm240, 0.0
      %245 = vst.msk [vmem:[#allocation2 + $0x30] sm:$0xff] %vm237, 0.0
      %246 = vst.msk [vmem:[#allocation2 + $0x38] sm:$0xff] %vm237, 0.0
      %247 = vst.msk [vmem:[#allocation2 + $0x40] sm:$0x3] %vm240, 0.0
      %248 = vst.msk [vmem:[#allocation2 + $0x48] sm:$0xff] %vm237, 0.0
      %249 = vst.msk [vmem:[#allocation2 + $0x50] sm:$0xff] %vm237, 0.0
      %250 = vst.msk [vmem:[#allocation2 + $0x58] sm:$0x3] %vm240, 0.0
      %251 = vst.msk [vmem:[#allocation2 + $0x60] sm:$0xff] %vm237, 0.0
      %252 = vst.msk [vmem:[#allocation2 + $0x68] sm:$0xff] %vm237, 0.0
      %253 = vst.msk [vmem:[#allocation2 + $0x70] sm:$0x3] %vm240, 0.0
      %254 = vst.msk [vmem:[#allocation2 + $0x78] sm:$0xff] %vm237, 0.0
      %255 = vst.msk [vmem:[#allocation2 + $0x80] sm:$0xff] %vm237, 0.0
      %256 = vst.msk [vmem:[#allocation2 + $0x88] sm:$0x3] %vm240, 0.0
      %257 = vst.msk [vmem:[#allocation2 + $0x90] sm:$0xff] %vm237, 0.0
      %258 = vst.msk [vmem:[#allocation2 + $0x98] sm:$0xff] %vm237, 0.0
      %259 = vst.msk [vmem:[#allocation2 + $0xa0] sm:$0x3] %vm240, 0.0
      %260 = vst.msk [vmem:[#allocation2 + $0xa8] sm:$0xff] %vm237, 0.0
      %261 = vst.msk [vmem:[#allocation2 + $0xb0] sm:$0xff] %vm237, 0.0
      %262 = vst.msk [vmem:[#allocation2 + $0xb8] sm:$0x3] %vm240, 0.0
      %263 = vst.msk [vmem:[#allocation2 + $0xc0] sm:$0xff] %vm237, 0.0
      %264 = vst.msk [vmem:[#allocation2 + $0xc8] sm:$0xff] %vm237, 0.0
      %265 = vst.msk [vmem:[#allocation2 + $0xd0] sm:$0x3] %vm240, 0.0
      %266 = vst.msk [vmem:[#allocation2 + $0xd8] sm:$0xff] %vm237, 0.0
      %267 = vst.msk [vmem:[#allocation2 + $0xe0] sm:$0xff] %vm237, 0.0
      %268 = vst.msk [vmem:[#allocation2 + $0xe8] sm:$0x3] %vm240, 0.0
      %269 = vst.msk [vmem:[#allocation2 + $0xf0] sm:$0xff] %vm237, 0.0
      %270 = vst.msk [vmem:[#allocation2 + $0xf8] sm:$0xff] %vm237, 0.0
      %271 = vst.msk [vmem:[#allocation2 + $0x100] sm:$0x3] %vm240, 0.0
      %272 = vst.msk [vmem:[#allocation2 + $0x108] sm:$0xff] %vm237, 0.0
      %273 = vst.msk [vmem:[#allocation2 + $0x110] sm:$0xff] %vm237, 0.0
      %274 = vst.msk [vmem:[#allocation2 + $0x118] sm:$0x3] %vm240, 0.0
      %275 = vst.msk [vmem:[#allocation2 + $0x120] sm:$0xff] %vm237, 0.0
      %276 = vst.msk [vmem:[#allocation2 + $0x128] sm:$0xff] %vm237, 0.0
      %277 = vst.msk [vmem:[#allocation2 + $0x130] sm:$0x3] %vm240, 0.0
      %278 = vst.msk [vmem:[#allocation2 + $0x138] sm:$0xff] %vm237, 0.0
      %279 = vst.msk [vmem:[#allocation2 + $0x140] sm:$0xff] %vm237, 0.0
      %280 = vst.msk [vmem:[#allocation2 + $0x148] sm:$0x3] %vm240, 0.0
      %281 = vst.msk [vmem:[#allocation2 + $0x150] sm:$0xff] %vm237, 0.0
      %282 = vst.msk [vmem:[#allocation2 + $0x158] sm:$0xff] %vm237, 0.0
      %283 = vst.msk [vmem:[#allocation2 + $0x160] sm:$0x3] %vm240, 0.0
      %284 = vst.msk [vmem:[#allocation2 + $0x168] sm:$0xff] %vm237, 0.0
      %285 = vst.msk [vmem:[#allocation2 + $0x170] sm:$0xff] %vm237, 0.0
      %286 = vst.msk [vmem:[#allocation2 + $0x178] sm:$0x3] %vm240, 0.0
      %287 = vst.msk [vmem:[#allocation2 + $0x180] sm:$0xff] %vm237, 0.0
      %288 = vst.msk [vmem:[#allocation2 + $0x188] sm:$0xff] %vm237, 0.0
      %289 = vst.msk [vmem:[#allocation2 + $0x190] sm:$0x3] %vm240, 0.0
      %290 = vst.msk [vmem:[#allocation2 + $0x198] sm:$0xff] %vm237, 0.0
      %291 = vst.msk [vmem:[#allocation2 + $0x1a0] sm:$0xff] %vm237, 0.0
      %292 = vst.msk [vmem:[#allocation2 + $0x1a8] sm:$0x3] %vm240, 0.0
      %v293 = vld [vmem:[%s226] sm:$0xff]
      %v294 = vld [vmem:[%s226 + $0x8] sm:$0xff]
      %v295 = vld [vmem:[%s226 + $0x10] sm:$0xff]
      %v296 = vld [vmem:[%s226 + $0x18] sm:$0xff]
      %v297 = vld [vmem:[%s226 + $0x20] sm:$0xff]
      %v298 = vld [vmem:[%s226 + $0x28] sm:$0xff]
      %v299 = vld [vmem:[%s226 + $0x30] sm:$0xff]
      %v300 = vld [vmem:[%s226 + $0x38] sm:$0xff]
      %v301 = vld [vmem:[%s226 + $0x40] sm:$0xff]
      %v302 = vld [vmem:[%s226 + $0x48] sm:$0xff]
      %v303 = vld [vmem:[%s226 + $0x50] sm:$0xff]
      %v304 = vld [vmem:[%s226 + $0x58] sm:$0xff]
      %v305 = vld [vmem:[%s226 + $0x60] sm:$0xff]
      %v306 = vld [vmem:[%s226 + $0x68] sm:$0xff]
      %v307 = vld [vmem:[%s226 + $0x70] sm:$0xff]
      %v308 = vld [vmem:[%s226 + $0x78] sm:$0xff]
      %v309 = vld [vmem:[%s226 + $0x80] sm:$0xff]
      %v310 = vld [vmem:[%s226 + $0x88] sm:$0xff]
      %v311 = vld [vmem:[%s226 + $0x90] sm:$0xff]
      %v312 = vld [vmem:[%s226 + $0x98] sm:$0xff]
      %v313 = vld [vmem:[%s226 + $0xa0] sm:$0xff]
      %v314 = vld [vmem:[%s226 + $0xa8] sm:$0xff]
      %v315 = vld [vmem:[%s226 + $0xb0] sm:$0xff]
      %v316 = vld [vmem:[%s226 + $0xb8] sm:$0xff]
      %v317 = vld [vmem:[%s226 + $0xc0] sm:$0xff]
      %v318 = vld [vmem:[%s226 + $0xc8] sm:$0xff]
      %v319 = vld [vmem:[%s226 + $0xd0] sm:$0xff]
      %v320 = vld [vmem:[%s226 + $0xd8] sm:$0xff]
      %v321 = vld [vmem:[%s226 + $0xe0] sm:$0xff]
      %v322 = vld [vmem:[%s226 + $0xe8] sm:$0xff]
      %v323 = vld [vmem:[%s226 + $0xf0] sm:$0xff]
      %v324 = vld [vmem:[%s226 + $0xf8] sm:$0xff]
      %v325 = vld [vmem:[%s2] sm:$0x1]
      %v327 = vperm.slane %v325, 0
      %v329 = vmul.f32 %v293, %v327
      %v330 = vmul.f32 %v294, %v327
      %v331 = vmul.f32 %v295, %v327
      %v332 = vmul.f32 %v296, %v327
      %v333 = vmul.f32 %v297, %v327
      %v334 = vmul.f32 %v298, %v327
      %v335 = vmul.f32 %v299, %v327
      %v336 = vmul.f32 %v300, %v327
      %v337 = vmul.f32 %v301, %v327
      %v338 = vmul.f32 %v302, %v327
      %v339 = vmul.f32 %v303, %v327
      %v340 = vmul.f32 %v304, %v327
      %v341 = vmul.f32 %v305, %v327
      %v342 = vmul.f32 %v306, %v327
      %v343 = vmul.f32 %v307, %v327
      %v344 = vmul.f32 %v308, %v327
      %v345 = vmul.f32 %v309, %v327
      %v346 = vmul.f32 %v310, %v327
      %v347 = vmul.f32 %v311, %v327
      %v348 = vmul.f32 %v312, %v327
      %v349 = vmul.f32 %v313, %v327
      %v350 = vmul.f32 %v314, %v327
      %v351 = vmul.f32 %v315, %v327
      %v352 = vmul.f32 %v316, %v327
      %v353 = vmul.f32 %v317, %v327
      %v354 = vmul.f32 %v318, %v327
      %v355 = vmul.f32 %v319, %v327
      %v356 = vmul.f32 %v320, %v327
      %v357 = vmul.f32 %v321, %v327
      %v358 = vmul.f32 %v322, %v327
      %v359 = vmul.f32 %v323, %v327
      %v360 = vmul.f32 %v324, %v327
      %v361 = vld [vmem:[%s3] sm:$0x1]
      %v363 = vperm.slane %v361, 0
      %v365 = vadd.f32 %v329, %v363
      %v366 = vadd.f32 %v330, %v363
      %v367 = vadd.f32 %v331, %v363
      %v368 = vadd.f32 %v332, %v363
      %v369 = vadd.f32 %v333, %v363
      %v370 = vadd.f32 %v334, %v363
      %v371 = vadd.f32 %v335, %v363
      %v372 = vadd.f32 %v336, %v363
      %v373 = vadd.f32 %v337, %v363
      %v374 = vadd.f32 %v338, %v363
      %v375 = vadd.f32 %v339, %v363
      %v376 = vadd.f32 %v340, %v363
      %v377 = vadd.f32 %v341, %v363
      %v378 = vadd.f32 %v342, %v363
      %v379 = vadd.f32 %v343, %v363
      %v380 = vadd.f32 %v344, %v363
      %v381 = vadd.f32 %v345, %v363
      %v382 = vadd.f32 %v346, %v363
      %v383 = vadd.f32 %v347, %v363
      %v384 = vadd.f32 %v348, %v363
      %v385 = vadd.f32 %v349, %v363
      %v386 = vadd.f32 %v350, %v363
      %v387 = vadd.f32 %v351, %v363
      %v388 = vadd.f32 %v352, %v363
      %v389 = vadd.f32 %v353, %v363
      %v390 = vadd.f32 %v354, %v363
      %v391 = vadd.f32 %v355, %v363
      %v392 = vadd.f32 %v356, %v363
      %v393 = vadd.f32 %v357, %v363
      %v394 = vadd.f32 %v358, %v363
      %v395 = vadd.f32 %v359, %v363
      %v396 = vadd.f32 %v360, %v363
      %v397 = vmax.f32 %v365, 0.0
      %v398 = vmax.f32 %v366, 0.0
      %v399 = vmax.f32 %v367, 0.0
      %v400 = vmax.f32 %v368, 0.0
      %v401 = vmax.f32 %v369, 0.0
      %v402 = vmax.f32 %v370, 0.0
      %v403 = vmax.f32 %v371, 0.0
      %v404 = vmax.f32 %v372, 0.0
      %v405 = vmax.f32 %v373, 0.0
      %v406 = vmax.f32 %v374, 0.0
      %v407 = vmax.f32 %v375, 0.0
      %v408 = vmax.f32 %v376, 0.0
      %v409 = vmax.f32 %v377, 0.0
      %v410 = vmax.f32 %v378, 0.0
      %v411 = vmax.f32 %v379, 0.0
      %v412 = vmax.f32 %v380, 0.0
      %v413 = vmax.f32 %v381, 0.0
      %v414 = vmax.f32 %v382, 0.0
      %v415 = vmax.f32 %v383, 0.0
      %v416 = vmax.f32 %v384, 0.0
      %v417 = vmax.f32 %v385, 0.0
      %v418 = vmax.f32 %v386, 0.0
      %v419 = vmax.f32 %v387, 0.0
      %v420 = vmax.f32 %v388, 0.0
      %v421 = vmax.f32 %v389, 0.0
      %v422 = vmax.f32 %v390, 0.0
      %v423 = vmax.f32 %v391, 0.0
      %v424 = vmax.f32 %v392, 0.0
      %v425 = vmax.f32 %v393, 0.0
      %v426 = vmax.f32 %v394, 0.0
      %v427 = vmax.f32 %v395, 0.0
      %v428 = vmax.f32 %v396, 0.0
      %s429 = scalar_lea.vmem [#allocation2], 24
      %430 = vst.msk [vmem:[%s429 + $0x1] sm:$0xff] %vm237, %v397
      %431 = vst.msk [vmem:[%s429 + $0x9] sm:$0xff] %vm237, %v398
      %432 = vst.msk [vmem:[%s429 + $0x19] sm:$0xff] %vm237, %v399
      %433 = vst.msk [vmem:[%s429 + $0x21] sm:$0xff] %vm237, %v400
      %434 = vst.msk [vmem:[%s429 + $0x31] sm:$0xff] %vm237, %v401
      %435 = vst.msk [vmem:[%s429 + $0x39] sm:$0xff] %vm237, %v402
      %436 = vst.msk [vmem:[%s429 + $0x49] sm:$0xff] %vm237, %v403
      %437 = vst.msk [vmem:[%s429 + $0x51] sm:$0xff] %vm237, %v404
      %438 = vst.msk [vmem:[%s429 + $0x61] sm:$0xff] %vm237, %v405
      %439 = vst.msk [vmem:[%s429 + $0x69] sm:$0xff] %vm237, %v406
      %440 = vst.msk [vmem:[%s429 + $0x79] sm:$0xff] %vm237, %v407
      %441 = vst.msk [vmem:[%s429 + $0x81] sm:$0xff] %vm237, %v408
      %442 = vst.msk [vmem:[%s429 + $0x91] sm:$0xff] %vm237, %v409
      %443 = vst.msk [vmem:[%s429 + $0x99] sm:$0xff] %vm237, %v410
      %444 = vst.msk [vmem:[%s429 + $0xa9] sm:$0xff] %vm237, %v411
      %445 = vst.msk [vmem:[%s429 + $0xb1] sm:$0xff] %vm237, %v412
      %446 = vst.msk [vmem:[%s429 + $0xc1] sm:$0xff] %vm237, %v413
      %447 = vst.msk [vmem:[%s429 + $0xc9] sm:$0xff] %vm237, %v414
      %448 = vst.msk [vmem:[%s429 + $0xd9] sm:$0xff] %vm237, %v415
      %449 = vst.msk [vmem:[%s429 + $0xe1] sm:$0xff] %vm237, %v416
      %450 = vst.msk [vmem:[%s429 + $0xf1] sm:$0xff] %vm237, %v417
      %451 = vst.msk [vmem:[%s429 + $0xf9] sm:$0xff] %vm237, %v418
      %452 = vst.msk [vmem:[%s429 + $0x109] sm:$0xff] %vm237, %v419
      %453 = vst.msk [vmem:[%s429 + $0x111] sm:$0xff] %vm237, %v420
      %454 = vst.msk [vmem:[%s429 + $0x121] sm:$0xff] %vm237, %v421
      %455 = vst.msk [vmem:[%s429 + $0x129] sm:$0xff] %vm237, %v422
      %456 = vst.msk [vmem:[%s429 + $0x139] sm:$0xff] %vm237, %v423
      %457 = vst.msk [vmem:[%s429 + $0x141] sm:$0xff] %vm237, %v424
      %458 = vst.msk [vmem:[%s429 + $0x151] sm:$0xff] %vm237, %v425
      %459 = vst.msk [vmem:[%s429 + $0x159] sm:$0xff] %vm237, %v426
      %460 = vst.msk [vmem:[%s429 + $0x169] sm:$0xff] %vm237, %v427
      %461 = vst.msk [vmem:[%s429 + $0x171] sm:$0xff] %vm237, %v428
      %v462 = vld [vmem:[#allocation2] sm:$0xff]
      %v463 = vld [vmem:[#allocation2 + $0x8] sm:$0xff]
      %v464 = vld [vmem:[#allocation2 + $0x18] sm:$0xff]
      %v465 = vld [vmem:[#allocation2 + $0x20] sm:$0xff]
      %v466 = vld [vmem:[#allocation2 + $0x30] sm:$0xff]
      %v467 = vld [vmem:[#allocation2 + $0x38] sm:$0xff]
      %v468 = vld [vmem:[#allocation2 + $0x48] sm:$0xff]
      %v469 = vld [vmem:[#allocation2 + $0x50] sm:$0xff]
      %v470 = vld [vmem:[#allocation2 + $0x60] sm:$0xff]
      %v471 = vld [vmem:[#allocation2 + $0x68] sm:$0xff]
      %v472 = vld [vmem:[#allocation2 + $0x78] sm:$0xff]
      %v473 = vld [vmem:[#allocation2 + $0x80] sm:$0xff]
      %v474 = vld [vmem:[#allocation2 + $0x90] sm:$0xff]
      %v475 = vld [vmem:[#allocation2 + $0x98] sm:$0xff]
      %v476 = vld [vmem:[#allocation2 + $0xa8] sm:$0xff]
      %v477 = vld [vmem:[#allocation2 + $0xb0] sm:$0xff]
      %v478 = vld [vmem:[#allocation2 + $0xc0] sm:$0xff]
      %v479 = vld [vmem:[#allocation2 + $0xc8] sm:$0xff]
      %v480 = vld [vmem:[#allocation2 + $0xd8] sm:$0xff]
      %v481 = vld [vmem:[#allocation2 + $0xe0] sm:$0xff]
      %v482 = vld [vmem:[#allocation2 + $0xf0] sm:$0xff]
      %v483 = vld [vmem:[#allocation2 + $0xf8] sm:$0xff]
      %v484 = vld [vmem:[#allocation2 + $0x108] sm:$0xff]
      %v485 = vld [vmem:[#allocation2 + $0x110] sm:$0xff]
      %v486 = vld [vmem:[#allocation2 + $0x120] sm:$0xff]
      %v487 = vld [vmem:[#allocation2 + $0x128] sm:$0xff]
      %v488 = vld [vmem:[#allocation2 + $0x138] sm:$0xff]
      %v489 = vld [vmem:[#allocation2 + $0x140] sm:$0xff]
      %v490 = vld [vmem:[#allocation2 + $0x150] sm:$0xff]
      %v491 = vld [vmem:[#allocation2 + $0x158] sm:$0xff]
      %v492 = vld [vmem:[#allocation2 + $0x168] sm:$0xff]
      %v493 = vld [vmem:[#allocation2 + $0x170] sm:$0xff]
      %v494 = vpack.c.bf16 %v463, %v462
      %v495 = vpack.c.bf16 %v465, %v464
      %v496 = vpack.c.bf16 %v467, %v466
      %v497 = vpack.c.bf16 %v469, %v468
      %v498 = vpack.c.bf16 %v471, %v470
      %v499 = vpack.c.bf16 %v473, %v472
      %v500 = vpack.c.bf16 %v475, %v474
      %v501 = vpack.c.bf16 %v477, %v476
      %v502 = vpack.c.bf16 %v479, %v478
      %v503 = vpack.c.bf16 %v481, %v480
      %v504 = vpack.c.bf16 %v483, %v482
      %v505 = vpack.c.bf16 %v485, %v484
      %v506 = vpack.c.bf16 %v487, %v486
      %v507 = vpack.c.bf16 %v489, %v488
      %v508 = vpack.c.bf16 %v491, %v490
      %v509 = vpack.c.bf16 %v493, %v492
      %v510 = vld [vmem:[%s1] sm:$0x3]
      %v511 = vld [vmem:[#allocation2 + $0x1] sm:$0xff]
      %v512 = vld [vmem:[#allocation2 + $0x9] sm:$0xff]
      %v513 = vld [vmem:[#allocation2 + $0x19] sm:$0xff]
      %v514 = vld [vmem:[#allocation2 + $0x21] sm:$0xff]
      %v515 = vld [vmem:[#allocation2 + $0x31] sm:$0xff]
      %v516 = vld [vmem:[#allocation2 + $0x39] sm:$0xff]
      %v517 = vld [vmem:[#allocation2 + $0x49] sm:$0xff]
      %v518 = vld [vmem:[#allocation2 + $0x51] sm:$0xff]
      %v519 = vld [vmem:[#allocation2 + $0x61] sm:$0xff]
      %v520 = vld [vmem:[#allocation2 + $0x69] sm:$0xff]
      %v521 = vld [vmem:[#allocation2 + $0x79] sm:$0xff]
      %v522 = vld [vmem:[#allocation2 + $0x81] sm:$0xff]
      %v523 = vld [vmem:[#allocation2 + $0x91] sm:$0xff]
      %v524 = vld [vmem:[#allocation2 + $0x99] sm:$0xff]
      %v525 = vld [vmem:[#allocation2 + $0xa9] sm:$0xff]
      %v526 = vld [vmem:[#allocation2 + $0xb1] sm:$0xff]
      %v527 = vld [vmem:[#allocation2 + $0xc1] sm:$0xff]
      %v528 = vld [vmem:[#allocation2 + $0xc9] sm:$0xff]
      %v529 = vld [vmem:[#allocation2 + $0xd9] sm:$0xff]
      %v530 = vld [vmem:[#allocation2 + $0xe1] sm:$0xff]
      %v531 = vld [vmem:[#allocation2 + $0xf1] sm:$0xff]
      %v532 = vld [vmem:[#allocation2 + $0xf9] sm:$0xff]
      %v533 = vld [vmem:[#allocation2 + $0x109] sm:$0xff]
      %v534 = vld [vmem:[#allocation2 + $0x111] sm:$0xff]
      %v535 = vld [vmem:[#allocation2 + $0x121] sm:$0xff]
      %v536 = vld [vmem:[#allocation2 + $0x129] sm:$0xff]
      %v537 = vld [vmem:[#allocation2 + $0x139] sm:$0xff]
      %v538 = vld [vmem:[#allocation2 + $0x141] sm:$0xff]
      %v539 = vld [vmem:[#allocation2 + $0x151] sm:$0xff]
      %v540 = vld [vmem:[#allocation2 + $0x159] sm:$0xff]
      %v541 = vld [vmem:[#allocation2 + $0x169] sm:$0xff]
      %v542 = vld [vmem:[#allocation2 + $0x171] sm:$0xff]
      %v543 = vpack.c.bf16 %v512, %v511
      %v544 = vpack.c.bf16 %v514, %v513
      %v545 = vpack.c.bf16 %v516, %v515
      %v546 = vpack.c.bf16 %v518, %v517
      %v547 = vpack.c.bf16 %v520, %v519
      %v548 = vpack.c.bf16 %v522, %v521
      %v549 = vpack.c.bf16 %v524, %v523
      %v550 = vpack.c.bf16 %v526, %v525
      %v551 = vpack.c.bf16 %v528, %v527
      %v552 = vpack.c.bf16 %v530, %v529
      %v553 = vpack.c.bf16 %v532, %v531
      %v554 = vpack.c.bf16 %v534, %v533
      %v555 = vpack.c.bf16 %v536, %v535
      %v556 = vpack.c.bf16 %v538, %v537
      %v557 = vpack.c.bf16 %v540, %v539
      %v558 = vpack.c.bf16 %v542, %v541
      %s559 = scalar_lea.vmem %s1, 2
      %v560 = vld [vmem:[%s559] sm:$0x3]
      %v562 = vsel %vm237, %v543, 0
      %v565 = vsel %vm237, %v544, 0
      %v568 = vsel %vm237, %v545, 0
      %v571 = vsel %vm237, %v546, 0
      %v574 = vsel %vm237, %v547, 0
      %v577 = vsel %vm237, %v548, 0
      %v580 = vsel %vm237, %v549, 0
      %v583 = vsel %vm237, %v550, 0
      %v586 = vsel %vm237, %v551, 0
      %v589 = vsel %vm237, %v552, 0
      %v592 = vsel %vm237, %v553, 0
      %v595 = vsel %vm237, %v554, 0
      %v598 = vsel %vm237, %v555, 0
      %v601 = vsel %vm237, %v556, 0
      %v604 = vsel %vm237, %v557, 0
      %v607 = vsel %vm237, %v558, 0
      %vm609 = vcmask 1041408
      %v611 = vsel %vm609, %v560, 0
      %613 = vmatpush.bf16.msra.mxu0 0
      %614 = vmatpush.bf16.msra.mxu0 0
      %615 = vmatpush.bf16.msra.mxu0 0
      %616 = vmatpush.bf16.msra.mxu0 0
      %617 = vmatpush.bf16.msra.mxu0 0
      %618 = vmatpush.bf16.msra.mxu0 0
      %619 = vmatpush.bf16.msra.mxu0 0
      %620 = vmatpush.bf16.msra.mxu0 %v611
      %621 = vmatmul.bf16.gmra.mxu0 %v562
      %v622 = vpop.f32.mrf.mxu0
      %v623 = vadd.f32 0.0, %v622
      %v624 = vpop.f32.mrf.mxu0
      %v625 = vadd.f32 0.0, %v624
      %626 = vmatmul.bf16.gmra.mxu0 %v565
      %v627 = vpop.f32.mrf.mxu0
      %v628 = vadd.f32 0.0, %v627
      %v629 = vpop.f32.mrf.mxu0
      %v630 = vadd.f32 0.0, %v629
      %631 = vmatmul.bf16.gmra.mxu0 %v568
      %v632 = vpop.f32.mrf.mxu0
      %v633 = vadd.f32 0.0, %v632
      %v634 = vpop.f32.mrf.mxu0
      %v635 = vadd.f32 0.0, %v634
      %636 = vmatmul.bf16.gmra.mxu0 %v571
      %v637 = vpop.f32.mrf.mxu0
      %v638 = vadd.f32 0.0, %v637
      %v639 = vpop.f32.mrf.mxu0
      %v640 = vadd.f32 0.0, %v639
      %641 = vmatmul.bf16.gmra.mxu0 %v574
      %v642 = vpop.f32.mrf.mxu0
      %v643 = vadd.f32 0.0, %v642
      %v644 = vpop.f32.mrf.mxu0
      %v645 = vadd.f32 0.0, %v644
      %646 = vmatmul.bf16.gmra.mxu0 %v577
      %v647 = vpop.f32.mrf.mxu0
      %v648 = vadd.f32 0.0, %v647
      %v649 = vpop.f32.mrf.mxu0
      %v650 = vadd.f32 0.0, %v649
      %651 = vmatmul.bf16.gmra.mxu0 %v580
      %v652 = vpop.f32.mrf.mxu0
      %v653 = vadd.f32 0.0, %v652
      %v654 = vpop.f32.mrf.mxu0
      %v655 = vadd.f32 0.0, %v654
      %656 = vmatmul.bf16.gmra.mxu0 %v583
      %v657 = vpop.f32.mrf.mxu0
      %v658 = vadd.f32 0.0, %v657
      %v659 = vpop.f32.mrf.mxu0
      %v660 = vadd.f32 0.0, %v659
      %661 = vmatmul.bf16.gmra.mxu0 %v586
      %v662 = vpop.f32.mrf.mxu0
      %v663 = vadd.f32 0.0, %v662
      %v664 = vpop.f32.mrf.mxu0
      %v665 = vadd.f32 0.0, %v664
      %666 = vmatmul.bf16.gmra.mxu0 %v589
      %v667 = vpop.f32.mrf.mxu0
      %v668 = vadd.f32 0.0, %v667
      %v669 = vpop.f32.mrf.mxu0
      %v670 = vadd.f32 0.0, %v669
      %671 = vmatmul.bf16.gmra.mxu0 %v592
      %v672 = vpop.f32.mrf.mxu0
      %v673 = vadd.f32 0.0, %v672
      %v674 = vpop.f32.mrf.mxu0
      %v675 = vadd.f32 0.0, %v674
      %676 = vmatmul.bf16.gmra.mxu0 %v595
      %v677 = vpop.f32.mrf.mxu0
      %v678 = vadd.f32 0.0, %v677
      %v679 = vpop.f32.mrf.mxu0
      %v680 = vadd.f32 0.0, %v679
      %681 = vmatmul.bf16.gmra.mxu0 %v598
      %v682 = vpop.f32.mrf.mxu0
      %v683 = vadd.f32 0.0, %v682
      %v684 = vpop.f32.mrf.mxu0
      %v685 = vadd.f32 0.0, %v684
      %686 = vmatmul.bf16.gmra.mxu0 %v601
      %v687 = vpop.f32.mrf.mxu0
      %v688 = vadd.f32 0.0, %v687
      %v689 = vpop.f32.mrf.mxu0
      %v690 = vadd.f32 0.0, %v689
      %691 = vmatmul.bf16.gmra.mxu0 %v604
      %v692 = vpop.f32.mrf.mxu0
      %v693 = vadd.f32 0.0, %v692
      %v694 = vpop.f32.mrf.mxu0
      %v695 = vadd.f32 0.0, %v694
      %696 = vmatmul.bf16.gmra.mxu0 %v607
      %v697 = vpop.f32.mrf.mxu0
      %v698 = vadd.f32 0.0, %v697
      %v699 = vpop.f32.mrf.mxu0
      %v700 = vadd.f32 0.0, %v699
      %701 = vdwg.mxu0
      %v703 = vsel %vm237, %v494, 0
      %v706 = vsel %vm237, %v495, 0
      %v709 = vsel %vm237, %v496, 0
      %v712 = vsel %vm237, %v497, 0
      %v715 = vsel %vm237, %v498, 0
      %v718 = vsel %vm237, %v499, 0
      %v721 = vsel %vm237, %v500, 0
      %v724 = vsel %vm237, %v501, 0
      %v727 = vsel %vm237, %v502, 0
      %v730 = vsel %vm237, %v503, 0
      %v733 = vsel %vm237, %v504, 0
      %v736 = vsel %vm237, %v505, 0
      %v739 = vsel %vm237, %v506, 0
      %v742 = vsel %vm237, %v507, 0
      %v745 = vsel %vm237, %v508, 0
      %v748 = vsel %vm237, %v509, 0
      %v751 = vsel %vm609, %v510, 0
      %753 = vmatpush.bf16.msra.mxu0 0
      %754 = vmatpush.bf16.msra.mxu0 0
      %755 = vmatpush.bf16.msra.mxu0 0
      %756 = vmatpush.bf16.msra.mxu0 0
      %757 = vmatpush.bf16.msra.mxu0 0
      %758 = vmatpush.bf16.msra.mxu0 0
      %759 = vmatpush.bf16.msra.mxu0 0
      %760 = vmatpush.bf16.msra.mxu0 %v751
      %761 = vmatmul.bf16.gmra.mxu0 %v703
      %v762 = vpop.f32.mrf.mxu0
      %v763 = vadd.f32 %v623, %v762
      %v764 = vpop.f32.mrf.mxu0
      %v765 = vadd.f32 %v625, %v764
      %766 = vmatmul.bf16.gmra.mxu0 %v706
      %v767 = vpop.f32.mrf.mxu0
      %v768 = vadd.f32 %v628, %v767
      %v769 = vpop.f32.mrf.mxu0
      %v770 = vadd.f32 %v630, %v769
      %771 = vmatmul.bf16.gmra.mxu0 %v709
      %v772 = vpop.f32.mrf.mxu0
      %v773 = vadd.f32 %v633, %v772
      %v774 = vpop.f32.mrf.mxu0
      %v775 = vadd.f32 %v635, %v774
      %776 = vmatmul.bf16.gmra.mxu0 %v712
      %v777 = vpop.f32.mrf.mxu0
      %v778 = vadd.f32 %v638, %v777
      %v779 = vpop.f32.mrf.mxu0
      %v780 = vadd.f32 %v640, %v779
      %781 = vmatmul.bf16.gmra.mxu0 %v715
      %v782 = vpop.f32.mrf.mxu0
      %v783 = vadd.f32 %v643, %v782
      %v784 = vpop.f32.mrf.mxu0
      %v785 = vadd.f32 %v645, %v784
      %786 = vmatmul.bf16.gmra.mxu0 %v718
      %v787 = vpop.f32.mrf.mxu0
      %v788 = vadd.f32 %v648, %v787
      %v789 = vpop.f32.mrf.mxu0
      %v790 = vadd.f32 %v650, %v789
      %791 = vmatmul.bf16.gmra.mxu0 %v721
      %v792 = vpop.f32.mrf.mxu0
      %v793 = vadd.f32 %v653, %v792
      %v794 = vpop.f32.mrf.mxu0
      %v795 = vadd.f32 %v655, %v794
      %796 = vmatmul.bf16.gmra.mxu0 %v724
      %v797 = vpop.f32.mrf.mxu0
      %v798 = vadd.f32 %v658, %v797
      %v799 = vpop.f32.mrf.mxu0
      %v800 = vadd.f32 %v660, %v799
      %801 = vmatmul.bf16.gmra.mxu0 %v727
      %v802 = vpop.f32.mrf.mxu0
      %v803 = vadd.f32 %v663, %v802
      %v804 = vpop.f32.mrf.mxu0
      %v805 = vadd.f32 %v665, %v804
      %806 = vmatmul.bf16.gmra.mxu0 %v730
      %v807 = vpop.f32.mrf.mxu0
      %v808 = vadd.f32 %v668, %v807
      %v809 = vpop.f32.mrf.mxu0
      %v810 = vadd.f32 %v670, %v809
      %811 = vmatmul.bf16.gmra.mxu0 %v733
      %v812 = vpop.f32.mrf.mxu0
      %v813 = vadd.f32 %v673, %v812
      %v814 = vpop.f32.mrf.mxu0
      %v815 = vadd.f32 %v675, %v814
      %816 = vmatmul.bf16.gmra.mxu0 %v736
      %v817 = vpop.f32.mrf.mxu0
      %v818 = vadd.f32 %v678, %v817
      %v819 = vpop.f32.mrf.mxu0
      %v820 = vadd.f32 %v680, %v819
      %821 = vmatmul.bf16.gmra.mxu0 %v739
      %v822 = vpop.f32.mrf.mxu0
      %v823 = vadd.f32 %v683, %v822
      %v824 = vpop.f32.mrf.mxu0
      %v825 = vadd.f32 %v685, %v824
      %826 = vmatmul.bf16.gmra.mxu0 %v742
      %v827 = vpop.f32.mrf.mxu0
      %v828 = vadd.f32 %v688, %v827
      %v829 = vpop.f32.mrf.mxu0
      %v830 = vadd.f32 %v690, %v829
      %831 = vmatmul.bf16.gmra.mxu0 %v745
      %v832 = vpop.f32.mrf.mxu0
      %v833 = vadd.f32 %v693, %v832
      %v834 = vpop.f32.mrf.mxu0
      %v835 = vadd.f32 %v695, %v834
      %836 = vmatmul.bf16.gmra.mxu0 %v748
      %v837 = vpop.f32.mrf.mxu0
      %v838 = vadd.f32 %v698, %v837
      %v839 = vpop.f32.mrf.mxu0
      %v840 = vadd.f32 %v700, %v839
      %841 = vdwg.mxu0
      %v842 = vld [vmem:[#allocation2 + $0x2] sm:$0xff]
      %v843 = vld [vmem:[#allocation2 + $0xa] sm:$0xff]
      %v844 = vld [vmem:[#allocation2 + $0x1a] sm:$0xff]
      %v845 = vld [vmem:[#allocation2 + $0x22] sm:$0xff]
      %v846 = vld [vmem:[#allocation2 + $0x32] sm:$0xff]
      %v847 = vld [vmem:[#allocation2 + $0x3a] sm:$0xff]
      %v848 = vld [vmem:[#allocation2 + $0x4a] sm:$0xff]
      %v849 = vld [vmem:[#allocation2 + $0x52] sm:$0xff]
      %v850 = vld [vmem:[#allocation2 + $0x62] sm:$0xff]
      %v851 = vld [vmem:[#allocation2 + $0x6a] sm:$0xff]
      %v852 = vld [vmem:[#allocation2 + $0x7a] sm:$0xff]
      %v853 = vld [vmem:[#allocation2 + $0x82] sm:$0xff]
      %v854 = vld [vmem:[#allocation2 + $0x92] sm:$0xff]
      %v855 = vld [vmem:[#allocation2 + $0x9a] sm:$0xff]
      %v856 = vld [vmem:[#allocation2 + $0xaa] sm:$0xff]
      %v857 = vld [vmem:[#allocation2 + $0xb2] sm:$0xff]
      %v858 = vld [vmem:[#allocation2 + $0xc2] sm:$0xff]
      %v859 = vld [vmem:[#allocation2 + $0xca] sm:$0xff]
      %v860 = vld [vmem:[#allocation2 + $0xda] sm:$0xff]
      %v861 = vld [vmem:[#allocation2 + $0xe2] sm:$0xff]
      %v862 = vld [vmem:[#allocation2 + $0xf2] sm:$0xff]
      %v863 = vld [vmem:[#allocation2 + $0xfa] sm:$0xff]
      %v864 = vld [vmem:[#allocation2 + $0x10a] sm:$0xff]
      %v865 = vld [vmem:[#allocation2 + $0x112] sm:$0xff]
      %v866 = vld [vmem:[#allocation2 + $0x122] sm:$0xff]
      %v867 = vld [vmem:[#allocation2 + $0x12a] sm:$0xff]
      %v868 = vld [vmem:[#allocation2 + $0x13a] sm:$0xff]
      %v869 = vld [vmem:[#allocation2 + $0x142] sm:$0xff]
      %v870 = vld [vmem:[#allocation2 + $0x152] sm:$0xff]
      %v871 = vld [vmem:[#allocation2 + $0x15a] sm:$0xff]
      %v872 = vld [vmem:[#allocation2 + $0x16a] sm:$0xff]
      %v873 = vld [vmem:[#allocation2 + $0x172] sm:$0xff]
      %v874 = vpack.c.bf16 %v843, %v842
      %v875 = vpack.c.bf16 %v845, %v844
      %v876 = vpack.c.bf16 %v847, %v846
      %v877 = vpack.c.bf16 %v849, %v848
      %v878 = vpack.c.bf16 %v851, %v850
      %v879 = vpack.c.bf16 %v853, %v852
      %v880 = vpack.c.bf16 %v855, %v854
      %v881 = vpack.c.bf16 %v857, %v856
      %v882 = vpack.c.bf16 %v859, %v858
      %v883 = vpack.c.bf16 %v861, %v860
      %v884 = vpack.c.bf16 %v863, %v862
      %v885 = vpack.c.bf16 %v865, %v864
      %v886 = vpack.c.bf16 %v867, %v866
      %v887 = vpack.c.bf16 %v869, %v868
      %v888 = vpack.c.bf16 %v871, %v870
      %v889 = vpack.c.bf16 %v873, %v872
      %s890 = scalar_lea.vmem %s1, 4
      %v891 = vld [vmem:[%s890] sm:$0x3]
      %v893 = vsel %vm237, %v874, 0
      %v896 = vsel %vm237, %v875, 0
      %v899 = vsel %vm237, %v876, 0
      %v902 = vsel %vm237, %v877, 0
      %v905 = vsel %vm237, %v878, 0
      %v908 = vsel %vm237, %v879, 0
      %v911 = vsel %vm237, %v880, 0
      %v914 = vsel %vm237, %v881, 0
      %v917 = vsel %vm237, %v882, 0
      %v920 = vsel %vm237, %v883, 0
      %v923 = vsel %vm237, %v884, 0
      %v926 = vsel %vm237, %v885, 0
      %v929 = vsel %vm237, %v886, 0
      %v932 = vsel %vm237, %v887, 0
      %v935 = vsel %vm237, %v888, 0
      %v938 = vsel %vm237, %v889, 0
      %v941 = vsel %vm609, %v891, 0
      %943 = vmatpush.bf16.msra.mxu0 0
      %944 = vmatpush.bf16.msra.mxu0 0
      %945 = vmatpush.bf16.msra.mxu0 0
      %946 = vmatpush.bf16.msra.mxu0 0
      %947 = vmatpush.bf16.msra.mxu0 0
      %948 = vmatpush.bf16.msra.mxu0 0
      %949 = vmatpush.bf16.msra.mxu0 0
      %950 = vmatpush.bf16.msra.mxu0 %v941
      %951 = vmatmul.bf16.gmra.mxu0 %v893
      %v952 = vpop.f32.mrf.mxu0
      %v953 = vadd.f32 0.0, %v952
      %v954 = vpop.f32.mrf.mxu0
      %v955 = vadd.f32 0.0, %v954
      %956 = vmatmul.bf16.gmra.mxu0 %v896
      %v957 = vpop.f32.mrf.mxu0
      %v958 = vadd.f32 0.0, %v957
      %v959 = vpop.f32.mrf.mxu0
      %v960 = vadd.f32 0.0, %v959
      %961 = vmatmul.bf16.gmra.mxu0 %v899
      %v962 = vpop.f32.mrf.mxu0
      %v963 = vadd.f32 0.0, %v962
      %v964 = vpop.f32.mrf.mxu0
      %v965 = vadd.f32 0.0, %v964
      %966 = vmatmul.bf16.gmra.mxu0 %v902
      %v967 = vpop.f32.mrf.mxu0
      %v968 = vadd.f32 0.0, %v967
      %v969 = vpop.f32.mrf.mxu0
      %v970 = vadd.f32 0.0, %v969
      %971 = vmatmul.bf16.gmra.mxu0 %v905
      %v972 = vpop.f32.mrf.mxu0
      %v973 = vadd.f32 0.0, %v972
      %v974 = vpop.f32.mrf.mxu0
      %v975 = vadd.f32 0.0, %v974
      %976 = vmatmul.bf16.gmra.mxu0 %v908
      %v977 = vpop.f32.mrf.mxu0
      %v978 = vadd.f32 0.0, %v977
      %v979 = vpop.f32.mrf.mxu0
      %v980 = vadd.f32 0.0, %v979
      %981 = vmatmul.bf16.gmra.mxu0 %v911
      %v982 = vpop.f32.mrf.mxu0
      %v983 = vadd.f32 0.0, %v982
      %v984 = vpop.f32.mrf.mxu0
      %v985 = vadd.f32 0.0, %v984
      %986 = vmatmul.bf16.gmra.mxu0 %v914
      %v987 = vpop.f32.mrf.mxu0
      %v988 = vadd.f32 0.0, %v987
      %v989 = vpop.f32.mrf.mxu0
      %v990 = vadd.f32 0.0, %v989
      %991 = vmatmul.bf16.gmra.mxu0 %v917
      %v992 = vpop.f32.mrf.mxu0
      %v993 = vadd.f32 0.0, %v992
      %v994 = vpop.f32.mrf.mxu0
      %v995 = vadd.f32 0.0, %v994
      %996 = vmatmul.bf16.gmra.mxu0 %v920
      %v997 = vpop.f32.mrf.mxu0
      %v998 = vadd.f32 0.0, %v997
      %v999 = vpop.f32.mrf.mxu0
      %v1000 = vadd.f32 0.0, %v999
      %1001 = vmatmul.bf16.gmra.mxu0 %v923
      %v1002 = vpop.f32.mrf.mxu0
      %v1003 = vadd.f32 0.0, %v1002
      %v1004 = vpop.f32.mrf.mxu0
      %v1005 = vadd.f32 0.0, %v1004
      %1006 = vmatmul.bf16.gmra.mxu0 %v926
      %v1007 = vpop.f32.mrf.mxu0
      %v1008 = vadd.f32 0.0, %v1007
      %v1009 = vpop.f32.mrf.mxu0
      %v1010 = vadd.f32 0.0, %v1009
      %1011 = vmatmul.bf16.gmra.mxu0 %v929
      %v1012 = vpop.f32.mrf.mxu0
      %v1013 = vadd.f32 0.0, %v1012
      %v1014 = vpop.f32.mrf.mxu0
      %v1015 = vadd.f32 0.0, %v1014
      %1016 = vmatmul.bf16.gmra.mxu0 %v932
      %v1017 = vpop.f32.mrf.mxu0
      %v1018 = vadd.f32 0.0, %v1017
      %v1019 = vpop.f32.mrf.mxu0
      %v1020 = vadd.f32 0.0, %v1019
      %1021 = vmatmul.bf16.gmra.mxu0 %v935
      %v1022 = vpop.f32.mrf.mxu0
      %v1023 = vadd.f32 0.0, %v1022
      %v1024 = vpop.f32.mrf.mxu0
      %v1025 = vadd.f32 0.0, %v1024
      %1026 = vmatmul.bf16.gmra.mxu0 %v938
      %v1027 = vpop.f32.mrf.mxu0
      %v1028 = vadd.f32 0.0, %v1027
      %v1029 = vpop.f32.mrf.mxu0
      %v1030 = vadd.f32 0.0, %v1029
      %1031 = vdwg.mxu0
      %v1032 = vadd.f32 %v763, %v953
      %v1033 = vadd.f32 %v765, %v955
      %v1034 = vadd.f32 %v768, %v958
      %v1035 = vadd.f32 %v770, %v960
      %v1036 = vadd.f32 %v773, %v963
      %v1037 = vadd.f32 %v775, %v965
      %v1038 = vadd.f32 %v778, %v968
      %v1039 = vadd.f32 %v780, %v970
      %v1040 = vadd.f32 %v783, %v973
      %v1041 = vadd.f32 %v785, %v975
      %v1042 = vadd.f32 %v788, %v978
      %v1043 = vadd.f32 %v790, %v980
      %v1044 = vadd.f32 %v793, %v983
      %v1045 = vadd.f32 %v795, %v985
      %v1046 = vadd.f32 %v798, %v988
      %v1047 = vadd.f32 %v800, %v990
      %v1048 = vadd.f32 %v803, %v993
      %v1049 = vadd.f32 %v805, %v995
      %v1050 = vadd.f32 %v808, %v998
      %v1051 = vadd.f32 %v810, %v1000
      %v1052 = vadd.f32 %v813, %v1003
      %v1053 = vadd.f32 %v815, %v1005
      %v1054 = vadd.f32 %v818, %v1008
      %v1055 = vadd.f32 %v820, %v1010
      %v1056 = vadd.f32 %v823, %v1013
      %v1057 = vadd.f32 %v825, %v1015
      %v1058 = vadd.f32 %v828, %v1018
      %v1059 = vadd.f32 %v830, %v1020
      %v1060 = vadd.f32 %v833, %v1023
      %v1061 = vadd.f32 %v835, %v1025
      %v1062 = vadd.f32 %v838, %v1028
      %v1063 = vadd.f32 %v840, %v1030
      %v1064 = vld [vmem:[%s429] sm:$0xff]
      %v1065 = vld [vmem:[%s429 + $0x8] sm:$0xff]
      %v1066 = vld [vmem:[%s429 + $0x18] sm:$0xff]
      %v1067 = vld [vmem:[%s429 + $0x20] sm:$0xff]
      %v1068 = vld [vmem:[%s429 + $0x30] sm:$0xff]
      %v1069 = vld [vmem:[%s429 + $0x38] sm:$0xff]
      %v1070 = vld [vmem:[%s429 + $0x48] sm:$0xff]
      %v1071 = vld [vmem:[%s429 + $0x50] sm:$0xff]
      %v1072 = vld [vmem:[%s429 + $0x60] sm:$0xff]
      %v1073 = vld [vmem:[%s429 + $0x68] sm:$0xff]
      %v1074 = vld [vmem:[%s429 + $0x78] sm:$0xff]
      %v1075 = vld [vmem:[%s429 + $0x80] sm:$0xff]
      %v1076 = vld [vmem:[%s429 + $0x90] sm:$0xff]
      %v1077 = vld [vmem:[%s429 + $0x98] sm:$0xff]
      %v1078 = vld [vmem:[%s429 + $0xa8] sm:$0xff]
      %v1079 = vld [vmem:[%s429 + $0xb0] sm:$0xff]
      %v1080 = vld [vmem:[%s429 + $0xc0] sm:$0xff]
      %v1081 = vld [vmem:[%s429 + $0xc8] sm:$0xff]
      %v1082 = vld [vmem:[%s429 + $0xd8] sm:$0xff]
      %v1083 = vld [vmem:[%s429 + $0xe0] sm:$0xff]
      %v1084 = vld [vmem:[%s429 + $0xf0] sm:$0xff]
      %v1085 = vld [vmem:[%s429 + $0xf8] sm:$0xff]
      %v1086 = vld [vmem:[%s429 + $0x108] sm:$0xff]
      %v1087 = vld [vmem:[%s429 + $0x110] sm:$0xff]
      %v1088 = vld [vmem:[%s429 + $0x120] sm:$0xff]
      %v1089 = vld [vmem:[%s429 + $0x128] sm:$0xff]
      %v1090 = vld [vmem:[%s429 + $0x138] sm:$0xff]
      %v1091 = vld [vmem:[%s429 + $0x140] sm:$0xff]
      %v1092 = vld [vmem:[%s429 + $0x150] sm:$0xff]
      %v1093 = vld [vmem:[%s429 + $0x158] sm:$0xff]
      %v1094 = vld [vmem:[%s429 + $0x168] sm:$0xff]
      %v1095 = vld [vmem:[%s429 + $0x170] sm:$0xff]
      %v1096 = vpack.c.bf16 %v1065, %v1064
      %v1097 = vpack.c.bf16 %v1067, %v1066
      %v1098 = vpack.c.bf16 %v1069, %v1068
      %v1099 = vpack.c.bf16 %v1071, %v1070
      %v1100 = vpack.c.bf16 %v1073, %v1072
      %v1101 = vpack.c.bf16 %v1075, %v1074
      %v1102 = vpack.c.bf16 %v1077, %v1076
      %v1103 = vpack.c.bf16 %v1079, %v1078
      %v1104 = vpack.c.bf16 %v1081, %v1080
      %v1105 = vpack.c.bf16 %v1083, %v1082
      %v1106 = vpack.c.bf16 %v1085, %v1084
      %v1107 = vpack.c.bf16 %v1087, %v1086
      %v1108 = vpack.c.bf16 %v1089, %v1088
      %v1109 = vpack.c.bf16 %v1091, %v1090
      %v1110 = vpack.c.bf16 %v1093, %v1092
      %v1111 = vpack.c.bf16 %v1095, %v1094
      %s1112 = scalar_lea.vmem %s1, 6
      %v1113 = vld [vmem:[%s1112] sm:$0x3]
      %v1115 = vsel %vm237, %v1096, 0
      %v1118 = vsel %vm237, %v1097, 0
      %v1121 = vsel %vm237, %v1098, 0
      %v1124 = vsel %vm237, %v1099, 0
      %v1127 = vsel %vm237, %v1100, 0
      %v1130 = vsel %vm237, %v1101, 0
      %v1133 = vsel %vm237, %v1102, 0
      %v1136 = vsel %vm237, %v1103, 0
      %v1139 = vsel %vm237, %v1104, 0
      %v1142 = vsel %vm237, %v1105, 0
      %v1145 = vsel %vm237, %v1106, 0
      %v1148 = vsel %vm237, %v1107, 0
      %v1151 = vsel %vm237, %v1108, 0
      %v1154 = vsel %vm237, %v1109, 0
      %v1157 = vsel %vm237, %v1110, 0
      %v1160 = vsel %vm237, %v1111, 0
      %v1163 = vsel %vm609, %v1113, 0
      %1165 = vmatpush.bf16.msra.mxu0 0
      %1166 = vmatpush.bf16.msra.mxu0 0
      %1167 = vmatpush.bf16.msra.mxu0 0
      %1168 = vmatpush.bf16.msra.mxu0 0
      %1169 = vmatpush.bf16.msra.mxu0 0
      %1170 = vmatpush.bf16.msra.mxu0 0
      %1171 = vmatpush.bf16.msra.mxu0 0
      %1172 = vmatpush.bf16.msra.mxu0 %v1163
      %1173 = vmatmul.bf16.gmra.mxu0 %v1115
      %v1174 = vpop.f32.mrf.mxu0
      %v1175 = vadd.f32 0.0, %v1174
      %v1176 = vpop.f32.mrf.mxu0
      %v1177 = vadd.f32 0.0, %v1176
      %1178 = vmatmul.bf16.gmra.mxu0 %v1118
      %v1179 = vpop.f32.mrf.mxu0
      %v1180 = vadd.f32 0.0, %v1179
      %v1181 = vpop.f32.mrf.mxu0
      %v1182 = vadd.f32 0.0, %v1181
      %1183 = vmatmul.bf16.gmra.mxu0 %v1121
      %v1184 = vpop.f32.mrf.mxu0
      %v1185 = vadd.f32 0.0, %v1184
      %v1186 = vpop.f32.mrf.mxu0
      %v1187 = vadd.f32 0.0, %v1186
      %1188 = vmatmul.bf16.gmra.mxu0 %v1124
      %v1189 = vpop.f32.mrf.mxu0
      %v1190 = vadd.f32 0.0, %v1189
      %v1191 = vpop.f32.mrf.mxu0
      %v1192 = vadd.f32 0.0, %v1191
      %1193 = vmatmul.bf16.gmra.mxu0 %v1127
      %v1194 = vpop.f32.mrf.mxu0
      %v1195 = vadd.f32 0.0, %v1194
      %v1196 = vpop.f32.mrf.mxu0
      %v1197 = vadd.f32 0.0, %v1196
      %1198 = vmatmul.bf16.gmra.mxu0 %v1130
      %v1199 = vpop.f32.mrf.mxu0
      %v1200 = vadd.f32 0.0, %v1199
      %v1201 = vpop.f32.mrf.mxu0
      %v1202 = vadd.f32 0.0, %v1201
      %1203 = vmatmul.bf16.gmra.mxu0 %v1133
      %v1204 = vpop.f32.mrf.mxu0
      %v1205 = vadd.f32 0.0, %v1204
      %v1206 = vpop.f32.mrf.mxu0
      %v1207 = vadd.f32 0.0, %v1206
      %1208 = vmatmul.bf16.gmra.mxu0 %v1136
      %v1209 = vpop.f32.mrf.mxu0
      %v1210 = vadd.f32 0.0, %v1209
      %v1211 = vpop.f32.mrf.mxu0
      %v1212 = vadd.f32 0.0, %v1211
      %1213 = vmatmul.bf16.gmra.mxu0 %v1139
      %v1214 = vpop.f32.mrf.mxu0
      %v1215 = vadd.f32 0.0, %v1214
      %v1216 = vpop.f32.mrf.mxu0
      %v1217 = vadd.f32 0.0, %v1216
      %1218 = vmatmul.bf16.gmra.mxu0 %v1142
      %v1219 = vpop.f32.mrf.mxu0
      %v1220 = vadd.f32 0.0, %v1219
      %v1221 = vpop.f32.mrf.mxu0
      %v1222 = vadd.f32 0.0, %v1221
      %1223 = vmatmul.bf16.gmra.mxu0 %v1145
      %v1224 = vpop.f32.mrf.mxu0
      %v1225 = vadd.f32 0.0, %v1224
      %v1226 = vpop.f32.mrf.mxu0
      %v1227 = vadd.f32 0.0, %v1226
      %1228 = vmatmul.bf16.gmra.mxu0 %v1148
      %v1229 = vpop.f32.mrf.mxu0
      %v1230 = vadd.f32 0.0, %v1229
      %v1231 = vpop.f32.mrf.mxu0
      %v1232 = vadd.f32 0.0, %v1231
      %1233 = vmatmul.bf16.gmra.mxu0 %v1151
      %v1234 = vpop.f32.mrf.mxu0
      %v1235 = vadd.f32 0.0, %v1234
      %v1236 = vpop.f32.mrf.mxu0
      %v1237 = vadd.f32 0.0, %v1236
      %1238 = vmatmul.bf16.gmra.mxu0 %v1154
      %v1239 = vpop.f32.mrf.mxu0
      %v1240 = vadd.f32 0.0, %v1239
      %v1241 = vpop.f32.mrf.mxu0
      %v1242 = vadd.f32 0.0, %v1241
      %1243 = vmatmul.bf16.gmra.mxu0 %v1157
      %v1244 = vpop.f32.mrf.mxu0
      %v1245 = vadd.f32 0.0, %v1244
      %v1246 = vpop.f32.mrf.mxu0
      %v1247 = vadd.f32 0.0, %v1246
      %1248 = vmatmul.bf16.gmra.mxu0 %v1160
      %v1249 = vpop.f32.mrf.mxu0
      %v1250 = vadd.f32 0.0, %v1249
      %v1251 = vpop.f32.mrf.mxu0
      %v1252 = vadd.f32 0.0, %v1251
      %1253 = vdwg.mxu0
      %v1254 = vadd.f32 %v1032, %v1175
      %v1255 = vadd.f32 %v1033, %v1177
      %v1256 = vadd.f32 %v1034, %v1180
      %v1257 = vadd.f32 %v1035, %v1182
      %v1258 = vadd.f32 %v1036, %v1185
      %v1259 = vadd.f32 %v1037, %v1187
      %v1260 = vadd.f32 %v1038, %v1190
      %v1261 = vadd.f32 %v1039, %v1192
      %v1262 = vadd.f32 %v1040, %v1195
      %v1263 = vadd.f32 %v1041, %v1197
      %v1264 = vadd.f32 %v1042, %v1200
      %v1265 = vadd.f32 %v1043, %v1202
      %v1266 = vadd.f32 %v1044, %v1205
      %v1267 = vadd.f32 %v1045, %v1207
      %v1268 = vadd.f32 %v1046, %v1210
      %v1269 = vadd.f32 %v1047, %v1212
      %v1270 = vadd.f32 %v1048, %v1215
      %v1271 = vadd.f32 %v1049, %v1217
      %v1272 = vadd.f32 %v1050, %v1220
      %v1273 = vadd.f32 %v1051, %v1222
      %v1274 = vadd.f32 %v1052, %v1225
      %v1275 = vadd.f32 %v1053, %v1227
      %v1276 = vadd.f32 %v1054, %v1230
      %v1277 = vadd.f32 %v1055, %v1232
      %v1278 = vadd.f32 %v1056, %v1235
      %v1279 = vadd.f32 %v1057, %v1237
      %v1280 = vadd.f32 %v1058, %v1240
      %v1281 = vadd.f32 %v1059, %v1242
      %v1282 = vadd.f32 %v1060, %v1245
      %v1283 = vadd.f32 %v1061, %v1247
      %v1284 = vadd.f32 %v1062, %v1250
      %v1285 = vadd.f32 %v1063, %v1252
      %v1286 = vld [vmem:[%s429 + $0x1] sm:$0xff]
      %v1287 = vld [vmem:[%s429 + $0x9] sm:$0xff]
      %v1288 = vld [vmem:[%s429 + $0x19] sm:$0xff]
      %v1289 = vld [vmem:[%s429 + $0x21] sm:$0xff]
      %v1290 = vld [vmem:[%s429 + $0x31] sm:$0xff]
      %v1291 = vld [vmem:[%s429 + $0x39] sm:$0xff]
      %v1292 = vld [vmem:[%s429 + $0x49] sm:$0xff]
      %v1293 = vld [vmem:[%s429 + $0x51] sm:$0xff]
      %v1294 = vld [vmem:[%s429 + $0x61] sm:$0xff]
      %v1295 = vld [vmem:[%s429 + $0x69] sm:$0xff]
      %v1296 = vld [vmem:[%s429 + $0x79] sm:$0xff]
      %v1297 = vld [vmem:[%s429 + $0x81] sm:$0xff]
      %v1298 = vld [vmem:[%s429 + $0x91] sm:$0xff]
      %v1299 = vld [vmem:[%s429 + $0x99] sm:$0xff]
      %v1300 = vld [vmem:[%s429 + $0xa9] sm:$0xff]
      %v1301 = vld [vmem:[%s429 + $0xb1] sm:$0xff]
      %v1302 = vld [vmem:[%s429 + $0xc1] sm:$0xff]
      %v1303 = vld [vmem:[%s429 + $0xc9] sm:$0xff]
      %v1304 = vld [vmem:[%s429 + $0xd9] sm:$0xff]
      %v1305 = vld [vmem:[%s429 + $0xe1] sm:$0xff]
      %v1306 = vld [vmem:[%s429 + $0xf1] sm:$0xff]
      %v1307 = vld [vmem:[%s429 + $0xf9] sm:$0xff]
      %v1308 = vld [vmem:[%s429 + $0x109] sm:$0xff]
      %v1309 = vld [vmem:[%s429 + $0x111] sm:$0xff]
      %v1310 = vld [vmem:[%s429 + $0x121] sm:$0xff]
      %v1311 = vld [vmem:[%s429 + $0x129] sm:$0xff]
      %v1312 = vld [vmem:[%s429 + $0x139] sm:$0xff]
      %v1313 = vld [vmem:[%s429 + $0x141] sm:$0xff]
      %v1314 = vld [vmem:[%s429 + $0x151] sm:$0xff]
      %v1315 = vld [vmem:[%s429 + $0x159] sm:$0xff]
      %v1316 = vld [vmem:[%s429 + $0x169] sm:$0xff]
      %v1317 = vld [vmem:[%s429 + $0x171] sm:$0xff]
      %v1318 = vpack.c.bf16 %v1287, %v1286
      %v1319 = vpack.c.bf16 %v1289, %v1288
      %v1320 = vpack.c.bf16 %v1291, %v1290
      %v1321 = vpack.c.bf16 %v1293, %v1292
      %v1322 = vpack.c.bf16 %v1295, %v1294
      %v1323 = vpack.c.bf16 %v1297, %v1296
      %v1324 = vpack.c.bf16 %v1299, %v1298
      %v1325 = vpack.c.bf16 %v1301, %v1300
      %v1326 = vpack.c.bf16 %v1303, %v1302
      %v1327 = vpack.c.bf16 %v1305, %v1304
      %v1328 = vpack.c.bf16 %v1307, %v1306
      %v1329 = vpack.c.bf16 %v1309, %v1308
      %v1330 = vpack.c.bf16 %v1311, %v1310
      %v1331 = vpack.c.bf16 %v1313, %v1312
      %v1332 = vpack.c.bf16 %v1315, %v1314
      %v1333 = vpack.c.bf16 %v1317, %v1316
      %s1334 = scalar_lea.vmem %s1, 8
      %v1335 = vld [vmem:[%s1334] sm:$0x3]
      %v1337 = vsel %vm237, %v1318, 0
      %v1340 = vsel %vm237, %v1319, 0
      %v1343 = vsel %vm237, %v1320, 0
      %v1346 = vsel %vm237, %v1321, 0
      %v1349 = vsel %vm237, %v1322, 0
      %v1352 = vsel %vm237, %v1323, 0
      %v1355 = vsel %vm237, %v1324, 0
      %v1358 = vsel %vm237, %v1325, 0
      %v1361 = vsel %vm237, %v1326, 0
      %v1364 = vsel %vm237, %v1327, 0
      %v1367 = vsel %vm237, %v1328, 0
      %v1370 = vsel %vm237, %v1329, 0
      %v1373 = vsel %vm237, %v1330, 0
      %v1376 = vsel %vm237, %v1331, 0
      %v1379 = vsel %vm237, %v1332, 0
      %v1382 = vsel %vm237, %v1333, 0
      %v1385 = vsel %vm609, %v1335, 0
      %1387 = vmatpush.bf16.msra.mxu0 0
      %1388 = vmatpush.bf16.msra.mxu0 0
      %1389 = vmatpush.bf16.msra.mxu0 0
      %1390 = vmatpush.bf16.msra.mxu0 0
      %1391 = vmatpush.bf16.msra.mxu0 0
      %1392 = vmatpush.bf16.msra.mxu0 0
      %1393 = vmatpush.bf16.msra.mxu0 0
      %1394 = vmatpush.bf16.msra.mxu0 %v1385
      %1395 = vmatmul.bf16.gmra.mxu0 %v1337
      %v1396 = vpop.f32.mrf.mxu0
      %v1397 = vadd.f32 0.0, %v1396
      %v1398 = vpop.f32.mrf.mxu0
      %v1399 = vadd.f32 0.0, %v1398
      %1400 = vmatmul.bf16.gmra.mxu0 %v1340
      %v1401 = vpop.f32.mrf.mxu0
      %v1402 = vadd.f32 0.0, %v1401
      %v1403 = vpop.f32.mrf.mxu0
      %v1404 = vadd.f32 0.0, %v1403
      %1405 = vmatmul.bf16.gmra.mxu0 %v1343
      %v1406 = vpop.f32.mrf.mxu0
      %v1407 = vadd.f32 0.0, %v1406
      %v1408 = vpop.f32.mrf.mxu0
      %v1409 = vadd.f32 0.0, %v1408
      %1410 = vmatmul.bf16.gmra.mxu0 %v1346
      %v1411 = vpop.f32.mrf.mxu0
      %v1412 = vadd.f32 0.0, %v1411
      %v1413 = vpop.f32.mrf.mxu0
      %v1414 = vadd.f32 0.0, %v1413
      %1415 = vmatmul.bf16.gmra.mxu0 %v1349
      %v1416 = vpop.f32.mrf.mxu0
      %v1417 = vadd.f32 0.0, %v1416
      %v1418 = vpop.f32.mrf.mxu0
      %v1419 = vadd.f32 0.0, %v1418
      %1420 = vmatmul.bf16.gmra.mxu0 %v1352
      %v1421 = vpop.f32.mrf.mxu0
      %v1422 = vadd.f32 0.0, %v1421
      %v1423 = vpop.f32.mrf.mxu0
      %v1424 = vadd.f32 0.0, %v1423
      %1425 = vmatmul.bf16.gmra.mxu0 %v1355
      %v1426 = vpop.f32.mrf.mxu0
      %v1427 = vadd.f32 0.0, %v1426
      %v1428 = vpop.f32.mrf.mxu0
      %v1429 = vadd.f32 0.0, %v1428
      %1430 = vmatmul.bf16.gmra.mxu0 %v1358
      %v1431 = vpop.f32.mrf.mxu0
      %v1432 = vadd.f32 0.0, %v1431
      %v1433 = vpop.f32.mrf.mxu0
      %v1434 = vadd.f32 0.0, %v1433
      %1435 = vmatmul.bf16.gmra.mxu0 %v1361
      %v1436 = vpop.f32.mrf.mxu0
      %v1437 = vadd.f32 0.0, %v1436
      %v1438 = vpop.f32.mrf.mxu0
      %v1439 = vadd.f32 0.0, %v1438
      %1440 = vmatmul.bf16.gmra.mxu0 %v1364
      %v1441 = vpop.f32.mrf.mxu0
      %v1442 = vadd.f32 0.0, %v1441
      %v1443 = vpop.f32.mrf.mxu0
      %v1444 = vadd.f32 0.0, %v1443
      %1445 = vmatmul.bf16.gmra.mxu0 %v1367
      %v1446 = vpop.f32.mrf.mxu0
      %v1447 = vadd.f32 0.0, %v1446
      %v1448 = vpop.f32.mrf.mxu0
      %v1449 = vadd.f32 0.0, %v1448
      %1450 = vmatmul.bf16.gmra.mxu0 %v1370
      %v1451 = vpop.f32.mrf.mxu0
      %v1452 = vadd.f32 0.0, %v1451
      %v1453 = vpop.f32.mrf.mxu0
      %v1454 = vadd.f32 0.0, %v1453
      %1455 = vmatmul.bf16.gmra.mxu0 %v1373
      %v1456 = vpop.f32.mrf.mxu0
      %v1457 = vadd.f32 0.0, %v1456
      %v1458 = vpop.f32.mrf.mxu0
      %v1459 = vadd.f32 0.0, %v1458
      %1460 = vmatmul.bf16.gmra.mxu0 %v1376
      %v1461 = vpop.f32.mrf.mxu0
      %v1462 = vadd.f32 0.0, %v1461
      %v1463 = vpop.f32.mrf.mxu0
      %v1464 = vadd.f32 0.0, %v1463
      %1465 = vmatmul.bf16.gmra.mxu0 %v1379
      %v1466 = vpop.f32.mrf.mxu0
      %v1467 = vadd.f32 0.0, %v1466
      %v1468 = vpop.f32.mrf.mxu0
      %v1469 = vadd.f32 0.0, %v1468
      %1470 = vmatmul.bf16.gmra.mxu0 %v1382
      %v1471 = vpop.f32.mrf.mxu0
      %v1472 = vadd.f32 0.0, %v1471
      %v1473 = vpop.f32.mrf.mxu0
      %v1474 = vadd.f32 0.0, %v1473
      %1475 = vdwg.mxu0
      %v1476 = vadd.f32 %v1254, %v1397
      %v1477 = vadd.f32 %v1255, %v1399
      %v1478 = vadd.f32 %v1256, %v1402
      %v1479 = vadd.f32 %v1257, %v1404
      %v1480 = vadd.f32 %v1258, %v1407
      %v1481 = vadd.f32 %v1259, %v1409
      %v1482 = vadd.f32 %v1260, %v1412
      %v1483 = vadd.f32 %v1261, %v1414
      %v1484 = vadd.f32 %v1262, %v1417
      %v1485 = vadd.f32 %v1263, %v1419
      %v1486 = vadd.f32 %v1264, %v1422
      %v1487 = vadd.f32 %v1265, %v1424
      %v1488 = vadd.f32 %v1266, %v1427
      %v1489 = vadd.f32 %v1267, %v1429
      %v1490 = vadd.f32 %v1268, %v1432
      %v1491 = vadd.f32 %v1269, %v1434
      %v1492 = vadd.f32 %v1270, %v1437
      %v1493 = vadd.f32 %v1271, %v1439
      %v1494 = vadd.f32 %v1272, %v1442
      %v1495 = vadd.f32 %v1273, %v1444
      %v1496 = vadd.f32 %v1274, %v1447
      %v1497 = vadd.f32 %v1275, %v1449
      %v1498 = vadd.f32 %v1276, %v1452
      %v1499 = vadd.f32 %v1277, %v1454
      %v1500 = vadd.f32 %v1278, %v1457
      %v1501 = vadd.f32 %v1279, %v1459
      %v1502 = vadd.f32 %v1280, %v1462
      %v1503 = vadd.f32 %v1281, %v1464
      %v1504 = vadd.f32 %v1282, %v1467
      %v1505 = vadd.f32 %v1283, %v1469
      %v1506 = vadd.f32 %v1284, %v1472
      %v1507 = vadd.f32 %v1285, %v1474
      %v1508 = vld [vmem:[%s429 + $0x2] sm:$0xff]
      %v1509 = vld [vmem:[%s429 + $0xa] sm:$0xff]
      %v1510 = vld [vmem:[%s429 + $0x1a] sm:$0xff]
      %v1511 = vld [vmem:[%s429 + $0x22] sm:$0xff]
      %v1512 = vld [vmem:[%s429 + $0x32] sm:$0xff]
      %v1513 = vld [vmem:[%s429 + $0x3a] sm:$0xff]
      %v1514 = vld [vmem:[%s429 + $0x4a] sm:$0xff]
      %v1515 = vld [vmem:[%s429 + $0x52] sm:$0xff]
      %v1516 = vld [vmem:[%s429 + $0x62] sm:$0xff]
      %v1517 = vld [vmem:[%s429 + $0x6a] sm:$0xff]
      %v1518 = vld [vmem:[%s429 + $0x7a] sm:$0xff]
      %v1519 = vld [vmem:[%s429 + $0x82] sm:$0xff]
      %v1520 = vld [vmem:[%s429 + $0x92] sm:$0xff]
      %v1521 = vld [vmem:[%s429 + $0x9a] sm:$0xff]
      %v1522 = vld [vmem:[%s429 + $0xaa] sm:$0xff]
      %v1523 = vld [vmem:[%s429 + $0xb2] sm:$0xff]
      %v1524 = vld [vmem:[%s429 + $0xc2] sm:$0xff]
      %v1525 = vld [vmem:[%s429 + $0xca] sm:$0xff]
      %v1526 = vld [vmem:[%s429 + $0xda] sm:$0xff]
      %v1527 = vld [vmem:[%s429 + $0xe2] sm:$0xff]
      %v1528 = vld [vmem:[%s429 + $0xf2] sm:$0xff]
      %v1529 = vld [vmem:[%s429 + $0xfa] sm:$0xff]
      %v1530 = vld [vmem:[%s429 + $0x10a] sm:$0xff]
      %v1531 = vld [vmem:[%s429 + $0x112] sm:$0xff]
      %v1532 = vld [vmem:[%s429 + $0x122] sm:$0xff]
      %v1533 = vld [vmem:[%s429 + $0x12a] sm:$0xff]
      %v1534 = vld [vmem:[%s429 + $0x13a] sm:$0xff]
      %v1535 = vld [vmem:[%s429 + $0x142] sm:$0xff]
      %v1536 = vld [vmem:[%s429 + $0x152] sm:$0xff]
      %v1537 = vld [vmem:[%s429 + $0x15a] sm:$0xff]
      %v1538 = vld [vmem:[%s429 + $0x16a] sm:$0xff]
      %v1539 = vld [vmem:[%s429 + $0x172] sm:$0xff]
      %v1540 = vpack.c.bf16 %v1509, %v1508
      %v1541 = vpack.c.bf16 %v1511, %v1510
      %v1542 = vpack.c.bf16 %v1513, %v1512
      %v1543 = vpack.c.bf16 %v1515, %v1514
      %v1544 = vpack.c.bf16 %v1517, %v1516
      %v1545 = vpack.c.bf16 %v1519, %v1518
      %v1546 = vpack.c.bf16 %v1521, %v1520
      %v1547 = vpack.c.bf16 %v1523, %v1522
      %v1548 = vpack.c.bf16 %v1525, %v1524
      %v1549 = vpack.c.bf16 %v1527, %v1526
      %v1550 = vpack.c.bf16 %v1529, %v1528
      %v1551 = vpack.c.bf16 %v1531, %v1530
      %v1552 = vpack.c.bf16 %v1533, %v1532
      %v1553 = vpack.c.bf16 %v1535, %v1534
      %v1554 = vpack.c.bf16 %v1537, %v1536
      %v1555 = vpack.c.bf16 %v1539, %v1538
      %s1556 = scalar_lea.vmem %s1, 10
      %v1557 = vld [vmem:[%s1556] sm:$0x3]
      %v1559 = vsel %vm237, %v1540, 0
      %v1562 = vsel %vm237, %v1541, 0
      %v1565 = vsel %vm237, %v1542, 0
      %v1568 = vsel %vm237, %v1543, 0
      %v1571 = vsel %vm237, %v1544, 0
      %v1574 = vsel %vm237, %v1545, 0
      %v1577 = vsel %vm237, %v1546, 0
      %v1580 = vsel %vm237, %v1547, 0
      %v1583 = vsel %vm237, %v1548, 0
      %v1586 = vsel %vm237, %v1549, 0
      %v1589 = vsel %vm237, %v1550, 0
      %v1592 = vsel %vm237, %v1551, 0
      %v1595 = vsel %vm237, %v1552, 0
      %v1598 = vsel %vm237, %v1553, 0
      %v1601 = vsel %vm237, %v1554, 0
      %v1604 = vsel %vm237, %v1555, 0
      %v1607 = vsel %vm609, %v1557, 0
      %1609 = vmatpush.bf16.msra.mxu0 0
      %1610 = vmatpush.bf16.msra.mxu0 0
      %1611 = vmatpush.bf16.msra.mxu0 0
      %1612 = vmatpush.bf16.msra.mxu0 0
      %1613 = vmatpush.bf16.msra.mxu0 0
      %1614 = vmatpush.bf16.msra.mxu0 0
      %1615 = vmatpush.bf16.msra.mxu0 0
      %1616 = vmatpush.bf16.msra.mxu0 %v1607
      %1617 = vmatmul.bf16.gmra.mxu0 %v1559
      %v1618 = vpop.f32.mrf.mxu0
      %v1619 = vadd.f32 0.0, %v1618
      %v1620 = vpop.f32.mrf.mxu0
      %v1621 = vadd.f32 0.0, %v1620
      %1622 = vmatmul.bf16.gmra.mxu0 %v1562
      %v1623 = vpop.f32.mrf.mxu0
      %v1624 = vadd.f32 0.0, %v1623
      %v1625 = vpop.f32.mrf.mxu0
      %v1626 = vadd.f32 0.0, %v1625
      %1627 = vmatmul.bf16.gmra.mxu0 %v1565
      %v1628 = vpop.f32.mrf.mxu0
      %v1629 = vadd.f32 0.0, %v1628
      %v1630 = vpop.f32.mrf.mxu0
      %v1631 = vadd.f32 0.0, %v1630
      %1632 = vmatmul.bf16.gmra.mxu0 %v1568
      %v1633 = vpop.f32.mrf.mxu0
      %v1634 = vadd.f32 0.0, %v1633
      %v1635 = vpop.f32.mrf.mxu0
      %v1636 = vadd.f32 0.0, %v1635
      %1637 = vmatmul.bf16.gmra.mxu0 %v1571
      %v1638 = vpop.f32.mrf.mxu0
      %v1639 = vadd.f32 0.0, %v1638
      %v1640 = vpop.f32.mrf.mxu0
      %v1641 = vadd.f32 0.0, %v1640
      %1642 = vmatmul.bf16.gmra.mxu0 %v1574
      %v1643 = vpop.f32.mrf.mxu0
      %v1644 = vadd.f32 0.0, %v1643
      %v1645 = vpop.f32.mrf.mxu0
      %v1646 = vadd.f32 0.0, %v1645
      %1647 = vmatmul.bf16.gmra.mxu0 %v1577
      %v1648 = vpop.f32.mrf.mxu0
      %v1649 = vadd.f32 0.0, %v1648
      %v1650 = vpop.f32.mrf.mxu0
      %v1651 = vadd.f32 0.0, %v1650
      %1652 = vmatmul.bf16.gmra.mxu0 %v1580
      %v1653 = vpop.f32.mrf.mxu0
      %v1654 = vadd.f32 0.0, %v1653
      %v1655 = vpop.f32.mrf.mxu0
      %v1656 = vadd.f32 0.0, %v1655
      %1657 = vmatmul.bf16.gmra.mxu0 %v1583
      %v1658 = vpop.f32.mrf.mxu0
      %v1659 = vadd.f32 0.0, %v1658
      %v1660 = vpop.f32.mrf.mxu0
      %v1661 = vadd.f32 0.0, %v1660
      %1662 = vmatmul.bf16.gmra.mxu0 %v1586
      %v1663 = vpop.f32.mrf.mxu0
      %v1664 = vadd.f32 0.0, %v1663
      %v1665 = vpop.f32.mrf.mxu0
      %v1666 = vadd.f32 0.0, %v1665
      %1667 = vmatmul.bf16.gmra.mxu0 %v1589
      %v1668 = vpop.f32.mrf.mxu0
      %v1669 = vadd.f32 0.0, %v1668
      %v1670 = vpop.f32.mrf.mxu0
      %v1671 = vadd.f32 0.0, %v1670
      %1672 = vmatmul.bf16.gmra.mxu0 %v1592
      %v1673 = vpop.f32.mrf.mxu0
      %v1674 = vadd.f32 0.0, %v1673
      %v1675 = vpop.f32.mrf.mxu0
      %v1676 = vadd.f32 0.0, %v1675
      %1677 = vmatmul.bf16.gmra.mxu0 %v1595
      %v1678 = vpop.f32.mrf.mxu0
      %v1679 = vadd.f32 0.0, %v1678
      %v1680 = vpop.f32.mrf.mxu0
      %v1681 = vadd.f32 0.0, %v1680
      %1682 = vmatmul.bf16.gmra.mxu0 %v1598
      %v1683 = vpop.f32.mrf.mxu0
      %v1684 = vadd.f32 0.0, %v1683
      %v1685 = vpop.f32.mrf.mxu0
      %v1686 = vadd.f32 0.0, %v1685
      %1687 = vmatmul.bf16.gmra.mxu0 %v1601
      %v1688 = vpop.f32.mrf.mxu0
      %v1689 = vadd.f32 0.0, %v1688
      %v1690 = vpop.f32.mrf.mxu0
      %v1691 = vadd.f32 0.0, %v1690
      %1692 = vmatmul.bf16.gmra.mxu0 %v1604
      %v1693 = vpop.f32.mrf.mxu0
      %v1694 = vadd.f32 0.0, %v1693
      %v1695 = vpop.f32.mrf.mxu0
      %v1696 = vadd.f32 0.0, %v1695
      %1697 = vdwg.mxu0
      %v1698 = vadd.f32 %v1476, %v1619
      %v1699 = vadd.f32 %v1477, %v1621
      %v1700 = vadd.f32 %v1478, %v1624
      %v1701 = vadd.f32 %v1479, %v1626
      %v1702 = vadd.f32 %v1480, %v1629
      %v1703 = vadd.f32 %v1481, %v1631
      %v1704 = vadd.f32 %v1482, %v1634
      %v1705 = vadd.f32 %v1483, %v1636
      %v1706 = vadd.f32 %v1484, %v1639
      %v1707 = vadd.f32 %v1485, %v1641
      %v1708 = vadd.f32 %v1486, %v1644
      %v1709 = vadd.f32 %v1487, %v1646
      %v1710 = vadd.f32 %v1488, %v1649
      %v1711 = vadd.f32 %v1489, %v1651
      %v1712 = vadd.f32 %v1490, %v1654
      %v1713 = vadd.f32 %v1491, %v1656
      %v1714 = vadd.f32 %v1492, %v1659
      %v1715 = vadd.f32 %v1493, %v1661
      %v1716 = vadd.f32 %v1494, %v1664
      %v1717 = vadd.f32 %v1495, %v1666
      %v1718 = vadd.f32 %v1496, %v1669
      %v1719 = vadd.f32 %v1497, %v1671
      %v1720 = vadd.f32 %v1498, %v1674
      %v1721 = vadd.f32 %v1499, %v1676
      %v1722 = vadd.f32 %v1500, %v1679
      %v1723 = vadd.f32 %v1501, %v1681
      %v1724 = vadd.f32 %v1502, %v1684
      %v1725 = vadd.f32 %v1503, %v1686
      %v1726 = vadd.f32 %v1504, %v1689
      %v1727 = vadd.f32 %v1505, %v1691
      %v1728 = vadd.f32 %v1506, %v1694
      %v1729 = vadd.f32 %v1507, %v1696
      %s1730 = scalar_lea.vmem [#allocation2], 48
      %v1731 = vld [vmem:[%s1730] sm:$0xff]
      %v1732 = vld [vmem:[%s1730 + $0x8] sm:$0xff]
      %v1733 = vld [vmem:[%s1730 + $0x18] sm:$0xff]
      %v1734 = vld [vmem:[%s1730 + $0x20] sm:$0xff]
      %v1735 = vld [vmem:[%s1730 + $0x30] sm:$0xff]
      %v1736 = vld [vmem:[%s1730 + $0x38] sm:$0xff]
      %v1737 = vld [vmem:[%s1730 + $0x48] sm:$0xff]
      %v1738 = vld [vmem:[%s1730 + $0x50] sm:$0xff]
      %v1739 = vld [vmem:[%s1730 + $0x60] sm:$0xff]
      %v1740 = vld [vmem:[%s1730 + $0x68] sm:$0xff]
      %v1741 = vld [vmem:[%s1730 + $0x78] sm:$0xff]
      %v1742 = vld [vmem:[%s1730 + $0x80] sm:$0xff]
      %v1743 = vld [vmem:[%s1730 + $0x90] sm:$0xff]
      %v1744 = vld [vmem:[%s1730 + $0x98] sm:$0xff]
      %v1745 = vld [vmem:[%s1730 + $0xa8] sm:$0xff]
      %v1746 = vld [vmem:[%s1730 + $0xb0] sm:$0xff]
      %v1747 = vld [vmem:[%s1730 + $0xc0] sm:$0xff]
      %v1748 = vld [vmem:[%s1730 + $0xc8] sm:$0xff]
      %v1749 = vld [vmem:[%s1730 + $0xd8] sm:$0xff]
      %v1750 = vld [vmem:[%s1730 + $0xe0] sm:$0xff]
      %v1751 = vld [vmem:[%s1730 + $0xf0] sm:$0xff]
      %v1752 = vld [vmem:[%s1730 + $0xf8] sm:$0xff]
      %v1753 = vld [vmem:[%s1730 + $0x108] sm:$0xff]
      %v1754 = vld [vmem:[%s1730 + $0x110] sm:$0xff]
      %v1755 = vld [vmem:[%s1730 + $0x120] sm:$0xff]
      %v1756 = vld [vmem:[%s1730 + $0x128] sm:$0xff]
      %v1757 = vld [vmem:[%s1730 + $0x138] sm:$0xff]
      %v1758 = vld [vmem:[%s1730 + $0x140] sm:$0xff]
      %v1759 = vld [vmem:[%s1730 + $0x150] sm:$0xff]
      %v1760 = vld [vmem:[%s1730 + $0x158] sm:$0xff]
      %v1761 = vld [vmem:[%s1730 + $0x168] sm:$0xff]
      %v1762 = vld [vmem:[%s1730 + $0x170] sm:$0xff]
      %v1763 = vpack.c.bf16 %v1732, %v1731
      %v1764 = vpack.c.bf16 %v1734, %v1733
      %v1765 = vpack.c.bf16 %v1736, %v1735
      %v1766 = vpack.c.bf16 %v1738, %v1737
      %v1767 = vpack.c.bf16 %v1740, %v1739
      %v1768 = vpack.c.bf16 %v1742, %v1741
      %v1769 = vpack.c.bf16 %v1744, %v1743
      %v1770 = vpack.c.bf16 %v1746, %v1745
      %v1771 = vpack.c.bf16 %v1748, %v1747
      %v1772 = vpack.c.bf16 %v1750, %v1749
      %v1773 = vpack.c.bf16 %v1752, %v1751
      %v1774 = vpack.c.bf16 %v1754, %v1753
      %v1775 = vpack.c.bf16 %v1756, %v1755
      %v1776 = vpack.c.bf16 %v1758, %v1757
      %v1777 = vpack.c.bf16 %v1760, %v1759
      %v1778 = vpack.c.bf16 %v1762, %v1761
      %s1779 = scalar_lea.vmem %s1, 12
      %v1780 = vld [vmem:[%s1779] sm:$0x3]
      %v1782 = vsel %vm237, %v1763, 0
      %v1785 = vsel %vm237, %v1764, 0
      %v1788 = vsel %vm237, %v1765, 0
      %v1791 = vsel %vm237, %v1766, 0
      %v1794 = vsel %vm237, %v1767, 0
      %v1797 = vsel %vm237, %v1768, 0
      %v1800 = vsel %vm237, %v1769, 0
      %v1803 = vsel %vm237, %v1770, 0
      %v1806 = vsel %vm237, %v1771, 0
      %v1809 = vsel %vm237, %v1772, 0
      %v1812 = vsel %vm237, %v1773, 0
      %v1815 = vsel %vm237, %v1774, 0
      %v1818 = vsel %vm237, %v1775, 0
      %v1821 = vsel %vm237, %v1776, 0
      %v1824 = vsel %vm237, %v1777, 0
      %v1827 = vsel %vm237, %v1778, 0
      %v1830 = vsel %vm609, %v1780, 0
      %1832 = vmatpush.bf16.msra.mxu0 0
      %1833 = vmatpush.bf16.msra.mxu0 0
      %1834 = vmatpush.bf16.msra.mxu0 0
      %1835 = vmatpush.bf16.msra.mxu0 0
      %1836 = vmatpush.bf16.msra.mxu0 0
      %1837 = vmatpush.bf16.msra.mxu0 0
      %1838 = vmatpush.bf16.msra.mxu0 0
      %1839 = vmatpush.bf16.msra.mxu0 %v1830
      %1840 = vmatmul.bf16.gmra.mxu0 %v1782
      %v1841 = vpop.f32.mrf.mxu0
      %v1842 = vadd.f32 0.0, %v1841
      %v1843 = vpop.f32.mrf.mxu0
      %v1844 = vadd.f32 0.0, %v1843
      %1845 = vmatmul.bf16.gmra.mxu0 %v1785
      %v1846 = vpop.f32.mrf.mxu0
      %v1847 = vadd.f32 0.0, %v1846
      %v1848 = vpop.f32.mrf.mxu0
      %v1849 = vadd.f32 0.0, %v1848
      %1850 = vmatmul.bf16.gmra.mxu0 %v1788
      %v1851 = vpop.f32.mrf.mxu0
      %v1852 = vadd.f32 0.0, %v1851
      %v1853 = vpop.f32.mrf.mxu0
      %v1854 = vadd.f32 0.0, %v1853
      %1855 = vmatmul.bf16.gmra.mxu0 %v1791
      %v1856 = vpop.f32.mrf.mxu0
      %v1857 = vadd.f32 0.0, %v1856
      %v1858 = vpop.f32.mrf.mxu0
      %v1859 = vadd.f32 0.0, %v1858
      %1860 = vmatmul.bf16.gmra.mxu0 %v1794
      %v1861 = vpop.f32.mrf.mxu0
      %v1862 = vadd.f32 0.0, %v1861
      %v1863 = vpop.f32.mrf.mxu0
      %v1864 = vadd.f32 0.0, %v1863
      %1865 = vmatmul.bf16.gmra.mxu0 %v1797
      %v1866 = vpop.f32.mrf.mxu0
      %v1867 = vadd.f32 0.0, %v1866
      %v1868 = vpop.f32.mrf.mxu0
      %v1869 = vadd.f32 0.0, %v1868
      %1870 = vmatmul.bf16.gmra.mxu0 %v1800
      %v1871 = vpop.f32.mrf.mxu0
      %v1872 = vadd.f32 0.0, %v1871
      %v1873 = vpop.f32.mrf.mxu0
      %v1874 = vadd.f32 0.0, %v1873
      %1875 = vmatmul.bf16.gmra.mxu0 %v1803
      %v1876 = vpop.f32.mrf.mxu0
      %v1877 = vadd.f32 0.0, %v1876
      %v1878 = vpop.f32.mrf.mxu0
      %v1879 = vadd.f32 0.0, %v1878
      %1880 = vmatmul.bf16.gmra.mxu0 %v1806
      %v1881 = vpop.f32.mrf.mxu0
      %v1882 = vadd.f32 0.0, %v1881
      %v1883 = vpop.f32.mrf.mxu0
      %v1884 = vadd.f32 0.0, %v1883
      %1885 = vmatmul.bf16.gmra.mxu0 %v1809
      %v1886 = vpop.f32.mrf.mxu0
      %v1887 = vadd.f32 0.0, %v1886
      %v1888 = vpop.f32.mrf.mxu0
      %v1889 = vadd.f32 0.0, %v1888
      %1890 = vmatmul.bf16.gmra.mxu0 %v1812
      %v1891 = vpop.f32.mrf.mxu0
      %v1892 = vadd.f32 0.0, %v1891
      %v1893 = vpop.f32.mrf.mxu0
      %v1894 = vadd.f32 0.0, %v1893
      %1895 = vmatmul.bf16.gmra.mxu0 %v1815
      %v1896 = vpop.f32.mrf.mxu0
      %v1897 = vadd.f32 0.0, %v1896
      %v1898 = vpop.f32.mrf.mxu0
      %v1899 = vadd.f32 0.0, %v1898
      %1900 = vmatmul.bf16.gmra.mxu0 %v1818
      %v1901 = vpop.f32.mrf.mxu0
      %v1902 = vadd.f32 0.0, %v1901
      %v1903 = vpop.f32.mrf.mxu0
      %v1904 = vadd.f32 0.0, %v1903
      %1905 = vmatmul.bf16.gmra.mxu0 %v1821
      %v1906 = vpop.f32.mrf.mxu0
      %v1907 = vadd.f32 0.0, %v1906
      %v1908 = vpop.f32.mrf.mxu0
      %v1909 = vadd.f32 0.0, %v1908
      %1910 = vmatmul.bf16.gmra.mxu0 %v1824
      %v1911 = vpop.f32.mrf.mxu0
      %v1912 = vadd.f32 0.0, %v1911
      %v1913 = vpop.f32.mrf.mxu0
      %v1914 = vadd.f32 0.0, %v1913
      %1915 = vmatmul.bf16.gmra.mxu0 %v1827
      %v1916 = vpop.f32.mrf.mxu0
      %v1917 = vadd.f32 0.0, %v1916
      %v1918 = vpop.f32.mrf.mxu0
      %v1919 = vadd.f32 0.0, %v1918
      %1920 = vdwg.mxu0
      %v1921 = vadd.f32 %v1698, %v1842
      %v1922 = vadd.f32 %v1699, %v1844
      %v1923 = vadd.f32 %v1700, %v1847
      %v1924 = vadd.f32 %v1701, %v1849
      %v1925 = vadd.f32 %v1702, %v1852
      %v1926 = vadd.f32 %v1703, %v1854
      %v1927 = vadd.f32 %v1704, %v1857
      %v1928 = vadd.f32 %v1705, %v1859
      %v1929 = vadd.f32 %v1706, %v1862
      %v1930 = vadd.f32 %v1707, %v1864
      %v1931 = vadd.f32 %v1708, %v1867
      %v1932 = vadd.f32 %v1709, %v1869
      %v1933 = vadd.f32 %v1710, %v1872
      %v1934 = vadd.f32 %v1711, %v1874
      %v1935 = vadd.f32 %v1712, %v1877
      %v1936 = vadd.f32 %v1713, %v1879
      %v1937 = vadd.f32 %v1714, %v1882
      %v1938 = vadd.f32 %v1715, %v1884
      %v1939 = vadd.f32 %v1716, %v1887
      %v1940 = vadd.f32 %v1717, %v1889
      %v1941 = vadd.f32 %v1718, %v1892
      %v1942 = vadd.f32 %v1719, %v1894
      %v1943 = vadd.f32 %v1720, %v1897
      %v1944 = vadd.f32 %v1721, %v1899
      %v1945 = vadd.f32 %v1722, %v1902
      %v1946 = vadd.f32 %v1723, %v1904
      %v1947 = vadd.f32 %v1724, %v1907
      %v1948 = vadd.f32 %v1725, %v1909
      %v1949 = vadd.f32 %v1726, %v1912
      %v1950 = vadd.f32 %v1727, %v1914
      %v1951 = vadd.f32 %v1728, %v1917
      %v1952 = vadd.f32 %v1729, %v1919
      %v1953 = vld [vmem:[%s1730 + $0x1] sm:$0xff]
      %v1954 = vld [vmem:[%s1730 + $0x9] sm:$0xff]
      %v1955 = vld [vmem:[%s1730 + $0x19] sm:$0xff]
      %v1956 = vld [vmem:[%s1730 + $0x21] sm:$0xff]
      %v1957 = vld [vmem:[%s1730 + $0x31] sm:$0xff]
      %v1958 = vld [vmem:[%s1730 + $0x39] sm:$0xff]
      %v1959 = vld [vmem:[%s1730 + $0x49] sm:$0xff]
      %v1960 = vld [vmem:[%s1730 + $0x51] sm:$0xff]
      %v1961 = vld [vmem:[%s1730 + $0x61] sm:$0xff]
      %v1962 = vld [vmem:[%s1730 + $0x69] sm:$0xff]
      %v1963 = vld [vmem:[%s1730 + $0x79] sm:$0xff]
      %v1964 = vld [vmem:[%s1730 + $0x81] sm:$0xff]
      %v1965 = vld [vmem:[%s1730 + $0x91] sm:$0xff]
      %v1966 = vld [vmem:[%s1730 + $0x99] sm:$0xff]
      %v1967 = vld [vmem:[%s1730 + $0xa9] sm:$0xff]
      %v1968 = vld [vmem:[%s1730 + $0xb1] sm:$0xff]
      %v1969 = vld [vmem:[%s1730 + $0xc1] sm:$0xff]
      %v1970 = vld [vmem:[%s1730 + $0xc9] sm:$0xff]
      %v1971 = vld [vmem:[%s1730 + $0xd9] sm:$0xff]
      %v1972 = vld [vmem:[%s1730 + $0xe1] sm:$0xff]
      %v1973 = vld [vmem:[%s1730 + $0xf1] sm:$0xff]
      %v1974 = vld [vmem:[%s1730 + $0xf9] sm:$0xff]
      %v1975 = vld [vmem:[%s1730 + $0x109] sm:$0xff]
      %v1976 = vld [vmem:[%s1730 + $0x111] sm:$0xff]
      %v1977 = vld [vmem:[%s1730 + $0x121] sm:$0xff]
      %v1978 = vld [vmem:[%s1730 + $0x129] sm:$0xff]
      %v1979 = vld [vmem:[%s1730 + $0x139] sm:$0xff]
      %v1980 = vld [vmem:[%s1730 + $0x141] sm:$0xff]
      %v1981 = vld [vmem:[%s1730 + $0x151] sm:$0xff]
      %v1982 = vld [vmem:[%s1730 + $0x159] sm:$0xff]
      %v1983 = vld [vmem:[%s1730 + $0x169] sm:$0xff]
      %v1984 = vld [vmem:[%s1730 + $0x171] sm:$0xff]
      %v1985 = vpack.c.bf16 %v1954, %v1953
      %v1986 = vpack.c.bf16 %v1956, %v1955
      %v1987 = vpack.c.bf16 %v1958, %v1957
      %v1988 = vpack.c.bf16 %v1960, %v1959
      %v1989 = vpack.c.bf16 %v1962, %v1961
      %v1990 = vpack.c.bf16 %v1964, %v1963
      %v1991 = vpack.c.bf16 %v1966, %v1965
      %v1992 = vpack.c.bf16 %v1968, %v1967
      %v1993 = vpack.c.bf16 %v1970, %v1969
      %v1994 = vpack.c.bf16 %v1972, %v1971
      %v1995 = vpack.c.bf16 %v1974, %v1973
      %v1996 = vpack.c.bf16 %v1976, %v1975
      %v1997 = vpack.c.bf16 %v1978, %v1977
      %v1998 = vpack.c.bf16 %v1980, %v1979
      %v1999 = vpack.c.bf16 %v1982, %v1981
      %v2000 = vpack.c.bf16 %v1984, %v1983
      %s2001 = scalar_lea.vmem %s1, 14
      %v2002 = vld [vmem:[%s2001] sm:$0x3]
      %v2004 = vsel %vm237, %v1985, 0
      %v2007 = vsel %vm237, %v1986, 0
      %v2010 = vsel %vm237, %v1987, 0
      %v2013 = vsel %vm237, %v1988, 0
      %v2016 = vsel %vm237, %v1989, 0
      %v2019 = vsel %vm237, %v1990, 0
      %v2022 = vsel %vm237, %v1991, 0
      %v2025 = vsel %vm237, %v1992, 0
      %v2028 = vsel %vm237, %v1993, 0
      %v2031 = vsel %vm237, %v1994, 0
      %v2034 = vsel %vm237, %v1995, 0
      %v2037 = vsel %vm237, %v1996, 0
      %v2040 = vsel %vm237, %v1997, 0
      %v2043 = vsel %vm237, %v1998, 0
      %v2046 = vsel %vm237, %v1999, 0
      %v2049 = vsel %vm237, %v2000, 0
      %v2052 = vsel %vm609, %v2002, 0
      %2054 = vmatpush.bf16.msra.mxu0 0
      %2055 = vmatpush.bf16.msra.mxu0 0
      %2056 = vmatpush.bf16.msra.mxu0 0
      %2057 = vmatpush.bf16.msra.mxu0 0
      %2058 = vmatpush.bf16.msra.mxu0 0
      %2059 = vmatpush.bf16.msra.mxu0 0
      %2060 = vmatpush.bf16.msra.mxu0 0
      %2061 = vmatpush.bf16.msra.mxu0 %v2052
      %2062 = vmatmul.bf16.gmra.mxu0 %v2004
      %v2063 = vpop.f32.mrf.mxu0
      %v2064 = vadd.f32 0.0, %v2063
      %v2065 = vpop.f32.mrf.mxu0
      %v2066 = vadd.f32 0.0, %v2065
      %2067 = vmatmul.bf16.gmra.mxu0 %v2007
      %v2068 = vpop.f32.mrf.mxu0
      %v2069 = vadd.f32 0.0, %v2068
      %v2070 = vpop.f32.mrf.mxu0
      %v2071 = vadd.f32 0.0, %v2070
      %2072 = vmatmul.bf16.gmra.mxu0 %v2010
      %v2073 = vpop.f32.mrf.mxu0
      %v2074 = vadd.f32 0.0, %v2073
      %v2075 = vpop.f32.mrf.mxu0
      %v2076 = vadd.f32 0.0, %v2075
      %2077 = vmatmul.bf16.gmra.mxu0 %v2013
      %v2078 = vpop.f32.mrf.mxu0
      %v2079 = vadd.f32 0.0, %v2078
      %v2080 = vpop.f32.mrf.mxu0
      %v2081 = vadd.f32 0.0, %v2080
      %2082 = vmatmul.bf16.gmra.mxu0 %v2016
      %v2083 = vpop.f32.mrf.mxu0
      %v2084 = vadd.f32 0.0, %v2083
      %v2085 = vpop.f32.mrf.mxu0
      %v2086 = vadd.f32 0.0, %v2085
      %2087 = vmatmul.bf16.gmra.mxu0 %v2019
      %v2088 = vpop.f32.mrf.mxu0
      %v2089 = vadd.f32 0.0, %v2088
      %v2090 = vpop.f32.mrf.mxu0
      %v2091 = vadd.f32 0.0, %v2090
      %2092 = vmatmul.bf16.gmra.mxu0 %v2022
      %v2093 = vpop.f32.mrf.mxu0
      %v2094 = vadd.f32 0.0, %v2093
      %v2095 = vpop.f32.mrf.mxu0
      %v2096 = vadd.f32 0.0, %v2095
      %2097 = vmatmul.bf16.gmra.mxu0 %v2025
      %v2098 = vpop.f32.mrf.mxu0
      %v2099 = vadd.f32 0.0, %v2098
      %v2100 = vpop.f32.mrf.mxu0
      %v2101 = vadd.f32 0.0, %v2100
      %2102 = vmatmul.bf16.gmra.mxu0 %v2028
      %v2103 = vpop.f32.mrf.mxu0
      %v2104 = vadd.f32 0.0, %v2103
      %v2105 = vpop.f32.mrf.mxu0
      %v2106 = vadd.f32 0.0, %v2105
      %2107 = vmatmul.bf16.gmra.mxu0 %v2031
      %v2108 = vpop.f32.mrf.mxu0
      %v2109 = vadd.f32 0.0, %v2108
      %v2110 = vpop.f32.mrf.mxu0
      %v2111 = vadd.f32 0.0, %v2110
      %2112 = vmatmul.bf16.gmra.mxu0 %v2034
      %v2113 = vpop.f32.mrf.mxu0
      %v2114 = vadd.f32 0.0, %v2113
      %v2115 = vpop.f32.mrf.mxu0
      %v2116 = vadd.f32 0.0, %v2115
      %2117 = vmatmul.bf16.gmra.mxu0 %v2037
      %v2118 = vpop.f32.mrf.mxu0
      %v2119 = vadd.f32 0.0, %v2118
      %v2120 = vpop.f32.mrf.mxu0
      %v2121 = vadd.f32 0.0, %v2120
      %2122 = vmatmul.bf16.gmra.mxu0 %v2040
      %v2123 = vpop.f32.mrf.mxu0
      %v2124 = vadd.f32 0.0, %v2123
      %v2125 = vpop.f32.mrf.mxu0
      %v2126 = vadd.f32 0.0, %v2125
      %2127 = vmatmul.bf16.gmra.mxu0 %v2043
      %v2128 = vpop.f32.mrf.mxu0
      %v2129 = vadd.f32 0.0, %v2128
      %v2130 = vpop.f32.mrf.mxu0
      %v2131 = vadd.f32 0.0, %v2130
      %2132 = vmatmul.bf16.gmra.mxu0 %v2046
      %v2133 = vpop.f32.mrf.mxu0
      %v2134 = vadd.f32 0.0, %v2133
      %v2135 = vpop.f32.mrf.mxu0
      %v2136 = vadd.f32 0.0, %v2135
      %2137 = vmatmul.bf16.gmra.mxu0 %v2049
      %v2138 = vpop.f32.mrf.mxu0
      %v2139 = vadd.f32 0.0, %v2138
      %v2140 = vpop.f32.mrf.mxu0
      %v2141 = vadd.f32 0.0, %v2140
      %2142 = vdwg.mxu0
      %v2143 = vadd.f32 %v1921, %v2064
      %v2144 = vadd.f32 %v1922, %v2066
      %v2145 = vadd.f32 %v1923, %v2069
      %v2146 = vadd.f32 %v1924, %v2071
      %v2147 = vadd.f32 %v1925, %v2074
      %v2148 = vadd.f32 %v1926, %v2076
      %v2149 = vadd.f32 %v1927, %v2079
      %v2150 = vadd.f32 %v1928, %v2081
      %v2151 = vadd.f32 %v1929, %v2084
      %v2152 = vadd.f32 %v1930, %v2086
      %v2153 = vadd.f32 %v1931, %v2089
      %v2154 = vadd.f32 %v1932, %v2091
      %v2155 = vadd.f32 %v1933, %v2094
      %v2156 = vadd.f32 %v1934, %v2096
      %v2157 = vadd.f32 %v1935, %v2099
      %v2158 = vadd.f32 %v1936, %v2101
      %v2159 = vadd.f32 %v1937, %v2104
      %v2160 = vadd.f32 %v1938, %v2106
      %v2161 = vadd.f32 %v1939, %v2109
      %v2162 = vadd.f32 %v1940, %v2111
      %v2163 = vadd.f32 %v1941, %v2114
      %v2164 = vadd.f32 %v1942, %v2116
      %v2165 = vadd.f32 %v1943, %v2119
      %v2166 = vadd.f32 %v1944, %v2121
      %v2167 = vadd.f32 %v1945, %v2124
      %v2168 = vadd.f32 %v1946, %v2126
      %v2169 = vadd.f32 %v1947, %v2129
      %v2170 = vadd.f32 %v1948, %v2131
      %v2171 = vadd.f32 %v1949, %v2134
      %v2172 = vadd.f32 %v1950, %v2136
      %v2173 = vadd.f32 %v1951, %v2139
      %v2174 = vadd.f32 %v1952, %v2141
      %v2175 = vld [vmem:[%s1730 + $0x2] sm:$0xff]
      %v2176 = vld [vmem:[%s1730 + $0xa] sm:$0xff]
      %v2177 = vld [vmem:[%s1730 + $0x1a] sm:$0xff]
      %v2178 = vld [vmem:[%s1730 + $0x22] sm:$0xff]
      %v2179 = vld [vmem:[%s1730 + $0x32] sm:$0xff]
      %v2180 = vld [vmem:[%s1730 + $0x3a] sm:$0xff]
      %v2181 = vld [vmem:[%s1730 + $0x4a] sm:$0xff]
      %v2182 = vld [vmem:[%s1730 + $0x52] sm:$0xff]
      %v2183 = vld [vmem:[%s1730 + $0x62] sm:$0xff]
      %v2184 = vld [vmem:[%s1730 + $0x6a] sm:$0xff]
      %v2185 = vld [vmem:[%s1730 + $0x7a] sm:$0xff]
      %v2186 = vld [vmem:[%s1730 + $0x82] sm:$0xff]
      %v2187 = vld [vmem:[%s1730 + $0x92] sm:$0xff]
      %v2188 = vld [vmem:[%s1730 + $0x9a] sm:$0xff]
      %v2189 = vld [vmem:[%s1730 + $0xaa] sm:$0xff]
      %v2190 = vld [vmem:[%s1730 + $0xb2] sm:$0xff]
      %v2191 = vld [vmem:[%s1730 + $0xc2] sm:$0xff]
      %v2192 = vld [vmem:[%s1730 + $0xca] sm:$0xff]
      %v2193 = vld [vmem:[%s1730 + $0xda] sm:$0xff]
      %v2194 = vld [vmem:[%s1730 + $0xe2] sm:$0xff]
      %v2195 = vld [vmem:[%s1730 + $0xf2] sm:$0xff]
      %v2196 = vld [vmem:[%s1730 + $0xfa] sm:$0xff]
      %v2197 = vld [vmem:[%s1730 + $0x10a] sm:$0xff]
      %v2198 = vld [vmem:[%s1730 + $0x112] sm:$0xff]
      %v2199 = vld [vmem:[%s1730 + $0x122] sm:$0xff]
      %v2200 = vld [vmem:[%s1730 + $0x12a] sm:$0xff]
      %v2201 = vld [vmem:[%s1730 + $0x13a] sm:$0xff]
      %v2202 = vld [vmem:[%s1730 + $0x142] sm:$0xff]
      %v2203 = vld [vmem:[%s1730 + $0x152] sm:$0xff]
      %v2204 = vld [vmem:[%s1730 + $0x15a] sm:$0xff]
      %v2205 = vld [vmem:[%s1730 + $0x16a] sm:$0xff]
      %v2206 = vld [vmem:[%s1730 + $0x172] sm:$0xff]
      %v2207 = vpack.c.bf16 %v2176, %v2175
      %v2208 = vpack.c.bf16 %v2178, %v2177
      %v2209 = vpack.c.bf16 %v2180, %v2179
      %v2210 = vpack.c.bf16 %v2182, %v2181
      %v2211 = vpack.c.bf16 %v2184, %v2183
      %v2212 = vpack.c.bf16 %v2186, %v2185
      %v2213 = vpack.c.bf16 %v2188, %v2187
      %v2214 = vpack.c.bf16 %v2190, %v2189
      %v2215 = vpack.c.bf16 %v2192, %v2191
      %v2216 = vpack.c.bf16 %v2194, %v2193
      %v2217 = vpack.c.bf16 %v2196, %v2195
      %v2218 = vpack.c.bf16 %v2198, %v2197
      %v2219 = vpack.c.bf16 %v2200, %v2199
      %v2220 = vpack.c.bf16 %v2202, %v2201
      %v2221 = vpack.c.bf16 %v2204, %v2203
      %v2222 = vpack.c.bf16 %v2206, %v2205
      %s2223 = scalar_lea.vmem %s1, 16
      %v2224 = vld [vmem:[%s2223] sm:$0x3]
      %v2226 = vsel %vm237, %v2207, 0
      %v2229 = vsel %vm237, %v2208, 0
      %v2232 = vsel %vm237, %v2209, 0
      %v2235 = vsel %vm237, %v2210, 0
      %v2238 = vsel %vm237, %v2211, 0
      %v2241 = vsel %vm237, %v2212, 0
      %v2244 = vsel %vm237, %v2213, 0
      %v2247 = vsel %vm237, %v2214, 0
      %v2250 = vsel %vm237, %v2215, 0
      %v2253 = vsel %vm237, %v2216, 0
      %v2256 = vsel %vm237, %v2217, 0
      %v2259 = vsel %vm237, %v2218, 0
      %v2262 = vsel %vm237, %v2219, 0
      %v2265 = vsel %vm237, %v2220, 0
      %v2268 = vsel %vm237, %v2221, 0
      %v2271 = vsel %vm237, %v2222, 0
      %v2274 = vsel %vm609, %v2224, 0
      %2276 = vmatpush.bf16.msra.mxu0 0
      %2277 = vmatpush.bf16.msra.mxu0 0
      %2278 = vmatpush.bf16.msra.mxu0 0
      %2279 = vmatpush.bf16.msra.mxu0 0
      %2280 = vmatpush.bf16.msra.mxu0 0
      %2281 = vmatpush.bf16.msra.mxu0 0
      %2282 = vmatpush.bf16.msra.mxu0 0
      %2283 = vmatpush.bf16.msra.mxu0 %v2274
      %2284 = vmatmul.bf16.gmra.mxu0 %v2226
      %v2285 = vpop.f32.mrf.mxu0
      %v2286 = vadd.f32 0.0, %v2285
      %v2287 = vpop.f32.mrf.mxu0
      %v2288 = vadd.f32 0.0, %v2287
      %2289 = vmatmul.bf16.gmra.mxu0 %v2229
      %v2290 = vpop.f32.mrf.mxu0
      %v2291 = vadd.f32 0.0, %v2290
      %v2292 = vpop.f32.mrf.mxu0
      %v2293 = vadd.f32 0.0, %v2292
      %2294 = vmatmul.bf16.gmra.mxu0 %v2232
      %v2295 = vpop.f32.mrf.mxu0
      %v2296 = vadd.f32 0.0, %v2295
      %v2297 = vpop.f32.mrf.mxu0
      %v2298 = vadd.f32 0.0, %v2297
      %2299 = vmatmul.bf16.gmra.mxu0 %v2235
      %v2300 = vpop.f32.mrf.mxu0
      %v2301 = vadd.f32 0.0, %v2300
      %v2302 = vpop.f32.mrf.mxu0
      %v2303 = vadd.f32 0.0, %v2302
      %2304 = vmatmul.bf16.gmra.mxu0 %v2238
      %v2305 = vpop.f32.mrf.mxu0
      %v2306 = vadd.f32 0.0, %v2305
      %v2307 = vpop.f32.mrf.mxu0
      %v2308 = vadd.f32 0.0, %v2307
      %2309 = vmatmul.bf16.gmra.mxu0 %v2241
      %v2310 = vpop.f32.mrf.mxu0
      %v2311 = vadd.f32 0.0, %v2310
      %v2312 = vpop.f32.mrf.mxu0
      %v2313 = vadd.f32 0.0, %v2312
      %2314 = vmatmul.bf16.gmra.mxu0 %v2244
      %v2315 = vpop.f32.mrf.mxu0
      %v2316 = vadd.f32 0.0, %v2315
      %v2317 = vpop.f32.mrf.mxu0
      %v2318 = vadd.f32 0.0, %v2317
      %2319 = vmatmul.bf16.gmra.mxu0 %v2247
      %v2320 = vpop.f32.mrf.mxu0
      %v2321 = vadd.f32 0.0, %v2320
      %v2322 = vpop.f32.mrf.mxu0
      %v2323 = vadd.f32 0.0, %v2322
      %2324 = vmatmul.bf16.gmra.mxu0 %v2250
      %v2325 = vpop.f32.mrf.mxu0
      %v2326 = vadd.f32 0.0, %v2325
      %v2327 = vpop.f32.mrf.mxu0
      %v2328 = vadd.f32 0.0, %v2327
      %2329 = vmatmul.bf16.gmra.mxu0 %v2253
      %v2330 = vpop.f32.mrf.mxu0
      %v2331 = vadd.f32 0.0, %v2330
      %v2332 = vpop.f32.mrf.mxu0
      %v2333 = vadd.f32 0.0, %v2332
      %2334 = vmatmul.bf16.gmra.mxu0 %v2256
      %v2335 = vpop.f32.mrf.mxu0
      %v2336 = vadd.f32 0.0, %v2335
      %v2337 = vpop.f32.mrf.mxu0
      %v2338 = vadd.f32 0.0, %v2337
      %2339 = vmatmul.bf16.gmra.mxu0 %v2259
      %v2340 = vpop.f32.mrf.mxu0
      %v2341 = vadd.f32 0.0, %v2340
      %v2342 = vpop.f32.mrf.mxu0
      %v2343 = vadd.f32 0.0, %v2342
      %2344 = vmatmul.bf16.gmra.mxu0 %v2262
      %v2345 = vpop.f32.mrf.mxu0
      %v2346 = vadd.f32 0.0, %v2345
      %v2347 = vpop.f32.mrf.mxu0
      %v2348 = vadd.f32 0.0, %v2347
      %2349 = vmatmul.bf16.gmra.mxu0 %v2265
      %v2350 = vpop.f32.mrf.mxu0
      %v2351 = vadd.f32 0.0, %v2350
      %v2352 = vpop.f32.mrf.mxu0
      %v2353 = vadd.f32 0.0, %v2352
      %2354 = vmatmul.bf16.gmra.mxu0 %v2268
      %v2355 = vpop.f32.mrf.mxu0
      %v2356 = vadd.f32 0.0, %v2355
      %v2357 = vpop.f32.mrf.mxu0
      %v2358 = vadd.f32 0.0, %v2357
      %2359 = vmatmul.bf16.gmra.mxu0 %v2271
      %v2360 = vpop.f32.mrf.mxu0
      %v2361 = vadd.f32 0.0, %v2360
      %v2362 = vpop.f32.mrf.mxu0
      %v2363 = vadd.f32 0.0, %v2362
      %2364 = vdwg.mxu0
      %v2365 = vadd.f32 %v2143, %v2286
      %v2366 = vadd.f32 %v2144, %v2288
      %v2367 = vadd.f32 %v2145, %v2291
      %v2368 = vadd.f32 %v2146, %v2293
      %v2369 = vadd.f32 %v2147, %v2296
      %v2370 = vadd.f32 %v2148, %v2298
      %v2371 = vadd.f32 %v2149, %v2301
      %v2372 = vadd.f32 %v2150, %v2303
      %v2373 = vadd.f32 %v2151, %v2306
      %v2374 = vadd.f32 %v2152, %v2308
      %v2375 = vadd.f32 %v2153, %v2311
      %v2376 = vadd.f32 %v2154, %v2313
      %v2377 = vadd.f32 %v2155, %v2316
      %v2378 = vadd.f32 %v2156, %v2318
      %v2379 = vadd.f32 %v2157, %v2321
      %v2380 = vadd.f32 %v2158, %v2323
      %v2381 = vadd.f32 %v2159, %v2326
      %v2382 = vadd.f32 %v2160, %v2328
      %v2383 = vadd.f32 %v2161, %v2331
      %v2384 = vadd.f32 %v2162, %v2333
      %v2385 = vadd.f32 %v2163, %v2336
      %v2386 = vadd.f32 %v2164, %v2338
      %v2387 = vadd.f32 %v2165, %v2341
      %v2388 = vadd.f32 %v2166, %v2343
      %v2389 = vadd.f32 %v2167, %v2346
      %v2390 = vadd.f32 %v2168, %v2348
      %v2391 = vadd.f32 %v2169, %v2351
      %v2392 = vadd.f32 %v2170, %v2353
      %v2393 = vadd.f32 %v2171, %v2356
      %v2394 = vadd.f32 %v2172, %v2358
      %v2395 = vadd.f32 %v2173, %v2361
      %v2396 = vadd.f32 %v2174, %v2363
      %2397 = vst.msk [vmem:[%s231] sm:$0xff] %vm237, %v2365
      %2398 = vst.msk [vmem:[%s231 + $0x8] sm:$0xff] %vm237, %v2366
      %2399 = vst.msk [vmem:[%s231 + $0x10] sm:$0xff] %vm237, %v2367
      %2400 = vst.msk [vmem:[%s231 + $0x18] sm:$0xff] %vm237, %v2368
      %2401 = vst.msk [vmem:[%s231 + $0x20] sm:$0xff] %vm237, %v2369
      %2402 = vst.msk [vmem:[%s231 + $0x28] sm:$0xff] %vm237, %v2370
      %2403 = vst.msk [vmem:[%s231 + $0x30] sm:$0xff] %vm237, %v2371
      %2404 = vst.msk [vmem:[%s231 + $0x38] sm:$0xff] %vm237, %v2372
      %2405 = vst.msk [vmem:[%s231 + $0x40] sm:$0xff] %vm237, %v2373
      %2406 = vst.msk [vmem:[%s231 + $0x48] sm:$0xff] %vm237, %v2374
      %2407 = vst.msk [vmem:[%s231 + $0x50] sm:$0xff] %vm237, %v2375
      %2408 = vst.msk [vmem:[%s231 + $0x58] sm:$0xff] %vm237, %v2376
      %2409 = vst.msk [vmem:[%s231 + $0x60] sm:$0xff] %vm237, %v2377
      %2410 = vst.msk [vmem:[%s231 + $0x68] sm:$0xff] %vm237, %v2378
      %2411 = vst.msk [vmem:[%s231 + $0x70] sm:$0xff] %vm237, %v2379
      %2412 = vst.msk [vmem:[%s231 + $0x78] sm:$0xff] %vm237, %v2380
      %2413 = vst.msk [vmem:[%s231 + $0x80] sm:$0xff] %vm237, %v2381
      %2414 = vst.msk [vmem:[%s231 + $0x88] sm:$0xff] %vm237, %v2382
      %2415 = vst.msk [vmem:[%s231 + $0x90] sm:$0xff] %vm237, %v2383
      %2416 = vst.msk [vmem:[%s231 + $0x98] sm:$0xff] %vm237, %v2384
      %2417 = vst.msk [vmem:[%s231 + $0xa0] sm:$0xff] %vm237, %v2385
      %2418 = vst.msk [vmem:[%s231 + $0xa8] sm:$0xff] %vm237, %v2386
      %2419 = vst.msk [vmem:[%s231 + $0xb0] sm:$0xff] %vm237, %v2387
      %2420 = vst.msk [vmem:[%s231 + $0xb8] sm:$0xff] %vm237, %v2388
      %2421 = vst.msk [vmem:[%s231 + $0xc0] sm:$0xff] %vm237, %v2389
      %2422 = vst.msk [vmem:[%s231 + $0xc8] sm:$0xff] %vm237, %v2390
      %2423 = vst.msk [vmem:[%s231 + $0xd0] sm:$0xff] %vm237, %v2391
      %2424 = vst.msk [vmem:[%s231 + $0xd8] sm:$0xff] %vm237, %v2392
      %2425 = vst.msk [vmem:[%s231 + $0xe0] sm:$0xff] %vm237, %v2393
      %2426 = vst.msk [vmem:[%s231 + $0xe8] sm:$0xff] %vm237, %v2394
      %2427 = vst.msk [vmem:[%s231 + $0xf0] sm:$0xff] %vm237, %v2395
      %2428 = vst.msk [vmem:[%s231 + $0xf8] sm:$0xff] %vm237, %v2396
      %v2429 = vsel %vm237, %v2365, 0.0
      %v2430 = vsel %vm237, %v2366, 0.0
      %v2431 = vadd.f32 %v2429, %v2430
      %v2432 = vsel %vm237, %v2367, 0.0
      %v2433 = vadd.f32 %v2431, %v2432
      %v2434 = vsel %vm237, %v2368, 0.0
      %v2435 = vadd.f32 %v2433, %v2434
      %v2436 = vsel %vm237, %v2369, 0.0
      %v2437 = vadd.f32 %v2435, %v2436
      %v2438 = vsel %vm237, %v2370, 0.0
      %v2439 = vadd.f32 %v2437, %v2438
      %v2440 = vsel %vm237, %v2371, 0.0
      %v2441 = vadd.f32 %v2439, %v2440
      %v2442 = vsel %vm237, %v2372, 0.0
      %v2443 = vadd.f32 %v2441, %v2442
      %v2444 = vsel %vm237, %v2373, 0.0
      %v2445 = vadd.f32 %v2443, %v2444
      %v2446 = vsel %vm237, %v2374, 0.0
      %v2447 = vadd.f32 %v2445, %v2446
      %v2448 = vsel %vm237, %v2375, 0.0
      %v2449 = vadd.f32 %v2447, %v2448
      %v2450 = vsel %vm237, %v2376, 0.0
      %v2451 = vadd.f32 %v2449, %v2450
      %v2452 = vsel %vm237, %v2377, 0.0
      %v2453 = vadd.f32 %v2451, %v2452
      %v2454 = vsel %vm237, %v2378, 0.0
      %v2455 = vadd.f32 %v2453, %v2454
      %v2456 = vsel %vm237, %v2379, 0.0
      %v2457 = vadd.f32 %v2455, %v2456
      %v2458 = vsel %vm237, %v2380, 0.0
      %v2459 = vadd.f32 %v2457, %v2458
      %v2460 = vsel %vm237, %v2381, 0.0
      %v2461 = vadd.f32 %v2459, %v2460
      %v2462 = vsel %vm237, %v2382, 0.0
      %v2463 = vadd.f32 %v2461, %v2462
      %v2464 = vsel %vm237, %v2383, 0.0
      %v2465 = vadd.f32 %v2463, %v2464
      %v2466 = vsel %vm237, %v2384, 0.0
      %v2467 = vadd.f32 %v2465, %v2466
      %v2468 = vsel %vm237, %v2385, 0.0
      %v2469 = vadd.f32 %v2467, %v2468
      %v2470 = vsel %vm237, %v2386, 0.0
      %v2471 = vadd.f32 %v2469, %v2470
      %v2472 = vsel %vm237, %v2387, 0.0
      %v2473 = vadd.f32 %v2471, %v2472
      %v2474 = vsel %vm237, %v2388, 0.0
      %v2475 = vadd.f32 %v2473, %v2474
      %v2476 = vsel %vm237, %v2389, 0.0
      %v2477 = vadd.f32 %v2475, %v2476
      %v2478 = vsel %vm237, %v2390, 0.0
      %v2479 = vadd.f32 %v2477, %v2478
      %v2480 = vsel %vm237, %v2391, 0.0
      %v2481 = vadd.f32 %v2479, %v2480
      %v2482 = vsel %vm237, %v2392, 0.0
      %v2483 = vadd.f32 %v2481, %v2482
      %v2484 = vsel %vm237, %v2393, 0.0
      %v2485 = vadd.f32 %v2483, %v2484
      %v2486 = vsel %vm237, %v2394, 0.0
      %v2487 = vadd.f32 %v2485, %v2486
      %v2488 = vsel %vm237, %v2395, 0.0
      %v2489 = vadd.f32 %v2487, %v2488
      %v2490 = vsel %vm237, %v2396, 0.0
      %v2491 = vadd.f32 %v2489, %v2490
      %v2492 = vrot.slane %v2491, 4
      %v2493 = vadd.f32 %v2491, %v2492
      %v2494 = vrot.slane %v2493, 2
      %v2495 = vadd.f32 %v2493, %v2494
      %v2496 = vrot.slane %v2495, 1
      %v2497 = vadd.f32 %v2495, %v2496
      %vm2498 = vcmask 24576
      %2499 = vst.msk [vmem:[%s235] sm:$0x1] %vm2498, %v2497
      %v2500 = vmul.f32 %v2365, %v2365
      %v2501 = vmul.f32 %v2366, %v2366
      %v2502 = vmul.f32 %v2367, %v2367
      %v2503 = vmul.f32 %v2368, %v2368
      %v2504 = vmul.f32 %v2369, %v2369
      %v2505 = vmul.f32 %v2370, %v2370
      %v2506 = vmul.f32 %v2371, %v2371
      %v2507 = vmul.f32 %v2372, %v2372
      %v2508 = vmul.f32 %v2373, %v2373
      %v2509 = vmul.f32 %v2374, %v2374
      %v2510 = vmul.f32 %v2375, %v2375
      %v2511 = vmul.f32 %v2376, %v2376
      %v2512 = vmul.f32 %v2377, %v2377
      %v2513 = vmul.f32 %v2378, %v2378
      %v2514 = vmul.f32 %v2379, %v2379
      %v2515 = vmul.f32 %v2380, %v2380
      %v2516 = vmul.f32 %v2381, %v2381
      %v2517 = vmul.f32 %v2382, %v2382
      %v2518 = vmul.f32 %v2383, %v2383
      %v2519 = vmul.f32 %v2384, %v2384
      %v2520 = vmul.f32 %v2385, %v2385
      %v2521 = vmul.f32 %v2386, %v2386
      %v2522 = vmul.f32 %v2387, %v2387
      %v2523 = vmul.f32 %v2388, %v2388
      %v2524 = vmul.f32 %v2389, %v2389
      %v2525 = vmul.f32 %v2390, %v2390
      %v2526 = vmul.f32 %v2391, %v2391
      %v2527 = vmul.f32 %v2392, %v2392
      %v2528 = vmul.f32 %v2393, %v2393
      %v2529 = vmul.f32 %v2394, %v2394
      %v2530 = vmul.f32 %v2395, %v2395
      %v2531 = vmul.f32 %v2396, %v2396
      %v2532 = vsel %vm237, %v2500, 0.0
      %v2533 = vsel %vm237, %v2501, 0.0
      %v2534 = vadd.f32 %v2532, %v2533
      %v2535 = vsel %vm237, %v2502, 0.0
      %v2536 = vadd.f32 %v2534, %v2535
      %v2537 = vsel %vm237, %v2503, 0.0
      %v2538 = vadd.f32 %v2536, %v2537
      %v2539 = vsel %vm237, %v2504, 0.0
      %v2540 = vadd.f32 %v2538, %v2539
      %v2541 = vsel %vm237, %v2505, 0.0
      %v2542 = vadd.f32 %v2540, %v2541
      %v2543 = vsel %vm237, %v2506, 0.0
      %v2544 = vadd.f32 %v2542, %v2543
      %v2545 = vsel %vm237, %v2507, 0.0
      %v2546 = vadd.f32 %v2544, %v2545
      %v2547 = vsel %vm237, %v2508, 0.0
      %v2548 = vadd.f32 %v2546, %v2547
      %v2549 = vsel %vm237, %v2509, 0.0
      %v2550 = vadd.f32 %v2548, %v2549
      %v2551 = vsel %vm237, %v2510, 0.0
      %v2552 = vadd.f32 %v2550, %v2551
      %v2553 = vsel %vm237, %v2511, 0.0
      %v2554 = vadd.f32 %v2552, %v2553
      %v2555 = vsel %vm237, %v2512, 0.0
      %v2556 = vadd.f32 %v2554, %v2555
      %v2557 = vsel %vm237, %v2513, 0.0
      %v2558 = vadd.f32 %v2556, %v2557
      %v2559 = vsel %vm237, %v2514, 0.0
      %v2560 = vadd.f32 %v2558, %v2559
      %v2561 = vsel %vm237, %v2515, 0.0
      %v2562 = vadd.f32 %v2560, %v2561
      %v2563 = vsel %vm237, %v2516, 0.0
      %v2564 = vadd.f32 %v2562, %v2563
      %v2565 = vsel %vm237, %v2517, 0.0
      %v2566 = vadd.f32 %v2564, %v2565
      %v2567 = vsel %vm237, %v2518, 0.0
      %v2568 = vadd.f32 %v2566, %v2567
      %v2569 = vsel %vm237, %v2519, 0.0
      %v2570 = vadd.f32 %v2568, %v2569
      %v2571 = vsel %vm237, %v2520, 0.0
      %v2572 = vadd.f32 %v2570, %v2571
      %v2573 = vsel %vm237, %v2521, 0.0
      %v2574 = vadd.f32 %v2572, %v2573
      %v2575 = vsel %vm237, %v2522, 0.0
      %v2576 = vadd.f32 %v2574, %v2575
      %v2577 = vsel %vm237, %v2523, 0.0
      %v2578 = vadd.f32 %v2576, %v2577
      %v2579 = vsel %vm237, %v2524, 0.0
      %v2580 = vadd.f32 %v2578, %v2579
      %v2581 = vsel %vm237, %v2525, 0.0
      %v2582 = vadd.f32 %v2580, %v2581
      %v2583 = vsel %vm237, %v2526, 0.0
      %v2584 = vadd.f32 %v2582, %v2583
      %v2585 = vsel %vm237, %v2527, 0.0
      %v2586 = vadd.f32 %v2584, %v2585
      %v2587 = vsel %vm237, %v2528, 0.0
      %v2588 = vadd.f32 %v2586, %v2587
      %v2589 = vsel %vm237, %v2529, 0.0
      %v2590 = vadd.f32 %v2588, %v2589
      %v2591 = vsel %vm237, %v2530, 0.0
      %v2592 = vadd.f32 %v2590, %v2591
      %v2593 = vsel %vm237, %v2531, 0.0
      %v2594 = vadd.f32 %v2592, %v2593
      %v2595 = vrot.slane %v2594, 4
      %v2596 = vadd.f32 %v2594, %v2595
      %v2597 = vrot.slane %v2596, 2
      %v2598 = vadd.f32 %v2596, %v2597
      %v2599 = vrot.slane %v2598, 1
      %v2600 = vadd.f32 %v2598, %v2599
      %2601 = vst.msk [vmem:[%s235 + $0x1] sm:$0x1] %vm2498, %v2600
      %p2602 = scmp.lt.s32.totalorder %s17, 1
      %s2603 = scalar_select %p2602, %s17, 1
      %s2604 = smul.addr %s2603, 32
      %s2605 = smul.addr %s2604, 8
      %s2606 = scalar_lea.vmem %s4, %s2605
      %p2607 = scmp.lt.s32.totalorder %s17, 1
      %s2608 = scalar_select %p2607, %s17, 1
      %s2609 = smul.addr %s2608, 2
      %s2610 = scalar_lea.vmem %s5, %s2609
      // Predicated region
      $region37: #{decoder_forward.6} parent=35 // pred_check
        %p2611 = pneg %p124
      $region38: #{decoder_forward.6} parent=35 // pred_check_branch
        %2613 = sbr.rel (%p2611) target = $region40
      $region39: #{decoder_forward.6} parent=35 // pred_region
        _
      $region40: #{decoder_forward.6} parent=35 // pred_fallthru
        _
      // Predicated region
      $region41: #{decoder_forward.6} parent=35 // pred_check
        %p2614 = pneg %p150
      $region42: #{decoder_forward.6} parent=35 // pred_check_branch
        %2616 = sbr.rel (%p2614) target = $region44
      $region43: #{decoder_forward.6} parent=35 // pred_region
        _
      $region44: #{decoder_forward.6} parent=35 // pred_fallthru
        _
    $region36: #{decoder_forward.6} parent=5 // pred_fallthru
      _
    %p2617 = scmp.le.s32.totalorder 2, %s12
    // Predicated region
    $region45: #{decoder_forward.6} parent=5 // pred_check
      %p2618 = pneg %p2617
    $region46: #{decoder_forward.6} parent=5 // pred_check_branch
      %2620 = sbr.rel (%p2618) target = $region48
    $region47: #{decoder_forward.6} parent=5 // pred_region
      %s2621 = ssub.s32 %s12, 2
      // Predicated region
      $region49: #{decoder_forward.6} parent=47 // pred_check
        %p2622 = pneg %p130
      $region50: #{decoder_forward.6} parent=47 // pred_check_branch
        %2624 = sbr.rel (%p2622) target = $region52
      $region51: #{decoder_forward.6} parent=47 // pred_region
        %p2625 = scmp.lt.s32.totalorder %s18, 1
        %s2626 = scalar_select %p2625, %s18, 1
        %s2627 = smul.addr %s2626, 32
        %s2628 = smul.addr %s2627, 8
        %s2629 = scalar_lea.vmem %s4, %s2628
      $region52: #{decoder_forward.6} parent=47 // pred_fallthru
        _
      // Predicated region
      $region53: #{decoder_forward.6} parent=47 // pred_check
        %p2630 = pneg %p156
      $region54: #{decoder_forward.6} parent=47 // pred_check_branch
        %2632 = sbr.rel (%p2630) target = $region56
      $region55: #{decoder_forward.6} parent=47 // pred_region
        %p2633 = scmp.lt.s32.totalorder %s18, 1
        %s2634 = scalar_select %p2633, %s18, 1
        %s2635 = smul.addr %s2634, 2
        %s2636 = scalar_lea.vmem %s5, %s2635
      $region56: #{decoder_forward.6} parent=47 // pred_fallthru
        _
    $region48: #{decoder_forward.6} parent=5 // pred_fallthru
      _
  $region6: #{decoder_forward.6} parent=0 // loop_footer
    %s16 = sadd.s32 1, %s12
  $region7: #{decoder_forward.6} parent=0 // loop_footer_branch
    %11 = sbr.rel target = $region3
  $region8: #{decoder_forward.6} parent=0 // loop_exit
    _

// kernel: decoder_forward.5
$region0: #{decoder_forward.5}
  #allocation0 [shape = 'u32[]', space=smem, size = 0x4, offset = 0x4, fixed_abs, tag = 'smem constant byte address 0x4 - core index']
  #allocation1 [shape = 'u32[72,128]{1,0:T(1,128)}', space=vmem, size = 0x9000, scoped, tag = 'internal scratch']
  #allocation2 [shape = 'f32[18,18,4]{2,1,0:T(8,128)}', space=vmem, size = 0x36000, scoped, tag = 'scratch operand']
  #allocation3 [shape = 'f32[18,18,4]{2,1,0:T(8,128)}', space=vmem, size = 0x36000, scoped, tag = 'scratch operand']
  %s0 = inlined_call_operand.vmem [shape: f32[2,16,16,4], index: 0, kind: input, shape index: {}]
  %s1 = inlined_call_operand.vmem [shape: f32[2,16,16,4], index: 1, kind: input, shape index: {}]
  %s2 = inlined_call_operand.vmem [shape: bf16[9,4,4], index: 2, kind: input, shape index: {}]
  %s3 = inlined_call_operand.vmem [shape: bf16[9,4,4], index: 3, kind: input, shape index: {}]
  %s4 = inlined_call_operand.vmem [shape: f32[2,16,16,4], index: 4, kind: output, shape index: {0}]
  %s5 = inlined_call_operand.vmem [shape: f32[2,2,4], index: 5, kind: output, shape index: {1}]
  %6 = xla_tuple %s4, %s5
  %s7 = sld [smem:[#allocation0]]
  $region57: #{decoder_forward.5} parent=0
    _
  %s9 = ssub.s32 1, %s7
  %s10 = scalar_select 0, %s9, %s7
  loop: start=0, step=1, limit=4
  $region2: #{decoder_forward.5} parent=0 // loop_pre_header
    _
  $region3: #{decoder_forward.5} parent=0 // loop_header
    %s12 = sphi 0, %s16
    %p13 = scmp.ge.s32.totalorder %s12, 4
    %s22 = sphi 0, %s24
    %s25 = sphi 0, %s22
    %s26 = sphi 0, %s25
    %s42 = sphi 0, %s26
    %s48 = sphi 0, %s50
    %s51 = sphi 0, %s48
    %s52 = sphi 0, %s51
    %s68 = sphi 0, %s52
    %s72 = sphi 0, %s72
    %s74 = sphi 0, %s72
    %s75 = sphi 0, %s74
    %s89 = sphi 0, %s75
    %s93 = sphi 0, %s93
    %s95 = sphi 0, %s93
    %s96 = sphi 0, %s95
    %s110 = sphi 0, %s96
    %s116 = sphi 0, %s118
    %s119 = sphi 0, %s116
    %s120 = sphi 0, %s119
    %s136 = sphi 0, %s120
    %s142 = sphi 0, %s144
    %s145 = sphi 0, %s142
    %s146 = sphi 0, %s145
    %s162 = sphi 0, %s146
  $region4: #{decoder_forward.5} parent=0 // loop_header_branch
    %15 = sbr.rel (%p13) target = $region8
  $region5: #{decoder_forward.5} parent=0 // loop_body
    %s17 = ssub.s32 %s12, 1
    %s18 = ssub.s32 %s12, 2
    %s19 = sadd.s32 %s12, 1
    %s20 = ssub.s32 %s12, %s19
    %p21 = scmp.eq.s32.totalorder %s20, 0
    %s23 = sadd.s32 %s22, 1
    %s24 = scalar_select %p21, %s22, %s23
    %p27 = pneg %p21
    %p28 = scmp.eq.s32.totalorder %s12, 1
    %p29 = por %p27, %p28
    %p30 = scmp.ne.s32.totalorder %s22, %s25
    %p31 = scmp.eq.s32.totalorder %s12, 0
    %p32 = por %p30, %p31
    %p33 = scmp.ne.s32.totalorder %s22, %s25
    %p34 = scmp.eq.s32.totalorder %s17, 1
    %p35 = por %p33, %p34
    %p36 = scmp.ne.s32.totalorder %s25, %s26
    %p37 = scmp.eq.s32.totalorder %s17, 0
    %p38 = por %p36, %p37
    %p39 = scmp.ne.s32.totalorder %s25, %s26
    %p40 = scmp.eq.s32.totalorder %s18, 1
    %p41 = por %p39, %p40
    %p43 = scmp.ne.s32.totalorder %s26, %s42
    %p44 = scmp.eq.s32.totalorder %s18, 0
    %p45 = por %p43, %p44
    %s46 = ssub.s32 %s12, %s19
    %p47 = scmp.eq.s32.totalorder %s46, 0
    %s49 = sadd.s32 %s48, 1
    %s50 = scalar_select %p47, %s48, %s49
    %p53 = pneg %p47
    %p54 = scmp.eq.s32.totalorder %s12, 1
    %p55 = por %p53, %p54
    %p56 = scmp.ne.s32.totalorder %s48, %s51
    %p57 = scmp.eq.s32.totalorder %s12, 0
    %p58 = por %p56, %p57
    %p59 = scmp.ne.s32.totalorder %s48, %s51
    %p60 = scmp.eq.s32.totalorder %s17, 1
    %p61 = por %p59, %p60
    %p62 = scmp.ne.s32.totalorder %s51, %s52
    %p63 = scmp.eq.s32.totalorder %s17, 0
    %p64 = por %p62, %p63
    %p65 = scmp.ne.s32.totalorder %s51, %s52
    %p66 = scmp.eq.s32.totalorder %s18, 1
    %p67 = por %p65, %p66
    %p69 = scmp.ne.s32.totalorder %s52, %s68
    %p70 = scmp.eq.s32.totalorder %s18, 0
    %p71 = por %p69, %p70
    %s73 = sadd.s32 %s72, 1
    %p76 = scmp.eq.s32.totalorder %s12, 1
    %p77 = scmp.ne.s32.totalorder %s72, %s74
    %p78 = scmp.eq.s32.totalorder %s12, 0
    %p79 = por %p77, %p78
    %p80 = scmp.ne.s32.totalorder %s72, %s74
    %p81 = scmp.eq.s32.totalorder %s17, 1
    %p82 = por %p80, %p81
    %p83 = scmp.ne.s32.totalorder %s74, %s75
    %p84 = scmp.eq.s32.totalorder %s17, 0
    %p85 = por %p83, %p84
    %p86 = scmp.ne.s32.totalorder %s74, %s75
    %p87 = scmp.eq.s32.totalorder %s18, 1
    %p88 = por %p86, %p87
    %p90 = scmp.ne.s32.totalorder %s75, %s89
    %p91 = scmp.eq.s32.totalorder %s18, 0
    %p92 = por %p90, %p91
    %s94 = sadd.s32 %s93, 1
    %p97 = scmp.eq.s32.totalorder %s12, 1
    %p98 = scmp.ne.s32.totalorder %s93, %s95
    %p99 = scmp.eq.s32.totalorder %s12, 0
    %p100 = por %p98, %p99
    %p101 = scmp.ne.s32.totalorder %s93, %s95
    %p102 = scmp.eq.s32.totalorder %s17, 1
    %p103 = por %p101, %p102
    %p104 = scmp.ne.s32.totalorder %s95, %s96
    %p105 = scmp.eq.s32.totalorder %s17, 0
    %p106 = por %p104, %p105
    %p107 = scmp.ne.s32.totalorder %s95, %s96
    %p108 = scmp.eq.s32.totalorder %s18, 1
    %p109 = por %p107, %p108
    %p111 = scmp.ne.s32.totalorder %s96, %s110
    %p112 = scmp.eq.s32.totalorder %s18, 0
    %p113 = por %p111, %p112
    %s114 = ssub.s32 %s12, %s19
    %p115 = scmp.eq.s32.totalorder %s114, 0
    %s117 = sadd.s32 %s116, 1
    %s118 = scalar_select %p115, %s116, %s117
    %p121 = pneg %p115
    %p122 = scmp.eq.s32.totalorder %s12, 1
    %p123 = por %p121, %p122
    %p124 = scmp.ne.s32.totalorder %s116, %s119
    %p125 = scmp.eq.s32.totalorder %s12, 0
    %p126 = por %p124, %p125
    %p127 = scmp.ne.s32.totalorder %s116, %s119
    %p128 = scmp.eq.s32.totalorder %s17, 1
    %p129 = por %p127, %p128
    %p130 = scmp.ne.s32.totalorder %s119, %s120
    %p131 = scmp.eq.s32.totalorder %s17, 0
    %p132 = por %p130, %p131
    %p133 = scmp.ne.s32.totalorder %s119, %s120
    %p134 = scmp.eq.s32.totalorder %s18, 1
    %p135 = por %p133, %p134
    %p137 = scmp.ne.s32.totalorder %s120, %s136
    %p138 = scmp.eq.s32.totalorder %s18, 0
    %p139 = por %p137, %p138
    %s140 = ssub.s32 %s12, %s19
    %p141 = scmp.eq.s32.totalorder %s140, 0
    %s143 = sadd.s32 %s142, 1
    %s144 = scalar_select %p141, %s142, %s143
    %p147 = pneg %p141
    %p148 = scmp.eq.s32.totalorder %s12, 1
    %p149 = por %p147, %p148
    %p150 = scmp.ne.s32.totalorder %s142, %s145
    %p151 = scmp.eq.s32.totalorder %s12, 0
    %p152 = por %p150, %p151
    %p153 = scmp.ne.s32.totalorder %s142, %s145
    %p154 = scmp.eq.s32.totalorder %s17, 1
    %p155 = por %p153, %p154
    %p156 = scmp.ne.s32.totalorder %s145, %s146
    %p157 = scmp.eq.s32.totalorder %s17, 0
    %p158 = por %p156, %p157
    %p159 = scmp.ne.s32.totalorder %s145, %s146
    %p160 = scmp.eq.s32.totalorder %s18, 1
    %p161 = por %p159, %p160
    %p163 = scmp.ne.s32.totalorder %s146, %s162
    %p164 = scmp.eq.s32.totalorder %s18, 0
    %p165 = por %p163, %p164
    %p166 = scmp.le.s32.totalorder 1, %s12
    %p167 = scmp.lt.s32.totalorder %s12, 3
    %p168 = pnand %p166, %p167
    %p169 = pneg %p168
    // Predicated region
    $region9: #{decoder_forward.5} parent=5 // pred_check
      _
    $region10: #{decoder_forward.5} parent=5 // pred_check_branch
      %171 = sbr.rel (%p168) target = $region12
    $region11: #{decoder_forward.5} parent=5 // pred_region
      %s172 = ssub.s32 %s12, 1
      // Predicated region
      $region13: #{decoder_forward.5} parent=11 // pred_check
        %p173 = pneg %p85
      $region14: #{decoder_forward.5} parent=11 // pred_check_branch
        %175 = sbr.rel (%p173) target = $region16
      $region15: #{decoder_forward.5} parent=11 // pred_region
        _
      $region16: #{decoder_forward.5} parent=11 // pred_fallthru
        _
      // Predicated region
      $region17: #{decoder_forward.5} parent=11 // pred_check
        %p176 = pneg %p106
      $region18: #{decoder_forward.5} parent=11 // pred_check_branch
        %178 = sbr.rel (%p176) target = $region20
      $region19: #{decoder_forward.5} parent=11 // pred_region
        _
      $region20: #{decoder_forward.5} parent=11 // pred_fallthru
        _
    $region12: #{decoder_forward.5} parent=5 // pred_fallthru
      _
    %p179 = scmp.lt.s32.totalorder %s12, 2
    // Predicated region
    $region21: #{decoder_forward.5} parent=5 // pred_check
      %p180 = pneg %p179
    $region22: #{decoder_forward.5} parent=5 // pred_check_branch
      %182 = sbr.rel (%p180) target = $region24
    $region23: #{decoder_forward.5} parent=5 // pred_region
      // Predicated region
      $region25: #{decoder_forward.5} parent=23 // pred_check
        %p183 = pneg %p32
      $region26: #{decoder_forward.5} parent=23 // pred_check_branch
        %185 = sbr.rel (%p183) target = $region28
      $region27: #{decoder_forward.5} parent=23 // pred_region
        %p186 = scmp.lt.s32.totalorder %s12, 1
        %s187 = scalar_select %p186, %s12, 1
        %s188 = smul.addr %s187, 32
        %s189 = smul.addr %s188, 8
        %s190 = scalar_lea.vmem %s0, %s189
      $region28: #{decoder_forward.5} parent=23 // pred_fallthru
        _
      // Predicated region
      $region29: #{decoder_forward.5} parent=23 // pred_check
        %p191 = pneg %p58
      $region30: #{decoder_forward.5} parent=23 // pred_check_branch
        %193 = sbr.rel (%p191) target = $region32
      $region31: #{decoder_forward.5} parent=23 // pred_region
        %p194 = scmp.lt.s32.totalorder %s12, 1
        %s195 = scalar_select %p194, %s12, 1
        %s196 = smul.addr %s195, 32
        %s197 = smul.addr %s196, 8
        %s198 = scalar_lea.vmem %s1, %s197
      $region32: #{decoder_forward.5} parent=23 // pred_fallthru
        _
    $region24: #{decoder_forward.5} parent=5 // pred_fallthru
      _
    %p199 = scmp.le.s32.totalorder 1, %s12
    %p200 = scmp.lt.s32.totalorder %s12, 3
    %p201 = pnand %p199, %p200
    %p202 = pneg %p201
    // Predicated region
    $region33: #{decoder_forward.5} parent=5 // pred_check
      _
    $region34: #{decoder_forward.5} parent=5 // pred_check_branch
      %204 = sbr.rel (%p201) target = $region36
    $region35: #{decoder_forward.5} parent=5 // pred_region
      %s205 = ssub.s32 %s12, 1
      %p206 = scmp.lt.s32.totalorder %s17, 1
      %s207 = scalar_select %p206, %s17, 1
      %s208 = smul.addr %s207, 32
      %s209 = smul.addr %s208, 8
      %s210 = scalar_lea.vmem %s0, %s209
      %p211 = pneg %p38
      %p212 = pneg %p35
      %p213 = scmp.lt.s32.totalorder %s17, 1
      %s214 = scalar_select %p213, %s17, 1
      %s215 = smul.addr %s214, 32
      %s216 = smul.addr %s215, 8
      %s217 = scalar_lea.vmem %s1, %s216
      %p218 = pneg %p64
      %p219 = pneg %p61
      %p220 = pneg %p85
      %p221 = pneg %p82
      %p222 = pneg %p106
      %p223 = pneg %p103
      %p224 = pneg %p132
      %p225 = pneg %p129
      %p226 = scmp.lt.s32.totalorder %s17, 1
      %s227 = scalar_select %p226, %s17, 1
      %s228 = smul.addr %s227, 32
      %s229 = smul.addr %s228, 8
      %s230 = scalar_lea.vmem %s4, %s229
      %p231 = pneg %p158
      %p232 = pneg %p155
      %p233 = scmp.lt.s32.totalorder %s17, 1
      %s234 = scalar_select %p233, %s17, 1
      %s235 = smul.addr %s234, 2
      %s236 = scalar_lea.vmem %s5, %s235
      %p237 = scmp.lt.s32.totalorder %s17, 1
      %s238 = scalar_select %p237, %s17, 1
      %s239 = smul.addr %s238, 32
      %s240 = smul.addr %s239, 8
      %s241 = scalar_lea.vmem %s0, %s240
      %p242 = scmp.lt.s32.totalorder %s17, 1
      %s243 = scalar_select %p242, %s17, 1
      %s244 = smul.addr %s243, 32
      %s245 = smul.addr %s244, 8
      %s246 = scalar_lea.vmem %s1, %s245
      %p247 = scmp.lt.s32.totalorder %s17, 1
      %s248 = scalar_select %p247, %s17, 1
      %s249 = smul.addr %s248, 32
      %s250 = smul.addr %s249, 8
      %s251 = scalar_lea.vmem %s4, %s250
      %p252 = scmp.lt.s32.totalorder %s17, 1
      %s253 = scalar_select %p252, %s17, 1
      %s254 = smul.addr %s253, 2
      %s255 = scalar_lea.vmem %s5, %s254
      %vm257 = vcmask 31744
      %258 = vst.msk [vmem:[#allocation2] sm:$0xff] %vm257, 0.0
      %259 = vst.msk [vmem:[#allocation2 + $0x8] sm:$0xff] %vm257, 0.0
      %vm260 = vcmask 25600
      %261 = vst.msk [vmem:[#allocation2 + $0x10] sm:$0x3] %vm260, 0.0
      %262 = vst.msk [vmem:[#allocation2 + $0x18] sm:$0xff] %vm257, 0.0
      %263 = vst.msk [vmem:[#allocation2 + $0x20] sm:$0xff] %vm257, 0.0
      %264 = vst.msk [vmem:[#allocation2 + $0x28] sm:$0x3] %vm260, 0.0
      %265 = vst.msk [vmem:[#allocation2 + $0x30] sm:$0xff] %vm257, 0.0
      %266 = vst.msk [vmem:[#allocation2 + $0x38] sm:$0xff] %vm257, 0.0
      %267 = vst.msk [vmem:[#allocation2 + $0x40] sm:$0x3] %vm260, 0.0
      %268 = vst.msk [vmem:[#allocation2 + $0x48] sm:$0xff] %vm257, 0.0
      %269 = vst.msk [vmem:[#allocation2 + $0x50] sm:$0xff] %vm257, 0.0
      %270 = vst.msk [vmem:[#allocation2 + $0x58] sm:$0x3] %vm260, 0.0
      %271 = vst.msk [vmem:[#allocation2 + $0x60] sm:$0xff] %vm257, 0.0
      %272 = vst.msk [vmem:[#allocation2 + $0x68] sm:$0xff] %vm257, 0.0
      %273 = vst.msk [vmem:[#allocation2 + $0x70] sm:$0x3] %vm260, 0.0
      %274 = vst.msk [vmem:[#allocation2 + $0x78] sm:$0xff] %vm257, 0.0
      %275 = vst.msk [vmem:[#allocation2 + $0x80] sm:$0xff] %vm257, 0.0
      %276 = vst.msk [vmem:[#allocation2 + $0x88] sm:$0x3] %vm260, 0.0
      %277 = vst.msk [vmem:[#allocation2 + $0x90] sm:$0xff] %vm257, 0.0
      %278 = vst.msk [vmem:[#allocation2 + $0x98] sm:$0xff] %vm257, 0.0
      %279 = vst.msk [vmem:[#allocation2 + $0xa0] sm:$0x3] %vm260, 0.0
      %280 = vst.msk [vmem:[#allocation2 + $0xa8] sm:$0xff] %vm257, 0.0
      %281 = vst.msk [vmem:[#allocation2 + $0xb0] sm:$0xff] %vm257, 0.0
      %282 = vst.msk [vmem:[#allocation2 + $0xb8] sm:$0x3] %vm260, 0.0
      %283 = vst.msk [vmem:[#allocation2 + $0xc0] sm:$0xff] %vm257, 0.0
      %284 = vst.msk [vmem:[#allocation2 + $0xc8] sm:$0xff] %vm257, 0.0
      %285 = vst.msk [vmem:[#allocation2 + $0xd0] sm:$0x3] %vm260, 0.0
      %286 = vst.msk [vmem:[#allocation2 + $0xd8] sm:$0xff] %vm257, 0.0
      %287 = vst.msk [vmem:[#allocation2 + $0xe0] sm:$0xff] %vm257, 0.0
      %288 = vst.msk [vmem:[#allocation2 + $0xe8] sm:$0x3] %vm260, 0.0
      %289 = vst.msk [vmem:[#allocation2 + $0xf0] sm:$0xff] %vm257, 0.0
      %290 = vst.msk [vmem:[#allocation2 + $0xf8] sm:$0xff] %vm257, 0.0
      %291 = vst.msk [vmem:[#allocation2 + $0x100] sm:$0x3] %vm260, 0.0
      %292 = vst.msk [vmem:[#allocation2 + $0x108] sm:$0xff] %vm257, 0.0
      %293 = vst.msk [vmem:[#allocation2 + $0x110] sm:$0xff] %vm257, 0.0
      %294 = vst.msk [vmem:[#allocation2 + $0x118] sm:$0x3] %vm260, 0.0
      %295 = vst.msk [vmem:[#allocation2 + $0x120] sm:$0xff] %vm257, 0.0
      %296 = vst.msk [vmem:[#allocation2 + $0x128] sm:$0xff] %vm257, 0.0
      %297 = vst.msk [vmem:[#allocation2 + $0x130] sm:$0x3] %vm260, 0.0
      %298 = vst.msk [vmem:[#allocation2 + $0x138] sm:$0xff] %vm257, 0.0
      %299 = vst.msk [vmem:[#allocation2 + $0x140] sm:$0xff] %vm257, 0.0
      %300 = vst.msk [vmem:[#allocation2 + $0x148] sm:$0x3] %vm260, 0.0
      %301 = vst.msk [vmem:[#allocation2 + $0x150] sm:$0xff] %vm257, 0.0
      %302 = vst.msk [vmem:[#allocation2 + $0x158] sm:$0xff] %vm257, 0.0
      %303 = vst.msk [vmem:[#allocation2 + $0x160] sm:$0x3] %vm260, 0.0
      %304 = vst.msk [vmem:[#allocation2 + $0x168] sm:$0xff] %vm257, 0.0
      %305 = vst.msk [vmem:[#allocation2 + $0x170] sm:$0xff] %vm257, 0.0
      %306 = vst.msk [vmem:[#allocation2 + $0x178] sm:$0x3] %vm260, 0.0
      %307 = vst.msk [vmem:[#allocation2 + $0x180] sm:$0xff] %vm257, 0.0
      %308 = vst.msk [vmem:[#allocation2 + $0x188] sm:$0xff] %vm257, 0.0
      %309 = vst.msk [vmem:[#allocation2 + $0x190] sm:$0x3] %vm260, 0.0
      %310 = vst.msk [vmem:[#allocation2 + $0x198] sm:$0xff] %vm257, 0.0
      %311 = vst.msk [vmem:[#allocation2 + $0x1a0] sm:$0xff] %vm257, 0.0
      %312 = vst.msk [vmem:[#allocation2 + $0x1a8] sm:$0x3] %vm260, 0.0
      %v313 = vld [vmem:[%s241] sm:$0xff]
      %v314 = vld [vmem:[%s241 + $0x8] sm:$0xff]
      %v315 = vld [vmem:[%s241 + $0x10] sm:$0xff]
      %v316 = vld [vmem:[%s241 + $0x18] sm:$0xff]
      %v317 = vld [vmem:[%s241 + $0x20] sm:$0xff]
      %v318 = vld [vmem:[%s241 + $0x28] sm:$0xff]
      %v319 = vld [vmem:[%s241 + $0x30] sm:$0xff]
      %v320 = vld [vmem:[%s241 + $0x38] sm:$0xff]
      %v321 = vld [vmem:[%s241 + $0x40] sm:$0xff]
      %v322 = vld [vmem:[%s241 + $0x48] sm:$0xff]
      %v323 = vld [vmem:[%s241 + $0x50] sm:$0xff]
      %v324 = vld [vmem:[%s241 + $0x58] sm:$0xff]
      %v325 = vld [vmem:[%s241 + $0x60] sm:$0xff]
      %v326 = vld [vmem:[%s241 + $0x68] sm:$0xff]
      %v327 = vld [vmem:[%s241 + $0x70] sm:$0xff]
      %v328 = vld [vmem:[%s241 + $0x78] sm:$0xff]
      %v329 = vld [vmem:[%s241 + $0x80] sm:$0xff]
      %v330 = vld [vmem:[%s241 + $0x88] sm:$0xff]
      %v331 = vld [vmem:[%s241 + $0x90] sm:$0xff]
      %v332 = vld [vmem:[%s241 + $0x98] sm:$0xff]
      %v333 = vld [vmem:[%s241 + $0xa0] sm:$0xff]
      %v334 = vld [vmem:[%s241 + $0xa8] sm:$0xff]
      %v335 = vld [vmem:[%s241 + $0xb0] sm:$0xff]
      %v336 = vld [vmem:[%s241 + $0xb8] sm:$0xff]
      %v337 = vld [vmem:[%s241 + $0xc0] sm:$0xff]
      %v338 = vld [vmem:[%s241 + $0xc8] sm:$0xff]
      %v339 = vld [vmem:[%s241 + $0xd0] sm:$0xff]
      %v340 = vld [vmem:[%s241 + $0xd8] sm:$0xff]
      %v341 = vld [vmem:[%s241 + $0xe0] sm:$0xff]
      %v342 = vld [vmem:[%s241 + $0xe8] sm:$0xff]
      %v343 = vld [vmem:[%s241 + $0xf0] sm:$0xff]
      %v344 = vld [vmem:[%s241 + $0xf8] sm:$0xff]
      %s345 = scalar_lea.vmem [#allocation2], 24
      %346 = vst.msk [vmem:[%s345 + $0x1] sm:$0xff] %vm257, %v313
      %347 = vst.msk [vmem:[%s345 + $0x9] sm:$0xff] %vm257, %v314
      %348 = vst.msk [vmem:[%s345 + $0x19] sm:$0xff] %vm257, %v315
      %349 = vst.msk [vmem:[%s345 + $0x21] sm:$0xff] %vm257, %v316
      %350 = vst.msk [vmem:[%s345 + $0x31] sm:$0xff] %vm257, %v317
      %351 = vst.msk [vmem:[%s345 + $0x39] sm:$0xff] %vm257, %v318
      %352 = vst.msk [vmem:[%s345 + $0x49] sm:$0xff] %vm257, %v319
      %353 = vst.msk [vmem:[%s345 + $0x51] sm:$0xff] %vm257, %v320
      %354 = vst.msk [vmem:[%s345 + $0x61] sm:$0xff] %vm257, %v321
      %355 = vst.msk [vmem:[%s345 + $0x69] sm:$0xff] %vm257, %v322
      %356 = vst.msk [vmem:[%s345 + $0x79] sm:$0xff] %vm257, %v323
      %357 = vst.msk [vmem:[%s345 + $0x81] sm:$0xff] %vm257, %v324
      %358 = vst.msk [vmem:[%s345 + $0x91] sm:$0xff] %vm257, %v325
      %359 = vst.msk [vmem:[%s345 + $0x99] sm:$0xff] %vm257, %v326
      %360 = vst.msk [vmem:[%s345 + $0xa9] sm:$0xff] %vm257, %v327
      %361 = vst.msk [vmem:[%s345 + $0xb1] sm:$0xff] %vm257, %v328
      %362 = vst.msk [vmem:[%s345 + $0xc1] sm:$0xff] %vm257, %v329
      %363 = vst.msk [vmem:[%s345 + $0xc9] sm:$0xff] %vm257, %v330
      %364 = vst.msk [vmem:[%s345 + $0xd9] sm:$0xff] %vm257, %v331
      %365 = vst.msk [vmem:[%s345 + $0xe1] sm:$0xff] %vm257, %v332
      %366 = vst.msk [vmem:[%s345 + $0xf1] sm:$0xff] %vm257, %v333
      %367 = vst.msk [vmem:[%s345 + $0xf9] sm:$0xff] %vm257, %v334
      %368 = vst.msk [vmem:[%s345 + $0x109] sm:$0xff] %vm257, %v335
      %369 = vst.msk [vmem:[%s345 + $0x111] sm:$0xff] %vm257, %v336
      %370 = vst.msk [vmem:[%s345 + $0x121] sm:$0xff] %vm257, %v337
      %371 = vst.msk [vmem:[%s345 + $0x129] sm:$0xff] %vm257, %v338
      %372 = vst.msk [vmem:[%s345 + $0x139] sm:$0xff] %vm257, %v339
      %373 = vst.msk [vmem:[%s345 + $0x141] sm:$0xff] %vm257, %v340
      %374 = vst.msk [vmem:[%s345 + $0x151] sm:$0xff] %vm257, %v341
      %375 = vst.msk [vmem:[%s345 + $0x159] sm:$0xff] %vm257, %v342
      %376 = vst.msk [vmem:[%s345 + $0x169] sm:$0xff] %vm257, %v343
      %377 = vst.msk [vmem:[%s345 + $0x171] sm:$0xff] %vm257, %v344
      %378 = vst.msk [vmem:[#allocation3] sm:$0xff] %vm257, 0.0
      %379 = vst.msk [vmem:[#allocation3 + $0x8] sm:$0xff] %vm257, 0.0
      %380 = vst.msk [vmem:[#allocation3 + $0x10] sm:$0x3] %vm260, 0.0
      %381 = vst.msk [vmem:[#allocation3 + $0x18] sm:$0xff] %vm257, 0.0
      %382 = vst.msk [vmem:[#allocation3 + $0x20] sm:$0xff] %vm257, 0.0
      %383 = vst.msk [vmem:[#allocation3 + $0x28] sm:$0x3] %vm260, 0.0
      %384 = vst.msk [vmem:[#allocation3 + $0x30] sm:$0xff] %vm257, 0.0
      %385 = vst.msk [vmem:[#allocation3 + $0x38] sm:$0xff] %vm257, 0.0
      %386 = vst.msk [vmem:[#allocation3 + $0x40] sm:$0x3] %vm260, 0.0
      %387 = vst.msk [vmem:[#allocation3 + $0x48] sm:$0xff] %vm257, 0.0
      %388 = vst.msk [vmem:[#allocation3 + $0x50] sm:$0xff] %vm257, 0.0
      %389 = vst.msk [vmem:[#allocation3 + $0x58] sm:$0x3] %vm260, 0.0
      %390 = vst.msk [vmem:[#allocation3 + $0x60] sm:$0xff] %vm257, 0.0
      %391 = vst.msk [vmem:[#allocation3 + $0x68] sm:$0xff] %vm257, 0.0
      %392 = vst.msk [vmem:[#allocation3 + $0x70] sm:$0x3] %vm260, 0.0
      %393 = vst.msk [vmem:[#allocation3 + $0x78] sm:$0xff] %vm257, 0.0
      %394 = vst.msk [vmem:[#allocation3 + $0x80] sm:$0xff] %vm257, 0.0
      %395 = vst.msk [vmem:[#allocation3 + $0x88] sm:$0x3] %vm260, 0.0
      %396 = vst.msk [vmem:[#allocation3 + $0x90] sm:$0xff] %vm257, 0.0
      %397 = vst.msk [vmem:[#allocation3 + $0x98] sm:$0xff] %vm257, 0.0
      %398 = vst.msk [vmem:[#allocation3 + $0xa0] sm:$0x3] %vm260, 0.0
      %399 = vst.msk [vmem:[#allocation3 + $0xa8] sm:$0xff] %vm257, 0.0
      %400 = vst.msk [vmem:[#allocation3 + $0xb0] sm:$0xff] %vm257, 0.0
      %401 = vst.msk [vmem:[#allocation3 + $0xb8] sm:$0x3] %vm260, 0.0
      %402 = vst.msk [vmem:[#allocation3 + $0xc0] sm:$0xff] %vm257, 0.0
      %403 = vst.msk [vmem:[#allocation3 + $0xc8] sm:$0xff] %vm257, 0.0
      %404 = vst.msk [vmem:[#allocation3 + $0xd0] sm:$0x3] %vm260, 0.0
      %405 = vst.msk [vmem:[#allocation3 + $0xd8] sm:$0xff] %vm257, 0.0
      %406 = vst.msk [vmem:[#allocation3 + $0xe0] sm:$0xff] %vm257, 0.0
      %407 = vst.msk [vmem:[#allocation3 + $0xe8] sm:$0x3] %vm260, 0.0
      %408 = vst.msk [vmem:[#allocation3 + $0xf0] sm:$0xff] %vm257, 0.0
      %409 = vst.msk [vmem:[#allocation3 + $0xf8] sm:$0xff] %vm257, 0.0
      %410 = vst.msk [vmem:[#allocation3 + $0x100] sm:$0x3] %vm260, 0.0
      %411 = vst.msk [vmem:[#allocation3 + $0x108] sm:$0xff] %vm257, 0.0
      %412 = vst.msk [vmem:[#allocation3 + $0x110] sm:$0xff] %vm257, 0.0
      %413 = vst.msk [vmem:[#allocation3 + $0x118] sm:$0x3] %vm260, 0.0
      %414 = vst.msk [vmem:[#allocation3 + $0x120] sm:$0xff] %vm257, 0.0
      %415 = vst.msk [vmem:[#allocation3 + $0x128] sm:$0xff] %vm257, 0.0
      %416 = vst.msk [vmem:[#allocation3 + $0x130] sm:$0x3] %vm260, 0.0
      %417 = vst.msk [vmem:[#allocation3 + $0x138] sm:$0xff] %vm257, 0.0
      %418 = vst.msk [vmem:[#allocation3 + $0x140] sm:$0xff] %vm257, 0.0
      %419 = vst.msk [vmem:[#allocation3 + $0x148] sm:$0x3] %vm260, 0.0
      %420 = vst.msk [vmem:[#allocation3 + $0x150] sm:$0xff] %vm257, 0.0
      %421 = vst.msk [vmem:[#allocation3 + $0x158] sm:$0xff] %vm257, 0.0
      %422 = vst.msk [vmem:[#allocation3 + $0x160] sm:$0x3] %vm260, 0.0
      %423 = vst.msk [vmem:[#allocation3 + $0x168] sm:$0xff] %vm257, 0.0
      %424 = vst.msk [vmem:[#allocation3 + $0x170] sm:$0xff] %vm257, 0.0
      %425 = vst.msk [vmem:[#allocation3 + $0x178] sm:$0x3] %vm260, 0.0
      %426 = vst.msk [vmem:[#allocation3 + $0x180] sm:$0xff] %vm257, 0.0
      %427 = vst.msk [vmem:[#allocation3 + $0x188] sm:$0xff] %vm257, 0.0
      %428 = vst.msk [vmem:[#allocation3 + $0x190] sm:$0x3] %vm260, 0.0
      %429 = vst.msk [vmem:[#allocation3 + $0x198] sm:$0xff] %vm257, 0.0
      %430 = vst.msk [vmem:[#allocation3 + $0x1a0] sm:$0xff] %vm257, 0.0
      %431 = vst.msk [vmem:[#allocation3 + $0x1a8] sm:$0x3] %vm260, 0.0
      %v432 = vld [vmem:[%s246] sm:$0xff]
      %v433 = vld [vmem:[%s246 + $0x8] sm:$0xff]
      %v434 = vld [vmem:[%s246 + $0x10] sm:$0xff]
      %v435 = vld [vmem:[%s246 + $0x18] sm:$0xff]
      %v436 = vld [vmem:[%s246 + $0x20] sm:$0xff]
      %v437 = vld [vmem:[%s246 + $0x28] sm:$0xff]
      %v438 = vld [vmem:[%s246 + $0x30] sm:$0xff]
      %v439 = vld [vmem:[%s246 + $0x38] sm:$0xff]
      %v440 = vld [vmem:[%s246 + $0x40] sm:$0xff]
      %v441 = vld [vmem:[%s246 + $0x48] sm:$0xff]
      %v442 = vld [vmem:[%s246 + $0x50] sm:$0xff]
      %v443 = vld [vmem:[%s246 + $0x58] sm:$0xff]
      %v444 = vld [vmem:[%s246 + $0x60] sm:$0xff]
      %v445 = vld [vmem:[%s246 + $0x68] sm:$0xff]
      %v446 = vld [vmem:[%s246 + $0x70] sm:$0xff]
      %v447 = vld [vmem:[%s246 + $0x78] sm:$0xff]
      %v448 = vld [vmem:[%s246 + $0x80] sm:$0xff]
      %v449 = vld [vmem:[%s246 + $0x88] sm:$0xff]
      %v450 = vld [vmem:[%s246 + $0x90] sm:$0xff]
      %v451 = vld [vmem:[%s246 + $0x98] sm:$0xff]
      %v452 = vld [vmem:[%s246 + $0xa0] sm:$0xff]
      %v453 = vld [vmem:[%s246 + $0xa8] sm:$0xff]
      %v454 = vld [vmem:[%s246 + $0xb0] sm:$0xff]
      %v455 = vld [vmem:[%s246 + $0xb8] sm:$0xff]
      %v456 = vld [vmem:[%s246 + $0xc0] sm:$0xff]
      %v457 = vld [vmem:[%s246 + $0xc8] sm:$0xff]
      %v458 = vld [vmem:[%s246 + $0xd0] sm:$0xff]
      %v459 = vld [vmem:[%s246 + $0xd8] sm:$0xff]
      %v460 = vld [vmem:[%s246 + $0xe0] sm:$0xff]
      %v461 = vld [vmem:[%s246 + $0xe8] sm:$0xff]
      %v462 = vld [vmem:[%s246 + $0xf0] sm:$0xff]
      %v463 = vld [vmem:[%s246 + $0xf8] sm:$0xff]
      %s464 = scalar_lea.vmem [#allocation3], 24
      %465 = vst.msk [vmem:[%s464 + $0x1] sm:$0xff] %vm257, %v432
      %466 = vst.msk [vmem:[%s464 + $0x9] sm:$0xff] %vm257, %v433
      %467 = vst.msk [vmem:[%s464 + $0x19] sm:$0xff] %vm257, %v434
      %468 = vst.msk [vmem:[%s464 + $0x21] sm:$0xff] %vm257, %v435
      %469 = vst.msk [vmem:[%s464 + $0x31] sm:$0xff] %vm257, %v436
      %470 = vst.msk [vmem:[%s464 + $0x39] sm:$0xff] %vm257, %v437
      %471 = vst.msk [vmem:[%s464 + $0x49] sm:$0xff] %vm257, %v438
      %472 = vst.msk [vmem:[%s464 + $0x51] sm:$0xff] %vm257, %v439
      %473 = vst.msk [vmem:[%s464 + $0x61] sm:$0xff] %vm257, %v440
      %474 = vst.msk [vmem:[%s464 + $0x69] sm:$0xff] %vm257, %v441
      %475 = vst.msk [vmem:[%s464 + $0x79] sm:$0xff] %vm257, %v442
      %476 = vst.msk [vmem:[%s464 + $0x81] sm:$0xff] %vm257, %v443
      %477 = vst.msk [vmem:[%s464 + $0x91] sm:$0xff] %vm257, %v444
      %478 = vst.msk [vmem:[%s464 + $0x99] sm:$0xff] %vm257, %v445
      %479 = vst.msk [vmem:[%s464 + $0xa9] sm:$0xff] %vm257, %v446
      %480 = vst.msk [vmem:[%s464 + $0xb1] sm:$0xff] %vm257, %v447
      %481 = vst.msk [vmem:[%s464 + $0xc1] sm:$0xff] %vm257, %v448
      %482 = vst.msk [vmem:[%s464 + $0xc9] sm:$0xff] %vm257, %v449
      %483 = vst.msk [vmem:[%s464 + $0xd9] sm:$0xff] %vm257, %v450
      %484 = vst.msk [vmem:[%s464 + $0xe1] sm:$0xff] %vm257, %v451
      %485 = vst.msk [vmem:[%s464 + $0xf1] sm:$0xff] %vm257, %v452
      %486 = vst.msk [vmem:[%s464 + $0xf9] sm:$0xff] %vm257, %v453
      %487 = vst.msk [vmem:[%s464 + $0x109] sm:$0xff] %vm257, %v454
      %488 = vst.msk [vmem:[%s464 + $0x111] sm:$0xff] %vm257, %v455
      %489 = vst.msk [vmem:[%s464 + $0x121] sm:$0xff] %vm257, %v456
      %490 = vst.msk [vmem:[%s464 + $0x129] sm:$0xff] %vm257, %v457
      %491 = vst.msk [vmem:[%s464 + $0x139] sm:$0xff] %vm257, %v458
      %492 = vst.msk [vmem:[%s464 + $0x141] sm:$0xff] %vm257, %v459
      %493 = vst.msk [vmem:[%s464 + $0x151] sm:$0xff] %vm257, %v460
      %494 = vst.msk [vmem:[%s464 + $0x159] sm:$0xff] %vm257, %v461
      %495 = vst.msk [vmem:[%s464 + $0x169] sm:$0xff] %vm257, %v462
      %496 = vst.msk [vmem:[%s464 + $0x171] sm:$0xff] %vm257, %v463
      %v497 = vld [vmem:[#allocation2] sm:$0xff]
      %v498 = vld [vmem:[#allocation2 + $0x8] sm:$0xff]
      %v499 = vld [vmem:[#allocation2 + $0x18] sm:$0xff]
      %v500 = vld [vmem:[#allocation2 + $0x20] sm:$0xff]
      %v501 = vld [vmem:[#allocation2 + $0x30] sm:$0xff]
      %v502 = vld [vmem:[#allocation2 + $0x38] sm:$0xff]
      %v503 = vld [vmem:[#allocation2 + $0x48] sm:$0xff]
      %v504 = vld [vmem:[#allocation2 + $0x50] sm:$0xff]
      %v505 = vld [vmem:[#allocation2 + $0x60] sm:$0xff]
      %v506 = vld [vmem:[#allocation2 + $0x68] sm:$0xff]
      %v507 = vld [vmem:[#allocation2 + $0x78] sm:$0xff]
      %v508 = vld [vmem:[#allocation2 + $0x80] sm:$0xff]
      %v509 = vld [vmem:[#allocation2 + $0x90] sm:$0xff]
      %v510 = vld [vmem:[#allocation2 + $0x98] sm:$0xff]
      %v511 = vld [vmem:[#allocation2 + $0xa8] sm:$0xff]
      %v512 = vld [vmem:[#allocation2 + $0xb0] sm:$0xff]
      %v513 = vld [vmem:[#allocation2 + $0xc0] sm:$0xff]
      %v514 = vld [vmem:[#allocation2 + $0xc8] sm:$0xff]
      %v515 = vld [vmem:[#allocation2 + $0xd8] sm:$0xff]
      %v516 = vld [vmem:[#allocation2 + $0xe0] sm:$0xff]
      %v517 = vld [vmem:[#allocation2 + $0xf0] sm:$0xff]
      %v518 = vld [vmem:[#allocation2 + $0xf8] sm:$0xff]
      %v519 = vld [vmem:[#allocation2 + $0x108] sm:$0xff]
      %v520 = vld [vmem:[#allocation2 + $0x110] sm:$0xff]
      %v521 = vld [vmem:[#allocation2 + $0x120] sm:$0xff]
      %v522 = vld [vmem:[#allocation2 + $0x128] sm:$0xff]
      %v523 = vld [vmem:[#allocation2 + $0x138] sm:$0xff]
      %v524 = vld [vmem:[#allocation2 + $0x140] sm:$0xff]
      %v525 = vld [vmem:[#allocation2 + $0x150] sm:$0xff]
      %v526 = vld [vmem:[#allocation2 + $0x158] sm:$0xff]
      %v527 = vld [vmem:[#allocation2 + $0x168] sm:$0xff]
      %v528 = vld [vmem:[#allocation2 + $0x170] sm:$0xff]
      %v529 = vpack.c.bf16 %v498, %v497
      %v530 = vpack.c.bf16 %v500, %v499
      %v531 = vpack.c.bf16 %v502, %v501
      %v532 = vpack.c.bf16 %v504, %v503
      %v533 = vpack.c.bf16 %v506, %v505
      %v534 = vpack.c.bf16 %v508, %v507
      %v535 = vpack.c.bf16 %v510, %v509
      %v536 = vpack.c.bf16 %v512, %v511
      %v537 = vpack.c.bf16 %v514, %v513
      %v538 = vpack.c.bf16 %v516, %v515
      %v539 = vpack.c.bf16 %v518, %v517
      %v540 = vpack.c.bf16 %v520, %v519
      %v541 = vpack.c.bf16 %v522, %v521
      %v542 = vpack.c.bf16 %v524, %v523
      %v543 = vpack.c.bf16 %v526, %v525
      %v544 = vpack.c.bf16 %v528, %v527
      %v545 = vld [vmem:[%s2] sm:$0x3]
      %v546 = vld [vmem:[#allocation2 + $0x1] sm:$0xff]
      %v547 = vld [vmem:[#allocation2 + $0x9] sm:$0xff]
      %v548 = vld [vmem:[#allocation2 + $0x19] sm:$0xff]
      %v549 = vld [vmem:[#allocation2 + $0x21] sm:$0xff]
      %v550 = vld [vmem:[#allocation2 + $0x31] sm:$0xff]
      %v551 = vld [vmem:[#allocation2 + $0x39] sm:$0xff]
      %v552 = vld [vmem:[#allocation2 + $0x49] sm:$0xff]
      %v553 = vld [vmem:[#allocation2 + $0x51] sm:$0xff]
      %v554 = vld [vmem:[#allocation2 + $0x61] sm:$0xff]
      %v555 = vld [vmem:[#allocation2 + $0x69] sm:$0xff]
      %v556 = vld [vmem:[#allocation2 + $0x79] sm:$0xff]
      %v557 = vld [vmem:[#allocation2 + $0x81] sm:$0xff]
      %v558 = vld [vmem:[#allocation2 + $0x91] sm:$0xff]
      %v559 = vld [vmem:[#allocation2 + $0x99] sm:$0xff]
      %v560 = vld [vmem:[#allocation2 + $0xa9] sm:$0xff]
      %v561 = vld [vmem:[#allocation2 + $0xb1] sm:$0xff]
      %v562 = vld [vmem:[#allocation2 + $0xc1] sm:$0xff]
      %v563 = vld [vmem:[#allocation2 + $0xc9] sm:$0xff]
      %v564 = vld [vmem:[#allocation2 + $0xd9] sm:$0xff]
      %v565 = vld [vmem:[#allocation2 + $0xe1] sm:$0xff]
      %v566 = vld [vmem:[#allocation2 + $0xf1] sm:$0xff]
      %v567 = vld [vmem:[#allocation2 + $0xf9] sm:$0xff]
      %v568 = vld [vmem:[#allocation2 + $0x109] sm:$0xff]
      %v569 = vld [vmem:[#allocation2 + $0x111] sm:$0xff]
      %v570 = vld [vmem:[#allocation2 + $0x121] sm:$0xff]
      %v571 = vld [vmem:[#allocation2 + $0x129] sm:$0xff]
      %v572 = vld [vmem:[#allocation2 + $0x139] sm:$0xff]
      %v573 = vld [vmem:[#allocation2 + $0x141] sm:$0xff]
      %v574 = vld [vmem:[#allocation2 + $0x151] sm:$0xff]
      %v575 = vld [vmem:[#allocation2 + $0x159] sm:$0xff]
      %v576 = vld [vmem:[#allocation2 + $0x169] sm:$0xff]
      %v577 = vld [vmem:[#allocation2 + $0x171] sm:$0xff]
      %v578 = vpack.c.bf16 %v547, %v546
      %v579 = vpack.c.bf16 %v549, %v548
      %v580 = vpack.c.bf16 %v551, %v550
      %v581 = vpack.c.bf16 %v553, %v552
      %v582 = vpack.c.bf16 %v555, %v554
      %v583 = vpack.c.bf16 %v557, %v556
      %v584 = vpack.c.bf16 %v559, %v558
      %v585 = vpack.c.bf16 %v561, %v560
      %v586 = vpack.c.bf16 %v563, %v562
      %v587 = vpack.c.bf16 %v565, %v564
      %v588 = vpack.c.bf16 %v567, %v566
      %v589 = vpack.c.bf16 %v569, %v568
      %v590 = vpack.c.bf16 %v571, %v570
      %v591 = vpack.c.bf16 %v573, %v572
      %v592 = vpack.c.bf16 %v575, %v574
      %v593 = vpack.c.bf16 %v577, %v576
      %s594 = scalar_lea.vmem %s2, 2
      %v595 = vld [vmem:[%s594] sm:$0x3]
      %v597 = vsel %vm257, %v578, 0
      %v600 = vsel %vm257, %v579, 0
      %v603 = vsel %vm257, %v580, 0
      %v606 = vsel %vm257, %v581, 0
      %v609 = vsel %vm257, %v582, 0
      %v612 = vsel %vm257, %v583, 0
      %v615 = vsel %vm257, %v584, 0
      %v618 = vsel %vm257, %v585, 0
      %v621 = vsel %vm257, %v586, 0
      %v624 = vsel %vm257, %v587, 0
      %v627 = vsel %vm257, %v588, 0
      %v630 = vsel %vm257, %v589, 0
      %v633 = vsel %vm257, %v590, 0
      %v636 = vsel %vm257, %v591, 0
      %v639 = vsel %vm257, %v592, 0
      %v642 = vsel %vm257, %v593, 0
      %vm644 = vcmask 1041408
      %v646 = vsel %vm644, %v595, 0
      %648 = vmatpush.bf16.msra.mxu0 0
      %649 = vmatpush.bf16.msra.mxu0 0
      %650 = vmatpush.bf16.msra.mxu0 0
      %651 = vmatpush.bf16.msra.mxu0 0
      %652 = vmatpush.bf16.msra.mxu0 0
      %653 = vmatpush.bf16.msra.mxu0 0
      %654 = vmatpush.bf16.msra.mxu0 0
      %655 = vmatpush.bf16.msra.mxu0 %v646
      %656 = vmatmul.bf16.gmra.mxu0 %v597
      %v657 = vpop.f32.mrf.mxu0
      %v658 = vadd.f32 0.0, %v657
      %v659 = vpop.f32.mrf.mxu0
      %v660 = vadd.f32 0.0, %v659
      %661 = vmatmul.bf16.gmra.mxu0 %v600
      %v662 = vpop.f32.mrf.mxu0
      %v663 = vadd.f32 0.0, %v662
      %v664 = vpop.f32.mrf.mxu0
      %v665 = vadd.f32 0.0, %v664
      %666 = vmatmul.bf16.gmra.mxu0 %v603
      %v667 = vpop.f32.mrf.mxu0
      %v668 = vadd.f32 0.0, %v667
      %v669 = vpop.f32.mrf.mxu0
      %v670 = vadd.f32 0.0, %v669
      %671 = vmatmul.bf16.gmra.mxu0 %v606
      %v672 = vpop.f32.mrf.mxu0
      %v673 = vadd.f32 0.0, %v672
      %v674 = vpop.f32.mrf.mxu0
      %v675 = vadd.f32 0.0, %v674
      %676 = vmatmul.bf16.gmra.mxu0 %v609
      %v677 = vpop.f32.mrf.mxu0
      %v678 = vadd.f32 0.0, %v677
      %v679 = vpop.f32.mrf.mxu0
      %v680 = vadd.f32 0.0, %v679
      %681 = vmatmul.bf16.gmra.mxu0 %v612
      %v682 = vpop.f32.mrf.mxu0
      %v683 = vadd.f32 0.0, %v682
      %v684 = vpop.f32.mrf.mxu0
      %v685 = vadd.f32 0.0, %v684
      %686 = vmatmul.bf16.gmra.mxu0 %v615
      %v687 = vpop.f32.mrf.mxu0
      %v688 = vadd.f32 0.0, %v687
      %v689 = vpop.f32.mrf.mxu0
      %v690 = vadd.f32 0.0, %v689
      %691 = vmatmul.bf16.gmra.mxu0 %v618
      %v692 = vpop.f32.mrf.mxu0
      %v693 = vadd.f32 0.0, %v692
      %v694 = vpop.f32.mrf.mxu0
      %v695 = vadd.f32 0.0, %v694
      %696 = vmatmul.bf16.gmra.mxu0 %v621
      %v697 = vpop.f32.mrf.mxu0
      %v698 = vadd.f32 0.0, %v697
      %v699 = vpop.f32.mrf.mxu0
      %v700 = vadd.f32 0.0, %v699
      %701 = vmatmul.bf16.gmra.mxu0 %v624
      %v702 = vpop.f32.mrf.mxu0
      %v703 = vadd.f32 0.0, %v702
      %v704 = vpop.f32.mrf.mxu0
      %v705 = vadd.f32 0.0, %v704
      %706 = vmatmul.bf16.gmra.mxu0 %v627
      %v707 = vpop.f32.mrf.mxu0
      %v708 = vadd.f32 0.0, %v707
      %v709 = vpop.f32.mrf.mxu0
      %v710 = vadd.f32 0.0, %v709
      %711 = vmatmul.bf16.gmra.mxu0 %v630
      %v712 = vpop.f32.mrf.mxu0
      %v713 = vadd.f32 0.0, %v712
      %v714 = vpop.f32.mrf.mxu0
      %v715 = vadd.f32 0.0, %v714
      %716 = vmatmul.bf16.gmra.mxu0 %v633
      %v717 = vpop.f32.mrf.mxu0
      %v718 = vadd.f32 0.0, %v717
      %v719 = vpop.f32.mrf.mxu0
      %v720 = vadd.f32 0.0, %v719
      %721 = vmatmul.bf16.gmra.mxu0 %v636
      %v722 = vpop.f32.mrf.mxu0
      %v723 = vadd.f32 0.0, %v722
      %v724 = vpop.f32.mrf.mxu0
      %v725 = vadd.f32 0.0, %v724
      %726 = vmatmul.bf16.gmra.mxu0 %v639
      %v727 = vpop.f32.mrf.mxu0
      %v728 = vadd.f32 0.0, %v727
      %v729 = vpop.f32.mrf.mxu0
      %v730 = vadd.f32 0.0, %v729
      %731 = vmatmul.bf16.gmra.mxu0 %v642
      %v732 = vpop.f32.mrf.mxu0
      %v733 = vadd.f32 0.0, %v732
      %v734 = vpop.f32.mrf.mxu0
      %v735 = vadd.f32 0.0, %v734
      %736 = vdwg.mxu0
      %v738 = vsel %vm257, %v529, 0
      %v741 = vsel %vm257, %v530, 0
      %v744 = vsel %vm257, %v531, 0
      %v747 = vsel %vm257, %v532, 0
      %v750 = vsel %vm257, %v533, 0
      %v753 = vsel %vm257, %v534, 0
      %v756 = vsel %vm257, %v535, 0
      %v759 = vsel %vm257, %v536, 0
      %v762 = vsel %vm257, %v537, 0
      %v765 = vsel %vm257, %v538, 0
      %v768 = vsel %vm257, %v539, 0
      %v771 = vsel %vm257, %v540, 0
      %v774 = vsel %vm257, %v541, 0
      %v777 = vsel %vm257, %v542, 0
      %v780 = vsel %vm257, %v543, 0
      %v783 = vsel %vm257, %v544, 0
      %v786 = vsel %vm644, %v545, 0
      %788 = vmatpush.bf16.msra.mxu0 0
      %789 = vmatpush.bf16.msra.mxu0 0
      %790 = vmatpush.bf16.msra.mxu0 0
      %791 = vmatpush.bf16.msra.mxu0 0
      %792 = vmatpush.bf16.msra.mxu0 0
      %793 = vmatpush.bf16.msra.mxu0 0
      %794 = vmatpush.bf16.msra.mxu0 0
      %795 = vmatpush.bf16.msra.mxu0 %v786
      %796 = vmatmul.bf16.gmra.mxu0 %v738
      %v797 = vpop.f32.mrf.mxu0
      %v798 = vadd.f32 %v658, %v797
      %v799 = vpop.f32.mrf.mxu0
      %v800 = vadd.f32 %v660, %v799
      %801 = vmatmul.bf16.gmra.mxu0 %v741
      %v802 = vpop.f32.mrf.mxu0
      %v803 = vadd.f32 %v663, %v802
      %v804 = vpop.f32.mrf.mxu0
      %v805 = vadd.f32 %v665, %v804
      %806 = vmatmul.bf16.gmra.mxu0 %v744
      %v807 = vpop.f32.mrf.mxu0
      %v808 = vadd.f32 %v668, %v807
      %v809 = vpop.f32.mrf.mxu0
      %v810 = vadd.f32 %v670, %v809
      %811 = vmatmul.bf16.gmra.mxu0 %v747
      %v812 = vpop.f32.mrf.mxu0
      %v813 = vadd.f32 %v673, %v812
      %v814 = vpop.f32.mrf.mxu0
      %v815 = vadd.f32 %v675, %v814
      %816 = vmatmul.bf16.gmra.mxu0 %v750
      %v817 = vpop.f32.mrf.mxu0
      %v818 = vadd.f32 %v678, %v817
      %v819 = vpop.f32.mrf.mxu0
      %v820 = vadd.f32 %v680, %v819
      %821 = vmatmul.bf16.gmra.mxu0 %v753
      %v822 = vpop.f32.mrf.mxu0
      %v823 = vadd.f32 %v683, %v822
      %v824 = vpop.f32.mrf.mxu0
      %v825 = vadd.f32 %v685, %v824
      %826 = vmatmul.bf16.gmra.mxu0 %v756
      %v827 = vpop.f32.mrf.mxu0
      %v828 = vadd.f32 %v688, %v827
      %v829 = vpop.f32.mrf.mxu0
      %v830 = vadd.f32 %v690, %v829
      %831 = vmatmul.bf16.gmra.mxu0 %v759
      %v832 = vpop.f32.mrf.mxu0
      %v833 = vadd.f32 %v693, %v832
      %v834 = vpop.f32.mrf.mxu0
      %v835 = vadd.f32 %v695, %v834
      %836 = vmatmul.bf16.gmra.mxu0 %v762
      %v837 = vpop.f32.mrf.mxu0
      %v838 = vadd.f32 %v698, %v837
      %v839 = vpop.f32.mrf.mxu0
      %v840 = vadd.f32 %v700, %v839
      %841 = vmatmul.bf16.gmra.mxu0 %v765
      %v842 = vpop.f32.mrf.mxu0
      %v843 = vadd.f32 %v703, %v842
      %v844 = vpop.f32.mrf.mxu0
      %v845 = vadd.f32 %v705, %v844
      %846 = vmatmul.bf16.gmra.mxu0 %v768
      %v847 = vpop.f32.mrf.mxu0
      %v848 = vadd.f32 %v708, %v847
      %v849 = vpop.f32.mrf.mxu0
      %v850 = vadd.f32 %v710, %v849
      %851 = vmatmul.bf16.gmra.mxu0 %v771
      %v852 = vpop.f32.mrf.mxu0
      %v853 = vadd.f32 %v713, %v852
      %v854 = vpop.f32.mrf.mxu0
      %v855 = vadd.f32 %v715, %v854
      %856 = vmatmul.bf16.gmra.mxu0 %v774
      %v857 = vpop.f32.mrf.mxu0
      %v858 = vadd.f32 %v718, %v857
      %v859 = vpop.f32.mrf.mxu0
      %v860 = vadd.f32 %v720, %v859
      %861 = vmatmul.bf16.gmra.mxu0 %v777
      %v862 = vpop.f32.mrf.mxu0
      %v863 = vadd.f32 %v723, %v862
      %v864 = vpop.f32.mrf.mxu0
      %v865 = vadd.f32 %v725, %v864
      %866 = vmatmul.bf16.gmra.mxu0 %v780
      %v867 = vpop.f32.mrf.mxu0
      %v868 = vadd.f32 %v728, %v867
      %v869 = vpop.f32.mrf.mxu0
      %v870 = vadd.f32 %v730, %v869
      %871 = vmatmul.bf16.gmra.mxu0 %v783
      %v872 = vpop.f32.mrf.mxu0
      %v873 = vadd.f32 %v733, %v872
      %v874 = vpop.f32.mrf.mxu0
      %v875 = vadd.f32 %v735, %v874
      %876 = vdwg.mxu0
      %v877 = vld [vmem:[#allocation2 + $0x2] sm:$0xff]
      %v878 = vld [vmem:[#allocation2 + $0xa] sm:$0xff]
      %v879 = vld [vmem:[#allocation2 + $0x1a] sm:$0xff]
      %v880 = vld [vmem:[#allocation2 + $0x22] sm:$0xff]
      %v881 = vld [vmem:[#allocation2 + $0x32] sm:$0xff]
      %v882 = vld [vmem:[#allocation2 + $0x3a] sm:$0xff]
      %v883 = vld [vmem:[#allocation2 + $0x4a] sm:$0xff]
      %v884 = vld [vmem:[#allocation2 + $0x52] sm:$0xff]
      %v885 = vld [vmem:[#allocation2 + $0x62] sm:$0xff]
      %v886 = vld [vmem:[#allocation2 + $0x6a] sm:$0xff]
      %v887 = vld [vmem:[#allocation2 + $0x7a] sm:$0xff]
      %v888 = vld [vmem:[#allocation2 + $0x82] sm:$0xff]
      %v889 = vld [vmem:[#allocation2 + $0x92] sm:$0xff]
      %v890 = vld [vmem:[#allocation2 + $0x9a] sm:$0xff]
      %v891 = vld [vmem:[#allocation2 + $0xaa] sm:$0xff]
      %v892 = vld [vmem:[#allocation2 + $0xb2] sm:$0xff]
      %v893 = vld [vmem:[#allocation2 + $0xc2] sm:$0xff]
      %v894 = vld [vmem:[#allocation2 + $0xca] sm:$0xff]
      %v895 = vld [vmem:[#allocation2 + $0xda] sm:$0xff]
      %v896 = vld [vmem:[#allocation2 + $0xe2] sm:$0xff]
      %v897 = vld [vmem:[#allocation2 + $0xf2] sm:$0xff]
      %v898 = vld [vmem:[#allocation2 + $0xfa] sm:$0xff]
      %v899 = vld [vmem:[#allocation2 + $0x10a] sm:$0xff]
      %v900 = vld [vmem:[#allocation2 + $0x112] sm:$0xff]
      %v901 = vld [vmem:[#allocation2 + $0x122] sm:$0xff]
      %v902 = vld [vmem:[#allocation2 + $0x12a] sm:$0xff]
      %v903 = vld [vmem:[#allocation2 + $0x13a] sm:$0xff]
      %v904 = vld [vmem:[#allocation2 + $0x142] sm:$0xff]
      %v905 = vld [vmem:[#allocation2 + $0x152] sm:$0xff]
      %v906 = vld [vmem:[#allocation2 + $0x15a] sm:$0xff]
      %v907 = vld [vmem:[#allocation2 + $0x16a] sm:$0xff]
      %v908 = vld [vmem:[#allocation2 + $0x172] sm:$0xff]
      %v909 = vpack.c.bf16 %v878, %v877
      %v910 = vpack.c.bf16 %v880, %v879
      %v911 = vpack.c.bf16 %v882, %v881
      %v912 = vpack.c.bf16 %v884, %v883
      %v913 = vpack.c.bf16 %v886, %v885
      %v914 = vpack.c.bf16 %v888, %v887
      %v915 = vpack.c.bf16 %v890, %v889
      %v916 = vpack.c.bf16 %v892, %v891
      %v917 = vpack.c.bf16 %v894, %v893
      %v918 = vpack.c.bf16 %v896, %v895
      %v919 = vpack.c.bf16 %v898, %v897
      %v920 = vpack.c.bf16 %v900, %v899
      %v921 = vpack.c.bf16 %v902, %v901
      %v922 = vpack.c.bf16 %v904, %v903
      %v923 = vpack.c.bf16 %v906, %v905
      %v924 = vpack.c.bf16 %v908, %v907
      %s925 = scalar_lea.vmem %s2, 4
      %v926 = vld [vmem:[%s925] sm:$0x3]
      %v928 = vsel %vm257, %v909, 0
      %v931 = vsel %vm257, %v910, 0
      %v934 = vsel %vm257, %v911, 0
      %v937 = vsel %vm257, %v912, 0
      %v940 = vsel %vm257, %v913, 0
      %v943 = vsel %vm257, %v914, 0
      %v946 = vsel %vm257, %v915, 0
      %v949 = vsel %vm257, %v916, 0
      %v952 = vsel %vm257, %v917, 0
      %v955 = vsel %vm257, %v918, 0
      %v958 = vsel %vm257, %v919, 0
      %v961 = vsel %vm257, %v920, 0
      %v964 = vsel %vm257, %v921, 0
      %v967 = vsel %vm257, %v922, 0
      %v970 = vsel %vm257, %v923, 0
      %v973 = vsel %vm257, %v924, 0
      %v976 = vsel %vm644, %v926, 0
      %978 = vmatpush.bf16.msra.mxu0 0
      %979 = vmatpush.bf16.msra.mxu0 0
      %980 = vmatpush.bf16.msra.mxu0 0
      %981 = vmatpush.bf16.msra.mxu0 0
      %982 = vmatpush.bf16.msra.mxu0 0
      %983 = vmatpush.bf16.msra.mxu0 0
      %984 = vmatpush.bf16.msra.mxu0 0
      %985 = vmatpush.bf16.msra.mxu0 %v976
      %986 = vmatmul.bf16.gmra.mxu0 %v928
      %v987 = vpop.f32.mrf.mxu0
      %v988 = vadd.f32 0.0, %v987
      %v989 = vpop.f32.mrf.mxu0
      %v990 = vadd.f32 0.0, %v989
      %991 = vmatmul.bf16.gmra.mxu0 %v931
      %v992 = vpop.f32.mrf.mxu0
      %v993 = vadd.f32 0.0, %v992
      %v994 = vpop.f32.mrf.mxu0
      %v995 = vadd.f32 0.0, %v994
      %996 = vmatmul.bf16.gmra.mxu0 %v934
      %v997 = vpop.f32.mrf.mxu0
      %v998 = vadd.f32 0.0, %v997
      %v999 = vpop.f32.mrf.mxu0
      %v1000 = vadd.f32 0.0, %v999
      %1001 = vmatmul.bf16.gmra.mxu0 %v937
      %v1002 = vpop.f32.mrf.mxu0
      %v1003 = vadd.f32 0.0, %v1002
      %v1004 = vpop.f32.mrf.mxu0
      %v1005 = vadd.f32 0.0, %v1004
      %1006 = vmatmul.bf16.gmra.mxu0 %v940
      %v1007 = vpop.f32.mrf.mxu0
      %v1008 = vadd.f32 0.0, %v1007
      %v1009 = vpop.f32.mrf.mxu0
      %v1010 = vadd.f32 0.0, %v1009
      %1011 = vmatmul.bf16.gmra.mxu0 %v943
      %v1012 = vpop.f32.mrf.mxu0
      %v1013 = vadd.f32 0.0, %v1012
      %v1014 = vpop.f32.mrf.mxu0
      %v1015 = vadd.f32 0.0, %v1014
      %1016 = vmatmul.bf16.gmra.mxu0 %v946
      %v1017 = vpop.f32.mrf.mxu0
      %v1018 = vadd.f32 0.0, %v1017
      %v1019 = vpop.f32.mrf.mxu0
      %v1020 = vadd.f32 0.0, %v1019
      %1021 = vmatmul.bf16.gmra.mxu0 %v949
      %v1022 = vpop.f32.mrf.mxu0
      %v1023 = vadd.f32 0.0, %v1022
      %v1024 = vpop.f32.mrf.mxu0
      %v1025 = vadd.f32 0.0, %v1024
      %1026 = vmatmul.bf16.gmra.mxu0 %v952
      %v1027 = vpop.f32.mrf.mxu0
      %v1028 = vadd.f32 0.0, %v1027
      %v1029 = vpop.f32.mrf.mxu0
      %v1030 = vadd.f32 0.0, %v1029
      %1031 = vmatmul.bf16.gmra.mxu0 %v955
      %v1032 = vpop.f32.mrf.mxu0
      %v1033 = vadd.f32 0.0, %v1032
      %v1034 = vpop.f32.mrf.mxu0
      %v1035 = vadd.f32 0.0, %v1034
      %1036 = vmatmul.bf16.gmra.mxu0 %v958
      %v1037 = vpop.f32.mrf.mxu0
      %v1038 = vadd.f32 0.0, %v1037
      %v1039 = vpop.f32.mrf.mxu0
      %v1040 = vadd.f32 0.0, %v1039
      %1041 = vmatmul.bf16.gmra.mxu0 %v961
      %v1042 = vpop.f32.mrf.mxu0
      %v1043 = vadd.f32 0.0, %v1042
      %v1044 = vpop.f32.mrf.mxu0
      %v1045 = vadd.f32 0.0, %v1044
      %1046 = vmatmul.bf16.gmra.mxu0 %v964
      %v1047 = vpop.f32.mrf.mxu0
      %v1048 = vadd.f32 0.0, %v1047
      %v1049 = vpop.f32.mrf.mxu0
      %v1050 = vadd.f32 0.0, %v1049
      %1051 = vmatmul.bf16.gmra.mxu0 %v967
      %v1052 = vpop.f32.mrf.mxu0
      %v1053 = vadd.f32 0.0, %v1052
      %v1054 = vpop.f32.mrf.mxu0
      %v1055 = vadd.f32 0.0, %v1054
      %1056 = vmatmul.bf16.gmra.mxu0 %v970
      %v1057 = vpop.f32.mrf.mxu0
      %v1058 = vadd.f32 0.0, %v1057
      %v1059 = vpop.f32.mrf.mxu0
      %v1060 = vadd.f32 0.0, %v1059
      %1061 = vmatmul.bf16.gmra.mxu0 %v973
      %v1062 = vpop.f32.mrf.mxu0
      %v1063 = vadd.f32 0.0, %v1062
      %v1064 = vpop.f32.mrf.mxu0
      %v1065 = vadd.f32 0.0, %v1064
      %1066 = vdwg.mxu0
      %v1067 = vadd.f32 %v798, %v988
      %v1068 = vadd.f32 %v800, %v990
      %v1069 = vadd.f32 %v803, %v993
      %v1070 = vadd.f32 %v805, %v995
      %v1071 = vadd.f32 %v808, %v998
      %v1072 = vadd.f32 %v810, %v1000
      %v1073 = vadd.f32 %v813, %v1003
      %v1074 = vadd.f32 %v815, %v1005
      %v1075 = vadd.f32 %v818, %v1008
      %v1076 = vadd.f32 %v820, %v1010
      %v1077 = vadd.f32 %v823, %v1013
      %v1078 = vadd.f32 %v825, %v1015
      %v1079 = vadd.f32 %v828, %v1018
      %v1080 = vadd.f32 %v830, %v1020
      %v1081 = vadd.f32 %v833, %v1023
      %v1082 = vadd.f32 %v835, %v1025
      %v1083 = vadd.f32 %v838, %v1028
      %v1084 = vadd.f32 %v840, %v1030
      %v1085 = vadd.f32 %v843, %v1033
      %v1086 = vadd.f32 %v845, %v1035
      %v1087 = vadd.f32 %v848, %v1038
      %v1088 = vadd.f32 %v850, %v1040
      %v1089 = vadd.f32 %v853, %v1043
      %v1090 = vadd.f32 %v855, %v1045
      %v1091 = vadd.f32 %v858, %v1048
      %v1092 = vadd.f32 %v860, %v1050
      %v1093 = vadd.f32 %v863, %v1053
      %v1094 = vadd.f32 %v865, %v1055
      %v1095 = vadd.f32 %v868, %v1058
      %v1096 = vadd.f32 %v870, %v1060
      %v1097 = vadd.f32 %v873, %v1063
      %v1098 = vadd.f32 %v875, %v1065
      %v1099 = vld [vmem:[%s345] sm:$0xff]
      %v1100 = vld [vmem:[%s345 + $0x8] sm:$0xff]
      %v1101 = vld [vmem:[%s345 + $0x18] sm:$0xff]
      %v1102 = vld [vmem:[%s345 + $0x20] sm:$0xff]
      %v1103 = vld [vmem:[%s345 + $0x30] sm:$0xff]
      %v1104 = vld [vmem:[%s345 + $0x38] sm:$0xff]
      %v1105 = vld [vmem:[%s345 + $0x48] sm:$0xff]
      %v1106 = vld [vmem:[%s345 + $0x50] sm:$0xff]
      %v1107 = vld [vmem:[%s345 + $0x60] sm:$0xff]
      %v1108 = vld [vmem:[%s345 + $0x68] sm:$0xff]
      %v1109 = vld [vmem:[%s345 + $0x78] sm:$0xff]
      %v1110 = vld [vmem:[%s345 + $0x80] sm:$0xff]
      %v1111 = vld [vmem:[%s345 + $0x90] sm:$0xff]
      %v1112 = vld [vmem:[%s345 + $0x98] sm:$0xff]
      %v1113 = vld [vmem:[%s345 + $0xa8] sm:$0xff]
      %v1114 = vld [vmem:[%s345 + $0xb0] sm:$0xff]
      %v1115 = vld [vmem:[%s345 + $0xc0] sm:$0xff]
      %v1116 = vld [vmem:[%s345 + $0xc8] sm:$0xff]
      %v1117 = vld [vmem:[%s345 + $0xd8] sm:$0xff]
      %v1118 = vld [vmem:[%s345 + $0xe0] sm:$0xff]
      %v1119 = vld [vmem:[%s345 + $0xf0] sm:$0xff]
      %v1120 = vld [vmem:[%s345 + $0xf8] sm:$0xff]
      %v1121 = vld [vmem:[%s345 + $0x108] sm:$0xff]
      %v1122 = vld [vmem:[%s345 + $0x110] sm:$0xff]
      %v1123 = vld [vmem:[%s345 + $0x120] sm:$0xff]
      %v1124 = vld [vmem:[%s345 + $0x128] sm:$0xff]
      %v1125 = vld [vmem:[%s345 + $0x138] sm:$0xff]
      %v1126 = vld [vmem:[%s345 + $0x140] sm:$0xff]
      %v1127 = vld [vmem:[%s345 + $0x150] sm:$0xff]
      %v1128 = vld [vmem:[%s345 + $0x158] sm:$0xff]
      %v1129 = vld [vmem:[%s345 + $0x168] sm:$0xff]
      %v1130 = vld [vmem:[%s345 + $0x170] sm:$0xff]
      %v1131 = vpack.c.bf16 %v1100, %v1099
      %v1132 = vpack.c.bf16 %v1102, %v1101
      %v1133 = vpack.c.bf16 %v1104, %v1103
      %v1134 = vpack.c.bf16 %v1106, %v1105
      %v1135 = vpack.c.bf16 %v1108, %v1107
      %v1136 = vpack.c.bf16 %v1110, %v1109
      %v1137 = vpack.c.bf16 %v1112, %v1111
      %v1138 = vpack.c.bf16 %v1114, %v1113
      %v1139 = vpack.c.bf16 %v1116, %v1115
      %v1140 = vpack.c.bf16 %v1118, %v1117
      %v1141 = vpack.c.bf16 %v1120, %v1119
      %v1142 = vpack.c.bf16 %v1122, %v1121
      %v1143 = vpack.c.bf16 %v1124, %v1123
      %v1144 = vpack.c.bf16 %v1126, %v1125
      %v1145 = vpack.c.bf16 %v1128, %v1127
      %v1146 = vpack.c.bf16 %v1130, %v1129
      %s1147 = scalar_lea.vmem %s2, 6
      %v1148 = vld [vmem:[%s1147] sm:$0x3]
      %v1150 = vsel %vm257, %v1131, 0
      %v1153 = vsel %vm257, %v1132, 0
      %v1156 = vsel %vm257, %v1133, 0
      %v1159 = vsel %vm257, %v1134, 0
      %v1162 = vsel %vm257, %v1135, 0
      %v1165 = vsel %vm257, %v1136, 0
      %v1168 = vsel %vm257, %v1137, 0
      %v1171 = vsel %vm257, %v1138, 0
      %v1174 = vsel %vm257, %v1139, 0
      %v1177 = vsel %vm257, %v1140, 0
      %v1180 = vsel %vm257, %v1141, 0
      %v1183 = vsel %vm257, %v1142, 0
      %v1186 = vsel %vm257, %v1143, 0
      %v1189 = vsel %vm257, %v1144, 0
      %v1192 = vsel %vm257, %v1145, 0
      %v1195 = vsel %vm257, %v1146, 0
      %v1198 = vsel %vm644, %v1148, 0
      %1200 = vmatpush.bf16.msra.mxu0 0
      %1201 = vmatpush.bf16.msra.mxu0 0
      %1202 = vmatpush.bf16.msra.mxu0 0
      %1203 = vmatpush.bf16.msra.mxu0 0
      %1204 = vmatpush.bf16.msra.mxu0 0
      %1205 = vmatpush.bf16.msra.mxu0 0
      %1206 = vmatpush.bf16.msra.mxu0 0
      %1207 = vmatpush.bf16.msra.mxu0 %v1198
      %1208 = vmatmul.bf16.gmra.mxu0 %v1150
      %v1209 = vpop.f32.mrf.mxu0
      %v1210 = vadd.f32 0.0, %v1209
      %v1211 = vpop.f32.mrf.mxu0
      %v1212 = vadd.f32 0.0, %v1211
      %1213 = vmatmul.bf16.gmra.mxu0 %v1153
      %v1214 = vpop.f32.mrf.mxu0
      %v1215 = vadd.f32 0.0, %v1214
      %v1216 = vpop.f32.mrf.mxu0
      %v1217 = vadd.f32 0.0, %v1216
      %1218 = vmatmul.bf16.gmra.mxu0 %v1156
      %v1219 = vpop.f32.mrf.mxu0
      %v1220 = vadd.f32 0.0, %v1219
      %v1221 = vpop.f32.mrf.mxu0
      %v1222 = vadd.f32 0.0, %v1221
      %1223 = vmatmul.bf16.gmra.mxu0 %v1159
      %v1224 = vpop.f32.mrf.mxu0
      %v1225 = vadd.f32 0.0, %v1224
      %v1226 = vpop.f32.mrf.mxu0
      %v1227 = vadd.f32 0.0, %v1226
      %1228 = vmatmul.bf16.gmra.mxu0 %v1162
      %v1229 = vpop.f32.mrf.mxu0
      %v1230 = vadd.f32 0.0, %v1229
      %v1231 = vpop.f32.mrf.mxu0
      %v1232 = vadd.f32 0.0, %v1231
      %1233 = vmatmul.bf16.gmra.mxu0 %v1165
      %v1234 = vpop.f32.mrf.mxu0
      %v1235 = vadd.f32 0.0, %v1234
      %v1236 = vpop.f32.mrf.mxu0
      %v1237 = vadd.f32 0.0, %v1236
      %1238 = vmatmul.bf16.gmra.mxu0 %v1168
      %v1239 = vpop.f32.mrf.mxu0
      %v1240 = vadd.f32 0.0, %v1239
      %v1241 = vpop.f32.mrf.mxu0
      %v1242 = vadd.f32 0.0, %v1241
      %1243 = vmatmul.bf16.gmra.mxu0 %v1171
      %v1244 = vpop.f32.mrf.mxu0
      %v1245 = vadd.f32 0.0, %v1244
      %v1246 = vpop.f32.mrf.mxu0
      %v1247 = vadd.f32 0.0, %v1246
      %1248 = vmatmul.bf16.gmra.mxu0 %v1174
      %v1249 = vpop.f32.mrf.mxu0
      %v1250 = vadd.f32 0.0, %v1249
      %v1251 = vpop.f32.mrf.mxu0
      %v1252 = vadd.f32 0.0, %v1251
      %1253 = vmatmul.bf16.gmra.mxu0 %v1177
      %v1254 = vpop.f32.mrf.mxu0
      %v1255 = vadd.f32 0.0, %v1254
      %v1256 = vpop.f32.mrf.mxu0
      %v1257 = vadd.f32 0.0, %v1256
      %1258 = vmatmul.bf16.gmra.mxu0 %v1180
      %v1259 = vpop.f32.mrf.mxu0
      %v1260 = vadd.f32 0.0, %v1259
      %v1261 = vpop.f32.mrf.mxu0
      %v1262 = vadd.f32 0.0, %v1261
      %1263 = vmatmul.bf16.gmra.mxu0 %v1183
      %v1264 = vpop.f32.mrf.mxu0
      %v1265 = vadd.f32 0.0, %v1264
      %v1266 = vpop.f32.mrf.mxu0
      %v1267 = vadd.f32 0.0, %v1266
      %1268 = vmatmul.bf16.gmra.mxu0 %v1186
      %v1269 = vpop.f32.mrf.mxu0
      %v1270 = vadd.f32 0.0, %v1269
      %v1271 = vpop.f32.mrf.mxu0
      %v1272 = vadd.f32 0.0, %v1271
      %1273 = vmatmul.bf16.gmra.mxu0 %v1189
      %v1274 = vpop.f32.mrf.mxu0
      %v1275 = vadd.f32 0.0, %v1274
      %v1276 = vpop.f32.mrf.mxu0
      %v1277 = vadd.f32 0.0, %v1276
      %1278 = vmatmul.bf16.gmra.mxu0 %v1192
      %v1279 = vpop.f32.mrf.mxu0
      %v1280 = vadd.f32 0.0, %v1279
      %v1281 = vpop.f32.mrf.mxu0
      %v1282 = vadd.f32 0.0, %v1281
      %1283 = vmatmul.bf16.gmra.mxu0 %v1195
      %v1284 = vpop.f32.mrf.mxu0
      %v1285 = vadd.f32 0.0, %v1284
      %v1286 = vpop.f32.mrf.mxu0
      %v1287 = vadd.f32 0.0, %v1286
      %1288 = vdwg.mxu0
      %v1289 = vadd.f32 %v1067, %v1210
      %v1290 = vadd.f32 %v1068, %v1212
      %v1291 = vadd.f32 %v1069, %v1215
      %v1292 = vadd.f32 %v1070, %v1217
      %v1293 = vadd.f32 %v1071, %v1220
      %v1294 = vadd.f32 %v1072, %v1222
      %v1295 = vadd.f32 %v1073, %v1225
      %v1296 = vadd.f32 %v1074, %v1227
      %v1297 = vadd.f32 %v1075, %v1230
      %v1298 = vadd.f32 %v1076, %v1232
      %v1299 = vadd.f32 %v1077, %v1235
      %v1300 = vadd.f32 %v1078, %v1237
      %v1301 = vadd.f32 %v1079, %v1240
      %v1302 = vadd.f32 %v1080, %v1242
      %v1303 = vadd.f32 %v1081, %v1245
      %v1304 = vadd.f32 %v1082, %v1247
      %v1305 = vadd.f32 %v1083, %v1250
      %v1306 = vadd.f32 %v1084, %v1252
      %v1307 = vadd.f32 %v1085, %v1255
      %v1308 = vadd.f32 %v1086, %v1257
      %v1309 = vadd.f32 %v1087, %v1260
      %v1310 = vadd.f32 %v1088, %v1262
      %v1311 = vadd.f32 %v1089, %v1265
      %v1312 = vadd.f32 %v1090, %v1267
      %v1313 = vadd.f32 %v1091, %v1270
      %v1314 = vadd.f32 %v1092, %v1272
      %v1315 = vadd.f32 %v1093, %v1275
      %v1316 = vadd.f32 %v1094, %v1277
      %v1317 = vadd.f32 %v1095, %v1280
      %v1318 = vadd.f32 %v1096, %v1282
      %v1319 = vadd.f32 %v1097, %v1285
      %v1320 = vadd.f32 %v1098, %v1287
      %v1321 = vld [vmem:[%s345 + $0x1] sm:$0xff]
      %v1322 = vld [vmem:[%s345 + $0x9] sm:$0xff]
      %v1323 = vld [vmem:[%s345 + $0x19] sm:$0xff]
      %v1324 = vld [vmem:[%s345 + $0x21] sm:$0xff]
      %v1325 = vld [vmem:[%s345 + $0x31] sm:$0xff]
      %v1326 = vld [vmem:[%s345 + $0x39] sm:$0xff]
      %v1327 = vld [vmem:[%s345 + $0x49] sm:$0xff]
      %v1328 = vld [vmem:[%s345 + $0x51] sm:$0xff]
      %v1329 = vld [vmem:[%s345 + $0x61] sm:$0xff]
      %v1330 = vld [vmem:[%s345 + $0x69] sm:$0xff]
      %v1331 = vld [vmem:[%s345 + $0x79] sm:$0xff]
      %v1332 = vld [vmem:[%s345 + $0x81] sm:$0xff]
      %v1333 = vld [vmem:[%s345 + $0x91] sm:$0xff]
      %v1334 = vld [vmem:[%s345 + $0x99] sm:$0xff]
      %v1335 = vld [vmem:[%s345 + $0xa9] sm:$0xff]
      %v1336 = vld [vmem:[%s345 + $0xb1] sm:$0xff]
      %v1337 = vld [vmem:[%s345 + $0xc1] sm:$0xff]
      %v1338 = vld [vmem:[%s345 + $0xc9] sm:$0xff]
      %v1339 = vld [vmem:[%s345 + $0xd9] sm:$0xff]
      %v1340 = vld [vmem:[%s345 + $0xe1] sm:$0xff]
      %v1341 = vld [vmem:[%s345 + $0xf1] sm:$0xff]
      %v1342 = vld [vmem:[%s345 + $0xf9] sm:$0xff]
      %v1343 = vld [vmem:[%s345 + $0x109] sm:$0xff]
      %v1344 = vld [vmem:[%s345 + $0x111] sm:$0xff]
      %v1345 = vld [vmem:[%s345 + $0x121] sm:$0xff]
      %v1346 = vld [vmem:[%s345 + $0x129] sm:$0xff]
      %v1347 = vld [vmem:[%s345 + $0x139] sm:$0xff]
      %v1348 = vld [vmem:[%s345 + $0x141] sm:$0xff]
      %v1349 = vld [vmem:[%s345 + $0x151] sm:$0xff]
      %v1350 = vld [vmem:[%s345 + $0x159] sm:$0xff]
      %v1351 = vld [vmem:[%s345 + $0x169] sm:$0xff]
      %v1352 = vld [vmem:[%s345 + $0x171] sm:$0xff]
      %v1353 = vpack.c.bf16 %v1322, %v1321
      %v1354 = vpack.c.bf16 %v1324, %v1323
      %v1355 = vpack.c.bf16 %v1326, %v1325
      %v1356 = vpack.c.bf16 %v1328, %v1327
      %v1357 = vpack.c.bf16 %v1330, %v1329
      %v1358 = vpack.c.bf16 %v1332, %v1331
      %v1359 = vpack.c.bf16 %v1334, %v1333
      %v1360 = vpack.c.bf16 %v1336, %v1335
      %v1361 = vpack.c.bf16 %v1338, %v1337
      %v1362 = vpack.c.bf16 %v1340, %v1339
      %v1363 = vpack.c.bf16 %v1342, %v1341
      %v1364 = vpack.c.bf16 %v1344, %v1343
      %v1365 = vpack.c.bf16 %v1346, %v1345
      %v1366 = vpack.c.bf16 %v1348, %v1347
      %v1367 = vpack.c.bf16 %v1350, %v1349
      %v1368 = vpack.c.bf16 %v1352, %v1351
      %s1369 = scalar_lea.vmem %s2, 8
      %v1370 = vld [vmem:[%s1369] sm:$0x3]
      %v1372 = vsel %vm257, %v1353, 0
      %v1375 = vsel %vm257, %v1354, 0
      %v1378 = vsel %vm257, %v1355, 0
      %v1381 = vsel %vm257, %v1356, 0
      %v1384 = vsel %vm257, %v1357, 0
      %v1387 = vsel %vm257, %v1358, 0
      %v1390 = vsel %vm257, %v1359, 0
      %v1393 = vsel %vm257, %v1360, 0
      %v1396 = vsel %vm257, %v1361, 0
      %v1399 = vsel %vm257, %v1362, 0
      %v1402 = vsel %vm257, %v1363, 0
      %v1405 = vsel %vm257, %v1364, 0
      %v1408 = vsel %vm257, %v1365, 0
      %v1411 = vsel %vm257, %v1366, 0
      %v1414 = vsel %vm257, %v1367, 0
      %v1417 = vsel %vm257, %v1368, 0
      %v1420 = vsel %vm644, %v1370, 0
      %1422 = vmatpush.bf16.msra.mxu0 0
      %1423 = vmatpush.bf16.msra.mxu0 0
      %1424 = vmatpush.bf16.msra.mxu0 0
      %1425 = vmatpush.bf16.msra.mxu0 0
      %1426 = vmatpush.bf16.msra.mxu0 0
      %1427 = vmatpush.bf16.msra.mxu0 0
      %1428 = vmatpush.bf16.msra.mxu0 0
      %1429 = vmatpush.bf16.msra.mxu0 %v1420
      %1430 = vmatmul.bf16.gmra.mxu0 %v1372
      %v1431 = vpop.f32.mrf.mxu0
      %v1432 = vadd.f32 0.0, %v1431
      %v1433 = vpop.f32.mrf.mxu0
      %v1434 = vadd.f32 0.0, %v1433
      %1435 = vmatmul.bf16.gmra.mxu0 %v1375
      %v1436 = vpop.f32.mrf.mxu0
      %v1437 = vadd.f32 0.0, %v1436
      %v1438 = vpop.f32.mrf.mxu0
      %v1439 = vadd.f32 0.0, %v1438
      %1440 = vmatmul.bf16.gmra.mxu0 %v1378
      %v1441 = vpop.f32.mrf.mxu0
      %v1442 = vadd.f32 0.0, %v1441
      %v1443 = vpop.f32.mrf.mxu0
      %v1444 = vadd.f32 0.0, %v1443
      %1445 = vmatmul.bf16.gmra.mxu0 %v1381
      %v1446 = vpop.f32.mrf.mxu0
      %v1447 = vadd.f32 0.0, %v1446
      %v1448 = vpop.f32.mrf.mxu0
      %v1449 = vadd.f32 0.0, %v1448
      %1450 = vmatmul.bf16.gmra.mxu0 %v1384
      %v1451 = vpop.f32.mrf.mxu0
      %v1452 = vadd.f32 0.0, %v1451
      %v1453 = vpop.f32.mrf.mxu0
      %v1454 = vadd.f32 0.0, %v1453
      %1455 = vmatmul.bf16.gmra.mxu0 %v1387
      %v1456 = vpop.f32.mrf.mxu0
      %v1457 = vadd.f32 0.0, %v1456
      %v1458 = vpop.f32.mrf.mxu0
      %v1459 = vadd.f32 0.0, %v1458
      %1460 = vmatmul.bf16.gmra.mxu0 %v1390
      %v1461 = vpop.f32.mrf.mxu0
      %v1462 = vadd.f32 0.0, %v1461
      %v1463 = vpop.f32.mrf.mxu0
      %v1464 = vadd.f32 0.0, %v1463
      %1465 = vmatmul.bf16.gmra.mxu0 %v1393
      %v1466 = vpop.f32.mrf.mxu0
      %v1467 = vadd.f32 0.0, %v1466
      %v1468 = vpop.f32.mrf.mxu0
      %v1469 = vadd.f32 0.0, %v1468
      %1470 = vmatmul.bf16.gmra.mxu0 %v1396
      %v1471 = vpop.f32.mrf.mxu0
      %v1472 = vadd.f32 0.0, %v1471
      %v1473 = vpop.f32.mrf.mxu0
      %v1474 = vadd.f32 0.0, %v1473
      %1475 = vmatmul.bf16.gmra.mxu0 %v1399
      %v1476 = vpop.f32.mrf.mxu0
      %v1477 = vadd.f32 0.0, %v1476
      %v1478 = vpop.f32.mrf.mxu0
      %v1479 = vadd.f32 0.0, %v1478
      %1480 = vmatmul.bf16.gmra.mxu0 %v1402
      %v1481 = vpop.f32.mrf.mxu0
      %v1482 = vadd.f32 0.0, %v1481
      %v1483 = vpop.f32.mrf.mxu0
      %v1484 = vadd.f32 0.0, %v1483
      %1485 = vmatmul.bf16.gmra.mxu0 %v1405
      %v1486 = vpop.f32.mrf.mxu0
      %v1487 = vadd.f32 0.0, %v1486
      %v1488 = vpop.f32.mrf.mxu0
      %v1489 = vadd.f32 0.0, %v1488
      %1490 = vmatmul.bf16.gmra.mxu0 %v1408
      %v1491 = vpop.f32.mrf.mxu0
      %v1492 = vadd.f32 0.0, %v1491
      %v1493 = vpop.f32.mrf.mxu0
      %v1494 = vadd.f32 0.0, %v1493
      %1495 = vmatmul.bf16.gmra.mxu0 %v1411
      %v1496 = vpop.f32.mrf.mxu0
      %v1497 = vadd.f32 0.0, %v1496
      %v1498 = vpop.f32.mrf.mxu0
      %v1499 = vadd.f32 0.0, %v1498
      %1500 = vmatmul.bf16.gmra.mxu0 %v1414
      %v1501 = vpop.f32.mrf.mxu0
      %v1502 = vadd.f32 0.0, %v1501
      %v1503 = vpop.f32.mrf.mxu0
      %v1504 = vadd.f32 0.0, %v1503
      %1505 = vmatmul.bf16.gmra.mxu0 %v1417
      %v1506 = vpop.f32.mrf.mxu0
      %v1507 = vadd.f32 0.0, %v1506
      %v1508 = vpop.f32.mrf.mxu0
      %v1509 = vadd.f32 0.0, %v1508
      %1510 = vdwg.mxu0
      %v1511 = vadd.f32 %v1289, %v1432
      %v1512 = vadd.f32 %v1290, %v1434
      %v1513 = vadd.f32 %v1291, %v1437
      %v1514 = vadd.f32 %v1292, %v1439
      %v1515 = vadd.f32 %v1293, %v1442
      %v1516 = vadd.f32 %v1294, %v1444
      %v1517 = vadd.f32 %v1295, %v1447
      %v1518 = vadd.f32 %v1296, %v1449
      %v1519 = vadd.f32 %v1297, %v1452
      %v1520 = vadd.f32 %v1298, %v1454
      %v1521 = vadd.f32 %v1299, %v1457
      %v1522 = vadd.f32 %v1300, %v1459
      %v1523 = vadd.f32 %v1301, %v1462
      %v1524 = vadd.f32 %v1302, %v1464
      %v1525 = vadd.f32 %v1303, %v1467
      %v1526 = vadd.f32 %v1304, %v1469
      %v1527 = vadd.f32 %v1305, %v1472
      %v1528 = vadd.f32 %v1306, %v1474
      %v1529 = vadd.f32 %v1307, %v1477
      %v1530 = vadd.f32 %v1308, %v1479
      %v1531 = vadd.f32 %v1309, %v1482
      %v1532 = vadd.f32 %v1310, %v1484
      %v1533 = vadd.f32 %v1311, %v1487
      %v1534 = vadd.f32 %v1312, %v1489
      %v1535 = vadd.f32 %v1313, %v1492
      %v1536 = vadd.f32 %v1314, %v1494
      %v1537 = vadd.f32 %v1315, %v1497
      %v1538 = vadd.f32 %v1316, %v1499
      %v1539 = vadd.f32 %v1317, %v1502
      %v1540 = vadd.f32 %v1318, %v1504
      %v1541 = vadd.f32 %v1319, %v1507
      %v1542 = vadd.f32 %v1320, %v1509
      %v1543 = vld [vmem:[%s345 + $0x2] sm:$0xff]
      %v1544 = vld [vmem:[%s345 + $0xa] sm:$0xff]
      %v1545 = vld [vmem:[%s345 + $0x1a] sm:$0xff]
      %v1546 = vld [vmem:[%s345 + $0x22] sm:$0xff]
      %v1547 = vld [vmem:[%s345 + $0x32] sm:$0xff]
      %v1548 = vld [vmem:[%s345 + $0x3a] sm:$0xff]
      %v1549 = vld [vmem:[%s345 + $0x4a] sm:$0xff]
      %v1550 = vld [vmem:[%s345 + $0x52] sm:$0xff]
      %v1551 = vld [vmem:[%s345 + $0x62] sm:$0xff]
      %v1552 = vld [vmem:[%s345 + $0x6a] sm:$0xff]
      %v1553 = vld [vmem:[%s345 + $0x7a] sm:$0xff]
      %v1554 = vld [vmem:[%s345 + $0x82] sm:$0xff]
      %v1555 = vld [vmem:[%s345 + $0x92] sm:$0xff]
      %v1556 = vld [vmem:[%s345 + $0x9a] sm:$0xff]
      %v1557 = vld [vmem:[%s345 + $0xaa] sm:$0xff]
      %v1558 = vld [vmem:[%s345 + $0xb2] sm:$0xff]
      %v1559 = vld [vmem:[%s345 + $0xc2] sm:$0xff]
      %v1560 = vld [vmem:[%s345 + $0xca] sm:$0xff]
      %v1561 = vld [vmem:[%s345 + $0xda] sm:$0xff]
      %v1562 = vld [vmem:[%s345 + $0xe2] sm:$0xff]
      %v1563 = vld [vmem:[%s345 + $0xf2] sm:$0xff]
      %v1564 = vld [vmem:[%s345 + $0xfa] sm:$0xff]
      %v1565 = vld [vmem:[%s345 + $0x10a] sm:$0xff]
      %v1566 = vld [vmem:[%s345 + $0x112] sm:$0xff]
      %v1567 = vld [vmem:[%s345 + $0x122] sm:$0xff]
      %v1568 = vld [vmem:[%s345 + $0x12a] sm:$0xff]
      %v1569 = vld [vmem:[%s345 + $0x13a] sm:$0xff]
      %v1570 = vld [vmem:[%s345 + $0x142] sm:$0xff]
      %v1571 = vld [vmem:[%s345 + $0x152] sm:$0xff]
      %v1572 = vld [vmem:[%s345 + $0x15a] sm:$0xff]
      %v1573 = vld [vmem:[%s345 + $0x16a] sm:$0xff]
      %v1574 = vld [vmem:[%s345 + $0x172] sm:$0xff]
      %v1575 = vpack.c.bf16 %v1544, %v1543
      %v1576 = vpack.c.bf16 %v1546, %v1545
      %v1577 = vpack.c.bf16 %v1548, %v1547
      %v1578 = vpack.c.bf16 %v1550, %v1549
      %v1579 = vpack.c.bf16 %v1552, %v1551
      %v1580 = vpack.c.bf16 %v1554, %v1553
      %v1581 = vpack.c.bf16 %v1556, %v1555
      %v1582 = vpack.c.bf16 %v1558, %v1557
      %v1583 = vpack.c.bf16 %v1560, %v1559
      %v1584 = vpack.c.bf16 %v1562, %v1561
      %v1585 = vpack.c.bf16 %v1564, %v1563
      %v1586 = vpack.c.bf16 %v1566, %v1565
      %v1587 = vpack.c.bf16 %v1568, %v1567
      %v1588 = vpack.c.bf16 %v1570, %v1569
      %v1589 = vpack.c.bf16 %v1572, %v1571
      %v1590 = vpack.c.bf16 %v1574, %v1573
      %s1591 = scalar_lea.vmem %s2, 10
      %v1592 = vld [vmem:[%s1591] sm:$0x3]
      %v1594 = vsel %vm257, %v1575, 0
      %v1597 = vsel %vm257, %v1576, 0
      %v1600 = vsel %vm257, %v1577, 0
      %v1603 = vsel %vm257, %v1578, 0
      %v1606 = vsel %vm257, %v1579, 0
      %v1609 = vsel %vm257, %v1580, 0
      %v1612 = vsel %vm257, %v1581, 0
      %v1615 = vsel %vm257, %v1582, 0
      %v1618 = vsel %vm257, %v1583, 0
      %v1621 = vsel %vm257, %v1584, 0
      %v1624 = vsel %vm257, %v1585, 0
      %v1627 = vsel %vm257, %v1586, 0
      %v1630 = vsel %vm257, %v1587, 0
      %v1633 = vsel %vm257, %v1588, 0
      %v1636 = vsel %vm257, %v1589, 0
      %v1639 = vsel %vm257, %v1590, 0
      %v1642 = vsel %vm644, %v1592, 0
      %1644 = vmatpush.bf16.msra.mxu0 0
      %1645 = vmatpush.bf16.msra.mxu0 0
      %1646 = vmatpush.bf16.msra.mxu0 0
      %1647 = vmatpush.bf16.msra.mxu0 0
      %1648 = vmatpush.bf16.msra.mxu0 0
      %1649 = vmatpush.bf16.msra.mxu0 0
      %1650 = vmatpush.bf16.msra.mxu0 0
      %1651 = vmatpush.bf16.msra.mxu0 %v1642
      %1652 = vmatmul.bf16.gmra.mxu0 %v1594
      %v1653 = vpop.f32.mrf.mxu0
      %v1654 = vadd.f32 0.0, %v1653
      %v1655 = vpop.f32.mrf.mxu0
      %v1656 = vadd.f32 0.0, %v1655
      %1657 = vmatmul.bf16.gmra.mxu0 %v1597
      %v1658 = vpop.f32.mrf.mxu0
      %v1659 = vadd.f32 0.0, %v1658
      %v1660 = vpop.f32.mrf.mxu0
      %v1661 = vadd.f32 0.0, %v1660
      %1662 = vmatmul.bf16.gmra.mxu0 %v1600
      %v1663 = vpop.f32.mrf.mxu0
      %v1664 = vadd.f32 0.0, %v1663
      %v1665 = vpop.f32.mrf.mxu0
      %v1666 = vadd.f32 0.0, %v1665
      %1667 = vmatmul.bf16.gmra.mxu0 %v1603
      %v1668 = vpop.f32.mrf.mxu0
      %v1669 = vadd.f32 0.0, %v1668
      %v1670 = vpop.f32.mrf.mxu0
      %v1671 = vadd.f32 0.0, %v1670
      %1672 = vmatmul.bf16.gmra.mxu0 %v1606
      %v1673 = vpop.f32.mrf.mxu0
      %v1674 = vadd.f32 0.0, %v1673
      %v1675 = vpop.f32.mrf.mxu0
      %v1676 = vadd.f32 0.0, %v1675
      %1677 = vmatmul.bf16.gmra.mxu0 %v1609
      %v1678 = vpop.f32.mrf.mxu0
      %v1679 = vadd.f32 0.0, %v1678
      %v1680 = vpop.f32.mrf.mxu0
      %v1681 = vadd.f32 0.0, %v1680
      %1682 = vmatmul.bf16.gmra.mxu0 %v1612
      %v1683 = vpop.f32.mrf.mxu0
      %v1684 = vadd.f32 0.0, %v1683
      %v1685 = vpop.f32.mrf.mxu0
      %v1686 = vadd.f32 0.0, %v1685
      %1687 = vmatmul.bf16.gmra.mxu0 %v1615
      %v1688 = vpop.f32.mrf.mxu0
      %v1689 = vadd.f32 0.0, %v1688
      %v1690 = vpop.f32.mrf.mxu0
      %v1691 = vadd.f32 0.0, %v1690
      %1692 = vmatmul.bf16.gmra.mxu0 %v1618
      %v1693 = vpop.f32.mrf.mxu0
      %v1694 = vadd.f32 0.0, %v1693
      %v1695 = vpop.f32.mrf.mxu0
      %v1696 = vadd.f32 0.0, %v1695
      %1697 = vmatmul.bf16.gmra.mxu0 %v1621
      %v1698 = vpop.f32.mrf.mxu0
      %v1699 = vadd.f32 0.0, %v1698
      %v1700 = vpop.f32.mrf.mxu0
      %v1701 = vadd.f32 0.0, %v1700
      %1702 = vmatmul.bf16.gmra.mxu0 %v1624
      %v1703 = vpop.f32.mrf.mxu0
      %v1704 = vadd.f32 0.0, %v1703
      %v1705 = vpop.f32.mrf.mxu0
      %v1706 = vadd.f32 0.0, %v1705
      %1707 = vmatmul.bf16.gmra.mxu0 %v1627
      %v1708 = vpop.f32.mrf.mxu0
      %v1709 = vadd.f32 0.0, %v1708
      %v1710 = vpop.f32.mrf.mxu0
      %v1711 = vadd.f32 0.0, %v1710
      %1712 = vmatmul.bf16.gmra.mxu0 %v1630
      %v1713 = vpop.f32.mrf.mxu0
      %v1714 = vadd.f32 0.0, %v1713
      %v1715 = vpop.f32.mrf.mxu0
      %v1716 = vadd.f32 0.0, %v1715
      %1717 = vmatmul.bf16.gmra.mxu0 %v1633
      %v1718 = vpop.f32.mrf.mxu0
      %v1719 = vadd.f32 0.0, %v1718
      %v1720 = vpop.f32.mrf.mxu0
      %v1721 = vadd.f32 0.0, %v1720
      %1722 = vmatmul.bf16.gmra.mxu0 %v1636
      %v1723 = vpop.f32.mrf.mxu0
      %v1724 = vadd.f32 0.0, %v1723
      %v1725 = vpop.f32.mrf.mxu0
      %v1726 = vadd.f32 0.0, %v1725
      %1727 = vmatmul.bf16.gmra.mxu0 %v1639
      %v1728 = vpop.f32.mrf.mxu0
      %v1729 = vadd.f32 0.0, %v1728
      %v1730 = vpop.f32.mrf.mxu0
      %v1731 = vadd.f32 0.0, %v1730
      %1732 = vdwg.mxu0
      %v1733 = vadd.f32 %v1511, %v1654
      %v1734 = vadd.f32 %v1512, %v1656
      %v1735 = vadd.f32 %v1513, %v1659
      %v1736 = vadd.f32 %v1514, %v1661
      %v1737 = vadd.f32 %v1515, %v1664
      %v1738 = vadd.f32 %v1516, %v1666
      %v1739 = vadd.f32 %v1517, %v1669
      %v1740 = vadd.f32 %v1518, %v1671
      %v1741 = vadd.f32 %v1519, %v1674
      %v1742 = vadd.f32 %v1520, %v1676
      %v1743 = vadd.f32 %v1521, %v1679
      %v1744 = vadd.f32 %v1522, %v1681
      %v1745 = vadd.f32 %v1523, %v1684
      %v1746 = vadd.f32 %v1524, %v1686
      %v1747 = vadd.f32 %v1525, %v1689
      %v1748 = vadd.f32 %v1526, %v1691
      %v1749 = vadd.f32 %v1527, %v1694
      %v1750 = vadd.f32 %v1528, %v1696
      %v1751 = vadd.f32 %v1529, %v1699
      %v1752 = vadd.f32 %v1530, %v1701
      %v1753 = vadd.f32 %v1531, %v1704
      %v1754 = vadd.f32 %v1532, %v1706
      %v1755 = vadd.f32 %v1533, %v1709
      %v1756 = vadd.f32 %v1534, %v1711
      %v1757 = vadd.f32 %v1535, %v1714
      %v1758 = vadd.f32 %v1536, %v1716
      %v1759 = vadd.f32 %v1537, %v1719
      %v1760 = vadd.f32 %v1538, %v1721
      %v1761 = vadd.f32 %v1539, %v1724
      %v1762 = vadd.f32 %v1540, %v1726
      %v1763 = vadd.f32 %v1541, %v1729
      %v1764 = vadd.f32 %v1542, %v1731
      %s1765 = scalar_lea.vmem [#allocation2], 48
      %v1766 = vld [vmem:[%s1765] sm:$0xff]
      %v1767 = vld [vmem:[%s1765 + $0x8] sm:$0xff]
      %v1768 = vld [vmem:[%s1765 + $0x18] sm:$0xff]
      %v1769 = vld [vmem:[%s1765 + $0x20] sm:$0xff]
      %v1770 = vld [vmem:[%s1765 + $0x30] sm:$0xff]
      %v1771 = vld [vmem:[%s1765 + $0x38] sm:$0xff]
      %v1772 = vld [vmem:[%s1765 + $0x48] sm:$0xff]
      %v1773 = vld [vmem:[%s1765 + $0x50] sm:$0xff]
      %v1774 = vld [vmem:[%s1765 + $0x60] sm:$0xff]
      %v1775 = vld [vmem:[%s1765 + $0x68] sm:$0xff]
      %v1776 = vld [vmem:[%s1765 + $0x78] sm:$0xff]
      %v1777 = vld [vmem:[%s1765 + $0x80] sm:$0xff]
      %v1778 = vld [vmem:[%s1765 + $0x90] sm:$0xff]
      %v1779 = vld [vmem:[%s1765 + $0x98] sm:$0xff]
      %v1780 = vld [vmem:[%s1765 + $0xa8] sm:$0xff]
      %v1781 = vld [vmem:[%s1765 + $0xb0] sm:$0xff]
      %v1782 = vld [vmem:[%s1765 + $0xc0] sm:$0xff]
      %v1783 = vld [vmem:[%s1765 + $0xc8] sm:$0xff]
      %v1784 = vld [vmem:[%s1765 + $0xd8] sm:$0xff]
      %v1785 = vld [vmem:[%s1765 + $0xe0] sm:$0xff]
      %v1786 = vld [vmem:[%s1765 + $0xf0] sm:$0xff]
      %v1787 = vld [vmem:[%s1765 + $0xf8] sm:$0xff]
      %v1788 = vld [vmem:[%s1765 + $0x108] sm:$0xff]
      %v1789 = vld [vmem:[%s1765 + $0x110] sm:$0xff]
      %v1790 = vld [vmem:[%s1765 + $0x120] sm:$0xff]
      %v1791 = vld [vmem:[%s1765 + $0x128] sm:$0xff]
      %v1792 = vld [vmem:[%s1765 + $0x138] sm:$0xff]
      %v1793 = vld [vmem:[%s1765 + $0x140] sm:$0xff]
      %v1794 = vld [vmem:[%s1765 + $0x150] sm:$0xff]
      %v1795 = vld [vmem:[%s1765 + $0x158] sm:$0xff]
      %v1796 = vld [vmem:[%s1765 + $0x168] sm:$0xff]
      %v1797 = vld [vmem:[%s1765 + $0x170] sm:$0xff]
      %v1798 = vpack.c.bf16 %v1767, %v1766
      %v1799 = vpack.c.bf16 %v1769, %v1768
      %v1800 = vpack.c.bf16 %v1771, %v1770
      %v1801 = vpack.c.bf16 %v1773, %v1772
      %v1802 = vpack.c.bf16 %v1775, %v1774
      %v1803 = vpack.c.bf16 %v1777, %v1776
      %v1804 = vpack.c.bf16 %v1779, %v1778
      %v1805 = vpack.c.bf16 %v1781, %v1780
      %v1806 = vpack.c.bf16 %v1783, %v1782
      %v1807 = vpack.c.bf16 %v1785, %v1784
      %v1808 = vpack.c.bf16 %v1787, %v1786
      %v1809 = vpack.c.bf16 %v1789, %v1788
      %v1810 = vpack.c.bf16 %v1791, %v1790
      %v1811 = vpack.c.bf16 %v1793, %v1792
      %v1812 = vpack.c.bf16 %v1795, %v1794
      %v1813 = vpack.c.bf16 %v1797, %v1796
      %s1814 = scalar_lea.vmem %s2, 12
      %v1815 = vld [vmem:[%s1814] sm:$0x3]
      %v1817 = vsel %vm257, %v1798, 0
      %v1820 = vsel %vm257, %v1799, 0
      %v1823 = vsel %vm257, %v1800, 0
      %v1826 = vsel %vm257, %v1801, 0
      %v1829 = vsel %vm257, %v1802, 0
      %v1832 = vsel %vm257, %v1803, 0
      %v1835 = vsel %vm257, %v1804, 0
      %v1838 = vsel %vm257, %v1805, 0
      %v1841 = vsel %vm257, %v1806, 0
      %v1844 = vsel %vm257, %v1807, 0
      %v1847 = vsel %vm257, %v1808, 0
      %v1850 = vsel %vm257, %v1809, 0
      %v1853 = vsel %vm257, %v1810, 0
      %v1856 = vsel %vm257, %v1811, 0
      %v1859 = vsel %vm257, %v1812, 0
      %v1862 = vsel %vm257, %v1813, 0
      %v1865 = vsel %vm644, %v1815, 0
      %1867 = vmatpush.bf16.msra.mxu0 0
      %1868 = vmatpush.bf16.msra.mxu0 0
      %1869 = vmatpush.bf16.msra.mxu0 0
      %1870 = vmatpush.bf16.msra.mxu0 0
      %1871 = vmatpush.bf16.msra.mxu0 0
      %1872 = vmatpush.bf16.msra.mxu0 0
      %1873 = vmatpush.bf16.msra.mxu0 0
      %1874 = vmatpush.bf16.msra.mxu0 %v1865
      %1875 = vmatmul.bf16.gmra.mxu0 %v1817
      %v1876 = vpop.f32.mrf.mxu0
      %v1877 = vadd.f32 0.0, %v1876
      %v1878 = vpop.f32.mrf.mxu0
      %v1879 = vadd.f32 0.0, %v1878
      %1880 = vmatmul.bf16.gmra.mxu0 %v1820
      %v1881 = vpop.f32.mrf.mxu0
      %v1882 = vadd.f32 0.0, %v1881
      %v1883 = vpop.f32.mrf.mxu0
      %v1884 = vadd.f32 0.0, %v1883
      %1885 = vmatmul.bf16.gmra.mxu0 %v1823
      %v1886 = vpop.f32.mrf.mxu0
      %v1887 = vadd.f32 0.0, %v1886
      %v1888 = vpop.f32.mrf.mxu0
      %v1889 = vadd.f32 0.0, %v1888
      %1890 = vmatmul.bf16.gmra.mxu0 %v1826
      %v1891 = vpop.f32.mrf.mxu0
      %v1892 = vadd.f32 0.0, %v1891
      %v1893 = vpop.f32.mrf.mxu0
      %v1894 = vadd.f32 0.0, %v1893
      %1895 = vmatmul.bf16.gmra.mxu0 %v1829
      %v1896 = vpop.f32.mrf.mxu0
      %v1897 = vadd.f32 0.0, %v1896
      %v1898 = vpop.f32.mrf.mxu0
      %v1899 = vadd.f32 0.0, %v1898
      %1900 = vmatmul.bf16.gmra.mxu0 %v1832
      %v1901 = vpop.f32.mrf.mxu0
      %v1902 = vadd.f32 0.0, %v1901
      %v1903 = vpop.f32.mrf.mxu0
      %v1904 = vadd.f32 0.0, %v1903
      %1905 = vmatmul.bf16.gmra.mxu0 %v1835
      %v1906 = vpop.f32.mrf.mxu0
      %v1907 = vadd.f32 0.0, %v1906
      %v1908 = vpop.f32.mrf.mxu0
      %v1909 = vadd.f32 0.0, %v1908
      %1910 = vmatmul.bf16.gmra.mxu0 %v1838
      %v1911 = vpop.f32.mrf.mxu0
      %v1912 = vadd.f32 0.0, %v1911
      %v1913 = vpop.f32.mrf.mxu0
      %v1914 = vadd.f32 0.0, %v1913
      %1915 = vmatmul.bf16.gmra.mxu0 %v1841
      %v1916 = vpop.f32.mrf.mxu0
      %v1917 = vadd.f32 0.0, %v1916
      %v1918 = vpop.f32.mrf.mxu0
      %v1919 = vadd.f32 0.0, %v1918
      %1920 = vmatmul.bf16.gmra.mxu0 %v1844
      %v1921 = vpop.f32.mrf.mxu0
      %v1922 = vadd.f32 0.0, %v1921
      %v1923 = vpop.f32.mrf.mxu0
      %v1924 = vadd.f32 0.0, %v1923
      %1925 = vmatmul.bf16.gmra.mxu0 %v1847
      %v1926 = vpop.f32.mrf.mxu0
      %v1927 = vadd.f32 0.0, %v1926
      %v1928 = vpop.f32.mrf.mxu0
      %v1929 = vadd.f32 0.0, %v1928
      %1930 = vmatmul.bf16.gmra.mxu0 %v1850
      %v1931 = vpop.f32.mrf.mxu0
      %v1932 = vadd.f32 0.0, %v1931
      %v1933 = vpop.f32.mrf.mxu0
      %v1934 = vadd.f32 0.0, %v1933
      %1935 = vmatmul.bf16.gmra.mxu0 %v1853
      %v1936 = vpop.f32.mrf.mxu0
      %v1937 = vadd.f32 0.0, %v1936
      %v1938 = vpop.f32.mrf.mxu0
      %v1939 = vadd.f32 0.0, %v1938
      %1940 = vmatmul.bf16.gmra.mxu0 %v1856
      %v1941 = vpop.f32.mrf.mxu0
      %v1942 = vadd.f32 0.0, %v1941
      %v1943 = vpop.f32.mrf.mxu0
      %v1944 = vadd.f32 0.0, %v1943
      %1945 = vmatmul.bf16.gmra.mxu0 %v1859
      %v1946 = vpop.f32.mrf.mxu0
      %v1947 = vadd.f32 0.0, %v1946
      %v1948 = vpop.f32.mrf.mxu0
      %v1949 = vadd.f32 0.0, %v1948
      %1950 = vmatmul.bf16.gmra.mxu0 %v1862
      %v1951 = vpop.f32.mrf.mxu0
      %v1952 = vadd.f32 0.0, %v1951
      %v1953 = vpop.f32.mrf.mxu0
      %v1954 = vadd.f32 0.0, %v1953
      %1955 = vdwg.mxu0
      %v1956 = vadd.f32 %v1733, %v1877
      %v1957 = vadd.f32 %v1734, %v1879
      %v1958 = vadd.f32 %v1735, %v1882
      %v1959 = vadd.f32 %v1736, %v1884
      %v1960 = vadd.f32 %v1737, %v1887
      %v1961 = vadd.f32 %v1738, %v1889
      %v1962 = vadd.f32 %v1739, %v1892
      %v1963 = vadd.f32 %v1740, %v1894
      %v1964 = vadd.f32 %v1741, %v1897
      %v1965 = vadd.f32 %v1742, %v1899
      %v1966 = vadd.f32 %v1743, %v1902
      %v1967 = vadd.f32 %v1744, %v1904
      %v1968 = vadd.f32 %v1745, %v1907
      %v1969 = vadd.f32 %v1746, %v1909
      %v1970 = vadd.f32 %v1747, %v1912
      %v1971 = vadd.f32 %v1748, %v1914
      %v1972 = vadd.f32 %v1749, %v1917
      %v1973 = vadd.f32 %v1750, %v1919
      %v1974 = vadd.f32 %v1751, %v1922
      %v1975 = vadd.f32 %v1752, %v1924
      %v1976 = vadd.f32 %v1753, %v1927
      %v1977 = vadd.f32 %v1754, %v1929
      %v1978 = vadd.f32 %v1755, %v1932
      %v1979 = vadd.f32 %v1756, %v1934
      %v1980 = vadd.f32 %v1757, %v1937
      %v1981 = vadd.f32 %v1758, %v1939
      %v1982 = vadd.f32 %v1759, %v1942
      %v1983 = vadd.f32 %v1760, %v1944
      %v1984 = vadd.f32 %v1761, %v1947
      %v1985 = vadd.f32 %v1762, %v1949
      %v1986 = vadd.f32 %v1763, %v1952
      %v1987 = vadd.f32 %v1764, %v1954
      %v1988 = vld [vmem:[%s1765 + $0x1] sm:$0xff]
      %v1989 = vld [vmem:[%s1765 + $0x9] sm:$0xff]
      %v1990 = vld [vmem:[%s1765 + $0x19] sm:$0xff]
      %v1991 = vld [vmem:[%s1765 + $0x21] sm:$0xff]
      %v1992 = vld [vmem:[%s1765 + $0x31] sm:$0xff]
      %v1993 = vld [vmem:[%s1765 + $0x39] sm:$0xff]
      %v1994 = vld [vmem:[%s1765 + $0x49] sm:$0xff]
      %v1995 = vld [vmem:[%s1765 + $0x51] sm:$0xff]
      %v1996 = vld [vmem:[%s1765 + $0x61] sm:$0xff]
      %v1997 = vld [vmem:[%s1765 + $0x69] sm:$0xff]
      %v1998 = vld [vmem:[%s1765 + $0x79] sm:$0xff]
      %v1999 = vld [vmem:[%s1765 + $0x81] sm:$0xff]
      %v2000 = vld [vmem:[%s1765 + $0x91] sm:$0xff]
      %v2001 = vld [vmem:[%s1765 + $0x99] sm:$0xff]
      %v2002 = vld [vmem:[%s1765 + $0xa9] sm:$0xff]
      %v2003 = vld [vmem:[%s1765 + $0xb1] sm:$0xff]
      %v2004 = vld [vmem:[%s1765 + $0xc1] sm:$0xff]
      %v2005 = vld [vmem:[%s1765 + $0xc9] sm:$0xff]
      %v2006 = vld [vmem:[%s1765 + $0xd9] sm:$0xff]
      %v2007 = vld [vmem:[%s1765 + $0xe1] sm:$0xff]
      %v2008 = vld [vmem:[%s1765 + $0xf1] sm:$0xff]
      %v2009 = vld [vmem:[%s1765 + $0xf9] sm:$0xff]
      %v2010 = vld [vmem:[%s1765 + $0x109] sm:$0xff]
      %v2011 = vld [vmem:[%s1765 + $0x111] sm:$0xff]
      %v2012 = vld [vmem:[%s1765 + $0x121] sm:$0xff]
      %v2013 = vld [vmem:[%s1765 + $0x129] sm:$0xff]
      %v2014 = vld [vmem:[%s1765 + $0x139] sm:$0xff]
      %v2015 = vld [vmem:[%s1765 + $0x141] sm:$0xff]
      %v2016 = vld [vmem:[%s1765 + $0x151] sm:$0xff]
      %v2017 = vld [vmem:[%s1765 + $0x159] sm:$0xff]
      %v2018 = vld [vmem:[%s1765 + $0x169] sm:$0xff]
      %v2019 = vld [vmem:[%s1765 + $0x171] sm:$0xff]
      %v2020 = vpack.c.bf16 %v1989, %v1988
      %v2021 = vpack.c.bf16 %v1991, %v1990
      %v2022 = vpack.c.bf16 %v1993, %v1992
      %v2023 = vpack.c.bf16 %v1995, %v1994
      %v2024 = vpack.c.bf16 %v1997, %v1996
      %v2025 = vpack.c.bf16 %v1999, %v1998
      %v2026 = vpack.c.bf16 %v2001, %v2000
      %v2027 = vpack.c.bf16 %v2003, %v2002
      %v2028 = vpack.c.bf16 %v2005, %v2004
      %v2029 = vpack.c.bf16 %v2007, %v2006
      %v2030 = vpack.c.bf16 %v2009, %v2008
      %v2031 = vpack.c.bf16 %v2011, %v2010
      %v2032 = vpack.c.bf16 %v2013, %v2012
      %v2033 = vpack.c.bf16 %v2015, %v2014
      %v2034 = vpack.c.bf16 %v2017, %v2016
      %v2035 = vpack.c.bf16 %v2019, %v2018
      %s2036 = scalar_lea.vmem %s2, 14
      %v2037 = vld [vmem:[%s2036] sm:$0x3]
      %v2039 = vsel %vm257, %v2020, 0
      %v2042 = vsel %vm257, %v2021, 0
      %v2045 = vsel %vm257, %v2022, 0
      %v2048 = vsel %vm257, %v2023, 0
      %v2051 = vsel %vm257, %v2024, 0
      %v2054 = vsel %vm257, %v2025, 0
      %v2057 = vsel %vm257, %v2026, 0
      %v2060 = vsel %vm257, %v2027, 0
      %v2063 = vsel %vm257, %v2028, 0
      %v2066 = vsel %vm257, %v2029, 0
      %v2069 = vsel %vm257, %v2030, 0
      %v2072 = vsel %vm257, %v2031, 0
      %v2075 = vsel %vm257, %v2032, 0
      %v2078 = vsel %vm257, %v2033, 0
      %v2081 = vsel %vm257, %v2034, 0
      %v2084 = vsel %vm257, %v2035, 0
      %v2087 = vsel %vm644, %v2037, 0
      %2089 = vmatpush.bf16.msra.mxu0 0
      %2090 = vmatpush.bf16.msra.mxu0 0
      %2091 = vmatpush.bf16.msra.mxu0 0
      %2092 = vmatpush.bf16.msra.mxu0 0
      %2093 = vmatpush.bf16.msra.mxu0 0
      %2094 = vmatpush.bf16.msra.mxu0 0
      %2095 = vmatpush.bf16.msra.mxu0 0
      %2096 = vmatpush.bf16.msra.mxu0 %v2087
      %2097 = vmatmul.bf16.gmra.mxu0 %v2039
      %v2098 = vpop.f32.mrf.mxu0
      %v2099 = vadd.f32 0.0, %v2098
      %v2100 = vpop.f32.mrf.mxu0
      %v2101 = vadd.f32 0.0, %v2100
      %2102 = vmatmul.bf16.gmra.mxu0 %v2042
      %v2103 = vpop.f32.mrf.mxu0
      %v2104 = vadd.f32 0.0, %v2103
      %v2105 = vpop.f32.mrf.mxu0
      %v2106 = vadd.f32 0.0, %v2105
      %2107 = vmatmul.bf16.gmra.mxu0 %v2045
      %v2108 = vpop.f32.mrf.mxu0
      %v2109 = vadd.f32 0.0, %v2108
      %v2110 = vpop.f32.mrf.mxu0
      %v2111 = vadd.f32 0.0, %v2110
      %2112 = vmatmul.bf16.gmra.mxu0 %v2048
      %v2113 = vpop.f32.mrf.mxu0
      %v2114 = vadd.f32 0.0, %v2113
      %v2115 = vpop.f32.mrf.mxu0
      %v2116 = vadd.f32 0.0, %v2115
      %2117 = vmatmul.bf16.gmra.mxu0 %v2051
      %v2118 = vpop.f32.mrf.mxu0
      %v2119 = vadd.f32 0.0, %v2118
      %v2120 = vpop.f32.mrf.mxu0
      %v2121 = vadd.f32 0.0, %v2120
      %2122 = vmatmul.bf16.gmra.mxu0 %v2054
      %v2123 = vpop.f32.mrf.mxu0
      %v2124 = vadd.f32 0.0, %v2123
      %v2125 = vpop.f32.mrf.mxu0
      %v2126 = vadd.f32 0.0, %v2125
      %2127 = vmatmul.bf16.gmra.mxu0 %v2057
      %v2128 = vpop.f32.mrf.mxu0
      %v2129 = vadd.f32 0.0, %v2128
      %v2130 = vpop.f32.mrf.mxu0
      %v2131 = vadd.f32 0.0, %v2130
      %2132 = vmatmul.bf16.gmra.mxu0 %v2060
      %v2133 = vpop.f32.mrf.mxu0
      %v2134 = vadd.f32 0.0, %v2133
      %v2135 = vpop.f32.mrf.mxu0
      %v2136 = vadd.f32 0.0, %v2135
      %2137 = vmatmul.bf16.gmra.mxu0 %v2063
      %v2138 = vpop.f32.mrf.mxu0
      %v2139 = vadd.f32 0.0, %v2138
      %v2140 = vpop.f32.mrf.mxu0
      %v2141 = vadd.f32 0.0, %v2140
      %2142 = vmatmul.bf16.gmra.mxu0 %v2066
      %v2143 = vpop.f32.mrf.mxu0
      %v2144 = vadd.f32 0.0, %v2143
      %v2145 = vpop.f32.mrf.mxu0
      %v2146 = vadd.f32 0.0, %v2145
      %2147 = vmatmul.bf16.gmra.mxu0 %v2069
      %v2148 = vpop.f32.mrf.mxu0
      %v2149 = vadd.f32 0.0, %v2148
      %v2150 = vpop.f32.mrf.mxu0
      %v2151 = vadd.f32 0.0, %v2150
      %2152 = vmatmul.bf16.gmra.mxu0 %v2072
      %v2153 = vpop.f32.mrf.mxu0
      %v2154 = vadd.f32 0.0, %v2153
      %v2155 = vpop.f32.mrf.mxu0
      %v2156 = vadd.f32 0.0, %v2155
      %2157 = vmatmul.bf16.gmra.mxu0 %v2075
      %v2158 = vpop.f32.mrf.mxu0
      %v2159 = vadd.f32 0.0, %v2158
      %v2160 = vpop.f32.mrf.mxu0
      %v2161 = vadd.f32 0.0, %v2160
      %2162 = vmatmul.bf16.gmra.mxu0 %v2078
      %v2163 = vpop.f32.mrf.mxu0
      %v2164 = vadd.f32 0.0, %v2163
      %v2165 = vpop.f32.mrf.mxu0
      %v2166 = vadd.f32 0.0, %v2165
      %2167 = vmatmul.bf16.gmra.mxu0 %v2081
      %v2168 = vpop.f32.mrf.mxu0
      %v2169 = vadd.f32 0.0, %v2168
      %v2170 = vpop.f32.mrf.mxu0
      %v2171 = vadd.f32 0.0, %v2170
      %2172 = vmatmul.bf16.gmra.mxu0 %v2084
      %v2173 = vpop.f32.mrf.mxu0
      %v2174 = vadd.f32 0.0, %v2173
      %v2175 = vpop.f32.mrf.mxu0
      %v2176 = vadd.f32 0.0, %v2175
      %2177 = vdwg.mxu0
      %v2178 = vadd.f32 %v1956, %v2099
      %v2179 = vadd.f32 %v1957, %v2101
      %v2180 = vadd.f32 %v1958, %v2104
      %v2181 = vadd.f32 %v1959, %v2106
      %v2182 = vadd.f32 %v1960, %v2109
      %v2183 = vadd.f32 %v1961, %v2111
      %v2184 = vadd.f32 %v1962, %v2114
      %v2185 = vadd.f32 %v1963, %v2116
      %v2186 = vadd.f32 %v1964, %v2119
      %v2187 = vadd.f32 %v1965, %v2121
      %v2188 = vadd.f32 %v1966, %v2124
      %v2189 = vadd.f32 %v1967, %v2126
      %v2190 = vadd.f32 %v1968, %v2129
      %v2191 = vadd.f32 %v1969, %v2131
      %v2192 = vadd.f32 %v1970, %v2134
      %v2193 = vadd.f32 %v1971, %v2136
      %v2194 = vadd.f32 %v1972, %v2139
      %v2195 = vadd.f32 %v1973, %v2141
      %v2196 = vadd.f32 %v1974, %v2144
      %v2197 = vadd.f32 %v1975, %v2146
      %v2198 = vadd.f32 %v1976, %v2149
      %v2199 = vadd.f32 %v1977, %v2151
      %v2200 = vadd.f32 %v1978, %v2154
      %v2201 = vadd.f32 %v1979, %v2156
      %v2202 = vadd.f32 %v1980, %v2159
      %v2203 = vadd.f32 %v1981, %v2161
      %v2204 = vadd.f32 %v1982, %v2164
      %v2205 = vadd.f32 %v1983, %v2166
      %v2206 = vadd.f32 %v1984, %v2169
      %v2207 = vadd.f32 %v1985, %v2171
      %v2208 = vadd.f32 %v1986, %v2174
      %v2209 = vadd.f32 %v1987, %v2176
      %v2210 = vld [vmem:[%s1765 + $0x2] sm:$0xff]
      %v2211 = vld [vmem:[%s1765 + $0xa] sm:$0xff]
      %v2212 = vld [vmem:[%s1765 + $0x1a] sm:$0xff]
      %v2213 = vld [vmem:[%s1765 + $0x22] sm:$0xff]
      %v2214 = vld [vmem:[%s1765 + $0x32] sm:$0xff]
      %v2215 = vld [vmem:[%s1765 + $0x3a] sm:$0xff]
      %v2216 = vld [vmem:[%s1765 + $0x4a] sm:$0xff]
      %v2217 = vld [vmem:[%s1765 + $0x52] sm:$0xff]
      %v2218 = vld [vmem:[%s1765 + $0x62] sm:$0xff]
      %v2219 = vld [vmem:[%s1765 + $0x6a] sm:$0xff]
      %v2220 = vld [vmem:[%s1765 + $0x7a] sm:$0xff]
      %v2221 = vld [vmem:[%s1765 + $0x82] sm:$0xff]
      %v2222 = vld [vmem:[%s1765 + $0x92] sm:$0xff]
      %v2223 = vld [vmem:[%s1765 + $0x9a] sm:$0xff]
      %v2224 = vld [vmem:[%s1765 + $0xaa] sm:$0xff]
      %v2225 = vld [vmem:[%s1765 + $0xb2] sm:$0xff]
      %v2226 = vld [vmem:[%s1765 + $0xc2] sm:$0xff]
      %v2227 = vld [vmem:[%s1765 + $0xca] sm:$0xff]
      %v2228 = vld [vmem:[%s1765 + $0xda] sm:$0xff]
      %v2229 = vld [vmem:[%s1765 + $0xe2] sm:$0xff]
      %v2230 = vld [vmem:[%s1765 + $0xf2] sm:$0xff]
      %v2231 = vld [vmem:[%s1765 + $0xfa] sm:$0xff]
      %v2232 = vld [vmem:[%s1765 + $0x10a] sm:$0xff]
      %v2233 = vld [vmem:[%s1765 + $0x112] sm:$0xff]
      %v2234 = vld [vmem:[%s1765 + $0x122] sm:$0xff]
      %v2235 = vld [vmem:[%s1765 + $0x12a] sm:$0xff]
      %v2236 = vld [vmem:[%s1765 + $0x13a] sm:$0xff]
      %v2237 = vld [vmem:[%s1765 + $0x142] sm:$0xff]
      %v2238 = vld [vmem:[%s1765 + $0x152] sm:$0xff]
      %v2239 = vld [vmem:[%s1765 + $0x15a] sm:$0xff]
      %v2240 = vld [vmem:[%s1765 + $0x16a] sm:$0xff]
      %v2241 = vld [vmem:[%s1765 + $0x172] sm:$0xff]
      %v2242 = vpack.c.bf16 %v2211, %v2210
      %v2243 = vpack.c.bf16 %v2213, %v2212
      %v2244 = vpack.c.bf16 %v2215, %v2214
      %v2245 = vpack.c.bf16 %v2217, %v2216
      %v2246 = vpack.c.bf16 %v2219, %v2218
      %v2247 = vpack.c.bf16 %v2221, %v2220
      %v2248 = vpack.c.bf16 %v2223, %v2222
      %v2249 = vpack.c.bf16 %v2225, %v2224
      %v2250 = vpack.c.bf16 %v2227, %v2226
      %v2251 = vpack.c.bf16 %v2229, %v2228
      %v2252 = vpack.c.bf16 %v2231, %v2230
      %v2253 = vpack.c.bf16 %v2233, %v2232
      %v2254 = vpack.c.bf16 %v2235, %v2234
      %v2255 = vpack.c.bf16 %v2237, %v2236
      %v2256 = vpack.c.bf16 %v2239, %v2238
      %v2257 = vpack.c.bf16 %v2241, %v2240
      %s2258 = scalar_lea.vmem %s2, 16
      %v2259 = vld [vmem:[%s2258] sm:$0x3]
      %v2261 = vsel %vm257, %v2242, 0
      %v2264 = vsel %vm257, %v2243, 0
      %v2267 = vsel %vm257, %v2244, 0
      %v2270 = vsel %vm257, %v2245, 0
      %v2273 = vsel %vm257, %v2246, 0
      %v2276 = vsel %vm257, %v2247, 0
      %v2279 = vsel %vm257, %v2248, 0
      %v2282 = vsel %vm257, %v2249, 0
      %v2285 = vsel %vm257, %v2250, 0
      %v2288 = vsel %vm257, %v2251, 0
      %v2291 = vsel %vm257, %v2252, 0
      %v2294 = vsel %vm257, %v2253, 0
      %v2297 = vsel %vm257, %v2254, 0
      %v2300 = vsel %vm257, %v2255, 0
      %v2303 = vsel %vm257, %v2256, 0
      %v2306 = vsel %vm257, %v2257, 0
      %v2309 = vsel %vm644, %v2259, 0
      %2311 = vmatpush.bf16.msra.mxu0 0
      %2312 = vmatpush.bf16.msra.mxu0 0
      %2313 = vmatpush.bf16.msra.mxu0 0
      %2314 = vmatpush.bf16.msra.mxu0 0
      %2315 = vmatpush.bf16.msra.mxu0 0
      %2316 = vmatpush.bf16.msra.mxu0 0
      %2317 = vmatpush.bf16.msra.mxu0 0
      %2318 = vmatpush.bf16.msra.mxu0 %v2309
      %2319 = vmatmul.bf16.gmra.mxu0 %v2261
      %v2320 = vpop.f32.mrf.mxu0
      %v2321 = vadd.f32 0.0, %v2320
      %v2322 = vpop.f32.mrf.mxu0
      %v2323 = vadd.f32 0.0, %v2322
      %2324 = vmatmul.bf16.gmra.mxu0 %v2264
      %v2325 = vpop.f32.mrf.mxu0
      %v2326 = vadd.f32 0.0, %v2325
      %v2327 = vpop.f32.mrf.mxu0
      %v2328 = vadd.f32 0.0, %v2327
      %2329 = vmatmul.bf16.gmra.mxu0 %v2267
      %v2330 = vpop.f32.mrf.mxu0
      %v2331 = vadd.f32 0.0, %v2330
      %v2332 = vpop.f32.mrf.mxu0
      %v2333 = vadd.f32 0.0, %v2332
      %2334 = vmatmul.bf16.gmra.mxu0 %v2270
      %v2335 = vpop.f32.mrf.mxu0
      %v2336 = vadd.f32 0.0, %v2335
      %v2337 = vpop.f32.mrf.mxu0
      %v2338 = vadd.f32 0.0, %v2337
      %2339 = vmatmul.bf16.gmra.mxu0 %v2273
      %v2340 = vpop.f32.mrf.mxu0
      %v2341 = vadd.f32 0.0, %v2340
      %v2342 = vpop.f32.mrf.mxu0
      %v2343 = vadd.f32 0.0, %v2342
      %2344 = vmatmul.bf16.gmra.mxu0 %v2276
      %v2345 = vpop.f32.mrf.mxu0
      %v2346 = vadd.f32 0.0, %v2345
      %v2347 = vpop.f32.mrf.mxu0
      %v2348 = vadd.f32 0.0, %v2347
      %2349 = vmatmul.bf16.gmra.mxu0 %v2279
      %v2350 = vpop.f32.mrf.mxu0
      %v2351 = vadd.f32 0.0, %v2350
      %v2352 = vpop.f32.mrf.mxu0
      %v2353 = vadd.f32 0.0, %v2352
      %2354 = vmatmul.bf16.gmra.mxu0 %v2282
      %v2355 = vpop.f32.mrf.mxu0
      %v2356 = vadd.f32 0.0, %v2355
      %v2357 = vpop.f32.mrf.mxu0
      %v2358 = vadd.f32 0.0, %v2357
      %2359 = vmatmul.bf16.gmra.mxu0 %v2285
      %v2360 = vpop.f32.mrf.mxu0
      %v2361 = vadd.f32 0.0, %v2360
      %v2362 = vpop.f32.mrf.mxu0
      %v2363 = vadd.f32 0.0, %v2362
      %2364 = vmatmul.bf16.gmra.mxu0 %v2288
      %v2365 = vpop.f32.mrf.mxu0
      %v2366 = vadd.f32 0.0, %v2365
      %v2367 = vpop.f32.mrf.mxu0
      %v2368 = vadd.f32 0.0, %v2367
      %2369 = vmatmul.bf16.gmra.mxu0 %v2291
      %v2370 = vpop.f32.mrf.mxu0
      %v2371 = vadd.f32 0.0, %v2370
      %v2372 = vpop.f32.mrf.mxu0
      %v2373 = vadd.f32 0.0, %v2372
      %2374 = vmatmul.bf16.gmra.mxu0 %v2294
      %v2375 = vpop.f32.mrf.mxu0
      %v2376 = vadd.f32 0.0, %v2375
      %v2377 = vpop.f32.mrf.mxu0
      %v2378 = vadd.f32 0.0, %v2377
      %2379 = vmatmul.bf16.gmra.mxu0 %v2297
      %v2380 = vpop.f32.mrf.mxu0
      %v2381 = vadd.f32 0.0, %v2380
      %v2382 = vpop.f32.mrf.mxu0
      %v2383 = vadd.f32 0.0, %v2382
      %2384 = vmatmul.bf16.gmra.mxu0 %v2300
      %v2385 = vpop.f32.mrf.mxu0
      %v2386 = vadd.f32 0.0, %v2385
      %v2387 = vpop.f32.mrf.mxu0
      %v2388 = vadd.f32 0.0, %v2387
      %2389 = vmatmul.bf16.gmra.mxu0 %v2303
      %v2390 = vpop.f32.mrf.mxu0
      %v2391 = vadd.f32 0.0, %v2390
      %v2392 = vpop.f32.mrf.mxu0
      %v2393 = vadd.f32 0.0, %v2392
      %2394 = vmatmul.bf16.gmra.mxu0 %v2306
      %v2395 = vpop.f32.mrf.mxu0
      %v2396 = vadd.f32 0.0, %v2395
      %v2397 = vpop.f32.mrf.mxu0
      %v2398 = vadd.f32 0.0, %v2397
      %2399 = vdwg.mxu0
      %v2400 = vadd.f32 %v2178, %v2321
      %v2401 = vadd.f32 %v2179, %v2323
      %v2402 = vadd.f32 %v2180, %v2326
      %v2403 = vadd.f32 %v2181, %v2328
      %v2404 = vadd.f32 %v2182, %v2331
      %v2405 = vadd.f32 %v2183, %v2333
      %v2406 = vadd.f32 %v2184, %v2336
      %v2407 = vadd.f32 %v2185, %v2338
      %v2408 = vadd.f32 %v2186, %v2341
      %v2409 = vadd.f32 %v2187, %v2343
      %v2410 = vadd.f32 %v2188, %v2346
      %v2411 = vadd.f32 %v2189, %v2348
      %v2412 = vadd.f32 %v2190, %v2351
      %v2413 = vadd.f32 %v2191, %v2353
      %v2414 = vadd.f32 %v2192, %v2356
      %v2415 = vadd.f32 %v2193, %v2358
      %v2416 = vadd.f32 %v2194, %v2361
      %v2417 = vadd.f32 %v2195, %v2363
      %v2418 = vadd.f32 %v2196, %v2366
      %v2419 = vadd.f32 %v2197, %v2368
      %v2420 = vadd.f32 %v2198, %v2371
      %v2421 = vadd.f32 %v2199, %v2373
      %v2422 = vadd.f32 %v2200, %v2376
      %v2423 = vadd.f32 %v2201, %v2378
      %v2424 = vadd.f32 %v2202, %v2381
      %v2425 = vadd.f32 %v2203, %v2383
      %v2426 = vadd.f32 %v2204, %v2386
      %v2427 = vadd.f32 %v2205, %v2388
      %v2428 = vadd.f32 %v2206, %v2391
      %v2429 = vadd.f32 %v2207, %v2393
      %v2430 = vadd.f32 %v2208, %v2396
      %v2431 = vadd.f32 %v2209, %v2398
      %v2432 = vld [vmem:[#allocation3] sm:$0xff]
      %v2433 = vld [vmem:[#allocation3 + $0x8] sm:$0xff]
      %v2434 = vld [vmem:[#allocation3 + $0x18] sm:$0xff]
      %v2435 = vld [vmem:[#allocation3 + $0x20] sm:$0xff]
      %v2436 = vld [vmem:[#allocation3 + $0x30] sm:$0xff]
      %v2437 = vld [vmem:[#allocation3 + $0x38] sm:$0xff]
      %v2438 = vld [vmem:[#allocation3 + $0x48] sm:$0xff]
      %v2439 = vld [vmem:[#allocation3 + $0x50] sm:$0xff]
      %v2440 = vld [vmem:[#allocation3 + $0x60] sm:$0xff]
      %v2441 = vld [vmem:[#allocation3 + $0x68] sm:$0xff]
      %v2442 = vld [vmem:[#allocation3 + $0x78] sm:$0xff]
      %v2443 = vld [vmem:[#allocation3 + $0x80] sm:$0xff]
      %v2444 = vld [vmem:[#allocation3 + $0x90] sm:$0xff]
      %v2445 = vld [vmem:[#allocation3 + $0x98] sm:$0xff]
      %v2446 = vld [vmem:[#allocation3 + $0xa8] sm:$0xff]
      %v2447 = vld [vmem:[#allocation3 + $0xb0] sm:$0xff]
      %v2448 = vld [vmem:[#allocation3 + $0xc0] sm:$0xff]
      %v2449 = vld [vmem:[#allocation3 + $0xc8] sm:$0xff]
      %v2450 = vld [vmem:[#allocation3 + $0xd8] sm:$0xff]
      %v2451 = vld [vmem:[#allocation3 + $0xe0] sm:$0xff]
      %v2452 = vld [vmem:[#allocation3 + $0xf0] sm:$0xff]
      %v2453 = vld [vmem:[#allocation3 + $0xf8] sm:$0xff]
      %v2454 = vld [vmem:[#allocation3 + $0x108] sm:$0xff]
      %v2455 = vld [vmem:[#allocation3 + $0x110] sm:$0xff]
      %v2456 = vld [vmem:[#allocation3 + $0x120] sm:$0xff]
      %v2457 = vld [vmem:[#allocation3 + $0x128] sm:$0xff]
      %v2458 = vld [vmem:[#allocation3 + $0x138] sm:$0xff]
      %v2459 = vld [vmem:[#allocation3 + $0x140] sm:$0xff]
      %v2460 = vld [vmem:[#allocation3 + $0x150] sm:$0xff]
      %v2461 = vld [vmem:[#allocation3 + $0x158] sm:$0xff]
      %v2462 = vld [vmem:[#allocation3 + $0x168] sm:$0xff]
      %v2463 = vld [vmem:[#allocation3 + $0x170] sm:$0xff]
      %v2464 = vpack.c.bf16 %v2433, %v2432
      %v2465 = vpack.c.bf16 %v2435, %v2434
      %v2466 = vpack.c.bf16 %v2437, %v2436
      %v2467 = vpack.c.bf16 %v2439, %v2438
      %v2468 = vpack.c.bf16 %v2441, %v2440
      %v2469 = vpack.c.bf16 %v2443, %v2442
      %v2470 = vpack.c.bf16 %v2445, %v2444
      %v2471 = vpack.c.bf16 %v2447, %v2446
      %v2472 = vpack.c.bf16 %v2449, %v2448
      %v2473 = vpack.c.bf16 %v2451, %v2450
      %v2474 = vpack.c.bf16 %v2453, %v2452
      %v2475 = vpack.c.bf16 %v2455, %v2454
      %v2476 = vpack.c.bf16 %v2457, %v2456
      %v2477 = vpack.c.bf16 %v2459, %v2458
      %v2478 = vpack.c.bf16 %v2461, %v2460
      %v2479 = vpack.c.bf16 %v2463, %v2462
      %v2480 = vld [vmem:[%s3] sm:$0x3]
      %v2482 = vsel %vm257, %v2464, 0
      %v2485 = vsel %vm257, %v2465, 0
      %v2488 = vsel %vm257, %v2466, 0
      %v2491 = vsel %vm257, %v2467, 0
      %v2494 = vsel %vm257, %v2468, 0
      %v2497 = vsel %vm257, %v2469, 0
      %v2500 = vsel %vm257, %v2470, 0
      %v2503 = vsel %vm257, %v2471, 0
      %v2506 = vsel %vm257, %v2472, 0
      %v2509 = vsel %vm257, %v2473, 0
      %v2512 = vsel %vm257, %v2474, 0
      %v2515 = vsel %vm257, %v2475, 0
      %v2518 = vsel %vm257, %v2476, 0
      %v2521 = vsel %vm257, %v2477, 0
      %v2524 = vsel %vm257, %v2478, 0
      %v2527 = vsel %vm257, %v2479, 0
      %v2530 = vsel %vm644, %v2480, 0
      %2532 = vmatpush.bf16.msra.mxu0 0
      %2533 = vmatpush.bf16.msra.mxu0 0
      %2534 = vmatpush.bf16.msra.mxu0 0
      %2535 = vmatpush.bf16.msra.mxu0 0
      %2536 = vmatpush.bf16.msra.mxu0 0
      %2537 = vmatpush.bf16.msra.mxu0 0
      %2538 = vmatpush.bf16.msra.mxu0 0
      %2539 = vmatpush.bf16.msra.mxu0 %v2530
      %2540 = vmatmul.bf16.gmra.mxu0 %v2482
      %v2541 = vpop.f32.mrf.mxu0
      %v2542 = vadd.f32 0.0, %v2541
      %v2543 = vpop.f32.mrf.mxu0
      %v2544 = vadd.f32 0.0, %v2543
      %2545 = vmatmul.bf16.gmra.mxu0 %v2485
      %v2546 = vpop.f32.mrf.mxu0
      %v2547 = vadd.f32 0.0, %v2546
      %v2548 = vpop.f32.mrf.mxu0
      %v2549 = vadd.f32 0.0, %v2548
      %2550 = vmatmul.bf16.gmra.mxu0 %v2488
      %v2551 = vpop.f32.mrf.mxu0
      %v2552 = vadd.f32 0.0, %v2551
      %v2553 = vpop.f32.mrf.mxu0
      %v2554 = vadd.f32 0.0, %v2553
      %2555 = vmatmul.bf16.gmra.mxu0 %v2491
      %v2556 = vpop.f32.mrf.mxu0
      %v2557 = vadd.f32 0.0, %v2556
      %v2558 = vpop.f32.mrf.mxu0
      %v2559 = vadd.f32 0.0, %v2558
      %2560 = vmatmul.bf16.gmra.mxu0 %v2494
      %v2561 = vpop.f32.mrf.mxu0
      %v2562 = vadd.f32 0.0, %v2561
      %v2563 = vpop.f32.mrf.mxu0
      %v2564 = vadd.f32 0.0, %v2563
      %2565 = vmatmul.bf16.gmra.mxu0 %v2497
      %v2566 = vpop.f32.mrf.mxu0
      %v2567 = vadd.f32 0.0, %v2566
      %v2568 = vpop.f32.mrf.mxu0
      %v2569 = vadd.f32 0.0, %v2568
      %2570 = vmatmul.bf16.gmra.mxu0 %v2500
      %v2571 = vpop.f32.mrf.mxu0
      %v2572 = vadd.f32 0.0, %v2571
      %v2573 = vpop.f32.mrf.mxu0
      %v2574 = vadd.f32 0.0, %v2573
      %2575 = vmatmul.bf16.gmra.mxu0 %v2503
      %v2576 = vpop.f32.mrf.mxu0
      %v2577 = vadd.f32 0.0, %v2576
      %v2578 = vpop.f32.mrf.mxu0
      %v2579 = vadd.f32 0.0, %v2578
      %2580 = vmatmul.bf16.gmra.mxu0 %v2506
      %v2581 = vpop.f32.mrf.mxu0
      %v2582 = vadd.f32 0.0, %v2581
      %v2583 = vpop.f32.mrf.mxu0
      %v2584 = vadd.f32 0.0, %v2583
      %2585 = vmatmul.bf16.gmra.mxu0 %v2509
      %v2586 = vpop.f32.mrf.mxu0
      %v2587 = vadd.f32 0.0, %v2586
      %v2588 = vpop.f32.mrf.mxu0
      %v2589 = vadd.f32 0.0, %v2588
      %2590 = vmatmul.bf16.gmra.mxu0 %v2512
      %v2591 = vpop.f32.mrf.mxu0
      %v2592 = vadd.f32 0.0, %v2591
      %v2593 = vpop.f32.mrf.mxu0
      %v2594 = vadd.f32 0.0, %v2593
      %2595 = vmatmul.bf16.gmra.mxu0 %v2515
      %v2596 = vpop.f32.mrf.mxu0
      %v2597 = vadd.f32 0.0, %v2596
      %v2598 = vpop.f32.mrf.mxu0
      %v2599 = vadd.f32 0.0, %v2598
      %2600 = vmatmul.bf16.gmra.mxu0 %v2518
      %v2601 = vpop.f32.mrf.mxu0
      %v2602 = vadd.f32 0.0, %v2601
      %v2603 = vpop.f32.mrf.mxu0
      %v2604 = vadd.f32 0.0, %v2603
      %2605 = vmatmul.bf16.gmra.mxu0 %v2521
      %v2606 = vpop.f32.mrf.mxu0
      %v2607 = vadd.f32 0.0, %v2606
      %v2608 = vpop.f32.mrf.mxu0
      %v2609 = vadd.f32 0.0, %v2608
      %2610 = vmatmul.bf16.gmra.mxu0 %v2524
      %v2611 = vpop.f32.mrf.mxu0
      %v2612 = vadd.f32 0.0, %v2611
      %v2613 = vpop.f32.mrf.mxu0
      %v2614 = vadd.f32 0.0, %v2613
      %2615 = vmatmul.bf16.gmra.mxu0 %v2527
      %v2616 = vpop.f32.mrf.mxu0
      %v2617 = vadd.f32 0.0, %v2616
      %v2618 = vpop.f32.mrf.mxu0
      %v2619 = vadd.f32 0.0, %v2618
      %2620 = vdwg.mxu0
      %v2621 = vadd.f32 %v2400, %v2542
      %v2622 = vadd.f32 %v2401, %v2544
      %v2623 = vadd.f32 %v2402, %v2547
      %v2624 = vadd.f32 %v2403, %v2549
      %v2625 = vadd.f32 %v2404, %v2552
      %v2626 = vadd.f32 %v2405, %v2554
      %v2627 = vadd.f32 %v2406, %v2557
      %v2628 = vadd.f32 %v2407, %v2559
      %v2629 = vadd.f32 %v2408, %v2562
      %v2630 = vadd.f32 %v2409, %v2564
      %v2631 = vadd.f32 %v2410, %v2567
      %v2632 = vadd.f32 %v2411, %v2569
      %v2633 = vadd.f32 %v2412, %v2572
      %v2634 = vadd.f32 %v2413, %v2574
      %v2635 = vadd.f32 %v2414, %v2577
      %v2636 = vadd.f32 %v2415, %v2579
      %v2637 = vadd.f32 %v2416, %v2582
      %v2638 = vadd.f32 %v2417, %v2584
      %v2639 = vadd.f32 %v2418, %v2587
      %v2640 = vadd.f32 %v2419, %v2589
      %v2641 = vadd.f32 %v2420, %v2592
      %v2642 = vadd.f32 %v2421, %v2594
      %v2643 = vadd.f32 %v2422, %v2597
      %v2644 = vadd.f32 %v2423, %v2599
      %v2645 = vadd.f32 %v2424, %v2602
      %v2646 = vadd.f32 %v2425, %v2604
      %v2647 = vadd.f32 %v2426, %v2607
      %v2648 = vadd.f32 %v2427, %v2609
      %v2649 = vadd.f32 %v2428, %v2612
      %v2650 = vadd.f32 %v2429, %v2614
      %v2651 = vadd.f32 %v2430, %v2617
      %v2652 = vadd.f32 %v2431, %v2619
      %v2653 = vld [vmem:[#allocation3 + $0x1] sm:$0xff]
      %v2654 = vld [vmem:[#allocation3 + $0x9] sm:$0xff]
      %v2655 = vld [vmem:[#allocation3 + $0x19] sm:$0xff]
      %v2656 = vld [vmem:[#allocation3 + $0x21] sm:$0xff]
      %v2657 = vld [vmem:[#allocation3 + $0x31] sm:$0xff]
      %v2658 = vld [vmem:[#allocation3 + $0x39] sm:$0xff]
      %v2659 = vld [vmem:[#allocation3 + $0x49] sm:$0xff]
      %v2660 = vld [vmem:[#allocation3 + $0x51] sm:$0xff]
      %v2661 = vld [vmem:[#allocation3 + $0x61] sm:$0xff]
      %v2662 = vld [vmem:[#allocation3 + $0x69] sm:$0xff]
      %v2663 = vld [vmem:[#allocation3 + $0x79] sm:$0xff]
      %v2664 = vld [vmem:[#allocation3 + $0x81] sm:$0xff]
      %v2665 = vld [vmem:[#allocation3 + $0x91] sm:$0xff]
      %v2666 = vld [vmem:[#allocation3 + $0x99] sm:$0xff]
      %v2667 = vld [vmem:[#allocation3 + $0xa9] sm:$0xff]
      %v2668 = vld [vmem:[#allocation3 + $0xb1] sm:$0xff]
      %v2669 = vld [vmem:[#allocation3 + $0xc1] sm:$0xff]
      %v2670 = vld [vmem:[#allocation3 + $0xc9] sm:$0xff]
      %v2671 = vld [vmem:[#allocation3 + $0xd9] sm:$0xff]
      %v2672 = vld [vmem:[#allocation3 + $0xe1] sm:$0xff]
      %v2673 = vld [vmem:[#allocation3 + $0xf1] sm:$0xff]
      %v2674 = vld [vmem:[#allocation3 + $0xf9] sm:$0xff]
      %v2675 = vld [vmem:[#allocation3 + $0x109] sm:$0xff]
      %v2676 = vld [vmem:[#allocation3 + $0x111] sm:$0xff]
      %v2677 = vld [vmem:[#allocation3 + $0x121] sm:$0xff]
      %v2678 = vld [vmem:[#allocation3 + $0x129] sm:$0xff]
      %v2679 = vld [vmem:[#allocation3 + $0x139] sm:$0xff]
      %v2680 = vld [vmem:[#allocation3 + $0x141] sm:$0xff]
      %v2681 = vld [vmem:[#allocation3 + $0x151] sm:$0xff]
      %v2682 = vld [vmem:[#allocation3 + $0x159] sm:$0xff]
      %v2683 = vld [vmem:[#allocation3 + $0x169] sm:$0xff]
      %v2684 = vld [vmem:[#allocation3 + $0x171] sm:$0xff]
      %v2685 = vpack.c.bf16 %v2654, %v2653
      %v2686 = vpack.c.bf16 %v2656, %v2655
      %v2687 = vpack.c.bf16 %v2658, %v2657
      %v2688 = vpack.c.bf16 %v2660, %v2659
      %v2689 = vpack.c.bf16 %v2662, %v2661
      %v2690 = vpack.c.bf16 %v2664, %v2663
      %v2691 = vpack.c.bf16 %v2666, %v2665
      %v2692 = vpack.c.bf16 %v2668, %v2667
      %v2693 = vpack.c.bf16 %v2670, %v2669
      %v2694 = vpack.c.bf16 %v2672, %v2671
      %v2695 = vpack.c.bf16 %v2674, %v2673
      %v2696 = vpack.c.bf16 %v2676, %v2675
      %v2697 = vpack.c.bf16 %v2678, %v2677
      %v2698 = vpack.c.bf16 %v2680, %v2679
      %v2699 = vpack.c.bf16 %v2682, %v2681
      %v2700 = vpack.c.bf16 %v2684, %v2683
      %s2701 = scalar_lea.vmem %s3, 2
      %v2702 = vld [vmem:[%s2701] sm:$0x3]
      %v2704 = vsel %vm257, %v2685, 0
      %v2707 = vsel %vm257, %v2686, 0
      %v2710 = vsel %vm257, %v2687, 0
      %v2713 = vsel %vm257, %v2688, 0
      %v2716 = vsel %vm257, %v2689, 0
      %v2719 = vsel %vm257, %v2690, 0
      %v2722 = vsel %vm257, %v2691, 0
      %v2725 = vsel %vm257, %v2692, 0
      %v2728 = vsel %vm257, %v2693, 0
      %v2731 = vsel %vm257, %v2694, 0
      %v2734 = vsel %vm257, %v2695, 0
      %v2737 = vsel %vm257, %v2696, 0
      %v2740 = vsel %vm257, %v2697, 0
      %v2743 = vsel %vm257, %v2698, 0
      %v2746 = vsel %vm257, %v2699, 0
      %v2749 = vsel %vm257, %v2700, 0
      %v2752 = vsel %vm644, %v2702, 0
      %2754 = vmatpush.bf16.msra.mxu0 0
      %2755 = vmatpush.bf16.msra.mxu0 0
      %2756 = vmatpush.bf16.msra.mxu0 0
      %2757 = vmatpush.bf16.msra.mxu0 0
      %2758 = vmatpush.bf16.msra.mxu0 0
      %2759 = vmatpush.bf16.msra.mxu0 0
      %2760 = vmatpush.bf16.msra.mxu0 0
      %2761 = vmatpush.bf16.msra.mxu0 %v2752
      %2762 = vmatmul.bf16.gmra.mxu0 %v2704
      %v2763 = vpop.f32.mrf.mxu0
      %v2764 = vadd.f32 0.0, %v2763
      %v2765 = vpop.f32.mrf.mxu0
      %v2766 = vadd.f32 0.0, %v2765
      %2767 = vmatmul.bf16.gmra.mxu0 %v2707
      %v2768 = vpop.f32.mrf.mxu0
      %v2769 = vadd.f32 0.0, %v2768
      %v2770 = vpop.f32.mrf.mxu0
      %v2771 = vadd.f32 0.0, %v2770
      %2772 = vmatmul.bf16.gmra.mxu0 %v2710
      %v2773 = vpop.f32.mrf.mxu0
      %v2774 = vadd.f32 0.0, %v2773
      %v2775 = vpop.f32.mrf.mxu0
      %v2776 = vadd.f32 0.0, %v2775
      %2777 = vmatmul.bf16.gmra.mxu0 %v2713
      %v2778 = vpop.f32.mrf.mxu0
      %v2779 = vadd.f32 0.0, %v2778
      %v2780 = vpop.f32.mrf.mxu0
      %v2781 = vadd.f32 0.0, %v2780
      %2782 = vmatmul.bf16.gmra.mxu0 %v2716
      %v2783 = vpop.f32.mrf.mxu0
      %v2784 = vadd.f32 0.0, %v2783
      %v2785 = vpop.f32.mrf.mxu0
      %v2786 = vadd.f32 0.0, %v2785
      %2787 = vmatmul.bf16.gmra.mxu0 %v2719
      %v2788 = vpop.f32.mrf.mxu0
      %v2789 = vadd.f32 0.0, %v2788
      %v2790 = vpop.f32.mrf.mxu0
      %v2791 = vadd.f32 0.0, %v2790
      %2792 = vmatmul.bf16.gmra.mxu0 %v2722
      %v2793 = vpop.f32.mrf.mxu0
      %v2794 = vadd.f32 0.0, %v2793
      %v2795 = vpop.f32.mrf.mxu0
      %v2796 = vadd.f32 0.0, %v2795
      %2797 = vmatmul.bf16.gmra.mxu0 %v2725
      %v2798 = vpop.f32.mrf.mxu0
      %v2799 = vadd.f32 0.0, %v2798
      %v2800 = vpop.f32.mrf.mxu0
      %v2801 = vadd.f32 0.0, %v2800
      %2802 = vmatmul.bf16.gmra.mxu0 %v2728
      %v2803 = vpop.f32.mrf.mxu0
      %v2804 = vadd.f32 0.0, %v2803
      %v2805 = vpop.f32.mrf.mxu0
      %v2806 = vadd.f32 0.0, %v2805
      %2807 = vmatmul.bf16.gmra.mxu0 %v2731
      %v2808 = vpop.f32.mrf.mxu0
      %v2809 = vadd.f32 0.0, %v2808
      %v2810 = vpop.f32.mrf.mxu0
      %v2811 = vadd.f32 0.0, %v2810
      %2812 = vmatmul.bf16.gmra.mxu0 %v2734
      %v2813 = vpop.f32.mrf.mxu0
      %v2814 = vadd.f32 0.0, %v2813
      %v2815 = vpop.f32.mrf.mxu0
      %v2816 = vadd.f32 0.0, %v2815
      %2817 = vmatmul.bf16.gmra.mxu0 %v2737
      %v2818 = vpop.f32.mrf.mxu0
      %v2819 = vadd.f32 0.0, %v2818
      %v2820 = vpop.f32.mrf.mxu0
      %v2821 = vadd.f32 0.0, %v2820
      %2822 = vmatmul.bf16.gmra.mxu0 %v2740
      %v2823 = vpop.f32.mrf.mxu0
      %v2824 = vadd.f32 0.0, %v2823
      %v2825 = vpop.f32.mrf.mxu0
      %v2826 = vadd.f32 0.0, %v2825
      %2827 = vmatmul.bf16.gmra.mxu0 %v2743
      %v2828 = vpop.f32.mrf.mxu0
      %v2829 = vadd.f32 0.0, %v2828
      %v2830 = vpop.f32.mrf.mxu0
      %v2831 = vadd.f32 0.0, %v2830
      %2832 = vmatmul.bf16.gmra.mxu0 %v2746
      %v2833 = vpop.f32.mrf.mxu0
      %v2834 = vadd.f32 0.0, %v2833
      %v2835 = vpop.f32.mrf.mxu0
      %v2836 = vadd.f32 0.0, %v2835
      %2837 = vmatmul.bf16.gmra.mxu0 %v2749
      %v2838 = vpop.f32.mrf.mxu0
      %v2839 = vadd.f32 0.0, %v2838
      %v2840 = vpop.f32.mrf.mxu0
      %v2841 = vadd.f32 0.0, %v2840
      %2842 = vdwg.mxu0
      %v2843 = vadd.f32 %v2621, %v2764
      %v2844 = vadd.f32 %v2622, %v2766
      %v2845 = vadd.f32 %v2623, %v2769
      %v2846 = vadd.f32 %v2624, %v2771
      %v2847 = vadd.f32 %v2625, %v2774
      %v2848 = vadd.f32 %v2626, %v2776
      %v2849 = vadd.f32 %v2627, %v2779
      %v2850 = vadd.f32 %v2628, %v2781
      %v2851 = vadd.f32 %v2629, %v2784
      %v2852 = vadd.f32 %v2630, %v2786
      %v2853 = vadd.f32 %v2631, %v2789
      %v2854 = vadd.f32 %v2632, %v2791
      %v2855 = vadd.f32 %v2633, %v2794
      %v2856 = vadd.f32 %v2634, %v2796
      %v2857 = vadd.f32 %v2635, %v2799
      %v2858 = vadd.f32 %v2636, %v2801
      %v2859 = vadd.f32 %v2637, %v2804
      %v2860 = vadd.f32 %v2638, %v2806
      %v2861 = vadd.f32 %v2639, %v2809
      %v2862 = vadd.f32 %v2640, %v2811
      %v2863 = vadd.f32 %v2641, %v2814
      %v2864 = vadd.f32 %v2642, %v2816
      %v2865 = vadd.f32 %v2643, %v2819
      %v2866 = vadd.f32 %v2644, %v2821
      %v2867 = vadd.f32 %v2645, %v2824
      %v2868 = vadd.f32 %v2646, %v2826
      %v2869 = vadd.f32 %v2647, %v2829
      %v2870 = vadd.f32 %v2648, %v2831
      %v2871 = vadd.f32 %v2649, %v2834
      %v2872 = vadd.f32 %v2650, %v2836
      %v2873 = vadd.f32 %v2651, %v2839
      %v2874 = vadd.f32 %v2652, %v2841
      %v2875 = vld [vmem:[#allocation3 + $0x2] sm:$0xff]
      %v2876 = vld [vmem:[#allocation3 + $0xa] sm:$0xff]
      %v2877 = vld [vmem:[#allocation3 + $0x1a] sm:$0xff]
      %v2878 = vld [vmem:[#allocation3 + $0x22] sm:$0xff]
      %v2879 = vld [vmem:[#allocation3 + $0x32] sm:$0xff]
      %v2880 = vld [vmem:[#allocation3 + $0x3a] sm:$0xff]
      %v2881 = vld [vmem:[#allocation3 + $0x4a] sm:$0xff]
      %v2882 = vld [vmem:[#allocation3 + $0x52] sm:$0xff]
      %v2883 = vld [vmem:[#allocation3 + $0x62] sm:$0xff]
      %v2884 = vld [vmem:[#allocation3 + $0x6a] sm:$0xff]
      %v2885 = vld [vmem:[#allocation3 + $0x7a] sm:$0xff]
      %v2886 = vld [vmem:[#allocation3 + $0x82] sm:$0xff]
      %v2887 = vld [vmem:[#allocation3 + $0x92] sm:$0xff]
      %v2888 = vld [vmem:[#allocation3 + $0x9a] sm:$0xff]
      %v2889 = vld [vmem:[#allocation3 + $0xaa] sm:$0xff]
      %v2890 = vld [vmem:[#allocation3 + $0xb2] sm:$0xff]
      %v2891 = vld [vmem:[#allocation3 + $0xc2] sm:$0xff]
      %v2892 = vld [vmem:[#allocation3 + $0xca] sm:$0xff]
      %v2893 = vld [vmem:[#allocation3 + $0xda] sm:$0xff]
      %v2894 = vld [vmem:[#allocation3 + $0xe2] sm:$0xff]
      %v2895 = vld [vmem:[#allocation3 + $0xf2] sm:$0xff]
      %v2896 = vld [vmem:[#allocation3 + $0xfa] sm:$0xff]
      %v2897 = vld [vmem:[#allocation3 + $0x10a] sm:$0xff]
      %v2898 = vld [vmem:[#allocation3 + $0x112] sm:$0xff]
      %v2899 = vld [vmem:[#allocation3 + $0x122] sm:$0xff]
      %v2900 = vld [vmem:[#allocation3 + $0x12a] sm:$0xff]
      %v2901 = vld [vmem:[#allocation3 + $0x13a] sm:$0xff]
      %v2902 = vld [vmem:[#allocation3 + $0x142] sm:$0xff]
      %v2903 = vld [vmem:[#allocation3 + $0x152] sm:$0xff]
      %v2904 = vld [vmem:[#allocation3 + $0x15a] sm:$0xff]
      %v2905 = vld [vmem:[#allocation3 + $0x16a] sm:$0xff]
      %v2906 = vld [vmem:[#allocation3 + $0x172] sm:$0xff]
      %v2907 = vpack.c.bf16 %v2876, %v2875
      %v2908 = vpack.c.bf16 %v2878, %v2877
      %v2909 = vpack.c.bf16 %v2880, %v2879
      %v2910 = vpack.c.bf16 %v2882, %v2881
      %v2911 = vpack.c.bf16 %v2884, %v2883
      %v2912 = vpack.c.bf16 %v2886, %v2885
      %v2913 = vpack.c.bf16 %v2888, %v2887
      %v2914 = vpack.c.bf16 %v2890, %v2889
      %v2915 = vpack.c.bf16 %v2892, %v2891
      %v2916 = vpack.c.bf16 %v2894, %v2893
      %v2917 = vpack.c.bf16 %v2896, %v2895
      %v2918 = vpack.c.bf16 %v2898, %v2897
      %v2919 = vpack.c.bf16 %v2900, %v2899
      %v2920 = vpack.c.bf16 %v2902, %v2901
      %v2921 = vpack.c.bf16 %v2904, %v2903
      %v2922 = vpack.c.bf16 %v2906, %v2905
      %s2923 = scalar_lea.vmem %s3, 4
      %v2924 = vld [vmem:[%s2923] sm:$0x3]
      %v2926 = vsel %vm257, %v2907, 0
      %v2929 = vsel %vm257, %v2908, 0
      %v2932 = vsel %vm257, %v2909, 0
      %v2935 = vsel %vm257, %v2910, 0
      %v2938 = vsel %vm257, %v2911, 0
      %v2941 = vsel %vm257, %v2912, 0
      %v2944 = vsel %vm257, %v2913, 0
      %v2947 = vsel %vm257, %v2914, 0
      %v2950 = vsel %vm257, %v2915, 0
      %v2953 = vsel %vm257, %v2916, 0
      %v2956 = vsel %vm257, %v2917, 0
      %v2959 = vsel %vm257, %v2918, 0
      %v2962 = vsel %vm257, %v2919, 0
      %v2965 = vsel %vm257, %v2920, 0
      %v2968 = vsel %vm257, %v2921, 0
      %v2971 = vsel %vm257, %v2922, 0
      %v2974 = vsel %vm644, %v2924, 0
      %2976 = vmatpush.bf16.msra.mxu0 0
      %2977 = vmatpush.bf16.msra.mxu0 0
      %2978 = vmatpush.bf16.msra.mxu0 0
      %2979 = vmatpush.bf16.msra.mxu0 0
      %2980 = vmatpush.bf16.msra.mxu0 0
      %2981 = vmatpush.bf16.msra.mxu0 0
      %2982 = vmatpush.bf16.msra.mxu0 0
      %2983 = vmatpush.bf16.msra.mxu0 %v2974
      %2984 = vmatmul.bf16.gmra.mxu0 %v2926
      %v2985 = vpop.f32.mrf.mxu0
      %v2986 = vadd.f32 0.0, %v2985
      %v2987 = vpop.f32.mrf.mxu0
      %v2988 = vadd.f32 0.0, %v2987
      %2989 = vmatmul.bf16.gmra.mxu0 %v2929
      %v2990 = vpop.f32.mrf.mxu0
      %v2991 = vadd.f32 0.0, %v2990
      %v2992 = vpop.f32.mrf.mxu0
      %v2993 = vadd.f32 0.0, %v2992
      %2994 = vmatmul.bf16.gmra.mxu0 %v2932
      %v2995 = vpop.f32.mrf.mxu0
      %v2996 = vadd.f32 0.0, %v2995
      %v2997 = vpop.f32.mrf.mxu0
      %v2998 = vadd.f32 0.0, %v2997
      %2999 = vmatmul.bf16.gmra.mxu0 %v2935
      %v3000 = vpop.f32.mrf.mxu0
      %v3001 = vadd.f32 0.0, %v3000
      %v3002 = vpop.f32.mrf.mxu0
      %v3003 = vadd.f32 0.0, %v3002
      %3004 = vmatmul.bf16.gmra.mxu0 %v2938
      %v3005 = vpop.f32.mrf.mxu0
      %v3006 = vadd.f32 0.0, %v3005
      %v3007 = vpop.f32.mrf.mxu0
      %v3008 = vadd.f32 0.0, %v3007
      %3009 = vmatmul.bf16.gmra.mxu0 %v2941
      %v3010 = vpop.f32.mrf.mxu0
      %v3011 = vadd.f32 0.0, %v3010
      %v3012 = vpop.f32.mrf.mxu0
      %v3013 = vadd.f32 0.0, %v3012
      %3014 = vmatmul.bf16.gmra.mxu0 %v2944
      %v3015 = vpop.f32.mrf.mxu0
      %v3016 = vadd.f32 0.0, %v3015
      %v3017 = vpop.f32.mrf.mxu0
      %v3018 = vadd.f32 0.0, %v3017
      %3019 = vmatmul.bf16.gmra.mxu0 %v2947
      %v3020 = vpop.f32.mrf.mxu0
      %v3021 = vadd.f32 0.0, %v3020
      %v3022 = vpop.f32.mrf.mxu0
      %v3023 = vadd.f32 0.0, %v3022
      %3024 = vmatmul.bf16.gmra.mxu0 %v2950
      %v3025 = vpop.f32.mrf.mxu0
      %v3026 = vadd.f32 0.0, %v3025
      %v3027 = vpop.f32.mrf.mxu0
      %v3028 = vadd.f32 0.0, %v3027
      %3029 = vmatmul.bf16.gmra.mxu0 %v2953
      %v3030 = vpop.f32.mrf.mxu0
      %v3031 = vadd.f32 0.0, %v3030
      %v3032 = vpop.f32.mrf.mxu0
      %v3033 = vadd.f32 0.0, %v3032
      %3034 = vmatmul.bf16.gmra.mxu0 %v2956
      %v3035 = vpop.f32.mrf.mxu0
      %v3036 = vadd.f32 0.0, %v3035
      %v3037 = vpop.f32.mrf.mxu0
      %v3038 = vadd.f32 0.0, %v3037
      %3039 = vmatmul.bf16.gmra.mxu0 %v2959
      %v3040 = vpop.f32.mrf.mxu0
      %v3041 = vadd.f32 0.0, %v3040
      %v3042 = vpop.f32.mrf.mxu0
      %v3043 = vadd.f32 0.0, %v3042
      %3044 = vmatmul.bf16.gmra.mxu0 %v2962
      %v3045 = vpop.f32.mrf.mxu0
      %v3046 = vadd.f32 0.0, %v3045
      %v3047 = vpop.f32.mrf.mxu0
      %v3048 = vadd.f32 0.0, %v3047
      %3049 = vmatmul.bf16.gmra.mxu0 %v2965
      %v3050 = vpop.f32.mrf.mxu0
      %v3051 = vadd.f32 0.0, %v3050
      %v3052 = vpop.f32.mrf.mxu0
      %v3053 = vadd.f32 0.0, %v3052
      %3054 = vmatmul.bf16.gmra.mxu0 %v2968
      %v3055 = vpop.f32.mrf.mxu0
      %v3056 = vadd.f32 0.0, %v3055
      %v3057 = vpop.f32.mrf.mxu0
      %v3058 = vadd.f32 0.0, %v3057
      %3059 = vmatmul.bf16.gmra.mxu0 %v2971
      %v3060 = vpop.f32.mrf.mxu0
      %v3061 = vadd.f32 0.0, %v3060
      %v3062 = vpop.f32.mrf.mxu0
      %v3063 = vadd.f32 0.0, %v3062
      %3064 = vdwg.mxu0
      %v3065 = vadd.f32 %v2843, %v2986
      %v3066 = vadd.f32 %v2844, %v2988
      %v3067 = vadd.f32 %v2845, %v2991
      %v3068 = vadd.f32 %v2846, %v2993
      %v3069 = vadd.f32 %v2847, %v2996
      %v3070 = vadd.f32 %v2848, %v2998
      %v3071 = vadd.f32 %v2849, %v3001
      %v3072 = vadd.f32 %v2850, %v3003
      %v3073 = vadd.f32 %v2851, %v3006
      %v3074 = vadd.f32 %v2852, %v3008
      %v3075 = vadd.f32 %v2853, %v3011
      %v3076 = vadd.f32 %v2854, %v3013
      %v3077 = vadd.f32 %v2855, %v3016
      %v3078 = vadd.f32 %v2856, %v3018
      %v3079 = vadd.f32 %v2857, %v3021
      %v3080 = vadd.f32 %v2858, %v3023
      %v3081 = vadd.f32 %v2859, %v3026
      %v3082 = vadd.f32 %v2860, %v3028
      %v3083 = vadd.f32 %v2861, %v3031
      %v3084 = vadd.f32 %v2862, %v3033
      %v3085 = vadd.f32 %v2863, %v3036
      %v3086 = vadd.f32 %v2864, %v3038
      %v3087 = vadd.f32 %v2865, %v3041
      %v3088 = vadd.f32 %v2866, %v3043
      %v3089 = vadd.f32 %v2867, %v3046
      %v3090 = vadd.f32 %v2868, %v3048
      %v3091 = vadd.f32 %v2869, %v3051
      %v3092 = vadd.f32 %v2870, %v3053
      %v3093 = vadd.f32 %v2871, %v3056
      %v3094 = vadd.f32 %v2872, %v3058
      %v3095 = vadd.f32 %v2873, %v3061
      %v3096 = vadd.f32 %v2874, %v3063
      %v3097 = vld [vmem:[%s464] sm:$0xff]
      %v3098 = vld [vmem:[%s464 + $0x8] sm:$0xff]
      %v3099 = vld [vmem:[%s464 + $0x18] sm:$0xff]
      %v3100 = vld [vmem:[%s464 + $0x20] sm:$0xff]
      %v3101 = vld [vmem:[%s464 + $0x30] sm:$0xff]
      %v3102 = vld [vmem:[%s464 + $0x38] sm:$0xff]
      %v3103 = vld [vmem:[%s464 + $0x48] sm:$0xff]
      %v3104 = vld [vmem:[%s464 + $0x50] sm:$0xff]
      %v3105 = vld [vmem:[%s464 + $0x60] sm:$0xff]
      %v3106 = vld [vmem:[%s464 + $0x68] sm:$0xff]
      %v3107 = vld [vmem:[%s464 + $0x78] sm:$0xff]
      %v3108 = vld [vmem:[%s464 + $0x80] sm:$0xff]
      %v3109 = vld [vmem:[%s464 + $0x90] sm:$0xff]
      %v3110 = vld [vmem:[%s464 + $0x98] sm:$0xff]
      %v3111 = vld [vmem:[%s464 + $0xa8] sm:$0xff]
      %v3112 = vld [vmem:[%s464 + $0xb0] sm:$0xff]
      %v3113 = vld [vmem:[%s464 + $0xc0] sm:$0xff]
      %v3114 = vld [vmem:[%s464 + $0xc8] sm:$0xff]
      %v3115 = vld [vmem:[%s464 + $0xd8] sm:$0xff]
      %v3116 = vld [vmem:[%s464 + $0xe0] sm:$0xff]
      %v3117 = vld [vmem:[%s464 + $0xf0] sm:$0xff]
      %v3118 = vld [vmem:[%s464 + $0xf8] sm:$0xff]
      %v3119 = vld [vmem:[%s464 + $0x108] sm:$0xff]
      %v3120 = vld [vmem:[%s464 + $0x110] sm:$0xff]
      %v3121 = vld [vmem:[%s464 + $0x120] sm:$0xff]
      %v3122 = vld [vmem:[%s464 + $0x128] sm:$0xff]
      %v3123 = vld [vmem:[%s464 + $0x138] sm:$0xff]
      %v3124 = vld [vmem:[%s464 + $0x140] sm:$0xff]
      %v3125 = vld [vmem:[%s464 + $0x150] sm:$0xff]
      %v3126 = vld [vmem:[%s464 + $0x158] sm:$0xff]
      %v3127 = vld [vmem:[%s464 + $0x168] sm:$0xff]
      %v3128 = vld [vmem:[%s464 + $0x170] sm:$0xff]
      %v3129 = vpack.c.bf16 %v3098, %v3097
      %v3130 = vpack.c.bf16 %v3100, %v3099
      %v3131 = vpack.c.bf16 %v3102, %v3101
      %v3132 = vpack.c.bf16 %v3104, %v3103
      %v3133 = vpack.c.bf16 %v3106, %v3105
      %v3134 = vpack.c.bf16 %v3108, %v3107
      %v3135 = vpack.c.bf16 %v3110, %v3109
      %v3136 = vpack.c.bf16 %v3112, %v3111
      %v3137 = vpack.c.bf16 %v3114, %v3113
      %v3138 = vpack.c.bf16 %v3116, %v3115
      %v3139 = vpack.c.bf16 %v3118, %v3117
      %v3140 = vpack.c.bf16 %v3120, %v3119
      %v3141 = vpack.c.bf16 %v3122, %v3121
      %v3142 = vpack.c.bf16 %v3124, %v3123
      %v3143 = vpack.c.bf16 %v3126, %v3125
      %v3144 = vpack.c.bf16 %v3128, %v3127
      %s3145 = scalar_lea.vmem %s3, 6
      %v3146 = vld [vmem:[%s3145] sm:$0x3]
      %v3148 = vsel %vm257, %v3129, 0
      %v3151 = vsel %vm257, %v3130, 0
      %v3154 = vsel %vm257, %v3131, 0
      %v3157 = vsel %vm257, %v3132, 0
      %v3160 = vsel %vm257, %v3133, 0
      %v3163 = vsel %vm257, %v3134, 0
      %v3166 = vsel %vm257, %v3135, 0
      %v3169 = vsel %vm257, %v3136, 0
      %v3172 = vsel %vm257, %v3137, 0
      %v3175 = vsel %vm257, %v3138, 0
      %v3178 = vsel %vm257, %v3139, 0
      %v3181 = vsel %vm257, %v3140, 0
      %v3184 = vsel %vm257, %v3141, 0
      %v3187 = vsel %vm257, %v3142, 0
      %v3190 = vsel %vm257, %v3143, 0
      %v3193 = vsel %vm257, %v3144, 0
      %v3196 = vsel %vm644, %v3146, 0
      %3198 = vmatpush.bf16.msra.mxu0 0
      %3199 = vmatpush.bf16.msra.mxu0 0
      %3200 = vmatpush.bf16.msra.mxu0 0
      %3201 = vmatpush.bf16.msra.mxu0 0
      %3202 = vmatpush.bf16.msra.mxu0 0
      %3203 = vmatpush.bf16.msra.mxu0 0
      %3204 = vmatpush.bf16.msra.mxu0 0
      %3205 = vmatpush.bf16.msra.mxu0 %v3196
      %3206 = vmatmul.bf16.gmra.mxu0 %v3148
      %v3207 = vpop.f32.mrf.mxu0
      %v3208 = vadd.f32 0.0, %v3207
      %v3209 = vpop.f32.mrf.mxu0
      %v3210 = vadd.f32 0.0, %v3209
      %3211 = vmatmul.bf16.gmra.mxu0 %v3151
      %v3212 = vpop.f32.mrf.mxu0
      %v3213 = vadd.f32 0.0, %v3212
      %v3214 = vpop.f32.mrf.mxu0
      %v3215 = vadd.f32 0.0, %v3214
      %3216 = vmatmul.bf16.gmra.mxu0 %v3154
      %v3217 = vpop.f32.mrf.mxu0
      %v3218 = vadd.f32 0.0, %v3217
      %v3219 = vpop.f32.mrf.mxu0
      %v3220 = vadd.f32 0.0, %v3219
      %3221 = vmatmul.bf16.gmra.mxu0 %v3157
      %v3222 = vpop.f32.mrf.mxu0
      %v3223 = vadd.f32 0.0, %v3222
      %v3224 = vpop.f32.mrf.mxu0
      %v3225 = vadd.f32 0.0, %v3224
      %3226 = vmatmul.bf16.gmra.mxu0 %v3160
      %v3227 = vpop.f32.mrf.mxu0
      %v3228 = vadd.f32 0.0, %v3227
      %v3229 = vpop.f32.mrf.mxu0
      %v3230 = vadd.f32 0.0, %v3229
      %3231 = vmatmul.bf16.gmra.mxu0 %v3163
      %v3232 = vpop.f32.mrf.mxu0
      %v3233 = vadd.f32 0.0, %v3232
      %v3234 = vpop.f32.mrf.mxu0
      %v3235 = vadd.f32 0.0, %v3234
      %3236 = vmatmul.bf16.gmra.mxu0 %v3166
      %v3237 = vpop.f32.mrf.mxu0
      %v3238 = vadd.f32 0.0, %v3237
      %v3239 = vpop.f32.mrf.mxu0
      %v3240 = vadd.f32 0.0, %v3239
      %3241 = vmatmul.bf16.gmra.mxu0 %v3169
      %v3242 = vpop.f32.mrf.mxu0
      %v3243 = vadd.f32 0.0, %v3242
      %v3244 = vpop.f32.mrf.mxu0
      %v3245 = vadd.f32 0.0, %v3244
      %3246 = vmatmul.bf16.gmra.mxu0 %v3172
      %v3247 = vpop.f32.mrf.mxu0
      %v3248 = vadd.f32 0.0, %v3247
      %v3249 = vpop.f32.mrf.mxu0
      %v3250 = vadd.f32 0.0, %v3249
      %3251 = vmatmul.bf16.gmra.mxu0 %v3175
      %v3252 = vpop.f32.mrf.mxu0
      %v3253 = vadd.f32 0.0, %v3252
      %v3254 = vpop.f32.mrf.mxu0
      %v3255 = vadd.f32 0.0, %v3254
      %3256 = vmatmul.bf16.gmra.mxu0 %v3178
      %v3257 = vpop.f32.mrf.mxu0
      %v3258 = vadd.f32 0.0, %v3257
      %v3259 = vpop.f32.mrf.mxu0
      %v3260 = vadd.f32 0.0, %v3259
      %3261 = vmatmul.bf16.gmra.mxu0 %v3181
      %v3262 = vpop.f32.mrf.mxu0
      %v3263 = vadd.f32 0.0, %v3262
      %v3264 = vpop.f32.mrf.mxu0
      %v3265 = vadd.f32 0.0, %v3264
      %3266 = vmatmul.bf16.gmra.mxu0 %v3184
      %v3267 = vpop.f32.mrf.mxu0
      %v3268 = vadd.f32 0.0, %v3267
      %v3269 = vpop.f32.mrf.mxu0
      %v3270 = vadd.f32 0.0, %v3269
      %3271 = vmatmul.bf16.gmra.mxu0 %v3187
      %v3272 = vpop.f32.mrf.mxu0
      %v3273 = vadd.f32 0.0, %v3272
      %v3274 = vpop.f32.mrf.mxu0
      %v3275 = vadd.f32 0.0, %v3274
      %3276 = vmatmul.bf16.gmra.mxu0 %v3190
      %v3277 = vpop.f32.mrf.mxu0
      %v3278 = vadd.f32 0.0, %v3277
      %v3279 = vpop.f32.mrf.mxu0
      %v3280 = vadd.f32 0.0, %v3279
      %3281 = vmatmul.bf16.gmra.mxu0 %v3193
      %v3282 = vpop.f32.mrf.mxu0
      %v3283 = vadd.f32 0.0, %v3282
      %v3284 = vpop.f32.mrf.mxu0
      %v3285 = vadd.f32 0.0, %v3284
      %3286 = vdwg.mxu0
      %v3287 = vadd.f32 %v3065, %v3208
      %v3288 = vadd.f32 %v3066, %v3210
      %v3289 = vadd.f32 %v3067, %v3213
      %v3290 = vadd.f32 %v3068, %v3215
      %v3291 = vadd.f32 %v3069, %v3218
      %v3292 = vadd.f32 %v3070, %v3220
      %v3293 = vadd.f32 %v3071, %v3223
      %v3294 = vadd.f32 %v3072, %v3225
      %v3295 = vadd.f32 %v3073, %v3228
      %v3296 = vadd.f32 %v3074, %v3230
      %v3297 = vadd.f32 %v3075, %v3233
      %v3298 = vadd.f32 %v3076, %v3235
      %v3299 = vadd.f32 %v3077, %v3238
      %v3300 = vadd.f32 %v3078, %v3240
      %v3301 = vadd.f32 %v3079, %v3243
      %v3302 = vadd.f32 %v3080, %v3245
      %v3303 = vadd.f32 %v3081, %v3248
      %v3304 = vadd.f32 %v3082, %v3250
      %v3305 = vadd.f32 %v3083, %v3253
      %v3306 = vadd.f32 %v3084, %v3255
      %v3307 = vadd.f32 %v3085, %v3258
      %v3308 = vadd.f32 %v3086, %v3260
      %v3309 = vadd.f32 %v3087, %v3263
      %v3310 = vadd.f32 %v3088, %v3265
      %v3311 = vadd.f32 %v3089, %v3268
      %v3312 = vadd.f32 %v3090, %v3270
      %v3313 = vadd.f32 %v3091, %v3273
      %v3314 = vadd.f32 %v3092, %v3275
      %v3315 = vadd.f32 %v3093, %v3278
      %v3316 = vadd.f32 %v3094, %v3280
      %v3317 = vadd.f32 %v3095, %v3283
      %v3318 = vadd.f32 %v3096, %v3285
      %v3319 = vld [vmem:[%s464 + $0x1] sm:$0xff]
      %v3320 = vld [vmem:[%s464 + $0x9] sm:$0xff]
      %v3321 = vld [vmem:[%s464 + $0x19] sm:$0xff]
      %v3322 = vld [vmem:[%s464 + $0x21] sm:$0xff]
      %v3323 = vld [vmem:[%s464 + $0x31] sm:$0xff]
      %v3324 = vld [vmem:[%s464 + $0x39] sm:$0xff]
      %v3325 = vld [vmem:[%s464 + $0x49] sm:$0xff]
      %v3326 = vld [vmem:[%s464 + $0x51] sm:$0xff]
      %v3327 = vld [vmem:[%s464 + $0x61] sm:$0xff]
      %v3328 = vld [vmem:[%s464 + $0x69] sm:$0xff]
      %v3329 = vld [vmem:[%s464 + $0x79] sm:$0xff]
      %v3330 = vld [vmem:[%s464 + $0x81] sm:$0xff]
      %v3331 = vld [vmem:[%s464 + $0x91] sm:$0xff]
      %v3332 = vld [vmem:[%s464 + $0x99] sm:$0xff]
      %v3333 = vld [vmem:[%s464 + $0xa9] sm:$0xff]
      %v3334 = vld [vmem:[%s464 + $0xb1] sm:$0xff]
      %v3335 = vld [vmem:[%s464 + $0xc1] sm:$0xff]
      %v3336 = vld [vmem:[%s464 + $0xc9] sm:$0xff]
      %v3337 = vld [vmem:[%s464 + $0xd9] sm:$0xff]
      %v3338 = vld [vmem:[%s464 + $0xe1] sm:$0xff]
      %v3339 = vld [vmem:[%s464 + $0xf1] sm:$0xff]
      %v3340 = vld [vmem:[%s464 + $0xf9] sm:$0xff]
      %v3341 = vld [vmem:[%s464 + $0x109] sm:$0xff]
      %v3342 = vld [vmem:[%s464 + $0x111] sm:$0xff]
      %v3343 = vld [vmem:[%s464 + $0x121] sm:$0xff]
      %v3344 = vld [vmem:[%s464 + $0x129] sm:$0xff]
      %v3345 = vld [vmem:[%s464 + $0x139] sm:$0xff]
      %v3346 = vld [vmem:[%s464 + $0x141] sm:$0xff]
      %v3347 = vld [vmem:[%s464 + $0x151] sm:$0xff]
      %v3348 = vld [vmem:[%s464 + $0x159] sm:$0xff]
      %v3349 = vld [vmem:[%s464 + $0x169] sm:$0xff]
      %v3350 = vld [vmem:[%s464 + $0x171] sm:$0xff]
      %v3351 = vpack.c.bf16 %v3320, %v3319
      %v3352 = vpack.c.bf16 %v3322, %v3321
      %v3353 = vpack.c.bf16 %v3324, %v3323
      %v3354 = vpack.c.bf16 %v3326, %v3325
      %v3355 = vpack.c.bf16 %v3328, %v3327
      %v3356 = vpack.c.bf16 %v3330, %v3329
      %v3357 = vpack.c.bf16 %v3332, %v3331
      %v3358 = vpack.c.bf16 %v3334, %v3333
      %v3359 = vpack.c.bf16 %v3336, %v3335
      %v3360 = vpack.c.bf16 %v3338, %v3337
      %v3361 = vpack.c.bf16 %v3340, %v3339
      %v3362 = vpack.c.bf16 %v3342, %v3341
      %v3363 = vpack.c.bf16 %v3344, %v3343
      %v3364 = vpack.c.bf16 %v3346, %v3345
      %v3365 = vpack.c.bf16 %v3348, %v3347
      %v3366 = vpack.c.bf16 %v3350, %v3349
      %s3367 = scalar_lea.vmem %s3, 8
      %v3368 = vld [vmem:[%s3367] sm:$0x3]
      %v3370 = vsel %vm257, %v3351, 0
      %v3373 = vsel %vm257, %v3352, 0
      %v3376 = vsel %vm257, %v3353, 0
      %v3379 = vsel %vm257, %v3354, 0
      %v3382 = vsel %vm257, %v3355, 0
      %v3385 = vsel %vm257, %v3356, 0
      %v3388 = vsel %vm257, %v3357, 0
      %v3391 = vsel %vm257, %v3358, 0
      %v3394 = vsel %vm257, %v3359, 0
      %v3397 = vsel %vm257, %v3360, 0
      %v3400 = vsel %vm257, %v3361, 0
      %v3403 = vsel %vm257, %v3362, 0
      %v3406 = vsel %vm257, %v3363, 0
      %v3409 = vsel %vm257, %v3364, 0
      %v3412 = vsel %vm257, %v3365, 0
      %v3415 = vsel %vm257, %v3366, 0
      %v3418 = vsel %vm644, %v3368, 0
      %3420 = vmatpush.bf16.msra.mxu0 0
      %3421 = vmatpush.bf16.msra.mxu0 0
      %3422 = vmatpush.bf16.msra.mxu0 0
      %3423 = vmatpush.bf16.msra.mxu0 0
      %3424 = vmatpush.bf16.msra.mxu0 0
      %3425 = vmatpush.bf16.msra.mxu0 0
      %3426 = vmatpush.bf16.msra.mxu0 0
      %3427 = vmatpush.bf16.msra.mxu0 %v3418
      %3428 = vmatmul.bf16.gmra.mxu0 %v3370
      %v3429 = vpop.f32.mrf.mxu0
      %v3430 = vadd.f32 0.0, %v3429
      %v3431 = vpop.f32.mrf.mxu0
      %v3432 = vadd.f32 0.0, %v3431
      %3433 = vmatmul.bf16.gmra.mxu0 %v3373
      %v3434 = vpop.f32.mrf.mxu0
      %v3435 = vadd.f32 0.0, %v3434
      %v3436 = vpop.f32.mrf.mxu0
      %v3437 = vadd.f32 0.0, %v3436
      %3438 = vmatmul.bf16.gmra.mxu0 %v3376
      %v3439 = vpop.f32.mrf.mxu0
      %v3440 = vadd.f32 0.0, %v3439
      %v3441 = vpop.f32.mrf.mxu0
      %v3442 = vadd.f32 0.0, %v3441
      %3443 = vmatmul.bf16.gmra.mxu0 %v3379
      %v3444 = vpop.f32.mrf.mxu0
      %v3445 = vadd.f32 0.0, %v3444
      %v3446 = vpop.f32.mrf.mxu0
      %v3447 = vadd.f32 0.0, %v3446
      %3448 = vmatmul.bf16.gmra.mxu0 %v3382
      %v3449 = vpop.f32.mrf.mxu0
      %v3450 = vadd.f32 0.0, %v3449
      %v3451 = vpop.f32.mrf.mxu0
      %v3452 = vadd.f32 0.0, %v3451
      %3453 = vmatmul.bf16.gmra.mxu0 %v3385
      %v3454 = vpop.f32.mrf.mxu0
      %v3455 = vadd.f32 0.0, %v3454
      %v3456 = vpop.f32.mrf.mxu0
      %v3457 = vadd.f32 0.0, %v3456
      %3458 = vmatmul.bf16.gmra.mxu0 %v3388
      %v3459 = vpop.f32.mrf.mxu0
      %v3460 = vadd.f32 0.0, %v3459
      %v3461 = vpop.f32.mrf.mxu0
      %v3462 = vadd.f32 0.0, %v3461
      %3463 = vmatmul.bf16.gmra.mxu0 %v3391
      %v3464 = vpop.f32.mrf.mxu0
      %v3465 = vadd.f32 0.0, %v3464
      %v3466 = vpop.f32.mrf.mxu0
      %v3467 = vadd.f32 0.0, %v3466
      %3468 = vmatmul.bf16.gmra.mxu0 %v3394
      %v3469 = vpop.f32.mrf.mxu0
      %v3470 = vadd.f32 0.0, %v3469
      %v3471 = vpop.f32.mrf.mxu0
      %v3472 = vadd.f32 0.0, %v3471
      %3473 = vmatmul.bf16.gmra.mxu0 %v3397
      %v3474 = vpop.f32.mrf.mxu0
      %v3475 = vadd.f32 0.0, %v3474
      %v3476 = vpop.f32.mrf.mxu0
      %v3477 = vadd.f32 0.0, %v3476
      %3478 = vmatmul.bf16.gmra.mxu0 %v3400
      %v3479 = vpop.f32.mrf.mxu0
      %v3480 = vadd.f32 0.0, %v3479
      %v3481 = vpop.f32.mrf.mxu0
      %v3482 = vadd.f32 0.0, %v3481
      %3483 = vmatmul.bf16.gmra.mxu0 %v3403
      %v3484 = vpop.f32.mrf.mxu0
      %v3485 = vadd.f32 0.0, %v3484
      %v3486 = vpop.f32.mrf.mxu0
      %v3487 = vadd.f32 0.0, %v3486
      %3488 = vmatmul.bf16.gmra.mxu0 %v3406
      %v3489 = vpop.f32.mrf.mxu0
      %v3490 = vadd.f32 0.0, %v3489
      %v3491 = vpop.f32.mrf.mxu0
      %v3492 = vadd.f32 0.0, %v3491
      %3493 = vmatmul.bf16.gmra.mxu0 %v3409
      %v3494 = vpop.f32.mrf.mxu0
      %v3495 = vadd.f32 0.0, %v3494
      %v3496 = vpop.f32.mrf.mxu0
      %v3497 = vadd.f32 0.0, %v3496
      %3498 = vmatmul.bf16.gmra.mxu0 %v3412
      %v3499 = vpop.f32.mrf.mxu0
      %v3500 = vadd.f32 0.0, %v3499
      %v3501 = vpop.f32.mrf.mxu0
      %v3502 = vadd.f32 0.0, %v3501
      %3503 = vmatmul.bf16.gmra.mxu0 %v3415
      %v3504 = vpop.f32.mrf.mxu0
      %v3505 = vadd.f32 0.0, %v3504
      %v3506 = vpop.f32.mrf.mxu0
      %v3507 = vadd.f32 0.0, %v3506
      %3508 = vdwg.mxu0
      %v3509 = vadd.f32 %v3287, %v3430
      %v3510 = vadd.f32 %v3288, %v3432
      %v3511 = vadd.f32 %v3289, %v3435
      %v3512 = vadd.f32 %v3290, %v3437
      %v3513 = vadd.f32 %v3291, %v3440
      %v3514 = vadd.f32 %v3292, %v3442
      %v3515 = vadd.f32 %v3293, %v3445
      %v3516 = vadd.f32 %v3294, %v3447
      %v3517 = vadd.f32 %v3295, %v3450
      %v3518 = vadd.f32 %v3296, %v3452
      %v3519 = vadd.f32 %v3297, %v3455
      %v3520 = vadd.f32 %v3298, %v3457
      %v3521 = vadd.f32 %v3299, %v3460
      %v3522 = vadd.f32 %v3300, %v3462
      %v3523 = vadd.f32 %v3301, %v3465
      %v3524 = vadd.f32 %v3302, %v3467
      %v3525 = vadd.f32 %v3303, %v3470
      %v3526 = vadd.f32 %v3304, %v3472
      %v3527 = vadd.f32 %v3305, %v3475
      %v3528 = vadd.f32 %v3306, %v3477
      %v3529 = vadd.f32 %v3307, %v3480
      %v3530 = vadd.f32 %v3308, %v3482
      %v3531 = vadd.f32 %v3309, %v3485
      %v3532 = vadd.f32 %v3310, %v3487
      %v3533 = vadd.f32 %v3311, %v3490
      %v3534 = vadd.f32 %v3312, %v3492
      %v3535 = vadd.f32 %v3313, %v3495
      %v3536 = vadd.f32 %v3314, %v3497
      %v3537 = vadd.f32 %v3315, %v3500
      %v3538 = vadd.f32 %v3316, %v3502
      %v3539 = vadd.f32 %v3317, %v3505
      %v3540 = vadd.f32 %v3318, %v3507
      %v3541 = vld [vmem:[%s464 + $0x2] sm:$0xff]
      %v3542 = vld [vmem:[%s464 + $0xa] sm:$0xff]
      %v3543 = vld [vmem:[%s464 + $0x1a] sm:$0xff]
      %v3544 = vld [vmem:[%s464 + $0x22] sm:$0xff]
      %v3545 = vld [vmem:[%s464 + $0x32] sm:$0xff]
      %v3546 = vld [vmem:[%s464 + $0x3a] sm:$0xff]
      %v3547 = vld [vmem:[%s464 + $0x4a] sm:$0xff]
      %v3548 = vld [vmem:[%s464 + $0x52] sm:$0xff]
      %v3549 = vld [vmem:[%s464 + $0x62] sm:$0xff]
      %v3550 = vld [vmem:[%s464 + $0x6a] sm:$0xff]
      %v3551 = vld [vmem:[%s464 + $0x7a] sm:$0xff]
      %v3552 = vld [vmem:[%s464 + $0x82] sm:$0xff]
      %v3553 = vld [vmem:[%s464 + $0x92] sm:$0xff]
      %v3554 = vld [vmem:[%s464 + $0x9a] sm:$0xff]
      %v3555 = vld [vmem:[%s464 + $0xaa] sm:$0xff]
      %v3556 = vld [vmem:[%s464 + $0xb2] sm:$0xff]
      %v3557 = vld [vmem:[%s464 + $0xc2] sm:$0xff]
      %v3558 = vld [vmem:[%s464 + $0xca] sm:$0xff]
      %v3559 = vld [vmem:[%s464 + $0xda] sm:$0xff]
      %v3560 = vld [vmem:[%s464 + $0xe2] sm:$0xff]
      %v3561 = vld [vmem:[%s464 + $0xf2] sm:$0xff]
      %v3562 = vld [vmem:[%s464 + $0xfa] sm:$0xff]
      %v3563 = vld [vmem:[%s464 + $0x10a] sm:$0xff]
      %v3564 = vld [vmem:[%s464 + $0x112] sm:$0xff]
      %v3565 = vld [vmem:[%s464 + $0x122] sm:$0xff]
      %v3566 = vld [vmem:[%s464 + $0x12a] sm:$0xff]
      %v3567 = vld [vmem:[%s464 + $0x13a] sm:$0xff]
      %v3568 = vld [vmem:[%s464 + $0x142] sm:$0xff]
      %v3569 = vld [vmem:[%s464 + $0x152] sm:$0xff]
      %v3570 = vld [vmem:[%s464 + $0x15a] sm:$0xff]
      %v3571 = vld [vmem:[%s464 + $0x16a] sm:$0xff]
      %v3572 = vld [vmem:[%s464 + $0x172] sm:$0xff]
      %v3573 = vpack.c.bf16 %v3542, %v3541
      %v3574 = vpack.c.bf16 %v3544, %v3543
      %v3575 = vpack.c.bf16 %v3546, %v3545
      %v3576 = vpack.c.bf16 %v3548, %v3547
      %v3577 = vpack.c.bf16 %v3550, %v3549
      %v3578 = vpack.c.bf16 %v3552, %v3551
      %v3579 = vpack.c.bf16 %v3554, %v3553
      %v3580 = vpack.c.bf16 %v3556, %v3555
      %v3581 = vpack.c.bf16 %v3558, %v3557
      %v3582 = vpack.c.bf16 %v3560, %v3559
      %v3583 = vpack.c.bf16 %v3562, %v3561
      %v3584 = vpack.c.bf16 %v3564, %v3563
      %v3585 = vpack.c.bf16 %v3566, %v3565
      %v3586 = vpack.c.bf16 %v3568, %v3567
      %v3587 = vpack.c.bf16 %v3570, %v3569
      %v3588 = vpack.c.bf16 %v3572, %v3571
      %s3589 = scalar_lea.vmem %s3, 10
      %v3590 = vld [vmem:[%s3589] sm:$0x3]
      %v3592 = vsel %vm257, %v3573, 0
      %v3595 = vsel %vm257, %v3574, 0
      %v3598 = vsel %vm257, %v3575, 0
      %v3601 = vsel %vm257, %v3576, 0
      %v3604 = vsel %vm257, %v3577, 0
      %v3607 = vsel %vm257, %v3578, 0
      %v3610 = vsel %vm257, %v3579, 0
      %v3613 = vsel %vm257, %v3580, 0
      %v3616 = vsel %vm257, %v3581, 0
      %v3619 = vsel %vm257, %v3582, 0
      %v3622 = vsel %vm257, %v3583, 0
      %v3625 = vsel %vm257, %v3584, 0
      %v3628 = vsel %vm257, %v3585, 0
      %v3631 = vsel %vm257, %v3586, 0
      %v3634 = vsel %vm257, %v3587, 0
      %v3637 = vsel %vm257, %v3588, 0
      %v3640 = vsel %vm644, %v3590, 0
      %3642 = vmatpush.bf16.msra.mxu0 0
      %3643 = vmatpush.bf16.msra.mxu0 0
      %3644 = vmatpush.bf16.msra.mxu0 0
      %3645 = vmatpush.bf16.msra.mxu0 0
      %3646 = vmatpush.bf16.msra.mxu0 0
      %3647 = vmatpush.bf16.msra.mxu0 0
      %3648 = vmatpush.bf16.msra.mxu0 0
      %3649 = vmatpush.bf16.msra.mxu0 %v3640
      %3650 = vmatmul.bf16.gmra.mxu0 %v3592
      %v3651 = vpop.f32.mrf.mxu0
      %v3652 = vadd.f32 0.0, %v3651
      %v3653 = vpop.f32.mrf.mxu0
      %v3654 = vadd.f32 0.0, %v3653
      %3655 = vmatmul.bf16.gmra.mxu0 %v3595
      %v3656 = vpop.f32.mrf.mxu0
      %v3657 = vadd.f32 0.0, %v3656
      %v3658 = vpop.f32.mrf.mxu0
      %v3659 = vadd.f32 0.0, %v3658
      %3660 = vmatmul.bf16.gmra.mxu0 %v3598
      %v3661 = vpop.f32.mrf.mxu0
      %v3662 = vadd.f32 0.0, %v3661
      %v3663 = vpop.f32.mrf.mxu0
      %v3664 = vadd.f32 0.0, %v3663
      %3665 = vmatmul.bf16.gmra.mxu0 %v3601
      %v3666 = vpop.f32.mrf.mxu0
      %v3667 = vadd.f32 0.0, %v3666
      %v3668 = vpop.f32.mrf.mxu0
      %v3669 = vadd.f32 0.0, %v3668
      %3670 = vmatmul.bf16.gmra.mxu0 %v3604
      %v3671 = vpop.f32.mrf.mxu0
      %v3672 = vadd.f32 0.0, %v3671
      %v3673 = vpop.f32.mrf.mxu0
      %v3674 = vadd.f32 0.0, %v3673
      %3675 = vmatmul.bf16.gmra.mxu0 %v3607
      %v3676 = vpop.f32.mrf.mxu0
      %v3677 = vadd.f32 0.0, %v3676
      %v3678 = vpop.f32.mrf.mxu0
      %v3679 = vadd.f32 0.0, %v3678
      %3680 = vmatmul.bf16.gmra.mxu0 %v3610
      %v3681 = vpop.f32.mrf.mxu0
      %v3682 = vadd.f32 0.0, %v3681
      %v3683 = vpop.f32.mrf.mxu0
      %v3684 = vadd.f32 0.0, %v3683
      %3685 = vmatmul.bf16.gmra.mxu0 %v3613
      %v3686 = vpop.f32.mrf.mxu0
      %v3687 = vadd.f32 0.0, %v3686
      %v3688 = vpop.f32.mrf.mxu0
      %v3689 = vadd.f32 0.0, %v3688
      %3690 = vmatmul.bf16.gmra.mxu0 %v3616
      %v3691 = vpop.f32.mrf.mxu0
      %v3692 = vadd.f32 0.0, %v3691
      %v3693 = vpop.f32.mrf.mxu0
      %v3694 = vadd.f32 0.0, %v3693
      %3695 = vmatmul.bf16.gmra.mxu0 %v3619
      %v3696 = vpop.f32.mrf.mxu0
      %v3697 = vadd.f32 0.0, %v3696
      %v3698 = vpop.f32.mrf.mxu0
      %v3699 = vadd.f32 0.0, %v3698
      %3700 = vmatmul.bf16.gmra.mxu0 %v3622
      %v3701 = vpop.f32.mrf.mxu0
      %v3702 = vadd.f32 0.0, %v3701
      %v3703 = vpop.f32.mrf.mxu0
      %v3704 = vadd.f32 0.0, %v3703
      %3705 = vmatmul.bf16.gmra.mxu0 %v3625
      %v3706 = vpop.f32.mrf.mxu0
      %v3707 = vadd.f32 0.0, %v3706
      %v3708 = vpop.f32.mrf.mxu0
      %v3709 = vadd.f32 0.0, %v3708
      %3710 = vmatmul.bf16.gmra.mxu0 %v3628
      %v3711 = vpop.f32.mrf.mxu0
      %v3712 = vadd.f32 0.0, %v3711
      %v3713 = vpop.f32.mrf.mxu0
      %v3714 = vadd.f32 0.0, %v3713
      %3715 = vmatmul.bf16.gmra.mxu0 %v3631
      %v3716 = vpop.f32.mrf.mxu0
      %v3717 = vadd.f32 0.0, %v3716
      %v3718 = vpop.f32.mrf.mxu0
      %v3719 = vadd.f32 0.0, %v3718
      %3720 = vmatmul.bf16.gmra.mxu0 %v3634
      %v3721 = vpop.f32.mrf.mxu0
      %v3722 = vadd.f32 0.0, %v3721
      %v3723 = vpop.f32.mrf.mxu0
      %v3724 = vadd.f32 0.0, %v3723
      %3725 = vmatmul.bf16.gmra.mxu0 %v3637
      %v3726 = vpop.f32.mrf.mxu0
      %v3727 = vadd.f32 0.0, %v3726
      %v3728 = vpop.f32.mrf.mxu0
      %v3729 = vadd.f32 0.0, %v3728
      %3730 = vdwg.mxu0
      %v3731 = vadd.f32 %v3509, %v3652
      %v3732 = vadd.f32 %v3510, %v3654
      %v3733 = vadd.f32 %v3511, %v3657
      %v3734 = vadd.f32 %v3512, %v3659
      %v3735 = vadd.f32 %v3513, %v3662
      %v3736 = vadd.f32 %v3514, %v3664
      %v3737 = vadd.f32 %v3515, %v3667
      %v3738 = vadd.f32 %v3516, %v3669
      %v3739 = vadd.f32 %v3517, %v3672
      %v3740 = vadd.f32 %v3518, %v3674
      %v3741 = vadd.f32 %v3519, %v3677
      %v3742 = vadd.f32 %v3520, %v3679
      %v3743 = vadd.f32 %v3521, %v3682
      %v3744 = vadd.f32 %v3522, %v3684
      %v3745 = vadd.f32 %v3523, %v3687
      %v3746 = vadd.f32 %v3524, %v3689
      %v3747 = vadd.f32 %v3525, %v3692
      %v3748 = vadd.f32 %v3526, %v3694
      %v3749 = vadd.f32 %v3527, %v3697
      %v3750 = vadd.f32 %v3528, %v3699
      %v3751 = vadd.f32 %v3529, %v3702
      %v3752 = vadd.f32 %v3530, %v3704
      %v3753 = vadd.f32 %v3531, %v3707
      %v3754 = vadd.f32 %v3532, %v3709
      %v3755 = vadd.f32 %v3533, %v3712
      %v3756 = vadd.f32 %v3534, %v3714
      %v3757 = vadd.f32 %v3535, %v3717
      %v3758 = vadd.f32 %v3536, %v3719
      %v3759 = vadd.f32 %v3537, %v3722
      %v3760 = vadd.f32 %v3538, %v3724
      %v3761 = vadd.f32 %v3539, %v3727
      %v3762 = vadd.f32 %v3540, %v3729
      %s3763 = scalar_lea.vmem [#allocation3], 48
      %v3764 = vld [vmem:[%s3763] sm:$0xff]
      %v3765 = vld [vmem:[%s3763 + $0x8] sm:$0xff]
      %v3766 = vld [vmem:[%s3763 + $0x18] sm:$0xff]
      %v3767 = vld [vmem:[%s3763 + $0x20] sm:$0xff]
      %v3768 = vld [vmem:[%s3763 + $0x30] sm:$0xff]
      %v3769 = vld [vmem:[%s3763 + $0x38] sm:$0xff]
      %v3770 = vld [vmem:[%s3763 + $0x48] sm:$0xff]
      %v3771 = vld [vmem:[%s3763 + $0x50] sm:$0xff]
      %v3772 = vld [vmem:[%s3763 + $0x60] sm:$0xff]
      %v3773 = vld [vmem:[%s3763 + $0x68] sm:$0xff]
      %v3774 = vld [vmem:[%s3763 + $0x78] sm:$0xff]
      %v3775 = vld [vmem:[%s3763 + $0x80] sm:$0xff]
      %v3776 = vld [vmem:[%s3763 + $0x90] sm:$0xff]
      %v3777 = vld [vmem:[%s3763 + $0x98] sm:$0xff]
      %v3778 = vld [vmem:[%s3763 + $0xa8] sm:$0xff]
      %v3779 = vld [vmem:[%s3763 + $0xb0] sm:$0xff]
      %v3780 = vld [vmem:[%s3763 + $0xc0] sm:$0xff]
      %v3781 = vld [vmem:[%s3763 + $0xc8] sm:$0xff]
      %v3782 = vld [vmem:[%s3763 + $0xd8] sm:$0xff]
      %v3783 = vld [vmem:[%s3763 + $0xe0] sm:$0xff]
      %v3784 = vld [vmem:[%s3763 + $0xf0] sm:$0xff]
      %v3785 = vld [vmem:[%s3763 + $0xf8] sm:$0xff]
      %v3786 = vld [vmem:[%s3763 + $0x108] sm:$0xff]
      %v3787 = vld [vmem:[%s3763 + $0x110] sm:$0xff]
      %v3788 = vld [vmem:[%s3763 + $0x120] sm:$0xff]
      %v3789 = vld [vmem:[%s3763 + $0x128] sm:$0xff]
      %v3790 = vld [vmem:[%s3763 + $0x138] sm:$0xff]
      %v3791 = vld [vmem:[%s3763 + $0x140] sm:$0xff]
      %v3792 = vld [vmem:[%s3763 + $0x150] sm:$0xff]
      %v3793 = vld [vmem:[%s3763 + $0x158] sm:$0xff]
      %v3794 = vld [vmem:[%s3763 + $0x168] sm:$0xff]
      %v3795 = vld [vmem:[%s3763 + $0x170] sm:$0xff]
      %v3796 = vpack.c.bf16 %v3765, %v3764
      %v3797 = vpack.c.bf16 %v3767, %v3766
      %v3798 = vpack.c.bf16 %v3769, %v3768
      %v3799 = vpack.c.bf16 %v3771, %v3770
      %v3800 = vpack.c.bf16 %v3773, %v3772
      %v3801 = vpack.c.bf16 %v3775, %v3774
      %v3802 = vpack.c.bf16 %v3777, %v3776
      %v3803 = vpack.c.bf16 %v3779, %v3778
      %v3804 = vpack.c.bf16 %v3781, %v3780
      %v3805 = vpack.c.bf16 %v3783, %v3782
      %v3806 = vpack.c.bf16 %v3785, %v3784
      %v3807 = vpack.c.bf16 %v3787, %v3786
      %v3808 = vpack.c.bf16 %v3789, %v3788
      %v3809 = vpack.c.bf16 %v3791, %v3790
      %v3810 = vpack.c.bf16 %v3793, %v3792
      %v3811 = vpack.c.bf16 %v3795, %v3794
      %s3812 = scalar_lea.vmem %s3, 12
      %v3813 = vld [vmem:[%s3812] sm:$0x3]
      %v3815 = vsel %vm257, %v3796, 0
      %v3818 = vsel %vm257, %v3797, 0
      %v3821 = vsel %vm257, %v3798, 0
      %v3824 = vsel %vm257, %v3799, 0
      %v3827 = vsel %vm257, %v3800, 0
      %v3830 = vsel %vm257, %v3801, 0
      %v3833 = vsel %vm257, %v3802, 0
      %v3836 = vsel %vm257, %v3803, 0
      %v3839 = vsel %vm257, %v3804, 0
      %v3842 = vsel %vm257, %v3805, 0
      %v3845 = vsel %vm257, %v3806, 0
      %v3848 = vsel %vm257, %v3807, 0
      %v3851 = vsel %vm257, %v3808, 0
      %v3854 = vsel %vm257, %v3809, 0
      %v3857 = vsel %vm257, %v3810, 0
      %v3860 = vsel %vm257, %v3811, 0
      %v3863 = vsel %vm644, %v3813, 0
      %3865 = vmatpush.bf16.msra.mxu0 0
      %3866 = vmatpush.bf16.msra.mxu0 0
      %3867 = vmatpush.bf16.msra.mxu0 0
      %3868 = vmatpush.bf16.msra.mxu0 0
      %3869 = vmatpush.bf16.msra.mxu0 0
      %3870 = vmatpush.bf16.msra.mxu0 0
      %3871 = vmatpush.bf16.msra.mxu0 0
      %3872 = vmatpush.bf16.msra.mxu0 %v3863
      %3873 = vmatmul.bf16.gmra.mxu0 %v3815
      %v3874 = vpop.f32.mrf.mxu0
      %v3875 = vadd.f32 0.0, %v3874
      %v3876 = vpop.f32.mrf.mxu0
      %v3877 = vadd.f32 0.0, %v3876
      %3878 = vmatmul.bf16.gmra.mxu0 %v3818
      %v3879 = vpop.f32.mrf.mxu0
      %v3880 = vadd.f32 0.0, %v3879
      %v3881 = vpop.f32.mrf.mxu0
      %v3882 = vadd.f32 0.0, %v3881
      %3883 = vmatmul.bf16.gmra.mxu0 %v3821
      %v3884 = vpop.f32.mrf.mxu0
      %v3885 = vadd.f32 0.0, %v3884
      %v3886 = vpop.f32.mrf.mxu0
      %v3887 = vadd.f32 0.0, %v3886
      %3888 = vmatmul.bf16.gmra.mxu0 %v3824
      %v3889 = vpop.f32.mrf.mxu0
      %v3890 = vadd.f32 0.0, %v3889
      %v3891 = vpop.f32.mrf.mxu0
      %v3892 = vadd.f32 0.0, %v3891
      %3893 = vmatmul.bf16.gmra.mxu0 %v3827
      %v3894 = vpop.f32.mrf.mxu0
      %v3895 = vadd.f32 0.0, %v3894
      %v3896 = vpop.f32.mrf.mxu0
      %v3897 = vadd.f32 0.0, %v3896
      %3898 = vmatmul.bf16.gmra.mxu0 %v3830
      %v3899 = vpop.f32.mrf.mxu0
      %v3900 = vadd.f32 0.0, %v3899
      %v3901 = vpop.f32.mrf.mxu0
      %v3902 = vadd.f32 0.0, %v3901
      %3903 = vmatmul.bf16.gmra.mxu0 %v3833
      %v3904 = vpop.f32.mrf.mxu0
      %v3905 = vadd.f32 0.0, %v3904
      %v3906 = vpop.f32.mrf.mxu0
      %v3907 = vadd.f32 0.0, %v3906
      %3908 = vmatmul.bf16.gmra.mxu0 %v3836
      %v3909 = vpop.f32.mrf.mxu0
      %v3910 = vadd.f32 0.0, %v3909
      %v3911 = vpop.f32.mrf.mxu0
      %v3912 = vadd.f32 0.0, %v3911
      %3913 = vmatmul.bf16.gmra.mxu0 %v3839
      %v3914 = vpop.f32.mrf.mxu0
      %v3915 = vadd.f32 0.0, %v3914
      %v3916 = vpop.f32.mrf.mxu0
      %v3917 = vadd.f32 0.0, %v3916
      %3918 = vmatmul.bf16.gmra.mxu0 %v3842
      %v3919 = vpop.f32.mrf.mxu0
      %v3920 = vadd.f32 0.0, %v3919
      %v3921 = vpop.f32.mrf.mxu0
      %v3922 = vadd.f32 0.0, %v3921
      %3923 = vmatmul.bf16.gmra.mxu0 %v3845
      %v3924 = vpop.f32.mrf.mxu0
      %v3925 = vadd.f32 0.0, %v3924
      %v3926 = vpop.f32.mrf.mxu0
      %v3927 = vadd.f32 0.0, %v3926
      %3928 = vmatmul.bf16.gmra.mxu0 %v3848
      %v3929 = vpop.f32.mrf.mxu0
      %v3930 = vadd.f32 0.0, %v3929
      %v3931 = vpop.f32.mrf.mxu0
      %v3932 = vadd.f32 0.0, %v3931
      %3933 = vmatmul.bf16.gmra.mxu0 %v3851
      %v3934 = vpop.f32.mrf.mxu0
      %v3935 = vadd.f32 0.0, %v3934
      %v3936 = vpop.f32.mrf.mxu0
      %v3937 = vadd.f32 0.0, %v3936
      %3938 = vmatmul.bf16.gmra.mxu0 %v3854
      %v3939 = vpop.f32.mrf.mxu0
      %v3940 = vadd.f32 0.0, %v3939
      %v3941 = vpop.f32.mrf.mxu0
      %v3942 = vadd.f32 0.0, %v3941
      %3943 = vmatmul.bf16.gmra.mxu0 %v3857
      %v3944 = vpop.f32.mrf.mxu0
      %v3945 = vadd.f32 0.0, %v3944
      %v3946 = vpop.f32.mrf.mxu0
      %v3947 = vadd.f32 0.0, %v3946
      %3948 = vmatmul.bf16.gmra.mxu0 %v3860
      %v3949 = vpop.f32.mrf.mxu0
      %v3950 = vadd.f32 0.0, %v3949
      %v3951 = vpop.f32.mrf.mxu0
      %v3952 = vadd.f32 0.0, %v3951
      %3953 = vdwg.mxu0
      %v3954 = vadd.f32 %v3731, %v3875
      %v3955 = vadd.f32 %v3732, %v3877
      %v3956 = vadd.f32 %v3733, %v3880
      %v3957 = vadd.f32 %v3734, %v3882
      %v3958 = vadd.f32 %v3735, %v3885
      %v3959 = vadd.f32 %v3736, %v3887
      %v3960 = vadd.f32 %v3737, %v3890
      %v3961 = vadd.f32 %v3738, %v3892
      %v3962 = vadd.f32 %v3739, %v3895
      %v3963 = vadd.f32 %v3740, %v3897
      %v3964 = vadd.f32 %v3741, %v3900
      %v3965 = vadd.f32 %v3742, %v3902
      %v3966 = vadd.f32 %v3743, %v3905
      %v3967 = vadd.f32 %v3744, %v3907
      %v3968 = vadd.f32 %v3745, %v3910
      %v3969 = vadd.f32 %v3746, %v3912
      %v3970 = vadd.f32 %v3747, %v3915
      %v3971 = vadd.f32 %v3748, %v3917
      %v3972 = vadd.f32 %v3749, %v3920
      %v3973 = vadd.f32 %v3750, %v3922
      %v3974 = vadd.f32 %v3751, %v3925
      %v3975 = vadd.f32 %v3752, %v3927
      %v3976 = vadd.f32 %v3753, %v3930
      %v3977 = vadd.f32 %v3754, %v3932
      %v3978 = vadd.f32 %v3755, %v3935
      %v3979 = vadd.f32 %v3756, %v3937
      %v3980 = vadd.f32 %v3757, %v3940
      %v3981 = vadd.f32 %v3758, %v3942
      %v3982 = vadd.f32 %v3759, %v3945
      %v3983 = vadd.f32 %v3760, %v3947
      %v3984 = vadd.f32 %v3761, %v3950
      %v3985 = vadd.f32 %v3762, %v3952
      %v3986 = vld [vmem:[%s3763 + $0x1] sm:$0xff]
      %v3987 = vld [vmem:[%s3763 + $0x9] sm:$0xff]
      %v3988 = vld [vmem:[%s3763 + $0x19] sm:$0xff]
      %v3989 = vld [vmem:[%s3763 + $0x21] sm:$0xff]
      %v3990 = vld [vmem:[%s3763 + $0x31] sm:$0xff]
      %v3991 = vld [vmem:[%s3763 + $0x39] sm:$0xff]
      %v3992 = vld [vmem:[%s3763 + $0x49] sm:$0xff]
      %v3993 = vld [vmem:[%s3763 + $0x51] sm:$0xff]
      %v3994 = vld [vmem:[%s3763 + $0x61] sm:$0xff]
      %v3995 = vld [vmem:[%s3763 + $0x69] sm:$0xff]
      %v3996 = vld [vmem:[%s3763 + $0x79] sm:$0xff]
      %v3997 = vld [vmem:[%s3763 + $0x81] sm:$0xff]
      %v3998 = vld [vmem:[%s3763 + $0x91] sm:$0xff]
      %v3999 = vld [vmem:[%s3763 + $0x99] sm:$0xff]
      %v4000 = vld [vmem:[%s3763 + $0xa9] sm:$0xff]
      %v4001 = vld [vmem:[%s3763 + $0xb1] sm:$0xff]
      %v4002 = vld [vmem:[%s3763 + $0xc1] sm:$0xff]
      %v4003 = vld [vmem:[%s3763 + $0xc9] sm:$0xff]
      %v4004 = vld [vmem:[%s3763 + $0xd9] sm:$0xff]
      %v4005 = vld [vmem:[%s3763 + $0xe1] sm:$0xff]
      %v4006 = vld [vmem:[%s3763 + $0xf1] sm:$0xff]
      %v4007 = vld [vmem:[%s3763 + $0xf9] sm:$0xff]
      %v4008 = vld [vmem:[%s3763 + $0x109] sm:$0xff]
      %v4009 = vld [vmem:[%s3763 + $0x111] sm:$0xff]
      %v4010 = vld [vmem:[%s3763 + $0x121] sm:$0xff]
      %v4011 = vld [vmem:[%s3763 + $0x129] sm:$0xff]
      %v4012 = vld [vmem:[%s3763 + $0x139] sm:$0xff]
      %v4013 = vld [vmem:[%s3763 + $0x141] sm:$0xff]
      %v4014 = vld [vmem:[%s3763 + $0x151] sm:$0xff]
      %v4015 = vld [vmem:[%s3763 + $0x159] sm:$0xff]
      %v4016 = vld [vmem:[%s3763 + $0x169] sm:$0xff]
      %v4017 = vld [vmem:[%s3763 + $0x171] sm:$0xff]
      %v4018 = vpack.c.bf16 %v3987, %v3986
      %v4019 = vpack.c.bf16 %v3989, %v3988
      %v4020 = vpack.c.bf16 %v3991, %v3990
      %v4021 = vpack.c.bf16 %v3993, %v3992
      %v4022 = vpack.c.bf16 %v3995, %v3994
      %v4023 = vpack.c.bf16 %v3997, %v3996
      %v4024 = vpack.c.bf16 %v3999, %v3998
      %v4025 = vpack.c.bf16 %v4001, %v4000
      %v4026 = vpack.c.bf16 %v4003, %v4002
      %v4027 = vpack.c.bf16 %v4005, %v4004
      %v4028 = vpack.c.bf16 %v4007, %v4006
      %v4029 = vpack.c.bf16 %v4009, %v4008
      %v4030 = vpack.c.bf16 %v4011, %v4010
      %v4031 = vpack.c.bf16 %v4013, %v4012
      %v4032 = vpack.c.bf16 %v4015, %v4014
      %v4033 = vpack.c.bf16 %v4017, %v4016
      %s4034 = scalar_lea.vmem %s3, 14
      %v4035 = vld [vmem:[%s4034] sm:$0x3]
      %v4037 = vsel %vm257, %v4018, 0
      %v4040 = vsel %vm257, %v4019, 0
      %v4043 = vsel %vm257, %v4020, 0
      %v4046 = vsel %vm257, %v4021, 0
      %v4049 = vsel %vm257, %v4022, 0
      %v4052 = vsel %vm257, %v4023, 0
      %v4055 = vsel %vm257, %v4024, 0
      %v4058 = vsel %vm257, %v4025, 0
      %v4061 = vsel %vm257, %v4026, 0
      %v4064 = vsel %vm257, %v4027, 0
      %v4067 = vsel %vm257, %v4028, 0
      %v4070 = vsel %vm257, %v4029, 0
      %v4073 = vsel %vm257, %v4030, 0
      %v4076 = vsel %vm257, %v4031, 0
      %v4079 = vsel %vm257, %v4032, 0
      %v4082 = vsel %vm257, %v4033, 0
      %v4085 = vsel %vm644, %v4035, 0
      %4087 = vmatpush.bf16.msra.mxu0 0
      %4088 = vmatpush.bf16.msra.mxu0 0
      %4089 = vmatpush.bf16.msra.mxu0 0
      %4090 = vmatpush.bf16.msra.mxu0 0
      %4091 = vmatpush.bf16.msra.mxu0 0
      %4092 = vmatpush.bf16.msra.mxu0 0
      %4093 = vmatpush.bf16.msra.mxu0 0
      %4094 = vmatpush.bf16.msra.mxu0 %v4085
      %4095 = vmatmul.bf16.gmra.mxu0 %v4037
      %v4096 = vpop.f32.mrf.mxu0
      %v4097 = vadd.f32 0.0, %v4096
      %v4098 = vpop.f32.mrf.mxu0
      %v4099 = vadd.f32 0.0, %v4098
      %4100 = vmatmul.bf16.gmra.mxu0 %v4040
      %v4101 = vpop.f32.mrf.mxu0
      %v4102 = vadd.f32 0.0, %v4101
      %v4103 = vpop.f32.mrf.mxu0
      %v4104 = vadd.f32 0.0, %v4103
      %4105 = vmatmul.bf16.gmra.mxu0 %v4043
      %v4106 = vpop.f32.mrf.mxu0
      %v4107 = vadd.f32 0.0, %v4106
      %v4108 = vpop.f32.mrf.mxu0
      %v4109 = vadd.f32 0.0, %v4108
      %4110 = vmatmul.bf16.gmra.mxu0 %v4046
      %v4111 = vpop.f32.mrf.mxu0
      %v4112 = vadd.f32 0.0, %v4111
      %v4113 = vpop.f32.mrf.mxu0
      %v4114 = vadd.f32 0.0, %v4113
      %4115 = vmatmul.bf16.gmra.mxu0 %v4049
      %v4116 = vpop.f32.mrf.mxu0
      %v4117 = vadd.f32 0.0, %v4116
      %v4118 = vpop.f32.mrf.mxu0
      %v4119 = vadd.f32 0.0, %v4118
      %4120 = vmatmul.bf16.gmra.mxu0 %v4052
      %v4121 = vpop.f32.mrf.mxu0
      %v4122 = vadd.f32 0.0, %v4121
      %v4123 = vpop.f32.mrf.mxu0
      %v4124 = vadd.f32 0.0, %v4123
      %4125 = vmatmul.bf16.gmra.mxu0 %v4055
      %v4126 = vpop.f32.mrf.mxu0
      %v4127 = vadd.f32 0.0, %v4126
      %v4128 = vpop.f32.mrf.mxu0
      %v4129 = vadd.f32 0.0, %v4128
      %4130 = vmatmul.bf16.gmra.mxu0 %v4058
      %v4131 = vpop.f32.mrf.mxu0
      %v4132 = vadd.f32 0.0, %v4131
      %v4133 = vpop.f32.mrf.mxu0
      %v4134 = vadd.f32 0.0, %v4133
      %4135 = vmatmul.bf16.gmra.mxu0 %v4061
      %v4136 = vpop.f32.mrf.mxu0
      %v4137 = vadd.f32 0.0, %v4136
      %v4138 = vpop.f32.mrf.mxu0
      %v4139 = vadd.f32 0.0, %v4138
      %4140 = vmatmul.bf16.gmra.mxu0 %v4064
      %v4141 = vpop.f32.mrf.mxu0
      %v4142 = vadd.f32 0.0, %v4141
      %v4143 = vpop.f32.mrf.mxu0
      %v4144 = vadd.f32 0.0, %v4143
      %4145 = vmatmul.bf16.gmra.mxu0 %v4067
      %v4146 = vpop.f32.mrf.mxu0
      %v4147 = vadd.f32 0.0, %v4146
      %v4148 = vpop.f32.mrf.mxu0
      %v4149 = vadd.f32 0.0, %v4148
      %4150 = vmatmul.bf16.gmra.mxu0 %v4070
      %v4151 = vpop.f32.mrf.mxu0
      %v4152 = vadd.f32 0.0, %v4151
      %v4153 = vpop.f32.mrf.mxu0
      %v4154 = vadd.f32 0.0, %v4153
      %4155 = vmatmul.bf16.gmra.mxu0 %v4073
      %v4156 = vpop.f32.mrf.mxu0
      %v4157 = vadd.f32 0.0, %v4156
      %v4158 = vpop.f32.mrf.mxu0
      %v4159 = vadd.f32 0.0, %v4158
      %4160 = vmatmul.bf16.gmra.mxu0 %v4076
      %v4161 = vpop.f32.mrf.mxu0
      %v4162 = vadd.f32 0.0, %v4161
      %v4163 = vpop.f32.mrf.mxu0
      %v4164 = vadd.f32 0.0, %v4163
      %4165 = vmatmul.bf16.gmra.mxu0 %v4079
      %v4166 = vpop.f32.mrf.mxu0
      %v4167 = vadd.f32 0.0, %v4166
      %v4168 = vpop.f32.mrf.mxu0
      %v4169 = vadd.f32 0.0, %v4168
      %4170 = vmatmul.bf16.gmra.mxu0 %v4082
      %v4171 = vpop.f32.mrf.mxu0
      %v4172 = vadd.f32 0.0, %v4171
      %v4173 = vpop.f32.mrf.mxu0
      %v4174 = vadd.f32 0.0, %v4173
      %4175 = vdwg.mxu0
      %v4176 = vadd.f32 %v3954, %v4097
      %v4177 = vadd.f32 %v3955, %v4099
      %v4178 = vadd.f32 %v3956, %v4102
      %v4179 = vadd.f32 %v3957, %v4104
      %v4180 = vadd.f32 %v3958, %v4107
      %v4181 = vadd.f32 %v3959, %v4109
      %v4182 = vadd.f32 %v3960, %v4112
      %v4183 = vadd.f32 %v3961, %v4114
      %v4184 = vadd.f32 %v3962, %v4117
      %v4185 = vadd.f32 %v3963, %v4119
      %v4186 = vadd.f32 %v3964, %v4122
      %v4187 = vadd.f32 %v3965, %v4124
      %v4188 = vadd.f32 %v3966, %v4127
      %v4189 = vadd.f32 %v3967, %v4129
      %v4190 = vadd.f32 %v3968, %v4132
      %v4191 = vadd.f32 %v3969, %v4134
      %v4192 = vadd.f32 %v3970, %v4137
      %v4193 = vadd.f32 %v3971, %v4139
      %v4194 = vadd.f32 %v3972, %v4142
      %v4195 = vadd.f32 %v3973, %v4144
      %v4196 = vadd.f32 %v3974, %v4147
      %v4197 = vadd.f32 %v3975, %v4149
      %v4198 = vadd.f32 %v3976, %v4152
      %v4199 = vadd.f32 %v3977, %v4154
      %v4200 = vadd.f32 %v3978, %v4157
      %v4201 = vadd.f32 %v3979, %v4159
      %v4202 = vadd.f32 %v3980, %v4162
      %v4203 = vadd.f32 %v3981, %v4164
      %v4204 = vadd.f32 %v3982, %v4167
      %v4205 = vadd.f32 %v3983, %v4169
      %v4206 = vadd.f32 %v3984, %v4172
      %v4207 = vadd.f32 %v3985, %v4174
      %v4208 = vld [vmem:[%s3763 + $0x2] sm:$0xff]
      %v4209 = vld [vmem:[%s3763 + $0xa] sm:$0xff]
      %v4210 = vld [vmem:[%s3763 + $0x1a] sm:$0xff]
      %v4211 = vld [vmem:[%s3763 + $0x22] sm:$0xff]
      %v4212 = vld [vmem:[%s3763 + $0x32] sm:$0xff]
      %v4213 = vld [vmem:[%s3763 + $0x3a] sm:$0xff]
      %v4214 = vld [vmem:[%s3763 + $0x4a] sm:$0xff]
      %v4215 = vld [vmem:[%s3763 + $0x52] sm:$0xff]
      %v4216 = vld [vmem:[%s3763 + $0x62] sm:$0xff]
      %v4217 = vld [vmem:[%s3763 + $0x6a] sm:$0xff]
      %v4218 = vld [vmem:[%s3763 + $0x7a] sm:$0xff]
      %v4219 = vld [vmem:[%s3763 + $0x82] sm:$0xff]
      %v4220 = vld [vmem:[%s3763 + $0x92] sm:$0xff]
      %v4221 = vld [vmem:[%s3763 + $0x9a] sm:$0xff]
      %v4222 = vld [vmem:[%s3763 + $0xaa] sm:$0xff]
      %v4223 = vld [vmem:[%s3763 + $0xb2] sm:$0xff]
      %v4224 = vld [vmem:[%s3763 + $0xc2] sm:$0xff]
      %v4225 = vld [vmem:[%s3763 + $0xca] sm:$0xff]
      %v4226 = vld [vmem:[%s3763 + $0xda] sm:$0xff]
      %v4227 = vld [vmem:[%s3763 + $0xe2] sm:$0xff]
      %v4228 = vld [vmem:[%s3763 + $0xf2] sm:$0xff]
      %v4229 = vld [vmem:[%s3763 + $0xfa] sm:$0xff]
      %v4230 = vld [vmem:[%s3763 + $0x10a] sm:$0xff]
      %v4231 = vld [vmem:[%s3763 + $0x112] sm:$0xff]
      %v4232 = vld [vmem:[%s3763 + $0x122] sm:$0xff]
      %v4233 = vld [vmem:[%s3763 + $0x12a] sm:$0xff]
      %v4234 = vld [vmem:[%s3763 + $0x13a] sm:$0xff]
      %v4235 = vld [vmem:[%s3763 + $0x142] sm:$0xff]
      %v4236 = vld [vmem:[%s3763 + $0x152] sm:$0xff]
      %v4237 = vld [vmem:[%s3763 + $0x15a] sm:$0xff]
      %v4238 = vld [vmem:[%s3763 + $0x16a] sm:$0xff]
      %v4239 = vld [vmem:[%s3763 + $0x172] sm:$0xff]
      %v4240 = vpack.c.bf16 %v4209, %v4208
      %v4241 = vpack.c.bf16 %v4211, %v4210
      %v4242 = vpack.c.bf16 %v4213, %v4212
      %v4243 = vpack.c.bf16 %v4215, %v4214
      %v4244 = vpack.c.bf16 %v4217, %v4216
      %v4245 = vpack.c.bf16 %v4219, %v4218
      %v4246 = vpack.c.bf16 %v4221, %v4220
      %v4247 = vpack.c.bf16 %v4223, %v4222
      %v4248 = vpack.c.bf16 %v4225, %v4224
      %v4249 = vpack.c.bf16 %v4227, %v4226
      %v4250 = vpack.c.bf16 %v4229, %v4228
      %v4251 = vpack.c.bf16 %v4231, %v4230
      %v4252 = vpack.c.bf16 %v4233, %v4232
      %v4253 = vpack.c.bf16 %v4235, %v4234
      %v4254 = vpack.c.bf16 %v4237, %v4236
      %v4255 = vpack.c.bf16 %v4239, %v4238
      %s4256 = scalar_lea.vmem %s3, 16
      %v4257 = vld [vmem:[%s4256] sm:$0x3]
      %v4259 = vsel %vm257, %v4240, 0
      %v4262 = vsel %vm257, %v4241, 0
      %v4265 = vsel %vm257, %v4242, 0
      %v4268 = vsel %vm257, %v4243, 0
      %v4271 = vsel %vm257, %v4244, 0
      %v4274 = vsel %vm257, %v4245, 0
      %v4277 = vsel %vm257, %v4246, 0
      %v4280 = vsel %vm257, %v4247, 0
      %v4283 = vsel %vm257, %v4248, 0
      %v4286 = vsel %vm257, %v4249, 0
      %v4289 = vsel %vm257, %v4250, 0
      %v4292 = vsel %vm257, %v4251, 0
      %v4295 = vsel %vm257, %v4252, 0
      %v4298 = vsel %vm257, %v4253, 0
      %v4301 = vsel %vm257, %v4254, 0
      %v4304 = vsel %vm257, %v4255, 0
      %v4307 = vsel %vm644, %v4257, 0
      %4309 = vmatpush.bf16.msra.mxu0 0
      %4310 = vmatpush.bf16.msra.mxu0 0
      %4311 = vmatpush.bf16.msra.mxu0 0
      %4312 = vmatpush.bf16.msra.mxu0 0
      %4313 = vmatpush.bf16.msra.mxu0 0
      %4314 = vmatpush.bf16.msra.mxu0 0
      %4315 = vmatpush.bf16.msra.mxu0 0
      %4316 = vmatpush.bf16.msra.mxu0 %v4307
      %4317 = vmatmul.bf16.gmra.mxu0 %v4259
      %v4318 = vpop.f32.mrf.mxu0
      %v4319 = vadd.f32 0.0, %v4318
      %v4320 = vpop.f32.mrf.mxu0
      %v4321 = vadd.f32 0.0, %v4320
      %4322 = vmatmul.bf16.gmra.mxu0 %v4262
      %v4323 = vpop.f32.mrf.mxu0
      %v4324 = vadd.f32 0.0, %v4323
      %v4325 = vpop.f32.mrf.mxu0
      %v4326 = vadd.f32 0.0, %v4325
      %4327 = vmatmul.bf16.gmra.mxu0 %v4265
      %v4328 = vpop.f32.mrf.mxu0
      %v4329 = vadd.f32 0.0, %v4328
      %v4330 = vpop.f32.mrf.mxu0
      %v4331 = vadd.f32 0.0, %v4330
      %4332 = vmatmul.bf16.gmra.mxu0 %v4268
      %v4333 = vpop.f32.mrf.mxu0
      %v4334 = vadd.f32 0.0, %v4333
      %v4335 = vpop.f32.mrf.mxu0
      %v4336 = vadd.f32 0.0, %v4335
      %4337 = vmatmul.bf16.gmra.mxu0 %v4271
      %v4338 = vpop.f32.mrf.mxu0
      %v4339 = vadd.f32 0.0, %v4338
      %v4340 = vpop.f32.mrf.mxu0
      %v4341 = vadd.f32 0.0, %v4340
      %4342 = vmatmul.bf16.gmra.mxu0 %v4274
      %v4343 = vpop.f32.mrf.mxu0
      %v4344 = vadd.f32 0.0, %v4343
      %v4345 = vpop.f32.mrf.mxu0
      %v4346 = vadd.f32 0.0, %v4345
      %4347 = vmatmul.bf16.gmra.mxu0 %v4277
      %v4348 = vpop.f32.mrf.mxu0
      %v4349 = vadd.f32 0.0, %v4348
      %v4350 = vpop.f32.mrf.mxu0
      %v4351 = vadd.f32 0.0, %v4350
      %4352 = vmatmul.bf16.gmra.mxu0 %v4280
      %v4353 = vpop.f32.mrf.mxu0
      %v4354 = vadd.f32 0.0, %v4353
      %v4355 = vpop.f32.mrf.mxu0
      %v4356 = vadd.f32 0.0, %v4355
      %4357 = vmatmul.bf16.gmra.mxu0 %v4283
      %v4358 = vpop.f32.mrf.mxu0
      %v4359 = vadd.f32 0.0, %v4358
      %v4360 = vpop.f32.mrf.mxu0
      %v4361 = vadd.f32 0.0, %v4360
      %4362 = vmatmul.bf16.gmra.mxu0 %v4286
      %v4363 = vpop.f32.mrf.mxu0
      %v4364 = vadd.f32 0.0, %v4363
      %v4365 = vpop.f32.mrf.mxu0
      %v4366 = vadd.f32 0.0, %v4365
      %4367 = vmatmul.bf16.gmra.mxu0 %v4289
      %v4368 = vpop.f32.mrf.mxu0
      %v4369 = vadd.f32 0.0, %v4368
      %v4370 = vpop.f32.mrf.mxu0
      %v4371 = vadd.f32 0.0, %v4370
      %4372 = vmatmul.bf16.gmra.mxu0 %v4292
      %v4373 = vpop.f32.mrf.mxu0
      %v4374 = vadd.f32 0.0, %v4373
      %v4375 = vpop.f32.mrf.mxu0
      %v4376 = vadd.f32 0.0, %v4375
      %4377 = vmatmul.bf16.gmra.mxu0 %v4295
      %v4378 = vpop.f32.mrf.mxu0
      %v4379 = vadd.f32 0.0, %v4378
      %v4380 = vpop.f32.mrf.mxu0
      %v4381 = vadd.f32 0.0, %v4380
      %4382 = vmatmul.bf16.gmra.mxu0 %v4298
      %v4383 = vpop.f32.mrf.mxu0
      %v4384 = vadd.f32 0.0, %v4383
      %v4385 = vpop.f32.mrf.mxu0
      %v4386 = vadd.f32 0.0, %v4385
      %4387 = vmatmul.bf16.gmra.mxu0 %v4301
      %v4388 = vpop.f32.mrf.mxu0
      %v4389 = vadd.f32 0.0, %v4388
      %v4390 = vpop.f32.mrf.mxu0
      %v4391 = vadd.f32 0.0, %v4390
      %4392 = vmatmul.bf16.gmra.mxu0 %v4304
      %v4393 = vpop.f32.mrf.mxu0
      %v4394 = vadd.f32 0.0, %v4393
      %v4395 = vpop.f32.mrf.mxu0
      %v4396 = vadd.f32 0.0, %v4395
      %4397 = vdwg.mxu0
      %v4398 = vadd.f32 %v4176, %v4319
      %v4399 = vadd.f32 %v4177, %v4321
      %v4400 = vadd.f32 %v4178, %v4324
      %v4401 = vadd.f32 %v4179, %v4326
      %v4402 = vadd.f32 %v4180, %v4329
      %v4403 = vadd.f32 %v4181, %v4331
      %v4404 = vadd.f32 %v4182, %v4334
      %v4405 = vadd.f32 %v4183, %v4336
      %v4406 = vadd.f32 %v4184, %v4339
      %v4407 = vadd.f32 %v4185, %v4341
      %v4408 = vadd.f32 %v4186, %v4344
      %v4409 = vadd.f32 %v4187, %v4346
      %v4410 = vadd.f32 %v4188, %v4349
      %v4411 = vadd.f32 %v4189, %v4351
      %v4412 = vadd.f32 %v4190, %v4354
      %v4413 = vadd.f32 %v4191, %v4356
      %v4414 = vadd.f32 %v4192, %v4359
      %v4415 = vadd.f32 %v4193, %v4361
      %v4416 = vadd.f32 %v4194, %v4364
      %v4417 = vadd.f32 %v4195, %v4366
      %v4418 = vadd.f32 %v4196, %v4369
      %v4419 = vadd.f32 %v4197, %v4371
      %v4420 = vadd.f32 %v4198, %v4374
      %v4421 = vadd.f32 %v4199, %v4376
      %v4422 = vadd.f32 %v4200, %v4379
      %v4423 = vadd.f32 %v4201, %v4381
      %v4424 = vadd.f32 %v4202, %v4384
      %v4425 = vadd.f32 %v4203, %v4386
      %v4426 = vadd.f32 %v4204, %v4389
      %v4427 = vadd.f32 %v4205, %v4391
      %v4428 = vadd.f32 %v4206, %v4394
      %v4429 = vadd.f32 %v4207, %v4396
      %4430 = vst.msk [vmem:[%s251] sm:$0xff] %vm257, %v4398
      %4431 = vst.msk [vmem:[%s251 + $0x8] sm:$0xff] %vm257, %v4399
      %4432 = vst.msk [vmem:[%s251 + $0x10] sm:$0xff] %vm257, %v4400
      %4433 = vst.msk [vmem:[%s251 + $0x18] sm:$0xff] %vm257, %v4401
      %4434 = vst.msk [vmem:[%s251 + $0x20] sm:$0xff] %vm257, %v4402
      %4435 = vst.msk [vmem:[%s251 + $0x28] sm:$0xff] %vm257, %v4403
      %4436 = vst.msk [vmem:[%s251 + $0x30] sm:$0xff] %vm257, %v4404
      %4437 = vst.msk [vmem:[%s251 + $0x38] sm:$0xff] %vm257, %v4405
      %4438 = vst.msk [vmem:[%s251 + $0x40] sm:$0xff] %vm257, %v4406
      %4439 = vst.msk [vmem:[%s251 + $0x48] sm:$0xff] %vm257, %v4407
      %4440 = vst.msk [vmem:[%s251 + $0x50] sm:$0xff] %vm257, %v4408
      %4441 = vst.msk [vmem:[%s251 + $0x58] sm:$0xff] %vm257, %v4409
      %4442 = vst.msk [vmem:[%s251 + $0x60] sm:$0xff] %vm257, %v4410
      %4443 = vst.msk [vmem:[%s251 + $0x68] sm:$0xff] %vm257, %v4411
      %4444 = vst.msk [vmem:[%s251 + $0x70] sm:$0xff] %vm257, %v4412
      %4445 = vst.msk [vmem:[%s251 + $0x78] sm:$0xff] %vm257, %v4413
      %4446 = vst.msk [vmem:[%s251 + $0x80] sm:$0xff] %vm257, %v4414
      %4447 = vst.msk [vmem:[%s251 + $0x88] sm:$0xff] %vm257, %v4415
      %4448 = vst.msk [vmem:[%s251 + $0x90] sm:$0xff] %vm257, %v4416
      %4449 = vst.msk [vmem:[%s251 + $0x98] sm:$0xff] %vm257, %v4417
      %4450 = vst.msk [vmem:[%s251 + $0xa0] sm:$0xff] %vm257, %v4418
      %4451 = vst.msk [vmem:[%s251 + $0xa8] sm:$0xff] %vm257, %v4419
      %4452 = vst.msk [vmem:[%s251 + $0xb0] sm:$0xff] %vm257, %v4420
      %4453 = vst.msk [vmem:[%s251 + $0xb8] sm:$0xff] %vm257, %v4421
      %4454 = vst.msk [vmem:[%s251 + $0xc0] sm:$0xff] %vm257, %v4422
      %4455 = vst.msk [vmem:[%s251 + $0xc8] sm:$0xff] %vm257, %v4423
      %4456 = vst.msk [vmem:[%s251 + $0xd0] sm:$0xff] %vm257, %v4424
      %4457 = vst.msk [vmem:[%s251 + $0xd8] sm:$0xff] %vm257, %v4425
      %4458 = vst.msk [vmem:[%s251 + $0xe0] sm:$0xff] %vm257, %v4426
      %4459 = vst.msk [vmem:[%s251 + $0xe8] sm:$0xff] %vm257, %v4427
      %4460 = vst.msk [vmem:[%s251 + $0xf0] sm:$0xff] %vm257, %v4428
      %4461 = vst.msk [vmem:[%s251 + $0xf8] sm:$0xff] %vm257, %v4429
      %v4462 = vsel %vm257, %v4398, 0.0
      %v4463 = vsel %vm257, %v4399, 0.0
      %v4464 = vadd.f32 %v4462, %v4463
      %v4465 = vsel %vm257, %v4400, 0.0
      %v4466 = vadd.f32 %v4464, %v4465
      %v4467 = vsel %vm257, %v4401, 0.0
      %v4468 = vadd.f32 %v4466, %v4467
      %v4469 = vsel %vm257, %v4402, 0.0
      %v4470 = vadd.f32 %v4468, %v4469
      %v4471 = vsel %vm257, %v4403, 0.0
      %v4472 = vadd.f32 %v4470, %v4471
      %v4473 = vsel %vm257, %v4404, 0.0
      %v4474 = vadd.f32 %v4472, %v4473
      %v4475 = vsel %vm257, %v4405, 0.0
      %v4476 = vadd.f32 %v4474, %v4475
      %v4477 = vsel %vm257, %v4406, 0.0
      %v4478 = vadd.f32 %v4476, %v4477
      %v4479 = vsel %vm257, %v4407, 0.0
      %v4480 = vadd.f32 %v4478, %v4479
      %v4481 = vsel %vm257, %v4408, 0.0
      %v4482 = vadd.f32 %v4480, %v4481
      %v4483 = vsel %vm257, %v4409, 0.0
      %v4484 = vadd.f32 %v4482, %v4483
      %v4485 = vsel %vm257, %v4410, 0.0
      %v4486 = vadd.f32 %v4484, %v4485
      %v4487 = vsel %vm257, %v4411, 0.0
      %v4488 = vadd.f32 %v4486, %v4487
      %v4489 = vsel %vm257, %v4412, 0.0
      %v4490 = vadd.f32 %v4488, %v4489
      %v4491 = vsel %vm257, %v4413, 0.0
      %v4492 = vadd.f32 %v4490, %v4491
      %v4493 = vsel %vm257, %v4414, 0.0
      %v4494 = vadd.f32 %v4492, %v4493
      %v4495 = vsel %vm257, %v4415, 0.0
      %v4496 = vadd.f32 %v4494, %v4495
      %v4497 = vsel %vm257, %v4416, 0.0
      %v4498 = vadd.f32 %v4496, %v4497
      %v4499 = vsel %vm257, %v4417, 0.0
      %v4500 = vadd.f32 %v4498, %v4499
      %v4501 = vsel %vm257, %v4418, 0.0
      %v4502 = vadd.f32 %v4500, %v4501
      %v4503 = vsel %vm257, %v4419, 0.0
      %v4504 = vadd.f32 %v4502, %v4503
      %v4505 = vsel %vm257, %v4420, 0.0
      %v4506 = vadd.f32 %v4504, %v4505
      %v4507 = vsel %vm257, %v4421, 0.0
      %v4508 = vadd.f32 %v4506, %v4507
      %v4509 = vsel %vm257, %v4422, 0.0
      %v4510 = vadd.f32 %v4508, %v4509
      %v4511 = vsel %vm257, %v4423, 0.0
      %v4512 = vadd.f32 %v4510, %v4511
      %v4513 = vsel %vm257, %v4424, 0.0
      %v4514 = vadd.f32 %v4512, %v4513
      %v4515 = vsel %vm257, %v4425, 0.0
      %v4516 = vadd.f32 %v4514, %v4515
      %v4517 = vsel %vm257, %v4426, 0.0
      %v4518 = vadd.f32 %v4516, %v4517
      %v4519 = vsel %vm257, %v4427, 0.0
      %v4520 = vadd.f32 %v4518, %v4519
      %v4521 = vsel %vm257, %v4428, 0.0
      %v4522 = vadd.f32 %v4520, %v4521
      %v4523 = vsel %vm257, %v4429, 0.0
      %v4524 = vadd.f32 %v4522, %v4523
      %v4525 = vrot.slane %v4524, 4
      %v4526 = vadd.f32 %v4524, %v4525
      %v4527 = vrot.slane %v4526, 2
      %v4528 = vadd.f32 %v4526, %v4527
      %v4529 = vrot.slane %v4528, 1
      %v4530 = vadd.f32 %v4528, %v4529
      %vm4531 = vcmask 24576
      %4532 = vst.msk [vmem:[%s255] sm:$0x1] %vm4531, %v4530
      %v4533 = vmul.f32 %v4398, %v4398
      %v4534 = vmul.f32 %v4399, %v4399
      %v4535 = vmul.f32 %v4400, %v4400
      %v4536 = vmul.f32 %v4401, %v4401
      %v4537 = vmul.f32 %v4402, %v4402
      %v4538 = vmul.f32 %v4403, %v4403
      %v4539 = vmul.f32 %v4404, %v4404
      %v4540 = vmul.f32 %v4405, %v4405
      %v4541 = vmul.f32 %v4406, %v4406
      %v4542 = vmul.f32 %v4407, %v4407
      %v4543 = vmul.f32 %v4408, %v4408
      %v4544 = vmul.f32 %v4409, %v4409
      %v4545 = vmul.f32 %v4410, %v4410
      %v4546 = vmul.f32 %v4411, %v4411
      %v4547 = vmul.f32 %v4412, %v4412
      %v4548 = vmul.f32 %v4413, %v4413
      %v4549 = vmul.f32 %v4414, %v4414
      %v4550 = vmul.f32 %v4415, %v4415
      %v4551 = vmul.f32 %v4416, %v4416
      %v4552 = vmul.f32 %v4417, %v4417
      %v4553 = vmul.f32 %v4418, %v4418
      %v4554 = vmul.f32 %v4419, %v4419
      %v4555 = vmul.f32 %v4420, %v4420
      %v4556 = vmul.f32 %v4421, %v4421
      %v4557 = vmul.f32 %v4422, %v4422
      %v4558 = vmul.f32 %v4423, %v4423
      %v4559 = vmul.f32 %v4424, %v4424
      %v4560 = vmul.f32 %v4425, %v4425
      %v4561 = vmul.f32 %v4426, %v4426
      %v4562 = vmul.f32 %v4427, %v4427
      %v4563 = vmul.f32 %v4428, %v4428
      %v4564 = vmul.f32 %v4429, %v4429
      %v4565 = vsel %vm257, %v4533, 0.0
      %v4566 = vsel %vm257, %v4534, 0.0
      %v4567 = vadd.f32 %v4565, %v4566
      %v4568 = vsel %vm257, %v4535, 0.0
      %v4569 = vadd.f32 %v4567, %v4568
      %v4570 = vsel %vm257, %v4536, 0.0
      %v4571 = vadd.f32 %v4569, %v4570
      %v4572 = vsel %vm257, %v4537, 0.0
      %v4573 = vadd.f32 %v4571, %v4572
      %v4574 = vsel %vm257, %v4538, 0.0
      %v4575 = vadd.f32 %v4573, %v4574
      %v4576 = vsel %vm257, %v4539, 0.0
      %v4577 = vadd.f32 %v4575, %v4576
      %v4578 = vsel %vm257, %v4540, 0.0
      %v4579 = vadd.f32 %v4577, %v4578
      %v4580 = vsel %vm257, %v4541, 0.0
      %v4581 = vadd.f32 %v4579, %v4580
      %v4582 = vsel %vm257, %v4542, 0.0
      %v4583 = vadd.f32 %v4581, %v4582
      %v4584 = vsel %vm257, %v4543, 0.0
      %v4585 = vadd.f32 %v4583, %v4584
      %v4586 = vsel %vm257, %v4544, 0.0
      %v4587 = vadd.f32 %v4585, %v4586
      %v4588 = vsel %vm257, %v4545, 0.0
      %v4589 = vadd.f32 %v4587, %v4588
      %v4590 = vsel %vm257, %v4546, 0.0
      %v4591 = vadd.f32 %v4589, %v4590
      %v4592 = vsel %vm257, %v4547, 0.0
      %v4593 = vadd.f32 %v4591, %v4592
      %v4594 = vsel %vm257, %v4548, 0.0
      %v4595 = vadd.f32 %v4593, %v4594
      %v4596 = vsel %vm257, %v4549, 0.0
      %v4597 = vadd.f32 %v4595, %v4596
      %v4598 = vsel %vm257, %v4550, 0.0
      %v4599 = vadd.f32 %v4597, %v4598
      %v4600 = vsel %vm257, %v4551, 0.0
      %v4601 = vadd.f32 %v4599, %v4600
      %v4602 = vsel %vm257, %v4552, 0.0
      %v4603 = vadd.f32 %v4601, %v4602
      %v4604 = vsel %vm257, %v4553, 0.0
      %v4605 = vadd.f32 %v4603, %v4604
      %v4606 = vsel %vm257, %v4554, 0.0
      %v4607 = vadd.f32 %v4605, %v4606
      %v4608 = vsel %vm257, %v4555, 0.0
      %v4609 = vadd.f32 %v4607, %v4608
      %v4610 = vsel %vm257, %v4556, 0.0
      %v4611 = vadd.f32 %v4609, %v4610
      %v4612 = vsel %vm257, %v4557, 0.0
      %v4613 = vadd.f32 %v4611, %v4612
      %v4614 = vsel %vm257, %v4558, 0.0
      %v4615 = vadd.f32 %v4613, %v4614
      %v4616 = vsel %vm257, %v4559, 0.0
      %v4617 = vadd.f32 %v4615, %v4616
      %v4618 = vsel %vm257, %v4560, 0.0
      %v4619 = vadd.f32 %v4617, %v4618
      %v4620 = vsel %vm257, %v4561, 0.0
      %v4621 = vadd.f32 %v4619, %v4620
      %v4622 = vsel %vm257, %v4562, 0.0
      %v4623 = vadd.f32 %v4621, %v4622
      %v4624 = vsel %vm257, %v4563, 0.0
      %v4625 = vadd.f32 %v4623, %v4624
      %v4626 = vsel %vm257, %v4564, 0.0
      %v4627 = vadd.f32 %v4625, %v4626
      %v4628 = vrot.slane %v4627, 4
      %v4629 = vadd.f32 %v4627, %v4628
      %v4630 = vrot.slane %v4629, 2
      %v4631 = vadd.f32 %v4629, %v4630
      %v4632 = vrot.slane %v4631, 1
      %v4633 = vadd.f32 %v4631, %v4632
      %4634 = vst.msk [vmem:[%s255 + $0x1] sm:$0x1] %vm4531, %v4633
      %p4635 = scmp.lt.s32.totalorder %s17, 1
      %s4636 = scalar_select %p4635, %s17, 1
      %s4637 = smul.addr %s4636, 32
      %s4638 = smul.addr %s4637, 8
      %s4639 = scalar_lea.vmem %s4, %s4638
      %p4640 = scmp.lt.s32.totalorder %s17, 1
      %s4641 = scalar_select %p4640, %s17, 1
      %s4642 = smul.addr %s4641, 2
      %s4643 = scalar_lea.vmem %s5, %s4642
      // Predicated region
      $region37: #{decoder_forward.5} parent=35 // pred_check
        %p4644 = pneg %p129
      $region38: #{decoder_forward.5} parent=35 // pred_check_branch
        %4646 = sbr.rel (%p4644) target = $region40
      $region39: #{decoder_forward.5} parent=35 // pred_region
        _
      $region40: #{decoder_forward.5} parent=35 // pred_fallthru
        _
      // Predicated region
      $region41: #{decoder_forward.5} parent=35 // pred_check
        %p4647 = pneg %p155
      $region42: #{decoder_forward.5} parent=35 // pred_check_branch
        %4649 = sbr.rel (%p4647) target = $region44
      $region43: #{decoder_forward.5} parent=35 // pred_region
        _
      $region44: #{decoder_forward.5} parent=35 // pred_fallthru
        _
    $region36: #{decoder_forward.5} parent=5 // pred_fallthru
      _
    %p4650 = scmp.le.s32.totalorder 2, %s12
    // Predicated region
    $region45: #{decoder_forward.5} parent=5 // pred_check
      %p4651 = pneg %p4650
    $region46: #{decoder_forward.5} parent=5 // pred_check_branch
      %4653 = sbr.rel (%p4651) target = $region48
    $region47: #{decoder_forward.5} parent=5 // pred_region
      %s4654 = ssub.s32 %s12, 2
      // Predicated region
      $region49: #{decoder_forward.5} parent=47 // pred_check
        %p4655 = pneg %p135
      $region50: #{decoder_forward.5} parent=47 // pred_check_branch
        %4657 = sbr.rel (%p4655) target = $region52
      $region51: #{decoder_forward.5} parent=47 // pred_region
        %p4658 = scmp.lt.s32.totalorder %s18, 1
        %s4659 = scalar_select %p4658, %s18, 1
        %s4660 = smul.addr %s4659, 32
        %s4661 = smul.addr %s4660, 8
        %s4662 = scalar_lea.vmem %s4, %s4661
      $region52: #{decoder_forward.5} parent=47 // pred_fallthru
        _
      // Predicated region
      $region53: #{decoder_forward.5} parent=47 // pred_check
        %p4663 = pneg %p161
      $region54: #{decoder_forward.5} parent=47 // pred_check_branch
        %4665 = sbr.rel (%p4663) target = $region56
      $region55: #{decoder_forward.5} parent=47 // pred_region
        %p4666 = scmp.lt.s32.totalorder %s18, 1
        %s4667 = scalar_select %p4666, %s18, 1
        %s4668 = smul.addr %s4667, 2
        %s4669 = scalar_lea.vmem %s5, %s4668
      $region56: #{decoder_forward.5} parent=47 // pred_fallthru
        _
    $region48: #{decoder_forward.5} parent=5 // pred_fallthru
      _
  $region6: #{decoder_forward.5} parent=0 // loop_footer
    %s16 = sadd.s32 1, %s12
  $region7: #{decoder_forward.5} parent=0 // loop_footer_branch
    %11 = sbr.rel target = $region3
  $region8: #{decoder_forward.5} parent=0 // loop_exit
    _

</llo_original>
